<compile_context>
chip_gen: v7x
topology: tpu7x:2x2x1
jax: 0.10.0
libtpu: 0.0.40
codegen_flags: <defaults>
</compile_context>

<pallas_src>
import functools
import math

import jax
import jax.numpy as jnp
from jax import lax
from jax.experimental import pallas as pl
from jax.experimental.pallas import tpu as pltpu


def _instance_forward(e, c_feat, v_feat, w, *, p, T):
    """Forward for one LP instance. Shared (identical math) by the Pallas kernel and
    the pure-JAX reference. Returns (2, n) log-softmax scores, classes on sublanes."""
    f32 = jnp.float32
    bf16 = jnp.bfloat16
    relu = lambda x: jnp.maximum(x, 0.0)
    m, n = e.shape

    e = e.astype(bf16)                 # MXU-native operand dtype (no-op inside the kernel)
    c_feat = c_feat.astype(f32)        # (1, m)
    v_feat = v_feat.astype(f32)        # (1, n)

    # relu(e)/relu(-e) computed once, reused for row- and col-wise reductions (f32 accumulation).
    e_pos = relu(e).astype(f32)
    e_neg = relu(-e).astype(f32)
    s_pos_r = jnp.sum(e_pos, axis=1, keepdims=True)      # (m, 1)
    s_neg_r = jnp.sum(e_neg, axis=1, keepdims=True)      # (m, 1)
    s_pos_c = jnp.sum(e_pos, axis=0, keepdims=True)      # (1, n)
    s_neg_c = jnp.sum(e_neg, axis=0, keepdims=True)      # (1, n)

    # Edge aggregation: sum_j relu(theta4 * e_ij) via relu(a*b) = relu(a)relu(b) + relu(-a)relu(-b).
    edge_r = relu(w["t4rc"]) * s_pos_r.T + relu(-w["t4rc"]) * s_neg_r.T   # (p, m)
    edge_c = relu(w["t4cr"]) * s_pos_c + relu(-w["t4cr"]) * s_neg_c       # (p, n)

    # Per-node feature embeddings.
    x_r = w["t0"] * c_feat                                # (p, m)
    x_c = w["t1"] * v_feat                                # (p, n)

    er = jnp.dot(w["t3rc"], edge_r.astype(bf16), preferred_element_type=f32)   # (p, m)
    ec = jnp.dot(w["t3cr"], edge_c.astype(bf16), preferred_element_type=f32)   # (p, n)

    # Contract over e's last axis (== a @ e.T) without materializing e.T.
    dot_eT = lambda a, b: lax.dot_general(
        a, b, (((1,), (1,)), ((), ())), preferred_element_type=f32)

    def step(carry):
        mur, muc = carry
        mur_b = mur.astype(bf16)
        muc_b = muc.astype(bf16)
        # Row (constraint) update: theta2rc @ (muc @ e^T), associated so the p*p matmul
        # multiplies min(m, n).
        if n <= m:
            msg_r = dot_eT(
                jnp.dot(w["t2rc"], muc_b, preferred_element_type=jnp.float32).astype(bf16),
                e)                                                             # (p, m)
        else:
            msg_r = jnp.dot(w["t2rc"], dot_eT(muc_b, e).astype(bf16),
                            preferred_element_type=jnp.float32)                # (p, m)
        # Column (variable) update: theta2cr @ (mur @ e).
        if m <= n:
            msg_c = jnp.dot(
                jnp.dot(w["t2cr"], mur_b, preferred_element_type=jnp.float32).astype(bf16),
                e, preferred_element_type=jnp.float32)                         # (p, n)
        else:
            msg_c = jnp.dot(w["t2cr"],
                            jnp.dot(mur_b, e, preferred_element_type=jnp.float32).astype(bf16),
                            preferred_element_type=jnp.float32)                # (p, n)
        mur_new = relu(x_r + msg_r + er)
        muc_new = relu(x_c + msg_c + ec)
        return mur_new, muc_new

    mur = jnp.zeros((p, m), f32)       # mu = zeros(p, m+n), kept as two slabs
    muc = jnp.zeros((p, n), f32)
    if T <= 4:
        for _ in range(T):
            mur, muc = step((mur, muc))
    else:
        # partial unroll: keeps LLO scheduling visibility without blowing code size / vregs
        mur, muc = lax.fori_loop(0, T, lambda _, c_: step(c_), (mur, muc), unroll=2)

    # Readout: global pooled embedding + per-variable local embedding.
    pool_r = jnp.sum(mur, axis=1, keepdims=True)          # (p, 1)
    pool_c = jnp.sum(muc, axis=1, keepdims=True)          # (p, 1)
    glob = relu(jnp.dot(w["t6r"], pool_r.astype(bf16), preferred_element_type=f32)
                + jnp.dot(w["t6c"], pool_c.astype(bf16), preferred_element_type=f32))  # (p, 1)
    local = relu(jnp.dot(w["t7"], muc.astype(bf16), preferred_element_type=f32))       # (p, n)

    scores = (jnp.dot(w["t8g"], glob.astype(bf16), preferred_element_type=f32)
              + jnp.dot(w["t8l"], local.astype(bf16), preferred_element_type=f32))     # (2, n)

    # log-softmax over the class dim (size 2), stored lane-dense as (2, n).
    mx = jnp.max(scores, axis=0, keepdims=True)
    lse = mx + jnp.log(jnp.sum(jnp.exp(scores - mx), axis=0, keepdims=True))
    return scores - lse


def _s2v_bipartite_kernel(cfeat_ref, vfeat_ref, e_ref, mats_ref, vecs_ref, t8_ref,
                          out_ref, *, p, T):
    # ---- unpack packed parameter slabs; all leading-axis (sublane-aligned) slices ----
    mats = mats_ref[...]                       # (7, p, p)  bf16
    vecs = vecs_ref[...]                       # (4, p, 1)  f32
    t8 = t8_ref[...]                           # (2, 2, p)  bf16
    w = dict(
        t2rc=mats[0], t2cr=mats[1], t3rc=mats[2], t3cr=mats[3],
        t6r=mats[4], t6c=mats[5], t7=mats[6],
        t0=vecs[0], t1=vecs[1], t4rc=vecs[2], t4cr=vecs[3],
        t8g=t8[0], t8l=t8[1],
    )

    # ---- Bb instances per grid step (statically unrolled; Bb is small) ----
    Bb = out_ref.shape[0]
    for b in range(Bb):
        out_ref[b] = _instance_forward(e_ref[b], cfeat_ref[b], vfeat_ref[b], w, p=p, T=T)


def s2v_bipartite_forward(params, c_features, v_features, e_features, *, T, block_b=4):
    """Batched forward. Accepts (m,)/(n,)/(m,n) or (B,m)/(B,n)/(B,m,n) inputs.

    Returns (n, 2) or (B, n, 2) log-softmax scores (class dim last, matching dim=1
    of the PyTorch LogSoftmax on an (n, 2) score matrix).
    """
    c = jnp.asarray(c_features, jnp.float32)
    v = jnp.asarray(v_features, jnp.float32)
    e = jnp.asarray(e_features, jnp.float32)

    squeeze = (e.ndim == 2)
    if squeeze:
        c, v, e = c[None], v[None], e[None]

    B, m, n = e.shape
    p = params["theta0"].shape[0]

    # batch blocking: Bb instances per grid step (pad batch to a multiple of Bb)
    Bb = max(1, min(block_b, B))
    pad = (-B) % Bb
    if pad:
        c = jnp.concatenate([c, jnp.zeros((pad, m), c.dtype)], axis=0)
        v = jnp.concatenate([v, jnp.zeros((pad, n), v.dtype)], axis=0)
        e = jnp.concatenate([e, jnp.zeros((pad, m, n), e.dtype)], axis=0)
    Bp = B + pad

    cfeat = c.reshape(Bp, 1, m)
    vfeat = v.reshape(Bp, 1, n)
    e_bf = e.astype(jnp.bfloat16)                       # bf16 edge matrix: half DMA/VMEM

    # Pack parameters into 3 slabs with a leading "which-tensor" axis (aligned unpacks).
    mats = jnp.stack([params[k] for k in
                      ("theta2rc", "theta2cr", "theta3rc", "theta3cr",
                       "theta6r", "theta6c", "theta7")], axis=0).astype(jnp.bfloat16)   # (7,p,p)
    vecs = jnp.stack([params[k] for k in
                      ("theta0", "theta1", "theta4rc", "theta4cr")],
                     axis=0).astype(jnp.float32)                                        # (4,p,1)
    t8 = jnp.stack([params["theta8"][:, :p], params["theta8"][:, p:]],
                   axis=0).astype(jnp.bfloat16)                                         # (2,2,p)

    # Explicit VMEM budget (v5e scoped default is only 16 MiB; v7x physical is 64 MiB).
    blk_bytes = Bb * (m * n * 2 + (m + n) * 4 + 2 * n * 4)
    par_bytes = mats.size * 2 + vecs.size * 4 + t8.size * 2
    est = 2 * blk_bytes + 2 * par_bytes                 # double-buffered blocks
    vmem_limit = int(min(100 * 1024 * 1024, max(32 * 1024 * 1024, 4 * est)))

    kernel = functools.partial(_s2v_bipartite_kernel, p=p, T=T)

    out = pl.pallas_call(
        kernel,
        out_shape=jax.ShapeDtypeStruct((Bp, 2, n), jnp.float32),
        grid_spec=pltpu.PrefetchScalarGridSpec(
            num_scalar_prefetch=0,
            grid=(Bp // Bb,),
            in_specs=[
                pl.BlockSpec((Bb, 1, m), lambda g: (g, 0, 0)),    # c_features
                pl.BlockSpec((Bb, 1, n), lambda g: (g, 0, 0)),    # v_features
                pl.BlockSpec((Bb, m, n), lambda g: (g, 0, 0)),    # e_features (bf16)
                pl.BlockSpec((7, p, p), lambda g: (0, 0, 0)),     # packed (p,p) matrices
                pl.BlockSpec((4, p, 1), lambda g: (0, 0, 0)),     # packed (p,1) vectors
                pl.BlockSpec((2, 2, p), lambda g: (0, 0, 0)),     # theta8 (global/local split)
            ],
            out_specs=pl.BlockSpec((Bb, 2, n), lambda g: (g, 0, 0)),
        ),
        compiler_params=pltpu.CompilerParams(
            dimension_semantics=("parallel",),          # megacore-shardable batch axis
            vmem_limit_bytes=vmem_limit),
    )(cfeat, vfeat, e_bf, mats, vecs, t8)

    scores_out = jnp.transpose(out[:B], (0, 2, 1))      # (B, n, 2)
    if squeeze:
        scores_out = scores_out[0]
    return scores_out


def s2v_bipartite_reference(params, c_features, v_features, e_features, *, T):
    """Pure-JAX (non-Pallas) forward using the exact same math/casts, for validation."""
    p = params["theta0"].shape[0]
    f32, bf16 = jnp.float32, jnp.bfloat16
    w = dict(
        t2rc=params["theta2rc"].astype(bf16), t2cr=params["theta2cr"].astype(bf16),
        t3rc=params["theta3rc"].astype(bf16), t3cr=params["theta3cr"].astype(bf16),
        t6r=params["theta6r"].astype(bf16), t6c=params["theta6c"].astype(bf16),
        t7=params["theta7"].astype(bf16),
        t0=params["theta0"].astype(f32), t1=params["theta1"].astype(f32),
        t4rc=params["theta4rc"].astype(f32), t4cr=params["theta4cr"].astype(f32),
        t8g=params["theta8"][:, :p].astype(bf16), t8l=params["theta8"][:, p:].astype(bf16),
    )
    c = jnp.asarray(c_features, f32)
    v = jnp.asarray(v_features, f32)
    e = jnp.asarray(e_features, f32)
    squeeze = (e.ndim == 2)
    if squeeze:
        c, v, e = c[None], v[None], e[None]
    outs = []
    for b in range(e.shape[0]):
        sc = _instance_forward(e[b], c[b][None, :], v[b][None, :], w, p=p, T=T)
        outs.append(sc.T)                               # (n, 2)
    out = jnp.stack(outs, axis=0)
    return out[0] if squeeze else out


def init_params(key, p):
    """Deterministic parameter init mirroring Model.__init__ shapes."""
    scale = math.sqrt(1.0 / p)
    names_shapes = [
        ("theta0", (p, 1), 1.0), ("theta1", (p, 1), 1.0),
        ("theta2rr", (p, p), scale), ("theta2rc", (p, p), scale), ("theta2cr", (p, p), scale),
        ("theta3rr", (p, p), scale), ("theta3rc", (p, p), scale), ("theta3cr", (p, p), scale),
        ("theta4rr", (p, 1), scale), ("theta4rc", (p, 1), scale), ("theta4cr", (p, 1), scale),
        ("theta6r", (p, p), scale), ("theta6c", (p, p), scale),
        ("theta7", (p, p), scale), ("theta8", (2, 2 * p), scale),
    ]
    params = {}
    keys = jax.random.split(key, len(names_shapes))
    for k, (name, shape, s) in zip(keys, names_shapes):
        params[name] = (s * jax.random.normal(k, shape)).astype(jnp.float32)
    return params


if __name__ == "__main__":
    p = 32      # embedding dim
    T = 3       # s2v iterations
    m = 16      # constraint (row) nodes
    n = 16      # variable (col) nodes
    B = 6       # LP instances (not a multiple of block_b -> exercises batch padding)

    key = jax.random.PRNGKey(0)
    kp, kc, kv, ke = jax.random.split(key, 4)
    params = init_params(kp, p)

    c_batch = jax.random.normal(kc, (B, m), dtype=jnp.float32)
    v_batch = jax.random.normal(kv, (B, n), dtype=jnp.float32)
    e_batch = jax.random.normal(ke, (B, m, n), dtype=jnp.float32)

    # Batched path (Bb=4 instances per grid step, 2 grid steps after padding).
    scores_batched = s2v_bipartite_forward(params, c_batch, v_batch, e_batch, T=T, block_b=4)
    jax.block_until_ready(scores_batched)
    assert scores_batched.shape == (B, n, 2)
    assert bool(jnp.all(jnp.isfinite(scores_batched)))
    assert bool(jnp.allclose(jnp.exp(scores_batched).sum(axis=-1), 1.0, atol=1e-5))

    # Single-instance path (matches the original unbatched module interface).
    scores_single = s2v_bipartite_forward(params, c_batch[0], v_batch[0], e_batch[0], T=T)
    jax.block_until_ready(scores_single)
    assert scores_single.shape == (n, 2)
    assert bool(jnp.all(jnp.isfinite(scores_single)))
    assert bool(jnp.allclose(scores_batched[0], scores_single, rtol=1e-2, atol=1e-2))

    # Pure-JAX reference with identical bf16/f32 math.
    ref = s2v_bipartite_reference(params, c_batch, v_batch, e_batch, T=T)
    jax.block_until_ready(ref)
    assert bool(jnp.allclose(scores_batched, ref, rtol=2e-2, atol=2e-2))

    print("KERNEL_OK")
</pallas_src>

<mosaic_0001>
module attributes {stable_mosaic.version = 11 : i64} {
  func.func @_s2v_bipartite_kernel(%arg0: i32, %arg1: memref<4x1x16xf32, #tpu.memory_space<vmem>>, %arg2: memref<4x1x16xf32, #tpu.memory_space<vmem>>, %arg3: memref<4x16x16xbf16, #tpu.memory_space<vmem>>, %arg4: memref<7x32x32xbf16, #tpu.memory_space<vmem>>, %arg5: memref<4x32x1xf32, #tpu.memory_space<vmem>>, %arg6: memref<2x2x32xbf16, #tpu.memory_space<vmem>>, %arg7: memref<4x2x16xf32, #tpu.memory_space<vmem>>) attributes {dimension_semantics = [#tpu.dimension_semantics<parallel>], iteration_bounds = array<i64: 2>, scalar_prefetch = 0 : i64, scratch_operands = 0 : i64, tpu.core_type = #tpu.core_type<tc>, window_params = [{transform_indices = @transform_0, window_bounds = array<i64: 4, 1, 16>}, {transform_indices = @transform_1, window_bounds = array<i64: 4, 1, 16>}, {transform_indices = @transform_2, window_bounds = array<i64: 4, 16, 16>}, {pipeline_mode = #tpu.pipeline_mode<synchronous>, transform_indices = @transform_3, window_bounds = array<i64: 7, 32, 32>}, {pipeline_mode = #tpu.pipeline_mode<synchronous>, transform_indices = @transform_4, window_bounds = array<i64: 4, 32, 1>}, {pipeline_mode = #tpu.pipeline_mode<synchronous>, transform_indices = @transform_5, window_bounds = array<i64: 2, 2, 32>}, {transform_indices = @transform_6, window_bounds = array<i64: 4, 2, 16>}]} {
    %c0 = arith.constant 0 : index
    %c0_0 = arith.constant 0 : index
    %c0_1 = arith.constant 0 : index
    %0 = vector.load %arg4[%c0, %c0_0, %c0_1] : memref<7x32x32xbf16, #tpu.memory_space<vmem>>, vector<7x32x32xbf16>
    %c0_2 = arith.constant 0 : index
    %c0_3 = arith.constant 0 : index
    %c0_4 = arith.constant 0 : index
    %1 = vector.load %arg5[%c0_2, %c0_3, %c0_4] : memref<4x32x1xf32, #tpu.memory_space<vmem>>, vector<4x32x1xf32>
    %c0_5 = arith.constant 0 : index
    %c0_6 = arith.constant 0 : index
    %c0_7 = arith.constant 0 : index
    %2 = vector.load %arg6[%c0_5, %c0_6, %c0_7] : memref<2x2x32xbf16, #tpu.memory_space<vmem>>, vector<2x2x32xbf16>
    %3 = vector.extract_strided_slice %0 {offsets = [0, 0, 0], sizes = [1, 32, 32], strides = [1, 1, 1]} : vector<7x32x32xbf16> to vector<1x32x32xbf16>
    %4 = vector.shape_cast %3 : vector<1x32x32xbf16> to vector<32x32xbf16>
    %5 = vector.extract_strided_slice %0 {offsets = [1, 0, 0], sizes = [1, 32, 32], strides = [1, 1, 1]} : vector<7x32x32xbf16> to vector<1x32x32xbf16>
    %6 = vector.shape_cast %5 : vector<1x32x32xbf16> to vector<32x32xbf16>
    %7 = vector.extract_strided_slice %0 {offsets = [2, 0, 0], sizes = [1, 32, 32], strides = [1, 1, 1]} : vector<7x32x32xbf16> to vector<1x32x32xbf16>
    %8 = vector.shape_cast %7 : vector<1x32x32xbf16> to vector<32x32xbf16>
    %9 = vector.extract_strided_slice %0 {offsets = [3, 0, 0], sizes = [1, 32, 32], strides = [1, 1, 1]} : vector<7x32x32xbf16> to vector<1x32x32xbf16>
    %10 = vector.shape_cast %9 : vector<1x32x32xbf16> to vector<32x32xbf16>
    %11 = vector.extract_strided_slice %0 {offsets = [4, 0, 0], sizes = [1, 32, 32], strides = [1, 1, 1]} : vector<7x32x32xbf16> to vector<1x32x32xbf16>
    %12 = vector.shape_cast %11 : vector<1x32x32xbf16> to vector<32x32xbf16>
    %13 = vector.extract_strided_slice %0 {offsets = [5, 0, 0], sizes = [1, 32, 32], strides = [1, 1, 1]} : vector<7x32x32xbf16> to vector<1x32x32xbf16>
    %14 = vector.shape_cast %13 : vector<1x32x32xbf16> to vector<32x32xbf16>
    %15 = vector.extract_strided_slice %0 {offsets = [6, 0, 0], sizes = [1, 32, 32], strides = [1, 1, 1]} : vector<7x32x32xbf16> to vector<1x32x32xbf16>
    %16 = vector.shape_cast %15 : vector<1x32x32xbf16> to vector<32x32xbf16>
    %17 = vector.extract_strided_slice %1 {offsets = [0, 0, 0], sizes = [1, 32, 1], strides = [1, 1, 1]} : vector<4x32x1xf32> to vector<1x32x1xf32>
    %18 = vector.shape_cast %17 : vector<1x32x1xf32> to vector<32x1xf32>
    %19 = vector.extract_strided_slice %1 {offsets = [1, 0, 0], sizes = [1, 32, 1], strides = [1, 1, 1]} : vector<4x32x1xf32> to vector<1x32x1xf32>
    %20 = vector.shape_cast %19 : vector<1x32x1xf32> to vector<32x1xf32>
    %21 = vector.extract_strided_slice %1 {offsets = [2, 0, 0], sizes = [1, 32, 1], strides = [1, 1, 1]} : vector<4x32x1xf32> to vector<1x32x1xf32>
    %22 = vector.shape_cast %21 : vector<1x32x1xf32> to vector<32x1xf32>
    %23 = vector.extract_strided_slice %1 {offsets = [3, 0, 0], sizes = [1, 32, 1], strides = [1, 1, 1]} : vector<4x32x1xf32> to vector<1x32x1xf32>
    %24 = vector.shape_cast %23 : vector<1x32x1xf32> to vector<32x1xf32>
    %25 = vector.extract_strided_slice %2 {offsets = [0, 0, 0], sizes = [1, 2, 32], strides = [1, 1, 1]} : vector<2x2x32xbf16> to vector<1x2x32xbf16>
    %26 = vector.shape_cast %25 : vector<1x2x32xbf16> to vector<2x32xbf16>
    %27 = vector.extract_strided_slice %2 {offsets = [1, 0, 0], sizes = [1, 2, 32], strides = [1, 1, 1]} : vector<2x2x32xbf16> to vector<1x2x32xbf16>
    %28 = vector.shape_cast %27 : vector<1x2x32xbf16> to vector<2x32xbf16>
    %c0_8 = arith.constant 0 : index
    %c0_9 = arith.constant 0 : index
    %c0_10 = arith.constant 0 : index
    %29 = vector.load %arg3[%c0_8, %c0_9, %c0_10] : memref<4x16x16xbf16, #tpu.memory_space<vmem>>, vector<1x16x16xbf16>
    %30 = vector.shape_cast %29 : vector<1x16x16xbf16> to vector<16x16xbf16>
    %c0_11 = arith.constant 0 : index
    %c0_12 = arith.constant 0 : index
    %c0_13 = arith.constant 0 : index
    %31 = vector.load %arg1[%c0_11, %c0_12, %c0_13] : memref<4x1x16xf32, #tpu.memory_space<vmem>>, vector<1x1x16xf32>
    %32 = vector.shape_cast %31 : vector<1x1x16xf32> to vector<1x16xf32>
    %c0_14 = arith.constant 0 : index
    %c0_15 = arith.constant 0 : index
    %c0_16 = arith.constant 0 : index
    %33 = vector.load %arg2[%c0_14, %c0_15, %c0_16] : memref<4x1x16xf32, #tpu.memory_space<vmem>>, vector<1x1x16xf32>
    %34 = vector.shape_cast %33 : vector<1x1x16xf32> to vector<1x16xf32>
    %cst = arith.constant 0.000000e+00 : bf16
    %35 = vector.broadcast %cst : bf16 to vector<16x16xbf16>
    %36 = arith.maximumf %30, %35 : vector<16x16xbf16>
    %37 = arith.extf %36 : vector<16x16xbf16> to vector<16x16xf32>
    %cst_17 = arith.constant 0.000000e+00 : bf16
    %38 = vector.broadcast %cst_17 : bf16 to vector<16x16xbf16>
    %39 = arith.subf %38, %30 : vector<16x16xbf16>
    %cst_18 = arith.constant 0.000000e+00 : bf16
    %40 = vector.broadcast %cst_18 : bf16 to vector<16x16xbf16>
    %41 = arith.maximumf %39, %40 : vector<16x16xbf16>
    %42 = arith.extf %41 : vector<16x16xbf16> to vector<16x16xf32>
    %cst_19 = arith.constant dense<0.000000e+00> : vector<16xf32>
    %43 = vector.multi_reduction <add>, %37, %cst_19 [1] : vector<16x16xf32> to vector<16xf32>
    %44 = vector.shape_cast %43 : vector<16xf32> to vector<16x1xf32>
    %cst_20 = arith.constant dense<0.000000e+00> : vector<16xf32>
    %45 = vector.multi_reduction <add>, %42, %cst_20 [1] : vector<16x16xf32> to vector<16xf32>
    %46 = vector.shape_cast %45 : vector<16xf32> to vector<16x1xf32>
    %cst_21 = arith.constant dense<0.000000e+00> : vector<16xf32>
    %47 = vector.multi_reduction <add>, %37, %cst_21 [0] : vector<16x16xf32> to vector<16xf32>
    %48 = vector.shape_cast %47 : vector<16xf32> to vector<1x16xf32>
    %cst_22 = arith.constant dense<0.000000e+00> : vector<16xf32>
    %49 = vector.multi_reduction <add>, %42, %cst_22 [0] : vector<16x16xf32> to vector<16xf32>
    %50 = vector.shape_cast %49 : vector<16xf32> to vector<1x16xf32>
    %cst_23 = arith.constant 0.000000e+00 : f32
    %51 = vector.broadcast %cst_23 : f32 to vector<32x1xf32>
    %52 = arith.maximumf %22, %51 : vector<32x1xf32>
    %53 = tpu.transpose %44, [1, 0] : vector<16x1xf32> -> vector<1x16xf32>
    %54 = vector.broadcast %52 : vector<32x1xf32> to vector<32x16xf32>
    %55 = vector.broadcast %53 : vector<1x16xf32> to vector<32x16xf32>
    %56 = arith.mulf %54, %55 : vector<32x16xf32>
    %cst_24 = arith.constant 0.000000e+00 : f32
    %57 = vector.broadcast %cst_24 : f32 to vector<32x1xf32>
    %58 = arith.subf %57, %22 : vector<32x1xf32>
    %cst_25 = arith.constant 0.000000e+00 : f32
    %59 = vector.broadcast %cst_25 : f32 to vector<32x1xf32>
    %60 = arith.maximumf %58, %59 : vector<32x1xf32>
    %61 = tpu.transpose %46, [1, 0] : vector<16x1xf32> -> vector<1x16xf32>
    %62 = vector.broadcast %60 : vector<32x1xf32> to vector<32x16xf32>
    %63 = vector.broadcast %61 : vector<1x16xf32> to vector<32x16xf32>
    %64 = arith.mulf %62, %63 : vector<32x16xf32>
    %65 = arith.addf %56, %64 : vector<32x16xf32>
    %cst_26 = arith.constant 0.000000e+00 : f32
    %66 = vector.broadcast %cst_26 : f32 to vector<32x1xf32>
    %67 = arith.maximumf %24, %66 : vector<32x1xf32>
    %68 = vector.broadcast %67 : vector<32x1xf32> to vector<32x16xf32>
    %69 = vector.broadcast %48 : vector<1x16xf32> to vector<32x16xf32>
    %70 = arith.mulf %68, %69 : vector<32x16xf32>
    %cst_27 = arith.constant 0.000000e+00 : f32
    %71 = vector.broadcast %cst_27 : f32 to vector<32x1xf32>
    %72 = arith.subf %71, %24 : vector<32x1xf32>
    %cst_28 = arith.constant 0.000000e+00 : f32
    %73 = vector.broadcast %cst_28 : f32 to vector<32x1xf32>
    %74 = arith.maximumf %72, %73 : vector<32x1xf32>
    %75 = vector.broadcast %74 : vector<32x1xf32> to vector<32x16xf32>
    %76 = vector.broadcast %50 : vector<1x16xf32> to vector<32x16xf32>
    %77 = arith.mulf %75, %76 : vector<32x16xf32>
    %78 = arith.addf %70, %77 : vector<32x16xf32>
    %79 = vector.broadcast %18 : vector<32x1xf32> to vector<32x16xf32>
    %80 = vector.broadcast %32 : vector<1x16xf32> to vector<32x16xf32>
    %81 = arith.mulf %79, %80 : vector<32x16xf32>
    %82 = vector.broadcast %20 : vector<32x1xf32> to vector<32x16xf32>
    %83 = vector.broadcast %34 : vector<1x16xf32> to vector<32x16xf32>
    %84 = arith.mulf %82, %83 : vector<32x16xf32>
    %85 = arith.truncf %65 : vector<32x16xf32> to vector<32x16xbf16>
    %cst_29 = arith.constant dense<0.000000e+00> : vector<32x16xf32>
    %86 = tpu.matmul %8, %85, %cst_29 {dimension_numbers = #tpu.dot_dimension_numbers<[1], [0], [0], [1], [0, 0, 1, 1], [], []>} : vector<32x32xbf16>, vector<32x16xbf16>, vector<32x16xf32> -> vector<32x16xf32>
    %87 = arith.truncf %78 : vector<32x16xf32> to vector<32x16xbf16>
    %cst_30 = arith.constant dense<0.000000e+00> : vector<32x16xf32>
    %88 = tpu.matmul %10, %87, %cst_30 {dimension_numbers = #tpu.dot_dimension_numbers<[1], [0], [0], [1], [0, 0, 1, 1], [], []>} : vector<32x32xbf16>, vector<32x16xbf16>, vector<32x16xf32> -> vector<32x16xf32>
    %cst_31 = arith.constant 0.000000e+00 : f32
    %89 = vector.broadcast %cst_31 : f32 to vector<32x16xf32>
    %cst_32 = arith.constant 0.000000e+00 : f32
    %90 = vector.broadcast %cst_32 : f32 to vector<32x16xf32>
    %91 = arith.truncf %89 : vector<32x16xf32> to vector<32x16xbf16>
    %92 = arith.truncf %90 : vector<32x16xf32> to vector<32x16xbf16>
    %cst_33 = arith.constant dense<0.000000e+00> : vector<32x16xf32>
    %93 = tpu.matmul %4, %92, %cst_33 {dimension_numbers = #tpu.dot_dimension_numbers<[1], [0], [0], [1], [0, 0, 1, 1], [], []>} : vector<32x32xbf16>, vector<32x16xbf16>, vector<32x16xf32> -> vector<32x16xf32>
    %94 = arith.truncf %93 : vector<32x16xf32> to vector<32x16xbf16>
    %cst_34 = arith.constant dense<0.000000e+00> : vector<32x16xf32>
    %95 = tpu.matmul %94, %30, %cst_34 {dimension_numbers = #tpu.dot_dimension_numbers<[1], [1], [0], [0], [0, 0, 1, 0], [], []>} : vector<32x16xbf16>, vector<16x16xbf16>, vector<32x16xf32> -> vector<32x16xf32>
    %cst_35 = arith.constant dense<0.000000e+00> : vector<32x16xf32>
    %96 = tpu.matmul %6, %91, %cst_35 {dimension_numbers = #tpu.dot_dimension_numbers<[1], [0], [0], [1], [0, 0, 1, 1], [], []>} : vector<32x32xbf16>, vector<32x16xbf16>, vector<32x16xf32> -> vector<32x16xf32>
    %97 = arith.truncf %96 : vector<32x16xf32> to vector<32x16xbf16>
    %cst_36 = arith.constant dense<0.000000e+00> : vector<32x16xf32>
    %98 = tpu.matmul %97, %30, %cst_36 {dimension_numbers = #tpu.dot_dimension_numbers<[1], [0], [0], [1], [0, 0, 1, 1], [], []>} : vector<32x16xbf16>, vector<16x16xbf16>, vector<32x16xf32> -> vector<32x16xf32>
    %99 = arith.addf %81, %95 : vector<32x16xf32>
    %100 = arith.addf %99, %86 : vector<32x16xf32>
    %cst_37 = arith.constant 0.000000e+00 : f32
    %101 = vector.broadcast %cst_37 : f32 to vector<32x16xf32>
    %102 = arith.maximumf %100, %101 : vector<32x16xf32>
    %103 = arith.addf %84, %98 : vector<32x16xf32>
    %104 = arith.addf %103, %88 : vector<32x16xf32>
    %cst_38 = arith.constant 0.000000e+00 : f32
    %105 = vector.broadcast %cst_38 : f32 to vector<32x16xf32>
    %106 = arith.maximumf %104, %105 : vector<32x16xf32>
    %107 = arith.truncf %102 : vector<32x16xf32> to vector<32x16xbf16>
    %108 = arith.truncf %106 : vector<32x16xf32> to vector<32x16xbf16>
    %cst_39 = arith.constant dense<0.000000e+00> : vector<32x16xf32>
    %109 = tpu.matmul %4, %108, %cst_39 {dimension_numbers = #tpu.dot_dimension_numbers<[1], [0], [0], [1], [0, 0, 1, 1], [], []>} : vector<32x32xbf16>, vector<32x16xbf16>, vector<32x16xf32> -> vector<32x16xf32>
    %110 = arith.truncf %109 : vector<32x16xf32> to vector<32x16xbf16>
    %cst_40 = arith.constant dense<0.000000e+00> : vector<32x16xf32>
    %111 = tpu.matmul %110, %30, %cst_40 {dimension_numbers = #tpu.dot_dimension_numbers<[1], [1], [0], [0], [0, 0, 1, 0], [], []>} : vector<32x16xbf16>, vector<16x16xbf16>, vector<32x16xf32> -> vector<32x16xf32>
    %cst_41 = arith.constant dense<0.000000e+00> : vector<32x16xf32>
    %112 = tpu.matmul %6, %107, %cst_41 {dimension_numbers = #tpu.dot_dimension_numbers<[1], [0], [0], [1], [0, 0, 1, 1], [], []>} : vector<32x32xbf16>, vector<32x16xbf16>, vector<32x16xf32> -> vector<32x16xf32>
    %113 = arith.truncf %112 : vector<32x16xf32> to vector<32x16xbf16>
    %cst_42 = arith.constant dense<0.000000e+00> : vector<32x16xf32>
    %114 = tpu.matmul %113, %30, %cst_42 {dimension_numbers = #tpu.dot_dimension_numbers<[1], [0], [0], [1], [0, 0, 1, 1], [], []>} : vector<32x16xbf16>, vector<16x16xbf16>, vector<32x16xf32> -> vector<32x16xf32>
    %115 = arith.addf %81, %111 : vector<32x16xf32>
    %116 = arith.addf %115, %86 : vector<32x16xf32>
    %cst_43 = arith.constant 0.000000e+00 : f32
    %117 = vector.broadcast %cst_43 : f32 to vector<32x16xf32>
    %118 = arith.maximumf %116, %117 : vector<32x16xf32>
    %119 = arith.addf %84, %114 : vector<32x16xf32>
    %120 = arith.addf %119, %88 : vector<32x16xf32>
    %cst_44 = arith.constant 0.000000e+00 : f32
    %121 = vector.broadcast %cst_44 : f32 to vector<32x16xf32>
    %122 = arith.maximumf %120, %121 : vector<32x16xf32>
    %123 = arith.truncf %118 : vector<32x16xf32> to vector<32x16xbf16>
    %124 = arith.truncf %122 : vector<32x16xf32> to vector<32x16xbf16>
    %cst_45 = arith.constant dense<0.000000e+00> : vector<32x16xf32>
    %125 = tpu.matmul %4, %124, %cst_45 {dimension_numbers = #tpu.dot_dimension_numbers<[1], [0], [0], [1], [0, 0, 1, 1], [], []>} : vector<32x32xbf16>, vector<32x16xbf16>, vector<32x16xf32> -> vector<32x16xf32>
    %126 = arith.truncf %125 : vector<32x16xf32> to vector<32x16xbf16>
    %cst_46 = arith.constant dense<0.000000e+00> : vector<32x16xf32>
    %127 = tpu.matmul %126, %30, %cst_46 {dimension_numbers = #tpu.dot_dimension_numbers<[1], [1], [0], [0], [0, 0, 1, 0], [], []>} : vector<32x16xbf16>, vector<16x16xbf16>, vector<32x16xf32> -> vector<32x16xf32>
    %cst_47 = arith.constant dense<0.000000e+00> : vector<32x16xf32>
    %128 = tpu.matmul %6, %123, %cst_47 {dimension_numbers = #tpu.dot_dimension_numbers<[1], [0], [0], [1], [0, 0, 1, 1], [], []>} : vector<32x32xbf16>, vector<32x16xbf16>, vector<32x16xf32> -> vector<32x16xf32>
    %129 = arith.truncf %128 : vector<32x16xf32> to vector<32x16xbf16>
    %cst_48 = arith.constant dense<0.000000e+00> : vector<32x16xf32>
    %130 = tpu.matmul %129, %30, %cst_48 {dimension_numbers = #tpu.dot_dimension_numbers<[1], [0], [0], [1], [0, 0, 1, 1], [], []>} : vector<32x16xbf16>, vector<16x16xbf16>, vector<32x16xf32> -> vector<32x16xf32>
    %131 = arith.addf %81, %127 : vector<32x16xf32>
    %132 = arith.addf %131, %86 : vector<32x16xf32>
    %cst_49 = arith.constant 0.000000e+00 : f32
    %133 = vector.broadcast %cst_49 : f32 to vector<32x16xf32>
    %134 = arith.maximumf %132, %133 : vector<32x16xf32>
    %135 = arith.addf %84, %130 : vector<32x16xf32>
    %136 = arith.addf %135, %88 : vector<32x16xf32>
    %cst_50 = arith.constant 0.000000e+00 : f32
    %137 = vector.broadcast %cst_50 : f32 to vector<32x16xf32>
    %138 = arith.maximumf %136, %137 : vector<32x16xf32>
    %cst_51 = arith.constant dense<0.000000e+00> : vector<32xf32>
    %139 = vector.multi_reduction <add>, %134, %cst_51 [1] : vector<32x16xf32> to vector<32xf32>
    %140 = vector.shape_cast %139 : vector<32xf32> to vector<32x1xf32>
    %cst_52 = arith.constant dense<0.000000e+00> : vector<32xf32>
    %141 = vector.multi_reduction <add>, %138, %cst_52 [1] : vector<32x16xf32> to vector<32xf32>
    %142 = vector.shape_cast %141 : vector<32xf32> to vector<32x1xf32>
    %143 = arith.truncf %140 : vector<32x1xf32> to vector<32x1xbf16>
    %cst_53 = arith.constant dense<0.000000e+00> : vector<32x1xf32>
    %144 = tpu.matmul %12, %143, %cst_53 {dimension_numbers = #tpu.dot_dimension_numbers<[1], [0], [0], [1], [0, 0, 1, 1], [], []>} : vector<32x32xbf16>, vector<32x1xbf16>, vector<32x1xf32> -> vector<32x1xf32>
    %145 = arith.truncf %142 : vector<32x1xf32> to vector<32x1xbf16>
    %cst_54 = arith.constant dense<0.000000e+00> : vector<32x1xf32>
    %146 = tpu.matmul %14, %145, %cst_54 {dimension_numbers = #tpu.dot_dimension_numbers<[1], [0], [0], [1], [0, 0, 1, 1], [], []>} : vector<32x32xbf16>, vector<32x1xbf16>, vector<32x1xf32> -> vector<32x1xf32>
    %147 = arith.addf %144, %146 : vector<32x1xf32>
    %cst_55 = arith.constant 0.000000e+00 : f32
    %148 = vector.broadcast %cst_55 : f32 to vector<32x1xf32>
    %149 = arith.maximumf %147, %148 : vector<32x1xf32>
    %150 = arith.truncf %138 : vector<32x16xf32> to vector<32x16xbf16>
    %cst_56 = arith.constant dense<0.000000e+00> : vector<32x16xf32>
    %151 = tpu.matmul %16, %150, %cst_56 {dimension_numbers = #tpu.dot_dimension_numbers<[1], [0], [0], [1], [0, 0, 1, 1], [], []>} : vector<32x32xbf16>, vector<32x16xbf16>, vector<32x16xf32> -> vector<32x16xf32>
    %cst_57 = arith.constant 0.000000e+00 : f32
    %152 = vector.broadcast %cst_57 : f32 to vector<32x16xf32>
    %153 = arith.maximumf %151, %152 : vector<32x16xf32>
    %154 = arith.truncf %149 : vector<32x1xf32> to vector<32x1xbf16>
    %cst_58 = arith.constant dense<0.000000e+00> : vector<2x1xf32>
    %155 = tpu.matmul %26, %154, %cst_58 {dimension_numbers = #tpu.dot_dimension_numbers<[1], [0], [0], [1], [0, 0, 1, 1], [], []>} : vector<2x32xbf16>, vector<32x1xbf16>, vector<2x1xf32> -> vector<2x1xf32>
    %156 = arith.truncf %153 : vector<32x16xf32> to vector<32x16xbf16>
    %cst_59 = arith.constant dense<0.000000e+00> : vector<2x16xf32>
    %157 = tpu.matmul %28, %156, %cst_59 {dimension_numbers = #tpu.dot_dimension_numbers<[1], [0], [0], [1], [0, 0, 1, 1], [], []>} : vector<2x32xbf16>, vector<32x16xbf16>, vector<2x16xf32> -> vector<2x16xf32>
    %158 = vector.broadcast %155 : vector<2x1xf32> to vector<2x16xf32>
    %159 = arith.addf %158, %157 : vector<2x16xf32>
    %cst_60 = arith.constant dense<0xFF800000> : vector<16xf32>
    %160 = vector.multi_reduction <maximumf>, %159, %cst_60 [0] : vector<2x16xf32> to vector<16xf32>
    %161 = vector.shape_cast %160 : vector<16xf32> to vector<1x16xf32>
    %162 = vector.broadcast %161 : vector<1x16xf32> to vector<2x16xf32>
    %163 = arith.subf %159, %162 : vector<2x16xf32>
    %164 = math.exp %163 : vector<2x16xf32>
    %cst_61 = arith.constant dense<0.000000e+00> : vector<16xf32>
    %165 = vector.multi_reduction <add>, %164, %cst_61 [0] : vector<2x16xf32> to vector<16xf32>
    %166 = vector.shape_cast %165 : vector<16xf32> to vector<1x16xf32>
    %167 = math.log %166 : vector<1x16xf32>
    %168 = arith.addf %161, %167 : vector<1x16xf32>
    %169 = vector.broadcast %168 : vector<1x16xf32> to vector<2x16xf32>
    %170 = arith.subf %159, %169 : vector<2x16xf32>
    %c0_62 = arith.constant 0 : index
    %c0_63 = arith.constant 0 : index
    %c0_64 = arith.constant 0 : index
    %171 = vector.load %arg7[%c0_62, %c0_63, %c0_64] : memref<4x2x16xf32, #tpu.memory_space<vmem>>, vector<1x2x16xf32>
    %172 = vector.shape_cast %171 : vector<1x2x16xf32> to vector<2x16xf32>
    %173 = vector.shape_cast %170 : vector<2x16xf32> to vector<1x2x16xf32>
    tpu.vector_store %arg7[%c0_62, %c0_63, %c0_64], %173 {strides = array<i32>} : memref<4x2x16xf32, #tpu.memory_space<vmem>>, vector<1x2x16xf32>,
    %c1 = arith.constant 1 : index
    %c0_65 = arith.constant 0 : index
    %c0_66 = arith.constant 0 : index
    %174 = vector.load %arg3[%c1, %c0_65, %c0_66] : memref<4x16x16xbf16, #tpu.memory_space<vmem>>, vector<1x16x16xbf16>
    %175 = vector.shape_cast %174 : vector<1x16x16xbf16> to vector<16x16xbf16>
    %c1_67 = arith.constant 1 : index
    %c0_68 = arith.constant 0 : index
    %c0_69 = arith.constant 0 : index
    %176 = vector.load %arg1[%c1_67, %c0_68, %c0_69] : memref<4x1x16xf32, #tpu.memory_space<vmem>>, vector<1x1x16xf32>
    %177 = vector.shape_cast %176 : vector<1x1x16xf32> to vector<1x16xf32>
    %c1_70 = arith.constant 1 : index
    %c0_71 = arith.constant 0 : index
    %c0_72 = arith.constant 0 : index
    %178 = vector.load %arg2[%c1_70, %c0_71, %c0_72] : memref<4x1x16xf32, #tpu.memory_space<vmem>>, vector<1x1x16xf32>
    %179 = vector.shape_cast %178 : vector<1x1x16xf32> to vector<1x16xf32>
    %cst_73 = arith.constant 0.000000e+00 : bf16
    %180 = vector.broadcast %cst_73 : bf16 to vector<16x16xbf16>
    %181 = arith.maximumf %175, %180 : vector<16x16xbf16>
    %182 = arith.extf %181 : vector<16x16xbf16> to vector<16x16xf32>
    %cst_74 = arith.constant 0.000000e+00 : bf16
    %183 = vector.broadcast %cst_74 : bf16 to vector<16x16xbf16>
    %184 = arith.subf %183, %175 : vector<16x16xbf16>
    %cst_75 = arith.constant 0.000000e+00 : bf16
    %185 = vector.broadcast %cst_75 : bf16 to vector<16x16xbf16>
    %186 = arith.maximumf %184, %185 : vector<16x16xbf16>
    %187 = arith.extf %186 : vector<16x16xbf16> to vector<16x16xf32>
    %cst_76 = arith.constant dense<0.000000e+00> : vector<16xf32>
    %188 = vector.multi_reduction <add>, %182, %cst_76 [1] : vector<16x16xf32> to vector<16xf32>
    %189 = vector.shape_cast %188 : vector<16xf32> to vector<16x1xf32>
    %cst_77 = arith.constant dense<0.000000e+00> : vector<16xf32>
    %190 = vector.multi_reduction <add>, %187, %cst_77 [1] : vector<16x16xf32> to vector<16xf32>
    %191 = vector.shape_cast %190 : vector<16xf32> to vector<16x1xf32>
    %cst_78 = arith.constant dense<0.000000e+00> : vector<16xf32>
    %192 = vector.multi_reduction <add>, %182, %cst_78 [0] : vector<16x16xf32> to vector<16xf32>
    %193 = vector.shape_cast %192 : vector<16xf32> to vector<1x16xf32>
    %cst_79 = arith.constant dense<0.000000e+00> : vector<16xf32>
    %194 = vector.multi_reduction <add>, %187, %cst_79 [0] : vector<16x16xf32> to vector<16xf32>
    %195 = vector.shape_cast %194 : vector<16xf32> to vector<1x16xf32>
    %cst_80 = arith.constant 0.000000e+00 : f32
    %196 = vector.broadcast %cst_80 : f32 to vector<32x1xf32>
    %197 = arith.maximumf %22, %196 : vector<32x1xf32>
    %198 = tpu.transpose %189, [1, 0] : vector<16x1xf32> -> vector<1x16xf32>
    %199 = vector.broadcast %197 : vector<32x1xf32> to vector<32x16xf32>
    %200 = vector.broadcast %198 : vector<1x16xf32> to vector<32x16xf32>
    %201 = arith.mulf %199, %200 : vector<32x16xf32>
    %cst_81 = arith.constant 0.000000e+00 : f32
    %202 = vector.broadcast %cst_81 : f32 to vector<32x1xf32>
    %203 = arith.subf %202, %22 : vector<32x1xf32>
    %cst_82 = arith.constant 0.000000e+00 : f32
    %204 = vector.broadcast %cst_82 : f32 to vector<32x1xf32>
    %205 = arith.maximumf %203, %204 : vector<32x1xf32>
    %206 = tpu.transpose %191, [1, 0] : vector<16x1xf32> -> vector<1x16xf32>
    %207 = vector.broadcast %205 : vector<32x1xf32> to vector<32x16xf32>
    %208 = vector.broadcast %206 : vector<1x16xf32> to vector<32x16xf32>
    %209 = arith.mulf %207, %208 : vector<32x16xf32>
    %210 = arith.addf %201, %209 : vector<32x16xf32>
    %cst_83 = arith.constant 0.000000e+00 : f32
    %211 = vector.broadcast %cst_83 : f32 to vector<32x1xf32>
    %212 = arith.maximumf %24, %211 : vector<32x1xf32>
    %213 = vector.broadcast %212 : vector<32x1xf32> to vector<32x16xf32>
    %214 = vector.broadcast %193 : vector<1x16xf32> to vector<32x16xf32>
    %215 = arith.mulf %213, %214 : vector<32x16xf32>
    %cst_84 = arith.constant 0.000000e+00 : f32
    %216 = vector.broadcast %cst_84 : f32 to vector<32x1xf32>
    %217 = arith.subf %216, %24 : vector<32x1xf32>
    %cst_85 = arith.constant 0.000000e+00 : f32
    %218 = vector.broadcast %cst_85 : f32 to vector<32x1xf32>
    %219 = arith.maximumf %217, %218 : vector<32x1xf32>
    %220 = vector.broadcast %219 : vector<32x1xf32> to vector<32x16xf32>
    %221 = vector.broadcast %195 : vector<1x16xf32> to vector<32x16xf32>
    %222 = arith.mulf %220, %221 : vector<32x16xf32>
    %223 = arith.addf %215, %222 : vector<32x16xf32>
    %224 = vector.broadcast %18 : vector<32x1xf32> to vector<32x16xf32>
    %225 = vector.broadcast %177 : vector<1x16xf32> to vector<32x16xf32>
    %226 = arith.mulf %224, %225 : vector<32x16xf32>
    %227 = vector.broadcast %20 : vector<32x1xf32> to vector<32x16xf32>
    %228 = vector.broadcast %179 : vector<1x16xf32> to vector<32x16xf32>
    %229 = arith.mulf %227, %228 : vector<32x16xf32>
    %230 = arith.truncf %210 : vector<32x16xf32> to vector<32x16xbf16>
    %cst_86 = arith.constant dense<0.000000e+00> : vector<32x16xf32>
    %231 = tpu.matmul %8, %230, %cst_86 {dimension_numbers = #tpu.dot_dimension_numbers<[1], [0], [0], [1], [0, 0, 1, 1], [], []>} : vector<32x32xbf16>, vector<32x16xbf16>, vector<32x16xf32> -> vector<32x16xf32>
    %232 = arith.truncf %223 : vector<32x16xf32> to vector<32x16xbf16>
    %cst_87 = arith.constant dense<0.000000e+00> : vector<32x16xf32>
    %233 = tpu.matmul %10, %232, %cst_87 {dimension_numbers = #tpu.dot_dimension_numbers<[1], [0], [0], [1], [0, 0, 1, 1], [], []>} : vector<32x32xbf16>, vector<32x16xbf16>, vector<32x16xf32> -> vector<32x16xf32>
    %cst_88 = arith.constant 0.000000e+00 : f32
    %234 = vector.broadcast %cst_88 : f32 to vector<32x16xf32>
    %cst_89 = arith.constant 0.000000e+00 : f32
    %235 = vector.broadcast %cst_89 : f32 to vector<32x16xf32>
    %236 = arith.truncf %234 : vector<32x16xf32> to vector<32x16xbf16>
    %237 = arith.truncf %235 : vector<32x16xf32> to vector<32x16xbf16>
    %cst_90 = arith.constant dense<0.000000e+00> : vector<32x16xf32>
    %238 = tpu.matmul %4, %237, %cst_90 {dimension_numbers = #tpu.dot_dimension_numbers<[1], [0], [0], [1], [0, 0, 1, 1], [], []>} : vector<32x32xbf16>, vector<32x16xbf16>, vector<32x16xf32> -> vector<32x16xf32>
    %239 = arith.truncf %238 : vector<32x16xf32> to vector<32x16xbf16>
    %cst_91 = arith.constant dense<0.000000e+00> : vector<32x16xf32>
    %240 = tpu.matmul %239, %175, %cst_91 {dimension_numbers = #tpu.dot_dimension_numbers<[1], [1], [0], [0], [0, 0, 1, 0], [], []>} : vector<32x16xbf16>, vector<16x16xbf16>, vector<32x16xf32> -> vector<32x16xf32>
    %cst_92 = arith.constant dense<0.000000e+00> : vector<32x16xf32>
    %241 = tpu.matmul %6, %236, %cst_92 {dimension_numbers = #tpu.dot_dimension_numbers<[1], [0], [0], [1], [0, 0, 1, 1], [], []>} : vector<32x32xbf16>, vector<32x16xbf16>, vector<32x16xf32> -> vector<32x16xf32>
    %242 = arith.truncf %241 : vector<32x16xf32> to vector<32x16xbf16>
    %cst_93 = arith.constant dense<0.000000e+00> : vector<32x16xf32>
    %243 = tpu.matmul %242, %175, %cst_93 {dimension_numbers = #tpu.dot_dimension_numbers<[1], [0], [0], [1], [0, 0, 1, 1], [], []>} : vector<32x16xbf16>, vector<16x16xbf16>, vector<32x16xf32> -> vector<32x16xf32>
    %244 = arith.addf %226, %240 : vector<32x16xf32>
    %245 = arith.addf %244, %231 : vector<32x16xf32>
    %cst_94 = arith.constant 0.000000e+00 : f32
    %246 = vector.broadcast %cst_94 : f32 to vector<32x16xf32>
    %247 = arith.maximumf %245, %246 : vector<32x16xf32>
    %248 = arith.addf %229, %243 : vector<32x16xf32>
    %249 = arith.addf %248, %233 : vector<32x16xf32>
    %cst_95 = arith.constant 0.000000e+00 : f32
    %250 = vector.broadcast %cst_95 : f32 to vector<32x16xf32>
    %251 = arith.maximumf %249, %250 : vector<32x16xf32>
    %252 = arith.truncf %247 : vector<32x16xf32> to vector<32x16xbf16>
    %253 = arith.truncf %251 : vector<32x16xf32> to vector<32x16xbf16>
    %cst_96 = arith.constant dense<0.000000e+00> : vector<32x16xf32>
    %254 = tpu.matmul %4, %253, %cst_96 {dimension_numbers = #tpu.dot_dimension_numbers<[1], [0], [0], [1], [0, 0, 1, 1], [], []>} : vector<32x32xbf16>, vector<32x16xbf16>, vector<32x16xf32> -> vector<32x16xf32>
    %255 = arith.truncf %254 : vector<32x16xf32> to vector<32x16xbf16>
    %cst_97 = arith.constant dense<0.000000e+00> : vector<32x16xf32>
    %256 = tpu.matmul %255, %175, %cst_97 {dimension_numbers = #tpu.dot_dimension_numbers<[1], [1], [0], [0], [0, 0, 1, 0], [], []>} : vector<32x16xbf16>, vector<16x16xbf16>, vector<32x16xf32> -> vector<32x16xf32>
    %cst_98 = arith.constant dense<0.000000e+00> : vector<32x16xf32>
    %257 = tpu.matmul %6, %252, %cst_98 {dimension_numbers = #tpu.dot_dimension_numbers<[1], [0], [0], [1], [0, 0, 1, 1], [], []>} : vector<32x32xbf16>, vector<32x16xbf16>, vector<32x16xf32> -> vector<32x16xf32>
    %258 = arith.truncf %257 : vector<32x16xf32> to vector<32x16xbf16>
    %cst_99 = arith.constant dense<0.000000e+00> : vector<32x16xf32>
    %259 = tpu.matmul %258, %175, %cst_99 {dimension_numbers = #tpu.dot_dimension_numbers<[1], [0], [0], [1], [0, 0, 1, 1], [], []>} : vector<32x16xbf16>, vector<16x16xbf16>, vector<32x16xf32> -> vector<32x16xf32>
    %260 = arith.addf %226, %256 : vector<32x16xf32>
    %261 = arith.addf %260, %231 : vector<32x16xf32>
    %cst_100 = arith.constant 0.000000e+00 : f32
    %262 = vector.broadcast %cst_100 : f32 to vector<32x16xf32>
    %263 = arith.maximumf %261, %262 : vector<32x16xf32>
    %264 = arith.addf %229, %259 : vector<32x16xf32>
    %265 = arith.addf %264, %233 : vector<32x16xf32>
    %cst_101 = arith.constant 0.000000e+00 : f32
    %266 = vector.broadcast %cst_101 : f32 to vector<32x16xf32>
    %267 = arith.maximumf %265, %266 : vector<32x16xf32>
    %268 = arith.truncf %263 : vector<32x16xf32> to vector<32x16xbf16>
    %269 = arith.truncf %267 : vector<32x16xf32> to vector<32x16xbf16>
    %cst_102 = arith.constant dense<0.000000e+00> : vector<32x16xf32>
    %270 = tpu.matmul %4, %269, %cst_102 {dimension_numbers = #tpu.dot_dimension_numbers<[1], [0], [0], [1], [0, 0, 1, 1], [], []>} : vector<32x32xbf16>, vector<32x16xbf16>, vector<32x16xf32> -> vector<32x16xf32>
    %271 = arith.truncf %270 : vector<32x16xf32> to vector<32x16xbf16>
    %cst_103 = arith.constant dense<0.000000e+00> : vector<32x16xf32>
    %272 = tpu.matmul %271, %175, %cst_103 {dimension_numbers = #tpu.dot_dimension_numbers<[1], [1], [0], [0], [0, 0, 1, 0], [], []>} : vector<32x16xbf16>, vector<16x16xbf16>, vector<32x16xf32> -> vector<32x16xf32>
    %cst_104 = arith.constant dense<0.000000e+00> : vector<32x16xf32>
    %273 = tpu.matmul %6, %268, %cst_104 {dimension_numbers = #tpu.dot_dimension_numbers<[1], [0], [0], [1], [0, 0, 1, 1], [], []>} : vector<32x32xbf16>, vector<32x16xbf16>, vector<32x16xf32> -> vector<32x16xf32>
    %274 = arith.truncf %273 : vector<32x16xf32> to vector<32x16xbf16>
    %cst_105 = arith.constant dense<0.000000e+00> : vector<32x16xf32>
    %275 = tpu.matmul %274, %175, %cst_105 {dimension_numbers = #tpu.dot_dimension_numbers<[1], [0], [0], [1], [0, 0, 1, 1], [], []>} : vector<32x16xbf16>, vector<16x16xbf16>, vector<32x16xf32> -> vector<32x16xf32>
    %276 = arith.addf %226, %272 : vector<32x16xf32>
    %277 = arith.addf %276, %231 : vector<32x16xf32>
    %cst_106 = arith.constant 0.000000e+00 : f32
    %278 = vector.broadcast %cst_106 : f32 to vector<32x16xf32>
    %279 = arith.maximumf %277, %278 : vector<32x16xf32>
    %280 = arith.addf %229, %275 : vector<32x16xf32>
    %281 = arith.addf %280, %233 : vector<32x16xf32>
    %cst_107 = arith.constant 0.000000e+00 : f32
    %282 = vector.broadcast %cst_107 : f32 to vector<32x16xf32>
    %283 = arith.maximumf %281, %282 : vector<32x16xf32>
    %cst_108 = arith.constant dense<0.000000e+00> : vector<32xf32>
    %284 = vector.multi_reduction <add>, %279, %cst_108 [1] : vector<32x16xf32> to vector<32xf32>
    %285 = vector.shape_cast %284 : vector<32xf32> to vector<32x1xf32>
    %cst_109 = arith.constant dense<0.000000e+00> : vector<32xf32>
    %286 = vector.multi_reduction <add>, %283, %cst_109 [1] : vector<32x16xf32> to vector<32xf32>
    %287 = vector.shape_cast %286 : vector<32xf32> to vector<32x1xf32>
    %288 = arith.truncf %285 : vector<32x1xf32> to vector<32x1xbf16>
    %cst_110 = arith.constant dense<0.000000e+00> : vector<32x1xf32>
    %289 = tpu.matmul %12, %288, %cst_110 {dimension_numbers = #tpu.dot_dimension_numbers<[1], [0], [0], [1], [0, 0, 1, 1], [], []>} : vector<32x32xbf16>, vector<32x1xbf16>, vector<32x1xf32> -> vector<32x1xf32>
    %290 = arith.truncf %287 : vector<32x1xf32> to vector<32x1xbf16>
    %cst_111 = arith.constant dense<0.000000e+00> : vector<32x1xf32>
    %291 = tpu.matmul %14, %290, %cst_111 {dimension_numbers = #tpu.dot_dimension_numbers<[1], [0], [0], [1], [0, 0, 1, 1], [], []>} : vector<32x32xbf16>, vector<32x1xbf16>, vector<32x1xf32> -> vector<32x1xf32>
    %292 = arith.addf %289, %291 : vector<32x1xf32>
    %cst_112 = arith.constant 0.000000e+00 : f32
    %293 = vector.broadcast %cst_112 : f32 to vector<32x1xf32>
    %294 = arith.maximumf %292, %293 : vector<32x1xf32>
    %295 = arith.truncf %283 : vector<32x16xf32> to vector<32x16xbf16>
    %cst_113 = arith.constant dense<0.000000e+00> : vector<32x16xf32>
    %296 = tpu.matmul %16, %295, %cst_113 {dimension_numbers = #tpu.dot_dimension_numbers<[1], [0], [0], [1], [0, 0, 1, 1], [], []>} : vector<32x32xbf16>, vector<32x16xbf16>, vector<32x16xf32> -> vector<32x16xf32>
    %cst_114 = arith.constant 0.000000e+00 : f32
    %297 = vector.broadcast %cst_114 : f32 to vector<32x16xf32>
    %298 = arith.maximumf %296, %297 : vector<32x16xf32>
    %299 = arith.truncf %294 : vector<32x1xf32> to vector<32x1xbf16>
    %cst_115 = arith.constant dense<0.000000e+00> : vector<2x1xf32>
    %300 = tpu.matmul %26, %299, %cst_115 {dimension_numbers = #tpu.dot_dimension_numbers<[1], [0], [0], [1], [0, 0, 1, 1], [], []>} : vector<2x32xbf16>, vector<32x1xbf16>, vector<2x1xf32> -> vector<2x1xf32>
    %301 = arith.truncf %298 : vector<32x16xf32> to vector<32x16xbf16>
    %cst_116 = arith.constant dense<0.000000e+00> : vector<2x16xf32>
    %302 = tpu.matmul %28, %301, %cst_116 {dimension_numbers = #tpu.dot_dimension_numbers<[1], [0], [0], [1], [0, 0, 1, 1], [], []>} : vector<2x32xbf16>, vector<32x16xbf16>, vector<2x16xf32> -> vector<2x16xf32>
    %303 = vector.broadcast %300 : vector<2x1xf32> to vector<2x16xf32>
    %304 = arith.addf %303, %302 : vector<2x16xf32>
    %cst_117 = arith.constant dense<0xFF800000> : vector<16xf32>
    %305 = vector.multi_reduction <maximumf>, %304, %cst_117 [0] : vector<2x16xf32> to vector<16xf32>
    %306 = vector.shape_cast %305 : vector<16xf32> to vector<1x16xf32>
    %307 = vector.broadcast %306 : vector<1x16xf32> to vector<2x16xf32>
    %308 = arith.subf %304, %307 : vector<2x16xf32>
    %309 = math.exp %308 : vector<2x16xf32>
    %cst_118 = arith.constant dense<0.000000e+00> : vector<16xf32>
    %310 = vector.multi_reduction <add>, %309, %cst_118 [0] : vector<2x16xf32> to vector<16xf32>
    %311 = vector.shape_cast %310 : vector<16xf32> to vector<1x16xf32>
    %312 = math.log %311 : vector<1x16xf32>
    %313 = arith.addf %306, %312 : vector<1x16xf32>
    %314 = vector.broadcast %313 : vector<1x16xf32> to vector<2x16xf32>
    %315 = arith.subf %304, %314 : vector<2x16xf32>
    %c1_119 = arith.constant 1 : index
    %c0_120 = arith.constant 0 : index
    %c0_121 = arith.constant 0 : index
    %316 = vector.load %arg7[%c1_119, %c0_120, %c0_121] : memref<4x2x16xf32, #tpu.memory_space<vmem>>, vector<1x2x16xf32>
    %317 = vector.shape_cast %316 : vector<1x2x16xf32> to vector<2x16xf32>
    %318 = vector.shape_cast %315 : vector<2x16xf32> to vector<1x2x16xf32>
    tpu.vector_store %arg7[%c1_119, %c0_120, %c0_121], %318 {strides = array<i32>} : memref<4x2x16xf32, #tpu.memory_space<vmem>>, vector<1x2x16xf32>,
    %c2 = arith.constant 2 : index
    %c0_122 = arith.constant 0 : index
    %c0_123 = arith.constant 0 : index
    %319 = vector.load %arg3[%c2, %c0_122, %c0_123] : memref<4x16x16xbf16, #tpu.memory_space<vmem>>, vector<1x16x16xbf16>
    %320 = vector.shape_cast %319 : vector<1x16x16xbf16> to vector<16x16xbf16>
    %c2_124 = arith.constant 2 : index
    %c0_125 = arith.constant 0 : index
    %c0_126 = arith.constant 0 : index
    %321 = vector.load %arg1[%c2_124, %c0_125, %c0_126] : memref<4x1x16xf32, #tpu.memory_space<vmem>>, vector<1x1x16xf32>
    %322 = vector.shape_cast %321 : vector<1x1x16xf32> to vector<1x16xf32>
    %c2_127 = arith.constant 2 : index
    %c0_128 = arith.constant 0 : index
    %c0_129 = arith.constant 0 : index
    %323 = vector.load %arg2[%c2_127, %c0_128, %c0_129] : memref<4x1x16xf32, #tpu.memory_space<vmem>>, vector<1x1x16xf32>
    %324 = vector.shape_cast %323 : vector<1x1x16xf32> to vector<1x16xf32>
    %cst_130 = arith.constant 0.000000e+00 : bf16
    %325 = vector.broadcast %cst_130 : bf16 to vector<16x16xbf16>
    %326 = arith.maximumf %320, %325 : vector<16x16xbf16>
    %327 = arith.extf %326 : vector<16x16xbf16> to vector<16x16xf32>
    %cst_131 = arith.constant 0.000000e+00 : bf16
    %328 = vector.broadcast %cst_131 : bf16 to vector<16x16xbf16>
    %329 = arith.subf %328, %320 : vector<16x16xbf16>
    %cst_132 = arith.constant 0.000000e+00 : bf16
    %330 = vector.broadcast %cst_132 : bf16 to vector<16x16xbf16>
    %331 = arith.maximumf %329, %330 : vector<16x16xbf16>
    %332 = arith.extf %331 : vector<16x16xbf16> to vector<16x16xf32>
    %cst_133 = arith.constant dense<0.000000e+00> : vector<16xf32>
    %333 = vector.multi_reduction <add>, %327, %cst_133 [1] : vector<16x16xf32> to vector<16xf32>
    %334 = vector.shape_cast %333 : vector<16xf32> to vector<16x1xf32>
    %cst_134 = arith.constant dense<0.000000e+00> : vector<16xf32>
    %335 = vector.multi_reduction <add>, %332, %cst_134 [1] : vector<16x16xf32> to vector<16xf32>
    %336 = vector.shape_cast %335 : vector<16xf32> to vector<16x1xf32>
    %cst_135 = arith.constant dense<0.000000e+00> : vector<16xf32>
    %337 = vector.multi_reduction <add>, %327, %cst_135 [0] : vector<16x16xf32> to vector<16xf32>
    %338 = vector.shape_cast %337 : vector<16xf32> to vector<1x16xf32>
    %cst_136 = arith.constant dense<0.000000e+00> : vector<16xf32>
    %339 = vector.multi_reduction <add>, %332, %cst_136 [0] : vector<16x16xf32> to vector<16xf32>
    %340 = vector.shape_cast %339 : vector<16xf32> to vector<1x16xf32>
    %cst_137 = arith.constant 0.000000e+00 : f32
    %341 = vector.broadcast %cst_137 : f32 to vector<32x1xf32>
    %342 = arith.maximumf %22, %341 : vector<32x1xf32>
    %343 = tpu.transpose %334, [1, 0] : vector<16x1xf32> -> vector<1x16xf32>
    %344 = vector.broadcast %342 : vector<32x1xf32> to vector<32x16xf32>
    %345 = vector.broadcast %343 : vector<1x16xf32> to vector<32x16xf32>
    %346 = arith.mulf %344, %345 : vector<32x16xf32>
    %cst_138 = arith.constant 0.000000e+00 : f32
    %347 = vector.broadcast %cst_138 : f32 to vector<32x1xf32>
    %348 = arith.subf %347, %22 : vector<32x1xf32>
    %cst_139 = arith.constant 0.000000e+00 : f32
    %349 = vector.broadcast %cst_139 : f32 to vector<32x1xf32>
    %350 = arith.maximumf %348, %349 : vector<32x1xf32>
    %351 = tpu.transpose %336, [1, 0] : vector<16x1xf32> -> vector<1x16xf32>
    %352 = vector.broadcast %350 : vector<32x1xf32> to vector<32x16xf32>
    %353 = vector.broadcast %351 : vector<1x16xf32> to vector<32x16xf32>
    %354 = arith.mulf %352, %353 : vector<32x16xf32>
    %355 = arith.addf %346, %354 : vector<32x16xf32>
    %cst_140 = arith.constant 0.000000e+00 : f32
    %356 = vector.broadcast %cst_140 : f32 to vector<32x1xf32>
    %357 = arith.maximumf %24, %356 : vector<32x1xf32>
    %358 = vector.broadcast %357 : vector<32x1xf32> to vector<32x16xf32>
    %359 = vector.broadcast %338 : vector<1x16xf32> to vector<32x16xf32>
    %360 = arith.mulf %358, %359 : vector<32x16xf32>
    %cst_141 = arith.constant 0.000000e+00 : f32
    %361 = vector.broadcast %cst_141 : f32 to vector<32x1xf32>
    %362 = arith.subf %361, %24 : vector<32x1xf32>
    %cst_142 = arith.constant 0.000000e+00 : f32
    %363 = vector.broadcast %cst_142 : f32 to vector<32x1xf32>
    %364 = arith.maximumf %362, %363 : vector<32x1xf32>
    %365 = vector.broadcast %364 : vector<32x1xf32> to vector<32x16xf32>
    %366 = vector.broadcast %340 : vector<1x16xf32> to vector<32x16xf32>
    %367 = arith.mulf %365, %366 : vector<32x16xf32>
    %368 = arith.addf %360, %367 : vector<32x16xf32>
    %369 = vector.broadcast %18 : vector<32x1xf32> to vector<32x16xf32>
    %370 = vector.broadcast %322 : vector<1x16xf32> to vector<32x16xf32>
    %371 = arith.mulf %369, %370 : vector<32x16xf32>
    %372 = vector.broadcast %20 : vector<32x1xf32> to vector<32x16xf32>
    %373 = vector.broadcast %324 : vector<1x16xf32> to vector<32x16xf32>
    %374 = arith.mulf %372, %373 : vector<32x16xf32>
    %375 = arith.truncf %355 : vector<32x16xf32> to vector<32x16xbf16>
    %cst_143 = arith.constant dense<0.000000e+00> : vector<32x16xf32>
    %376 = tpu.matmul %8, %375, %cst_143 {dimension_numbers = #tpu.dot_dimension_numbers<[1], [0], [0], [1], [0, 0, 1, 1], [], []>} : vector<32x32xbf16>, vector<32x16xbf16>, vector<32x16xf32> -> vector<32x16xf32>
    %377 = arith.truncf %368 : vector<32x16xf32> to vector<32x16xbf16>
    %cst_144 = arith.constant dense<0.000000e+00> : vector<32x16xf32>
    %378 = tpu.matmul %10, %377, %cst_144 {dimension_numbers = #tpu.dot_dimension_numbers<[1], [0], [0], [1], [0, 0, 1, 1], [], []>} : vector<32x32xbf16>, vector<32x16xbf16>, vector<32x16xf32> -> vector<32x16xf32>
    %cst_145 = arith.constant 0.000000e+00 : f32
    %379 = vector.broadcast %cst_145 : f32 to vector<32x16xf32>
    %cst_146 = arith.constant 0.000000e+00 : f32
    %380 = vector.broadcast %cst_146 : f32 to vector<32x16xf32>
    %381 = arith.truncf %379 : vector<32x16xf32> to vector<32x16xbf16>
    %382 = arith.truncf %380 : vector<32x16xf32> to vector<32x16xbf16>
    %cst_147 = arith.constant dense<0.000000e+00> : vector<32x16xf32>
    %383 = tpu.matmul %4, %382, %cst_147 {dimension_numbers = #tpu.dot_dimension_numbers<[1], [0], [0], [1], [0, 0, 1, 1], [], []>} : vector<32x32xbf16>, vector<32x16xbf16>, vector<32x16xf32> -> vector<32x16xf32>
    %384 = arith.truncf %383 : vector<32x16xf32> to vector<32x16xbf16>
    %cst_148 = arith.constant dense<0.000000e+00> : vector<32x16xf32>
    %385 = tpu.matmul %384, %320, %cst_148 {dimension_numbers = #tpu.dot_dimension_numbers<[1], [1], [0], [0], [0, 0, 1, 0], [], []>} : vector<32x16xbf16>, vector<16x16xbf16>, vector<32x16xf32> -> vector<32x16xf32>
    %cst_149 = arith.constant dense<0.000000e+00> : vector<32x16xf32>
    %386 = tpu.matmul %6, %381, %cst_149 {dimension_numbers = #tpu.dot_dimension_numbers<[1], [0], [0], [1], [0, 0, 1, 1], [], []>} : vector<32x32xbf16>, vector<32x16xbf16>, vector<32x16xf32> -> vector<32x16xf32>
    %387 = arith.truncf %386 : vector<32x16xf32> to vector<32x16xbf16>
    %cst_150 = arith.constant dense<0.000000e+00> : vector<32x16xf32>
    %388 = tpu.matmul %387, %320, %cst_150 {dimension_numbers = #tpu.dot_dimension_numbers<[1], [0], [0], [1], [0, 0, 1, 1], [], []>} : vector<32x16xbf16>, vector<16x16xbf16>, vector<32x16xf32> -> vector<32x16xf32>
    %389 = arith.addf %371, %385 : vector<32x16xf32>
    %390 = arith.addf %389, %376 : vector<32x16xf32>
    %cst_151 = arith.constant 0.000000e+00 : f32
    %391 = vector.broadcast %cst_151 : f32 to vector<32x16xf32>
    %392 = arith.maximumf %390, %391 : vector<32x16xf32>
    %393 = arith.addf %374, %388 : vector<32x16xf32>
    %394 = arith.addf %393, %378 : vector<32x16xf32>
    %cst_152 = arith.constant 0.000000e+00 : f32
    %395 = vector.broadcast %cst_152 : f32 to vector<32x16xf32>
    %396 = arith.maximumf %394, %395 : vector<32x16xf32>
    %397 = arith.truncf %392 : vector<32x16xf32> to vector<32x16xbf16>
    %398 = arith.truncf %396 : vector<32x16xf32> to vector<32x16xbf16>
    %cst_153 = arith.constant dense<0.000000e+00> : vector<32x16xf32>
    %399 = tpu.matmul %4, %398, %cst_153 {dimension_numbers = #tpu.dot_dimension_numbers<[1], [0], [0], [1], [0, 0, 1, 1], [], []>} : vector<32x32xbf16>, vector<32x16xbf16>, vector<32x16xf32> -> vector<32x16xf32>
    %400 = arith.truncf %399 : vector<32x16xf32> to vector<32x16xbf16>
    %cst_154 = arith.constant dense<0.000000e+00> : vector<32x16xf32>
    %401 = tpu.matmul %400, %320, %cst_154 {dimension_numbers = #tpu.dot_dimension_numbers<[1], [1], [0], [0], [0, 0, 1, 0], [], []>} : vector<32x16xbf16>, vector<16x16xbf16>, vector<32x16xf32> -> vector<32x16xf32>
    %cst_155 = arith.constant dense<0.000000e+00> : vector<32x16xf32>
    %402 = tpu.matmul %6, %397, %cst_155 {dimension_numbers = #tpu.dot_dimension_numbers<[1], [0], [0], [1], [0, 0, 1, 1], [], []>} : vector<32x32xbf16>, vector<32x16xbf16>, vector<32x16xf32> -> vector<32x16xf32>
    %403 = arith.truncf %402 : vector<32x16xf32> to vector<32x16xbf16>
    %cst_156 = arith.constant dense<0.000000e+00> : vector<32x16xf32>
    %404 = tpu.matmul %403, %320, %cst_156 {dimension_numbers = #tpu.dot_dimension_numbers<[1], [0], [0], [1], [0, 0, 1, 1], [], []>} : vector<32x16xbf16>, vector<16x16xbf16>, vector<32x16xf32> -> vector<32x16xf32>
    %405 = arith.addf %371, %401 : vector<32x16xf32>
    %406 = arith.addf %405, %376 : vector<32x16xf32>
    %cst_157 = arith.constant 0.000000e+00 : f32
    %407 = vector.broadcast %cst_157 : f32 to vector<32x16xf32>
    %408 = arith.maximumf %406, %407 : vector<32x16xf32>
    %409 = arith.addf %374, %404 : vector<32x16xf32>
    %410 = arith.addf %409, %378 : vector<32x16xf32>
    %cst_158 = arith.constant 0.000000e+00 : f32
    %411 = vector.broadcast %cst_158 : f32 to vector<32x16xf32>
    %412 = arith.maximumf %410, %411 : vector<32x16xf32>
    %413 = arith.truncf %408 : vector<32x16xf32> to vector<32x16xbf16>
    %414 = arith.truncf %412 : vector<32x16xf32> to vector<32x16xbf16>
    %cst_159 = arith.constant dense<0.000000e+00> : vector<32x16xf32>
    %415 = tpu.matmul %4, %414, %cst_159 {dimension_numbers = #tpu.dot_dimension_numbers<[1], [0], [0], [1], [0, 0, 1, 1], [], []>} : vector<32x32xbf16>, vector<32x16xbf16>, vector<32x16xf32> -> vector<32x16xf32>
    %416 = arith.truncf %415 : vector<32x16xf32> to vector<32x16xbf16>
    %cst_160 = arith.constant dense<0.000000e+00> : vector<32x16xf32>
    %417 = tpu.matmul %416, %320, %cst_160 {dimension_numbers = #tpu.dot_dimension_numbers<[1], [1], [0], [0], [0, 0, 1, 0], [], []>} : vector<32x16xbf16>, vector<16x16xbf16>, vector<32x16xf32> -> vector<32x16xf32>
    %cst_161 = arith.constant dense<0.000000e+00> : vector<32x16xf32>
    %418 = tpu.matmul %6, %413, %cst_161 {dimension_numbers = #tpu.dot_dimension_numbers<[1], [0], [0], [1], [0, 0, 1, 1], [], []>} : vector<32x32xbf16>, vector<32x16xbf16>, vector<32x16xf32> -> vector<32x16xf32>
    %419 = arith.truncf %418 : vector<32x16xf32> to vector<32x16xbf16>
    %cst_162 = arith.constant dense<0.000000e+00> : vector<32x16xf32>
    %420 = tpu.matmul %419, %320, %cst_162 {dimension_numbers = #tpu.dot_dimension_numbers<[1], [0], [0], [1], [0, 0, 1, 1], [], []>} : vector<32x16xbf16>, vector<16x16xbf16>, vector<32x16xf32> -> vector<32x16xf32>
    %421 = arith.addf %371, %417 : vector<32x16xf32>
    %422 = arith.addf %421, %376 : vector<32x16xf32>
    %cst_163 = arith.constant 0.000000e+00 : f32
    %423 = vector.broadcast %cst_163 : f32 to vector<32x16xf32>
    %424 = arith.maximumf %422, %423 : vector<32x16xf32>
    %425 = arith.addf %374, %420 : vector<32x16xf32>
    %426 = arith.addf %425, %378 : vector<32x16xf32>
    %cst_164 = arith.constant 0.000000e+00 : f32
    %427 = vector.broadcast %cst_164 : f32 to vector<32x16xf32>
    %428 = arith.maximumf %426, %427 : vector<32x16xf32>
    %cst_165 = arith.constant dense<0.000000e+00> : vector<32xf32>
    %429 = vector.multi_reduction <add>, %424, %cst_165 [1] : vector<32x16xf32> to vector<32xf32>
    %430 = vector.shape_cast %429 : vector<32xf32> to vector<32x1xf32>
    %cst_166 = arith.constant dense<0.000000e+00> : vector<32xf32>
    %431 = vector.multi_reduction <add>, %428, %cst_166 [1] : vector<32x16xf32> to vector<32xf32>
    %432 = vector.shape_cast %431 : vector<32xf32> to vector<32x1xf32>
    %433 = arith.truncf %430 : vector<32x1xf32> to vector<32x1xbf16>
    %cst_167 = arith.constant dense<0.000000e+00> : vector<32x1xf32>
    %434 = tpu.matmul %12, %433, %cst_167 {dimension_numbers = #tpu.dot_dimension_numbers<[1], [0], [0], [1], [0, 0, 1, 1], [], []>} : vector<32x32xbf16>, vector<32x1xbf16>, vector<32x1xf32> -> vector<32x1xf32>
    %435 = arith.truncf %432 : vector<32x1xf32> to vector<32x1xbf16>
    %cst_168 = arith.constant dense<0.000000e+00> : vector<32x1xf32>
    %436 = tpu.matmul %14, %435, %cst_168 {dimension_numbers = #tpu.dot_dimension_numbers<[1], [0], [0], [1], [0, 0, 1, 1], [], []>} : vector<32x32xbf16>, vector<32x1xbf16>, vector<32x1xf32> -> vector<32x1xf32>
    %437 = arith.addf %434, %436 : vector<32x1xf32>
    %cst_169 = arith.constant 0.000000e+00 : f32
    %438 = vector.broadcast %cst_169 : f32 to vector<32x1xf32>
    %439 = arith.maximumf %437, %438 : vector<32x1xf32>
    %440 = arith.truncf %428 : vector<32x16xf32> to vector<32x16xbf16>
    %cst_170 = arith.constant dense<0.000000e+00> : vector<32x16xf32>
    %441 = tpu.matmul %16, %440, %cst_170 {dimension_numbers = #tpu.dot_dimension_numbers<[1], [0], [0], [1], [0, 0, 1, 1], [], []>} : vector<32x32xbf16>, vector<32x16xbf16>, vector<32x16xf32> -> vector<32x16xf32>
    %cst_171 = arith.constant 0.000000e+00 : f32
    %442 = vector.broadcast %cst_171 : f32 to vector<32x16xf32>
    %443 = arith.maximumf %441, %442 : vector<32x16xf32>
    %444 = arith.truncf %439 : vector<32x1xf32> to vector<32x1xbf16>
    %cst_172 = arith.constant dense<0.000000e+00> : vector<2x1xf32>
    %445 = tpu.matmul %26, %444, %cst_172 {dimension_numbers = #tpu.dot_dimension_numbers<[1], [0], [0], [1], [0, 0, 1, 1], [], []>} : vector<2x32xbf16>, vector<32x1xbf16>, vector<2x1xf32> -> vector<2x1xf32>
    %446 = arith.truncf %443 : vector<32x16xf32> to vector<32x16xbf16>
    %cst_173 = arith.constant dense<0.000000e+00> : vector<2x16xf32>
    %447 = tpu.matmul %28, %446, %cst_173 {dimension_numbers = #tpu.dot_dimension_numbers<[1], [0], [0], [1], [0, 0, 1, 1], [], []>} : vector<2x32xbf16>, vector<32x16xbf16>, vector<2x16xf32> -> vector<2x16xf32>
    %448 = vector.broadcast %445 : vector<2x1xf32> to vector<2x16xf32>
    %449 = arith.addf %448, %447 : vector<2x16xf32>
    %cst_174 = arith.constant dense<0xFF800000> : vector<16xf32>
    %450 = vector.multi_reduction <maximumf>, %449, %cst_174 [0] : vector<2x16xf32> to vector<16xf32>
    %451 = vector.shape_cast %450 : vector<16xf32> to vector<1x16xf32>
    %452 = vector.broadcast %451 : vector<1x16xf32> to vector<2x16xf32>
    %453 = arith.subf %449, %452 : vector<2x16xf32>
    %454 = math.exp %453 : vector<2x16xf32>
    %cst_175 = arith.constant dense<0.000000e+00> : vector<16xf32>
    %455 = vector.multi_reduction <add>, %454, %cst_175 [0] : vector<2x16xf32> to vector<16xf32>
    %456 = vector.shape_cast %455 : vector<16xf32> to vector<1x16xf32>
    %457 = math.log %456 : vector<1x16xf32>
    %458 = arith.addf %451, %457 : vector<1x16xf32>
    %459 = vector.broadcast %458 : vector<1x16xf32> to vector<2x16xf32>
    %460 = arith.subf %449, %459 : vector<2x16xf32>
    %c2_176 = arith.constant 2 : index
    %c0_177 = arith.constant 0 : index
    %c0_178 = arith.constant 0 : index
    %461 = vector.load %arg7[%c2_176, %c0_177, %c0_178] : memref<4x2x16xf32, #tpu.memory_space<vmem>>, vector<1x2x16xf32>
    %462 = vector.shape_cast %461 : vector<1x2x16xf32> to vector<2x16xf32>
    %463 = vector.shape_cast %460 : vector<2x16xf32> to vector<1x2x16xf32>
    tpu.vector_store %arg7[%c2_176, %c0_177, %c0_178], %463 {strides = array<i32>} : memref<4x2x16xf32, #tpu.memory_space<vmem>>, vector<1x2x16xf32>,
    %c3 = arith.constant 3 : index
    %c0_179 = arith.constant 0 : index
    %c0_180 = arith.constant 0 : index
    %464 = vector.load %arg3[%c3, %c0_179, %c0_180] : memref<4x16x16xbf16, #tpu.memory_space<vmem>>, vector<1x16x16xbf16>
    %465 = vector.shape_cast %464 : vector<1x16x16xbf16> to vector<16x16xbf16>
    %c3_181 = arith.constant 3 : index
    %c0_182 = arith.constant 0 : index
    %c0_183 = arith.constant 0 : index
    %466 = vector.load %arg1[%c3_181, %c0_182, %c0_183] : memref<4x1x16xf32, #tpu.memory_space<vmem>>, vector<1x1x16xf32>
    %467 = vector.shape_cast %466 : vector<1x1x16xf32> to vector<1x16xf32>
    %c3_184 = arith.constant 3 : index
    %c0_185 = arith.constant 0 : index
    %c0_186 = arith.constant 0 : index
    %468 = vector.load %arg2[%c3_184, %c0_185, %c0_186] : memref<4x1x16xf32, #tpu.memory_space<vmem>>, vector<1x1x16xf32>
    %469 = vector.shape_cast %468 : vector<1x1x16xf32> to vector<1x16xf32>
    %cst_187 = arith.constant 0.000000e+00 : bf16
    %470 = vector.broadcast %cst_187 : bf16 to vector<16x16xbf16>
    %471 = arith.maximumf %465, %470 : vector<16x16xbf16>
    %472 = arith.extf %471 : vector<16x16xbf16> to vector<16x16xf32>
    %cst_188 = arith.constant 0.000000e+00 : bf16
    %473 = vector.broadcast %cst_188 : bf16 to vector<16x16xbf16>
    %474 = arith.subf %473, %465 : vector<16x16xbf16>
    %cst_189 = arith.constant 0.000000e+00 : bf16
    %475 = vector.broadcast %cst_189 : bf16 to vector<16x16xbf16>
    %476 = arith.maximumf %474, %475 : vector<16x16xbf16>
    %477 = arith.extf %476 : vector<16x16xbf16> to vector<16x16xf32>
    %cst_190 = arith.constant dense<0.000000e+00> : vector<16xf32>
    %478 = vector.multi_reduction <add>, %472, %cst_190 [1] : vector<16x16xf32> to vector<16xf32>
    %479 = vector.shape_cast %478 : vector<16xf32> to vector<16x1xf32>
    %cst_191 = arith.constant dense<0.000000e+00> : vector<16xf32>
    %480 = vector.multi_reduction <add>, %477, %cst_191 [1] : vector<16x16xf32> to vector<16xf32>
    %481 = vector.shape_cast %480 : vector<16xf32> to vector<16x1xf32>
    %cst_192 = arith.constant dense<0.000000e+00> : vector<16xf32>
    %482 = vector.multi_reduction <add>, %472, %cst_192 [0] : vector<16x16xf32> to vector<16xf32>
    %483 = vector.shape_cast %482 : vector<16xf32> to vector<1x16xf32>
    %cst_193 = arith.constant dense<0.000000e+00> : vector<16xf32>
    %484 = vector.multi_reduction <add>, %477, %cst_193 [0] : vector<16x16xf32> to vector<16xf32>
    %485 = vector.shape_cast %484 : vector<16xf32> to vector<1x16xf32>
    %cst_194 = arith.constant 0.000000e+00 : f32
    %486 = vector.broadcast %cst_194 : f32 to vector<32x1xf32>
    %487 = arith.maximumf %22, %486 : vector<32x1xf32>
    %488 = tpu.transpose %479, [1, 0] : vector<16x1xf32> -> vector<1x16xf32>
    %489 = vector.broadcast %487 : vector<32x1xf32> to vector<32x16xf32>
    %490 = vector.broadcast %488 : vector<1x16xf32> to vector<32x16xf32>
    %491 = arith.mulf %489, %490 : vector<32x16xf32>
    %cst_195 = arith.constant 0.000000e+00 : f32
    %492 = vector.broadcast %cst_195 : f32 to vector<32x1xf32>
    %493 = arith.subf %492, %22 : vector<32x1xf32>
    %cst_196 = arith.constant 0.000000e+00 : f32
    %494 = vector.broadcast %cst_196 : f32 to vector<32x1xf32>
    %495 = arith.maximumf %493, %494 : vector<32x1xf32>
    %496 = tpu.transpose %481, [1, 0] : vector<16x1xf32> -> vector<1x16xf32>
    %497 = vector.broadcast %495 : vector<32x1xf32> to vector<32x16xf32>
    %498 = vector.broadcast %496 : vector<1x16xf32> to vector<32x16xf32>
    %499 = arith.mulf %497, %498 : vector<32x16xf32>
    %500 = arith.addf %491, %499 : vector<32x16xf32>
    %cst_197 = arith.constant 0.000000e+00 : f32
    %501 = vector.broadcast %cst_197 : f32 to vector<32x1xf32>
    %502 = arith.maximumf %24, %501 : vector<32x1xf32>
    %503 = vector.broadcast %502 : vector<32x1xf32> to vector<32x16xf32>
    %504 = vector.broadcast %483 : vector<1x16xf32> to vector<32x16xf32>
    %505 = arith.mulf %503, %504 : vector<32x16xf32>
    %cst_198 = arith.constant 0.000000e+00 : f32
    %506 = vector.broadcast %cst_198 : f32 to vector<32x1xf32>
    %507 = arith.subf %506, %24 : vector<32x1xf32>
    %cst_199 = arith.constant 0.000000e+00 : f32
    %508 = vector.broadcast %cst_199 : f32 to vector<32x1xf32>
    %509 = arith.maximumf %507, %508 : vector<32x1xf32>
    %510 = vector.broadcast %509 : vector<32x1xf32> to vector<32x16xf32>
    %511 = vector.broadcast %485 : vector<1x16xf32> to vector<32x16xf32>
    %512 = arith.mulf %510, %511 : vector<32x16xf32>
    %513 = arith.addf %505, %512 : vector<32x16xf32>
    %514 = vector.broadcast %18 : vector<32x1xf32> to vector<32x16xf32>
    %515 = vector.broadcast %467 : vector<1x16xf32> to vector<32x16xf32>
    %516 = arith.mulf %514, %515 : vector<32x16xf32>
    %517 = vector.broadcast %20 : vector<32x1xf32> to vector<32x16xf32>
    %518 = vector.broadcast %469 : vector<1x16xf32> to vector<32x16xf32>
    %519 = arith.mulf %517, %518 : vector<32x16xf32>
    %520 = arith.truncf %500 : vector<32x16xf32> to vector<32x16xbf16>
    %cst_200 = arith.constant dense<0.000000e+00> : vector<32x16xf32>
    %521 = tpu.matmul %8, %520, %cst_200 {dimension_numbers = #tpu.dot_dimension_numbers<[1], [0], [0], [1], [0, 0, 1, 1], [], []>} : vector<32x32xbf16>, vector<32x16xbf16>, vector<32x16xf32> -> vector<32x16xf32>
    %522 = arith.truncf %513 : vector<32x16xf32> to vector<32x16xbf16>
    %cst_201 = arith.constant dense<0.000000e+00> : vector<32x16xf32>
    %523 = tpu.matmul %10, %522, %cst_201 {dimension_numbers = #tpu.dot_dimension_numbers<[1], [0], [0], [1], [0, 0, 1, 1], [], []>} : vector<32x32xbf16>, vector<32x16xbf16>, vector<32x16xf32> -> vector<32x16xf32>
    %cst_202 = arith.constant 0.000000e+00 : f32
    %524 = vector.broadcast %cst_202 : f32 to vector<32x16xf32>
    %cst_203 = arith.constant 0.000000e+00 : f32
    %525 = vector.broadcast %cst_203 : f32 to vector<32x16xf32>
    %526 = arith.truncf %524 : vector<32x16xf32> to vector<32x16xbf16>
    %527 = arith.truncf %525 : vector<32x16xf32> to vector<32x16xbf16>
    %cst_204 = arith.constant dense<0.000000e+00> : vector<32x16xf32>
    %528 = tpu.matmul %4, %527, %cst_204 {dimension_numbers = #tpu.dot_dimension_numbers<[1], [0], [0], [1], [0, 0, 1, 1], [], []>} : vector<32x32xbf16>, vector<32x16xbf16>, vector<32x16xf32> -> vector<32x16xf32>
    %529 = arith.truncf %528 : vector<32x16xf32> to vector<32x16xbf16>
    %cst_205 = arith.constant dense<0.000000e+00> : vector<32x16xf32>
    %530 = tpu.matmul %529, %465, %cst_205 {dimension_numbers = #tpu.dot_dimension_numbers<[1], [1], [0], [0], [0, 0, 1, 0], [], []>} : vector<32x16xbf16>, vector<16x16xbf16>, vector<32x16xf32> -> vector<32x16xf32>
    %cst_206 = arith.constant dense<0.000000e+00> : vector<32x16xf32>
    %531 = tpu.matmul %6, %526, %cst_206 {dimension_numbers = #tpu.dot_dimension_numbers<[1], [0], [0], [1], [0, 0, 1, 1], [], []>} : vector<32x32xbf16>, vector<32x16xbf16>, vector<32x16xf32> -> vector<32x16xf32>
    %532 = arith.truncf %531 : vector<32x16xf32> to vector<32x16xbf16>
    %cst_207 = arith.constant dense<0.000000e+00> : vector<32x16xf32>
    %533 = tpu.matmul %532, %465, %cst_207 {dimension_numbers = #tpu.dot_dimension_numbers<[1], [0], [0], [1], [0, 0, 1, 1], [], []>} : vector<32x16xbf16>, vector<16x16xbf16>, vector<32x16xf32> -> vector<32x16xf32>
    %534 = arith.addf %516, %530 : vector<32x16xf32>
    %535 = arith.addf %534, %521 : vector<32x16xf32>
    %cst_208 = arith.constant 0.000000e+00 : f32
    %536 = vector.broadcast %cst_208 : f32 to vector<32x16xf32>
    %537 = arith.maximumf %535, %536 : vector<32x16xf32>
    %538 = arith.addf %519, %533 : vector<32x16xf32>
    %539 = arith.addf %538, %523 : vector<32x16xf32>
    %cst_209 = arith.constant 0.000000e+00 : f32
    %540 = vector.broadcast %cst_209 : f32 to vector<32x16xf32>
    %541 = arith.maximumf %539, %540 : vector<32x16xf32>
    %542 = arith.truncf %537 : vector<32x16xf32> to vector<32x16xbf16>
    %543 = arith.truncf %541 : vector<32x16xf32> to vector<32x16xbf16>
    %cst_210 = arith.constant dense<0.000000e+00> : vector<32x16xf32>
    %544 = tpu.matmul %4, %543, %cst_210 {dimension_numbers = #tpu.dot_dimension_numbers<[1], [0], [0], [1], [0, 0, 1, 1], [], []>} : vector<32x32xbf16>, vector<32x16xbf16>, vector<32x16xf32> -> vector<32x16xf32>
    %545 = arith.truncf %544 : vector<32x16xf32> to vector<32x16xbf16>
    %cst_211 = arith.constant dense<0.000000e+00> : vector<32x16xf32>
    %546 = tpu.matmul %545, %465, %cst_211 {dimension_numbers = #tpu.dot_dimension_numbers<[1], [1], [0], [0], [0, 0, 1, 0], [], []>} : vector<32x16xbf16>, vector<16x16xbf16>, vector<32x16xf32> -> vector<32x16xf32>
    %cst_212 = arith.constant dense<0.000000e+00> : vector<32x16xf32>
    %547 = tpu.matmul %6, %542, %cst_212 {dimension_numbers = #tpu.dot_dimension_numbers<[1], [0], [0], [1], [0, 0, 1, 1], [], []>} : vector<32x32xbf16>, vector<32x16xbf16>, vector<32x16xf32> -> vector<32x16xf32>
    %548 = arith.truncf %547 : vector<32x16xf32> to vector<32x16xbf16>
    %cst_213 = arith.constant dense<0.000000e+00> : vector<32x16xf32>
    %549 = tpu.matmul %548, %465, %cst_213 {dimension_numbers = #tpu.dot_dimension_numbers<[1], [0], [0], [1], [0, 0, 1, 1], [], []>} : vector<32x16xbf16>, vector<16x16xbf16>, vector<32x16xf32> -> vector<32x16xf32>
    %550 = arith.addf %516, %546 : vector<32x16xf32>
    %551 = arith.addf %550, %521 : vector<32x16xf32>
    %cst_214 = arith.constant 0.000000e+00 : f32
    %552 = vector.broadcast %cst_214 : f32 to vector<32x16xf32>
    %553 = arith.maximumf %551, %552 : vector<32x16xf32>
    %554 = arith.addf %519, %549 : vector<32x16xf32>
    %555 = arith.addf %554, %523 : vector<32x16xf32>
    %cst_215 = arith.constant 0.000000e+00 : f32
    %556 = vector.broadcast %cst_215 : f32 to vector<32x16xf32>
    %557 = arith.maximumf %555, %556 : vector<32x16xf32>
    %558 = arith.truncf %553 : vector<32x16xf32> to vector<32x16xbf16>
    %559 = arith.truncf %557 : vector<32x16xf32> to vector<32x16xbf16>
    %cst_216 = arith.constant dense<0.000000e+00> : vector<32x16xf32>
    %560 = tpu.matmul %4, %559, %cst_216 {dimension_numbers = #tpu.dot_dimension_numbers<[1], [0], [0], [1], [0, 0, 1, 1], [], []>} : vector<32x32xbf16>, vector<32x16xbf16>, vector<32x16xf32> -> vector<32x16xf32>
    %561 = arith.truncf %560 : vector<32x16xf32> to vector<32x16xbf16>
    %cst_217 = arith.constant dense<0.000000e+00> : vector<32x16xf32>
    %562 = tpu.matmul %561, %465, %cst_217 {dimension_numbers = #tpu.dot_dimension_numbers<[1], [1], [0], [0], [0, 0, 1, 0], [], []>} : vector<32x16xbf16>, vector<16x16xbf16>, vector<32x16xf32> -> vector<32x16xf32>
    %cst_218 = arith.constant dense<0.000000e+00> : vector<32x16xf32>
    %563 = tpu.matmul %6, %558, %cst_218 {dimension_numbers = #tpu.dot_dimension_numbers<[1], [0], [0], [1], [0, 0, 1, 1], [], []>} : vector<32x32xbf16>, vector<32x16xbf16>, vector<32x16xf32> -> vector<32x16xf32>
    %564 = arith.truncf %563 : vector<32x16xf32> to vector<32x16xbf16>
    %cst_219 = arith.constant dense<0.000000e+00> : vector<32x16xf32>
    %565 = tpu.matmul %564, %465, %cst_219 {dimension_numbers = #tpu.dot_dimension_numbers<[1], [0], [0], [1], [0, 0, 1, 1], [], []>} : vector<32x16xbf16>, vector<16x16xbf16>, vector<32x16xf32> -> vector<32x16xf32>
    %566 = arith.addf %516, %562 : vector<32x16xf32>
    %567 = arith.addf %566, %521 : vector<32x16xf32>
    %cst_220 = arith.constant 0.000000e+00 : f32
    %568 = vector.broadcast %cst_220 : f32 to vector<32x16xf32>
    %569 = arith.maximumf %567, %568 : vector<32x16xf32>
    %570 = arith.addf %519, %565 : vector<32x16xf32>
    %571 = arith.addf %570, %523 : vector<32x16xf32>
    %cst_221 = arith.constant 0.000000e+00 : f32
    %572 = vector.broadcast %cst_221 : f32 to vector<32x16xf32>
    %573 = arith.maximumf %571, %572 : vector<32x16xf32>
    %cst_222 = arith.constant dense<0.000000e+00> : vector<32xf32>
    %574 = vector.multi_reduction <add>, %569, %cst_222 [1] : vector<32x16xf32> to vector<32xf32>
    %575 = vector.shape_cast %574 : vector<32xf32> to vector<32x1xf32>
    %cst_223 = arith.constant dense<0.000000e+00> : vector<32xf32>
    %576 = vector.multi_reduction <add>, %573, %cst_223 [1] : vector<32x16xf32> to vector<32xf32>
    %577 = vector.shape_cast %576 : vector<32xf32> to vector<32x1xf32>
    %578 = arith.truncf %575 : vector<32x1xf32> to vector<32x1xbf16>
    %cst_224 = arith.constant dense<0.000000e+00> : vector<32x1xf32>
    %579 = tpu.matmul %12, %578, %cst_224 {dimension_numbers = #tpu.dot_dimension_numbers<[1], [0], [0], [1], [0, 0, 1, 1], [], []>} : vector<32x32xbf16>, vector<32x1xbf16>, vector<32x1xf32> -> vector<32x1xf32>
    %580 = arith.truncf %577 : vector<32x1xf32> to vector<32x1xbf16>
    %cst_225 = arith.constant dense<0.000000e+00> : vector<32x1xf32>
    %581 = tpu.matmul %14, %580, %cst_225 {dimension_numbers = #tpu.dot_dimension_numbers<[1], [0], [0], [1], [0, 0, 1, 1], [], []>} : vector<32x32xbf16>, vector<32x1xbf16>, vector<32x1xf32> -> vector<32x1xf32>
    %582 = arith.addf %579, %581 : vector<32x1xf32>
    %cst_226 = arith.constant 0.000000e+00 : f32
    %583 = vector.broadcast %cst_226 : f32 to vector<32x1xf32>
    %584 = arith.maximumf %582, %583 : vector<32x1xf32>
    %585 = arith.truncf %573 : vector<32x16xf32> to vector<32x16xbf16>
    %cst_227 = arith.constant dense<0.000000e+00> : vector<32x16xf32>
    %586 = tpu.matmul %16, %585, %cst_227 {dimension_numbers = #tpu.dot_dimension_numbers<[1], [0], [0], [1], [0, 0, 1, 1], [], []>} : vector<32x32xbf16>, vector<32x16xbf16>, vector<32x16xf32> -> vector<32x16xf32>
    %cst_228 = arith.constant 0.000000e+00 : f32
    %587 = vector.broadcast %cst_228 : f32 to vector<32x16xf32>
    %588 = arith.maximumf %586, %587 : vector<32x16xf32>
    %589 = arith.truncf %584 : vector<32x1xf32> to vector<32x1xbf16>
    %cst_229 = arith.constant dense<0.000000e+00> : vector<2x1xf32>
    %590 = tpu.matmul %26, %589, %cst_229 {dimension_numbers = #tpu.dot_dimension_numbers<[1], [0], [0], [1], [0, 0, 1, 1], [], []>} : vector<2x32xbf16>, vector<32x1xbf16>, vector<2x1xf32> -> vector<2x1xf32>
    %591 = arith.truncf %588 : vector<32x16xf32> to vector<32x16xbf16>
    %cst_230 = arith.constant dense<0.000000e+00> : vector<2x16xf32>
    %592 = tpu.matmul %28, %591, %cst_230 {dimension_numbers = #tpu.dot_dimension_numbers<[1], [0], [0], [1], [0, 0, 1, 1], [], []>} : vector<2x32xbf16>, vector<32x16xbf16>, vector<2x16xf32> -> vector<2x16xf32>
    %593 = vector.broadcast %590 : vector<2x1xf32> to vector<2x16xf32>
    %594 = arith.addf %593, %592 : vector<2x16xf32>
    %cst_231 = arith.constant dense<0xFF800000> : vector<16xf32>
    %595 = vector.multi_reduction <maximumf>, %594, %cst_231 [0] : vector<2x16xf32> to vector<16xf32>
    %596 = vector.shape_cast %595 : vector<16xf32> to vector<1x16xf32>
    %597 = vector.broadcast %596 : vector<1x16xf32> to vector<2x16xf32>
    %598 = arith.subf %594, %597 : vector<2x16xf32>
    %599 = math.exp %598 : vector<2x16xf32>
    %cst_232 = arith.constant dense<0.000000e+00> : vector<16xf32>
    %600 = vector.multi_reduction <add>, %599, %cst_232 [0] : vector<2x16xf32> to vector<16xf32>
    %601 = vector.shape_cast %600 : vector<16xf32> to vector<1x16xf32>
    %602 = math.log %601 : vector<1x16xf32>
    %603 = arith.addf %596, %602 : vector<1x16xf32>
    %604 = vector.broadcast %603 : vector<1x16xf32> to vector<2x16xf32>
    %605 = arith.subf %594, %604 : vector<2x16xf32>
    %c3_233 = arith.constant 3 : index
    %c0_234 = arith.constant 0 : index
    %c0_235 = arith.constant 0 : index
    %606 = vector.load %arg7[%c3_233, %c0_234, %c0_235] : memref<4x2x16xf32, #tpu.memory_space<vmem>>, vector<1x2x16xf32>
    %607 = vector.shape_cast %606 : vector<1x2x16xf32> to vector<2x16xf32>
    %608 = vector.shape_cast %605 : vector<2x16xf32> to vector<1x2x16xf32>
    tpu.vector_store %arg7[%c3_233, %c0_234, %c0_235], %608 {strides = array<i32>} : memref<4x2x16xf32, #tpu.memory_space<vmem>>, vector<1x2x16xf32>,
    return
  }
  func.func @transform_0(%arg0: i32) -> (i32, i32, i32) {
    %c0_i32 = arith.constant 0 : i32
    %c0_i32_0 = arith.constant 0 : i32
    %c0_i32_1 = arith.constant 0 : i32
    return %arg0, %c0_i32, %c0_i32_0 : i32, i32, i32
  }
  func.func @transform_1(%arg0: i32) -> (i32, i32, i32) {
    %c0_i32 = arith.constant 0 : i32
    %c0_i32_0 = arith.constant 0 : i32
    %c0_i32_1 = arith.constant 0 : i32
    return %arg0, %c0_i32, %c0_i32_0 : i32, i32, i32
  }
  func.func @transform_2(%arg0: i32) -> (i32, i32, i32) {
    %c0_i32 = arith.constant 0 : i32
    %c0_i32_0 = arith.constant 0 : i32
    %c0_i32_1 = arith.constant 0 : i32
    return %arg0, %c0_i32, %c0_i32_0 : i32, i32, i32
  }
  func.func @transform_3(%arg0: i32) -> (i32, i32, i32) {
    %c0_i32 = arith.constant 0 : i32
    %c0_i32_0 = arith.constant 0 : i32
    %c0_i32_1 = arith.constant 0 : i32
    %c0_i32_2 = arith.constant 0 : i32
    return %c0_i32, %c0_i32_0, %c0_i32_1 : i32, i32, i32
  }
  func.func @transform_4(%arg0: i32) -> (i32, i32, i32) {
    %c0_i32 = arith.constant 0 : i32
    %c0_i32_0 = arith.constant 0 : i32
    %c0_i32_1 = arith.constant 0 : i32
    %c0_i32_2 = arith.constant 0 : i32
    return %c0_i32, %c0_i32_0, %c0_i32_1 : i32, i32, i32
  }
  func.func @transform_5(%arg0: i32) -> (i32, i32, i32) {
    %c0_i32 = arith.constant 0 : i32
    %c0_i32_0 = arith.constant 0 : i32
    %c0_i32_1 = arith.constant 0 : i32
    %c0_i32_2 = arith.constant 0 : i32
    return %c0_i32, %c0_i32_0, %c0_i32_1 : i32, i32, i32
  }
  func.func @transform_6(%arg0: i32) -> (i32, i32, i32) {
    %c0_i32 = arith.constant 0 : i32
    %c0_i32_0 = arith.constant 0 : i32
    %c0_i32_1 = arith.constant 0 : i32
    return %arg0, %c0_i32, %c0_i32_0 : i32, i32, i32
  }
}

</mosaic_0001>

<llo_original>
// kernel: tpu_custom_call.1
$region0: #{tpu_custom_call.1}
  #allocation0 [shape = 'u32[]', space=smem, size = 0x4, offset = 0x4, fixed_abs, tag = 'smem constant byte address 0x4 - core index']
  #allocation1 [shape = 'u32[144,128]{1,0:T(1,128)}', space=vmem, size = 0x12000, scoped, tag = 'internal scratch']
  %s0 = inlined_call_operand.vmem [shape: f32[8,1,16], index: 0, kind: input, shape index: {}]
  %s1 = inlined_call_operand.vmem [shape: f32[8,1,16], index: 1, kind: input, shape index: {}]
  %s2 = inlined_call_operand.hbm [shape: bf16[8,16,16], index: 2, kind: input, shape index: {}]
  %s3 = inlined_call_operand.vmem [shape: bf16[7,32,32], index: 3, kind: input, shape index: {}]
  %s4 = inlined_call_operand.vmem [shape: f32[4,32,1], index: 4, kind: input, shape index: {}]
  %s5 = inlined_call_operand.vmem [shape: bf16[2,2,32], index: 5, kind: input, shape index: {}]
  %s6 = inlined_call_operand.hbm [shape: f32[8,2,16], index: 6, kind: output, shape index: {}]
  %s7 = sld [smem:[#allocation0]]
  $region61: #{tpu_custom_call.1} parent=0
    _
  %s9 = ssub.s32 1, %s7
  %s10 = scalar_select 0, %s9, %s7
  $region1: #{tpu_custom_call.1} parent=0
    #allocation2 [shape = 'u8[32768]{0}', space=vmem, size = 0x8000, scoped, tag = 'input window, operand 2']
    #allocation3 [shape = 's32[2]{0}', space=sflag, size = 0x8, scoped, tag = 'scoped memory for tpu_custom_call.1']
    #allocation4 [shape = 's32[2]{0}', space=sflag, size = 0x8, scoped, tag = 'scoped memory for tpu_custom_call.1']
    #allocation5 [shape = 'u8[8192]{0}', space=vmem, size = 0x2000, scoped, tag = 'output window, operand 0']
    %11 = vsyncpa [#allocation3], 0
    %s12 = scalar_lea.sflag [#allocation3], 1
    %13 = vsyncpa %s12, 0
    %14 = vsyncpa [#allocation4], 0
    %s15 = scalar_lea.sflag [#allocation4], 1
    %16 = vsyncpa %s15, 0
    loop: start=0, step=1, limit=4
    $region2: #{tpu_custom_call.1} parent=1 // loop_pre_header
      _
    $region3: #{tpu_custom_call.1} parent=1 // loop_header
      %s18 = sphi 0, %s22
      %p19 = scmp.ge.s32.totalorder %s18, 4
      %s28 = sphi 0, %s30
      %s31 = sphi 0, %s28
      %s32 = sphi 0, %s31
      %s48 = sphi 0, %s32
      %s54 = sphi 0, %s56
      %s57 = sphi 0, %s54
      %s58 = sphi 0, %s57
      %s74 = sphi 0, %s58
      %s80 = sphi 0, %s82
      %s83 = sphi 0, %s80
      %s84 = sphi 0, %s83
      %s100 = sphi 0, %s84
      %s104 = sphi 0, %s104
      %s106 = sphi 0, %s104
      %s107 = sphi 0, %s106
      %s121 = sphi 0, %s107
      %s125 = sphi 0, %s125
      %s127 = sphi 0, %s125
      %s128 = sphi 0, %s127
      %s142 = sphi 0, %s128
      %s146 = sphi 0, %s146
      %s148 = sphi 0, %s146
      %s149 = sphi 0, %s148
      %s163 = sphi 0, %s149
      %s169 = sphi 0, %s171
      %s172 = sphi 0, %s169
      %s173 = sphi 0, %s172
      %s189 = sphi 0, %s173
    $region4: #{tpu_custom_call.1} parent=1 // loop_header_branch
      %21 = sbr.rel (%p19) target = $region8
    $region5: #{tpu_custom_call.1} parent=1 // loop_body
      %s23 = ssub.s32 %s18, 1
      %s24 = ssub.s32 %s18, 2
      %s25 = sadd.s32 %s18, 1
      %s26 = ssub.s32 %s18, %s25
      %p27 = scmp.eq.s32.totalorder %s26, 0
      %s29 = sadd.s32 %s28, 1
      %s30 = scalar_select %p27, %s28, %s29
      %p33 = pneg %p27
      %p34 = scmp.eq.s32.totalorder %s18, 1
      %p35 = por %p33, %p34
      %p36 = scmp.ne.s32.totalorder %s28, %s31
      %p37 = scmp.eq.s32.totalorder %s18, 0
      %p38 = por %p36, %p37
      %p39 = scmp.ne.s32.totalorder %s28, %s31
      %p40 = scmp.eq.s32.totalorder %s23, 1
      %p41 = por %p39, %p40
      %p42 = scmp.ne.s32.totalorder %s31, %s32
      %p43 = scmp.eq.s32.totalorder %s23, 0
      %p44 = por %p42, %p43
      %p45 = scmp.ne.s32.totalorder %s31, %s32
      %p46 = scmp.eq.s32.totalorder %s24, 1
      %p47 = por %p45, %p46
      %p49 = scmp.ne.s32.totalorder %s32, %s48
      %p50 = scmp.eq.s32.totalorder %s24, 0
      %p51 = por %p49, %p50
      %s52 = ssub.s32 %s18, %s25
      %p53 = scmp.eq.s32.totalorder %s52, 0
      %s55 = sadd.s32 %s54, 1
      %s56 = scalar_select %p53, %s54, %s55
      %p59 = pneg %p53
      %p60 = scmp.eq.s32.totalorder %s18, 1
      %p61 = por %p59, %p60
      %p62 = scmp.ne.s32.totalorder %s54, %s57
      %p63 = scmp.eq.s32.totalorder %s18, 0
      %p64 = por %p62, %p63
      %p65 = scmp.ne.s32.totalorder %s54, %s57
      %p66 = scmp.eq.s32.totalorder %s23, 1
      %p67 = por %p65, %p66
      %p68 = scmp.ne.s32.totalorder %s57, %s58
      %p69 = scmp.eq.s32.totalorder %s23, 0
      %p70 = por %p68, %p69
      %p71 = scmp.ne.s32.totalorder %s57, %s58
      %p72 = scmp.eq.s32.totalorder %s24, 1
      %p73 = por %p71, %p72
      %p75 = scmp.ne.s32.totalorder %s58, %s74
      %p76 = scmp.eq.s32.totalorder %s24, 0
      %p77 = por %p75, %p76
      %s78 = ssub.s32 %s18, %s25
      %p79 = scmp.eq.s32.totalorder %s78, 0
      %s81 = sadd.s32 %s80, 1
      %s82 = scalar_select %p79, %s80, %s81
      %p85 = pneg %p79
      %p86 = scmp.eq.s32.totalorder %s18, 1
      %p87 = por %p85, %p86
      %p88 = scmp.ne.s32.totalorder %s80, %s83
      %p89 = scmp.eq.s32.totalorder %s18, 0
      %p90 = por %p88, %p89
      %p91 = scmp.ne.s32.totalorder %s80, %s83
      %p92 = scmp.eq.s32.totalorder %s23, 1
      %p93 = por %p91, %p92
      %p94 = scmp.ne.s32.totalorder %s83, %s84
      %p95 = scmp.eq.s32.totalorder %s23, 0
      %p96 = por %p94, %p95
      %p97 = scmp.ne.s32.totalorder %s83, %s84
      %p98 = scmp.eq.s32.totalorder %s24, 1
      %p99 = por %p97, %p98
      %p101 = scmp.ne.s32.totalorder %s84, %s100
      %p102 = scmp.eq.s32.totalorder %s24, 0
      %p103 = por %p101, %p102
      %s105 = sadd.s32 %s104, 1
      %p108 = scmp.eq.s32.totalorder %s18, 1
      %p109 = scmp.ne.s32.totalorder %s104, %s106
      %p110 = scmp.eq.s32.totalorder %s18, 0
      %p111 = por %p109, %p110
      %p112 = scmp.ne.s32.totalorder %s104, %s106
      %p113 = scmp.eq.s32.totalorder %s23, 1
      %p114 = por %p112, %p113
      %p115 = scmp.ne.s32.totalorder %s106, %s107
      %p116 = scmp.eq.s32.totalorder %s23, 0
      %p117 = por %p115, %p116
      %p118 = scmp.ne.s32.totalorder %s106, %s107
      %p119 = scmp.eq.s32.totalorder %s24, 1
      %p120 = por %p118, %p119
      %p122 = scmp.ne.s32.totalorder %s107, %s121
      %p123 = scmp.eq.s32.totalorder %s24, 0
      %p124 = por %p122, %p123
      %s126 = sadd.s32 %s125, 1
      %p129 = scmp.eq.s32.totalorder %s18, 1
      %p130 = scmp.ne.s32.totalorder %s125, %s127
      %p131 = scmp.eq.s32.totalorder %s18, 0
      %p132 = por %p130, %p131
      %p133 = scmp.ne.s32.totalorder %s125, %s127
      %p134 = scmp.eq.s32.totalorder %s23, 1
      %p135 = por %p133, %p134
      %p136 = scmp.ne.s32.totalorder %s127, %s128
      %p137 = scmp.eq.s32.totalorder %s23, 0
      %p138 = por %p136, %p137
      %p139 = scmp.ne.s32.totalorder %s127, %s128
      %p140 = scmp.eq.s32.totalorder %s24, 1
      %p141 = por %p139, %p140
      %p143 = scmp.ne.s32.totalorder %s128, %s142
      %p144 = scmp.eq.s32.totalorder %s24, 0
      %p145 = por %p143, %p144
      %s147 = sadd.s32 %s146, 1
      %p150 = scmp.eq.s32.totalorder %s18, 1
      %p151 = scmp.ne.s32.totalorder %s146, %s148
      %p152 = scmp.eq.s32.totalorder %s18, 0
      %p153 = por %p151, %p152
      %p154 = scmp.ne.s32.totalorder %s146, %s148
      %p155 = scmp.eq.s32.totalorder %s23, 1
      %p156 = por %p154, %p155
      %p157 = scmp.ne.s32.totalorder %s148, %s149
      %p158 = scmp.eq.s32.totalorder %s23, 0
      %p159 = por %p157, %p158
      %p160 = scmp.ne.s32.totalorder %s148, %s149
      %p161 = scmp.eq.s32.totalorder %s24, 1
      %p162 = por %p160, %p161
      %p164 = scmp.ne.s32.totalorder %s149, %s163
      %p165 = scmp.eq.s32.totalorder %s24, 0
      %p166 = por %p164, %p165
      %s167 = ssub.s32 %s18, %s25
      %p168 = scmp.eq.s32.totalorder %s167, 0
      %s170 = sadd.s32 %s169, 1
      %s171 = scalar_select %p168, %s169, %s170
      %p174 = pneg %p168
      %p175 = scmp.eq.s32.totalorder %s18, 1
      %p176 = por %p174, %p175
      %p177 = scmp.ne.s32.totalorder %s169, %s172
      %p178 = scmp.eq.s32.totalorder %s18, 0
      %p179 = por %p177, %p178
      %p180 = scmp.ne.s32.totalorder %s169, %s172
      %p181 = scmp.eq.s32.totalorder %s23, 1
      %p182 = por %p180, %p181
      %p183 = scmp.ne.s32.totalorder %s172, %s173
      %p184 = scmp.eq.s32.totalorder %s23, 0
      %p185 = por %p183, %p184
      %p186 = scmp.ne.s32.totalorder %s172, %s173
      %p187 = scmp.eq.s32.totalorder %s24, 1
      %p188 = por %p186, %p187
      %p190 = scmp.ne.s32.totalorder %s173, %s189
      %p191 = scmp.eq.s32.totalorder %s24, 0
      %p192 = por %p190, %p191
      %p193 = scmp.le.s32.totalorder 1, %s18
      %p194 = scmp.lt.s32.totalorder %s18, 3
      %p195 = pnand %p193, %p194
      %p196 = pneg %p195
      // Predicated region
      $region9: #{tpu_custom_call.1} parent=5 // pred_check
        _
      $region10: #{tpu_custom_call.1} parent=5 // pred_check_branch
        %198 = sbr.rel (%p195) target = $region12
      $region11: #{tpu_custom_call.1} parent=5 // pred_region
        %s199 = ssub.s32 %s18, 1
        // Predicated region
        $region13: #{tpu_custom_call.1} parent=11 // pred_check
          %p200 = pneg %p117
        $region14: #{tpu_custom_call.1} parent=11 // pred_check_branch
          %202 = sbr.rel (%p200) target = $region16
        $region15: #{tpu_custom_call.1} parent=11 // pred_region
          _
        $region16: #{tpu_custom_call.1} parent=11 // pred_fallthru
          _
        // Predicated region
        $region17: #{tpu_custom_call.1} parent=11 // pred_check
          %p203 = pneg %p138
        $region18: #{tpu_custom_call.1} parent=11 // pred_check_branch
          %205 = sbr.rel (%p203) target = $region20
        $region19: #{tpu_custom_call.1} parent=11 // pred_region
          _
        $region20: #{tpu_custom_call.1} parent=11 // pred_fallthru
          _
        // Predicated region
        $region21: #{tpu_custom_call.1} parent=11 // pred_check
          %p206 = pneg %p159
        $region22: #{tpu_custom_call.1} parent=11 // pred_check_branch
          %208 = sbr.rel (%p206) target = $region24
        $region23: #{tpu_custom_call.1} parent=11 // pred_region
          _
        $region24: #{tpu_custom_call.1} parent=11 // pred_fallthru
          _
      $region12: #{tpu_custom_call.1} parent=5 // pred_fallthru
        _
      %p209 = scmp.lt.s32.totalorder %s18, 2
      // Predicated region
      $region25: #{tpu_custom_call.1} parent=5 // pred_check
        %p210 = pneg %p209
      $region26: #{tpu_custom_call.1} parent=5 // pred_check_branch
        %212 = sbr.rel (%p210) target = $region28
      $region27: #{tpu_custom_call.1} parent=5 // pred_region
        // Predicated region
        $region29: #{tpu_custom_call.1} parent=27 // pred_check
          %p213 = pneg %p38
        $region30: #{tpu_custom_call.1} parent=27 // pred_check_branch
          %215 = sbr.rel (%p213) target = $region32
        $region31: #{tpu_custom_call.1} parent=27 // pred_region
          %s216 = smul.u32 4, %s18
          %p217 = scmp.lt.s32.totalorder %s216, 7
          %s218 = scalar_select %p217, %s216, 7
          %s219 = scalar_lea.vmem %s0, %s218
          %s220 = smul.u32 4, %s18
        $region32: #{tpu_custom_call.1} parent=27 // pred_fallthru
          _
        // Predicated region
        $region33: #{tpu_custom_call.1} parent=27 // pred_check
          %p221 = pneg %p64
        $region34: #{tpu_custom_call.1} parent=27 // pred_check_branch
          %223 = sbr.rel (%p221) target = $region36
        $region35: #{tpu_custom_call.1} parent=27 // pred_region
          %s224 = smul.u32 4, %s18
          %p225 = scmp.lt.s32.totalorder %s224, 7
          %s226 = scalar_select %p225, %s224, 7
          %s227 = scalar_lea.vmem %s1, %s226
          %s228 = smul.u32 4, %s18
        $region36: #{tpu_custom_call.1} parent=27 // pred_fallthru
          _
        // Predicated region
        $region37: #{tpu_custom_call.1} parent=27 // pred_check
          %p229 = pneg %p90
        $region38: #{tpu_custom_call.1} parent=27 // pred_check_branch
          %231 = sbr.rel (%p229) target = $region40
        $region39: #{tpu_custom_call.1} parent=27 // pred_region
          %s232 = sand.u32 %s80, 1
          %s233 = scalar_lea.sflag [#allocation3], %s232
          %s234 = sand.u32 %s80, 1
          %s235 = smul.addr %s234, 32
          %s236 = scalar_lea.vmem [#allocation2], %s235
          %s237 = smul.u32 4, %s18
          %s239 = ssub.s32 512, 512
          %240 = vsyncadd %s233, %s239
          %s241 = smul.addr %s237, 2
          %s242 = smul.addr %s241, 64
          %s243 = scalar_lea.hbm %s2, %s242
          %s244 = sshll.u32 %s236, 4
          %s245 = int_to_ptr.vmem [resolvable:$true] %s244
          %250 = dma.hbm_to_vmem [thread:$0]  %s243, 512, %s245, %s233, 64, 64, 4
        $region40: #{tpu_custom_call.1} parent=27 // pred_fallthru
          _
      $region28: #{tpu_custom_call.1} parent=5 // pred_fallthru
        _
      %p251 = scmp.le.s32.totalorder 1, %s18
      %p252 = scmp.lt.s32.totalorder %s18, 3
      %p253 = pnand %p251, %p252
      %p254 = pneg %p253
      // Predicated region
      $region41: #{tpu_custom_call.1} parent=5 // pred_check
        _
      $region42: #{tpu_custom_call.1} parent=5 // pred_check_branch
        %256 = sbr.rel (%p253) target = $region44
      $region43: #{tpu_custom_call.1} parent=5 // pred_region
        %s257 = ssub.s32 %s18, 1
        %s258 = sand.u32 %s83, 1
        %s259 = scalar_lea.sflag [#allocation3], %s258
        %s260 = sand.u32 %s83, 1
        %s261 = smul.addr %s260, 32
        %s262 = scalar_lea.vmem [#allocation2], %s261
        // Predicated region
        $region45: #{tpu_custom_call.1} parent=43 // pred_check
          %p263 = pneg %p96
        $region46: #{tpu_custom_call.1} parent=43 // pred_check_branch
          %265 = sbr.rel (%p263) target = $region48
        $region47: #{tpu_custom_call.1} parent=43 // pred_region
          %266 = dma.done %s259, 512
        $region48: #{tpu_custom_call.1} parent=43 // pred_fallthru
          _
        %s267 = smul.u32 4, %s23
        %p268 = scmp.lt.s32.totalorder %s267, 7
        %s269 = scalar_select %p268, %s267, 7
        %s270 = scalar_lea.vmem %s0, %s269
        %p271 = pneg %p44
        %p272 = pneg %p41
        %s273 = smul.u32 4, %s23
        %p274 = scmp.lt.s32.totalorder %s273, 7
        %s275 = scalar_select %p274, %s273, 7
        %s276 = scalar_lea.vmem %s1, %s275
        %p277 = pneg %p70
        %p278 = pneg %p67
        %s279 = sand.u32 %s83, 1
        %s280 = scalar_lea.sflag [#allocation3], %s279
        %s281 = sand.u32 %s83, 1
        %s282 = smul.addr %s281, 32
        %s283 = scalar_lea.vmem [#allocation2], %s282
        %p284 = pneg %p96
        %p285 = pneg %p93
        %p286 = pneg %p117
        %p287 = pneg %p114
        %p288 = pneg %p138
        %p289 = pneg %p135
        %p290 = pneg %p159
        %p291 = pneg %p156
        %p292 = pneg %p185
        %p293 = pneg %p182
        %s294 = sand.u32 %s172, 1
        %s295 = scalar_lea.sflag [#allocation4], %s294
        %s296 = sand.u32 %s172, 1
        %s297 = smul.addr %s296, 8
        %s298 = scalar_lea.vmem [#allocation5], %s297
        %s299 = smul.u32 4, %s23
        %p300 = scmp.lt.s32.totalorder %s299, 7
        %s301 = scalar_select %p300, %s299, 7
        %s302 = scalar_lea.vmem %s0, %s301
        %s303 = smul.u32 4, %s23
        %s304 = smul.u32 4, %s23
        %p305 = scmp.lt.s32.totalorder %s304, 7
        %s306 = scalar_select %p305, %s304, 7
        %s307 = scalar_lea.vmem %s1, %s306
        %s308 = smul.u32 4, %s23
        %s309 = smul.u32 4, %s23
        %s310 = smul.u32 4, %s23
        %v312 = vld [vmem:[%s3] sm:$0xf]
        %v313 = vld [vmem:[%s3 + $0x4] sm:$0xf]
        %v314 = vld [vmem:[%s3 + $0x8] sm:$0xf]
        %v315 = vld [vmem:[%s3 + $0xc] sm:$0xf]
        %v316 = vld [vmem:[%s3 + $0x10] sm:$0xf]
        %v317 = vld [vmem:[%s3 + $0x14] sm:$0xf]
        %v318 = vld [vmem:[%s3 + $0x18] sm:$0xf]
        %v319 = vld [vmem:[%s3 + $0x1c] sm:$0xf]
        %v320 = vld [vmem:[%s3 + $0x20] sm:$0xf]
        %v321 = vld [vmem:[%s3 + $0x24] sm:$0xf]
        %v322 = vld [vmem:[%s3 + $0x28] sm:$0xf]
        %v323 = vld [vmem:[%s3 + $0x2c] sm:$0xf]
        %v324 = vld [vmem:[%s3 + $0x30] sm:$0xf]
        %v325 = vld [vmem:[%s3 + $0x34] sm:$0xf]
        %v326 = vld [vmem:[%s3 + $0x38] sm:$0xf]
        %v327 = vld [vmem:[%s3 + $0x3c] sm:$0xf]
        %v328 = vld [vmem:[%s3 + $0x40] sm:$0xf]
        %v329 = vld [vmem:[%s3 + $0x44] sm:$0xf]
        %v330 = vld [vmem:[%s3 + $0x48] sm:$0xf]
        %v331 = vld [vmem:[%s3 + $0x4c] sm:$0xf]
        %v332 = vld [vmem:[%s3 + $0x50] sm:$0xf]
        %v333 = vld [vmem:[%s3 + $0x54] sm:$0xf]
        %v334 = vld [vmem:[%s3 + $0x58] sm:$0xf]
        %v335 = vld [vmem:[%s3 + $0x5c] sm:$0xf]
        %v336 = vld [vmem:[%s3 + $0x60] sm:$0xf]
        %v337 = vld [vmem:[%s3 + $0x64] sm:$0xf]
        %v338 = vld [vmem:[%s3 + $0x68] sm:$0xf]
        %v339 = vld [vmem:[%s3 + $0x6c] sm:$0xf]
        %v340 = vld [vmem:[%s4] sm:$0xff]
        %v341 = vld [vmem:[%s4 + $0x8] sm:$0xff]
        %v342 = vld [vmem:[%s4 + $0x10] sm:$0xff]
        %v343 = vld [vmem:[%s4 + $0x18] sm:$0xff]
        %v344 = vld [vmem:[%s4 + $0x20] sm:$0xff]
        %v345 = vld [vmem:[%s4 + $0x28] sm:$0xff]
        %v346 = vld [vmem:[%s4 + $0x30] sm:$0xff]
        %v347 = vld [vmem:[%s4 + $0x38] sm:$0xff]
        %v348 = vld [vmem:[%s4 + $0x40] sm:$0xff]
        %v349 = vld [vmem:[%s4 + $0x48] sm:$0xff]
        %v350 = vld [vmem:[%s4 + $0x50] sm:$0xff]
        %v351 = vld [vmem:[%s4 + $0x58] sm:$0xff]
        %v352 = vld [vmem:[%s4 + $0x60] sm:$0xff]
        %v353 = vld [vmem:[%s4 + $0x68] sm:$0xff]
        %v354 = vld [vmem:[%s4 + $0x70] sm:$0xff]
        %v355 = vld [vmem:[%s4 + $0x78] sm:$0xff]
        %v356 = vld [vmem:[%s5] sm:$0x1]
        %v357 = vld [vmem:[%s5 + $0x1] sm:$0x1]
        %v358 = vld [vmem:[%s262] sm:$0xf]
        %v359 = vld [vmem:[%s262 + $0x4] sm:$0xf]
        %v360 = vld [vmem:[%s302] sm:$0x1]
        %v361 = vld [vmem:[%s307] sm:$0x1]
        %v362 = vmax.bf16 %v358, 0
        %v363 = vmax.bf16 %v359, 0
        %v364 = vunpack.c.l.bf16 %v362
        %v365 = vunpack.c.l.bf16 %v363
        %v366 = vsub.bf16 0, %v358
        %v367 = vsub.bf16 0, %v359
        %v368 = vmax.bf16 %v366, 0
        %v369 = vmax.bf16 %v367, 0
        %v370 = vunpack.c.l.bf16 %v368
        %v371 = vunpack.c.l.bf16 %v369
        %vm372 = vcmask 130048
        %v373 = vsel %vm372, %v364, 0.0
        %374 = vadd.xlane.f32.xlu0 %v373
        %v375 = vpop.xlane.xlu0 %374
        %v376 = vsel %vm372, %v365, 0.0
        %377 = vadd.xlane.f32.xlu0 %v376
        %v378 = vpop.xlane.xlu0 %377
        %v379 = vsel %vm372, %v370, 0.0
        %380 = vadd.xlane.f32.xlu0 %v379
        %v381 = vpop.xlane.xlu0 %380
        %v382 = vsel %vm372, %v371, 0.0
        %383 = vadd.xlane.f32.xlu0 %v382
        %v384 = vpop.xlane.xlu0 %383
        %v385 = vadd.f32 %v373, %v376
        %v386 = vrot.slane %v385, 4
        %v387 = vadd.f32 %v385, %v386
        %v388 = vrot.slane %v387, 2
        %v389 = vadd.f32 %v387, %v388
        %v390 = vrot.slane %v389, 1
        %v391 = vadd.f32 %v389, %v390
        %v392 = vadd.f32 %v379, %v382
        %v393 = vrot.slane %v392, 4
        %v394 = vadd.f32 %v392, %v393
        %v395 = vrot.slane %v394, 2
        %v396 = vadd.f32 %v394, %v395
        %v397 = vrot.slane %v396, 1
        %v398 = vadd.f32 %v396, %v397
        %v399 = vmax.f32 %v348, 0.0
        %v400 = vmax.f32 %v349, 0.0
        %v401 = vmax.f32 %v350, 0.0
        %v402 = vmax.f32 %v351, 0.0
        %403 = vxpose.xlu0.b32.start [1/16] %v375, 128
        %404 = vxpose.xlu0.b32.cont [2/16] %v378, 128
        %405 = vxpose.xlu0.b32.cont [3/16] 0.0, 128
        %406 = vxpose.xlu0.b32.cont [4/16] 0.0, 128
        %407 = vxpose.xlu0.b32.cont [5/16] 0.0, 128
        %408 = vxpose.xlu0.b32.cont [6/16] 0.0, 128
        %409 = vxpose.xlu0.b32.cont [7/16] 0.0, 128
        %410 = vxpose.xlu0.b32.cont [8/16] 0.0, 128
        %411 = vxpose.xlu0.b32.cont [9/16] 0.0, 128
        %412 = vxpose.xlu0.b32.cont [10/16] 0.0, 128
        %413 = vxpose.xlu0.b32.cont [11/16] 0.0, 128
        %414 = vxpose.xlu0.b32.cont [12/16] 0.0, 128
        %415 = vxpose.xlu0.b32.cont [13/16] 0.0, 128
        %416 = vxpose.xlu0.b32.cont [14/16] 0.0, 128
        %417 = vxpose.xlu0.b32.cont [15/16] 0.0, 128
        %418 = vxpose.xlu0.b32.end [16/16] 0.0, 128
        %v419 = vpop.trf.xlu0
        %v420 = vpop.trf.xlu0
        %v421 = vpop.trf.xlu0
        %v422 = vpop.trf.xlu0
        %v423 = vpop.trf.xlu0
        %v424 = vpop.trf.xlu0
        %v425 = vpop.trf.xlu0
        %v426 = vpop.trf.xlu0
        %v427 = vpop.trf.xlu0
        %v428 = vpop.trf.xlu0
        %v429 = vpop.trf.xlu0
        %v430 = vpop.trf.xlu0
        %v431 = vpop.trf.xlu0
        %v432 = vpop.trf.xlu0
        %v433 = vpop.trf.xlu0
        %v434 = vpop.trf.xlu0
        %436 = vset.pattern.permute.xlu0 0
        %437 = vperm.xlu0 %436, %v399
        %v438 = vpop.permute.xlu0 %437
        %441 = vset.pattern.permute.xlu0 0
        %442 = vperm.xlu0 %441, %v400
        %v443 = vpop.permute.xlu0 %442
        %446 = vset.pattern.permute.xlu0 0
        %447 = vperm.xlu0 %446, %v401
        %v448 = vpop.permute.xlu0 %447
        %451 = vset.pattern.permute.xlu0 0
        %452 = vperm.xlu0 %451, %v402
        %v453 = vpop.permute.xlu0 %452
        %v455 = vlaneseq
        %v456 = vshrl.u32 %v455, 7
        %v457 = vsub.s32 0, %v456
        %v458 = vrot.slane %v419, %v457
        %v459 = vmul.f32 %v438, %v458
        %v460 = vmul.f32 %v443, %v458
        %v461 = vmul.f32 %v448, %v458
        %v462 = vmul.f32 %v453, %v458
        %v463 = vsub.f32 0.0, %v348
        %v464 = vsub.f32 0.0, %v349
        %v465 = vsub.f32 0.0, %v350
        %v466 = vsub.f32 0.0, %v351
        %v467 = vmax.f32 %v463, 0.0
        %v468 = vmax.f32 %v464, 0.0
        %v469 = vmax.f32 %v465, 0.0
        %v470 = vmax.f32 %v466, 0.0
        %471 = vxpose.xlu0.b32.start [1/16] %v381, 128
        %472 = vxpose.xlu0.b32.cont [2/16] %v384, 128
        %473 = vxpose.xlu0.b32.cont [3/16] 0.0, 128
        %474 = vxpose.xlu0.b32.cont [4/16] 0.0, 128
        %475 = vxpose.xlu0.b32.cont [5/16] 0.0, 128
        %476 = vxpose.xlu0.b32.cont [6/16] 0.0, 128
        %477 = vxpose.xlu0.b32.cont [7/16] 0.0, 128
        %478 = vxpose.xlu0.b32.cont [8/16] 0.0, 128
        %479 = vxpose.xlu0.b32.cont [9/16] 0.0, 128
        %480 = vxpose.xlu0.b32.cont [10/16] 0.0, 128
        %481 = vxpose.xlu0.b32.cont [11/16] 0.0, 128
        %482 = vxpose.xlu0.b32.cont [12/16] 0.0, 128
        %483 = vxpose.xlu0.b32.cont [13/16] 0.0, 128
        %484 = vxpose.xlu0.b32.cont [14/16] 0.0, 128
        %485 = vxpose.xlu0.b32.cont [15/16] 0.0, 128
        %486 = vxpose.xlu0.b32.end [16/16] 0.0, 128
        %v487 = vpop.trf.xlu0
        %v488 = vpop.trf.xlu0
        %v489 = vpop.trf.xlu0
        %v490 = vpop.trf.xlu0
        %v491 = vpop.trf.xlu0
        %v492 = vpop.trf.xlu0
        %v493 = vpop.trf.xlu0
        %v494 = vpop.trf.xlu0
        %v495 = vpop.trf.xlu0
        %v496 = vpop.trf.xlu0
        %v497 = vpop.trf.xlu0
        %v498 = vpop.trf.xlu0
        %v499 = vpop.trf.xlu0
        %v500 = vpop.trf.xlu0
        %v501 = vpop.trf.xlu0
        %v502 = vpop.trf.xlu0
        %504 = vset.pattern.permute.xlu0 0
        %505 = vperm.xlu0 %504, %v467
        %v506 = vpop.permute.xlu0 %505
        %509 = vset.pattern.permute.xlu0 0
        %510 = vperm.xlu0 %509, %v468
        %v511 = vpop.permute.xlu0 %510
        %514 = vset.pattern.permute.xlu0 0
        %515 = vperm.xlu0 %514, %v469
        %v516 = vpop.permute.xlu0 %515
        %519 = vset.pattern.permute.xlu0 0
        %520 = vperm.xlu0 %519, %v470
        %v521 = vpop.permute.xlu0 %520
        %v523 = vlaneseq
        %v524 = vshrl.u32 %v523, 7
        %v525 = vsub.s32 0, %v524
        %v526 = vrot.slane %v487, %v525
        %v527 = vmul.f32 %v506, %v526
        %v528 = vmul.f32 %v511, %v526
        %v529 = vmul.f32 %v516, %v526
        %v530 = vmul.f32 %v521, %v526
        %v531 = vadd.f32 %v459, %v527
        %v532 = vadd.f32 %v460, %v528
        %v533 = vadd.f32 %v461, %v529
        %v534 = vadd.f32 %v462, %v530
        %v535 = vmax.f32 %v352, 0.0
        %v536 = vmax.f32 %v353, 0.0
        %v537 = vmax.f32 %v354, 0.0
        %v538 = vmax.f32 %v355, 0.0
        %540 = vset.pattern.permute.xlu0 0
        %541 = vperm.xlu0 %540, %v535
        %v542 = vpop.permute.xlu0 %541
        %545 = vset.pattern.permute.xlu0 0
        %546 = vperm.xlu0 %545, %v536
        %v547 = vpop.permute.xlu0 %546
        %550 = vset.pattern.permute.xlu0 0
        %551 = vperm.xlu0 %550, %v537
        %v552 = vpop.permute.xlu0 %551
        %555 = vset.pattern.permute.xlu0 0
        %556 = vperm.xlu0 %555, %v538
        %v557 = vpop.permute.xlu0 %556
        %v559 = vmul.f32 %v542, %v391
        %v560 = vmul.f32 %v547, %v391
        %v561 = vmul.f32 %v552, %v391
        %v562 = vmul.f32 %v557, %v391
        %v563 = vsub.f32 0.0, %v352
        %v564 = vsub.f32 0.0, %v353
        %v565 = vsub.f32 0.0, %v354
        %v566 = vsub.f32 0.0, %v355
        %v567 = vmax.f32 %v563, 0.0
        %v568 = vmax.f32 %v564, 0.0
        %v569 = vmax.f32 %v565, 0.0
        %v570 = vmax.f32 %v566, 0.0
        %572 = vset.pattern.permute.xlu0 0
        %573 = vperm.xlu0 %572, %v567
        %v574 = vpop.permute.xlu0 %573
        %577 = vset.pattern.permute.xlu0 0
        %578 = vperm.xlu0 %577, %v568
        %v579 = vpop.permute.xlu0 %578
        %582 = vset.pattern.permute.xlu0 0
        %583 = vperm.xlu0 %582, %v569
        %v584 = vpop.permute.xlu0 %583
        %587 = vset.pattern.permute.xlu0 0
        %588 = vperm.xlu0 %587, %v570
        %v589 = vpop.permute.xlu0 %588
        %v591 = vmul.f32 %v574, %v398
        %v592 = vmul.f32 %v579, %v398
        %v593 = vmul.f32 %v584, %v398
        %v594 = vmul.f32 %v589, %v398
        %v595 = vadd.f32 %v559, %v591
        %v596 = vadd.f32 %v560, %v592
        %v597 = vadd.f32 %v561, %v593
        %v598 = vadd.f32 %v562, %v594
        %600 = vset.pattern.permute.xlu0 0
        %601 = vperm.xlu0 %600, %v340
        %v602 = vpop.permute.xlu0 %601
        %605 = vset.pattern.permute.xlu0 0
        %606 = vperm.xlu0 %605, %v341
        %v607 = vpop.permute.xlu0 %606
        %610 = vset.pattern.permute.xlu0 0
        %611 = vperm.xlu0 %610, %v342
        %v612 = vpop.permute.xlu0 %611
        %615 = vset.pattern.permute.xlu0 0
        %616 = vperm.xlu0 %615, %v343
        %v617 = vpop.permute.xlu0 %616
        %v620 = vlaneseq
        %v621 = vshrl.u32 %v620, 7
        %v622 = vsub.s32 0, %v621
        %v623 = vrot.slane %v360, %v622
        %v625 = vmul.f32 %v602, %v623
        %v626 = vmul.f32 %v607, %v623
        %v627 = vmul.f32 %v612, %v623
        %v628 = vmul.f32 %v617, %v623
        %630 = vset.pattern.permute.xlu0 0
        %631 = vperm.xlu0 %630, %v344
        %v632 = vpop.permute.xlu0 %631
        %635 = vset.pattern.permute.xlu0 0
        %636 = vperm.xlu0 %635, %v345
        %v637 = vpop.permute.xlu0 %636
        %640 = vset.pattern.permute.xlu0 0
        %641 = vperm.xlu0 %640, %v346
        %v642 = vpop.permute.xlu0 %641
        %645 = vset.pattern.permute.xlu0 0
        %646 = vperm.xlu0 %645, %v347
        %v647 = vpop.permute.xlu0 %646
        %v650 = vlaneseq
        %v651 = vshrl.u32 %v650, 7
        %v652 = vsub.s32 0, %v651
        %v653 = vrot.slane %v361, %v652
        %v655 = vmul.f32 %v632, %v653
        %v656 = vmul.f32 %v637, %v653
        %v657 = vmul.f32 %v642, %v653
        %v658 = vmul.f32 %v647, %v653
        %v659 = vpack.c.bf16 %v532, %v531
        %v660 = vpack.c.bf16 %v534, %v533
        %v665 = vunpack.c.l.b16 %v320
        %v666 = vunpack.c.l.b16 %v321
        %v667 = vunpack.c.l.b16 %v322
        %v668 = vunpack.c.l.b16 %v323
        %v669 = vpack.c.b16 %v666, %v665
        %v670 = vpack.c.b16 %v668, %v667
        %vm671 = vcmask 261120
        %v673 = vsel %vm671, %v669, 0
        %v676 = vsel %vm671, %v670, 0
        %678 = vmatprep.subr.bf16.mxu0 0
        %679 = vmatpush1.bf16.msra.mxu0 %v659
        %680 = vmatprep.subr.bf16.mxu0 0
        %681 = vmatpush1.bf16.msra.mxu0 %v660
        %682 = vmatprep.subr.bf16.mxu0 0
        %683 = vmatpush1.bf16.msra.mxu0 0
        %684 = vmatprep.subr.bf16.mxu0 0
        %685 = vmatpush1.bf16.msra.mxu0 0
        %686 = vmatprep.subr.bf16.mxu0 0
        %687 = vmatpush1.bf16.msra.mxu0 0
        %688 = vmatprep.subr.bf16.mxu0 0
        %689 = vmatpush1.bf16.msra.mxu0 0
        %690 = vmatprep.subr.bf16.mxu0 0
        %691 = vmatpush1.bf16.msra.mxu0 0
        %692 = vmatprep.subr.bf16.mxu0 0
        %693 = vmatpush1.bf16.msra.mxu0 0
        %694 = vmatprep.subr.bf16.mxu0 0
        %695 = vmatpush1.bf16.msra.mxu0 0
        %696 = vmatprep.subr.bf16.mxu0 0
        %697 = vmatpush1.bf16.msra.mxu0 0
        %698 = vmatprep.subr.bf16.mxu0 0
        %699 = vmatpush1.bf16.msra.mxu0 0
        %700 = vmatprep.subr.bf16.mxu0 0
        %701 = vmatpush1.bf16.msra.mxu0 0
        %702 = vmatprep.subr.bf16.mxu0 0
        %703 = vmatpush1.bf16.msra.mxu0 0
        %704 = vmatprep.subr.bf16.mxu0 0
        %705 = vmatpush1.bf16.msra.mxu0 0
        %706 = vmatprep.subr.bf16.mxu0 0
        %707 = vmatpush1.bf16.msra.mxu0 0
        %708 = vmatprep.subr.bf16.mxu0 0
        %709 = vmatpush1.bf16.msra.mxu0 0
        %710 = vmatprep.mubr.bf16.mxu0 0
        %711 = vmatmul.mubr.bf16.gmra.mrb[0].mxu0 %v673
        %v712 = vpop.f32.mrb[0].mxu0
        %v713 = vadd.f32 0.0, %v712
        %v714 = vpop.f32.mrb[0].mxu0
        %v715 = vpop.f32.mrb[0].mxu0
        %v716 = vadd.f32 0.0, %v715
        %v717 = vpop.f32.mrb[0].mxu0
        %718 = vmatprep.mubr.bf16.mxu0 0
        %719 = vmatmul.mubr.bf16.gmra.mrb[0].mxu0 %v676
        %v720 = vpop.f32.mrb[0].mxu0
        %v721 = vadd.f32 0.0, %v720
        %v722 = vpop.f32.mrb[0].mxu0
        %v723 = vpop.f32.mrb[0].mxu0
        %v724 = vadd.f32 0.0, %v723
        %v725 = vpop.f32.mrb[0].mxu0
        %726 = vdwg.mxu0
        %v727 = vpack.c.bf16 %v596, %v595
        %v728 = vpack.c.bf16 %v598, %v597
        %v733 = vunpack.c.l.b16 %v324
        %v734 = vunpack.c.l.b16 %v325
        %v735 = vunpack.c.l.b16 %v326
        %v736 = vunpack.c.l.b16 %v327
        %v737 = vpack.c.b16 %v734, %v733
        %v738 = vpack.c.b16 %v736, %v735
        %v740 = vsel %vm671, %v737, 0
        %v743 = vsel %vm671, %v738, 0
        %745 = vmatprep.subr.bf16.mxu0 0
        %746 = vmatpush1.bf16.msra.mxu0 %v727
        %747 = vmatprep.subr.bf16.mxu0 0
        %748 = vmatpush1.bf16.msra.mxu0 %v728
        %749 = vmatprep.subr.bf16.mxu0 0
        %750 = vmatpush1.bf16.msra.mxu0 0
        %751 = vmatprep.subr.bf16.mxu0 0
        %752 = vmatpush1.bf16.msra.mxu0 0
        %753 = vmatprep.subr.bf16.mxu0 0
        %754 = vmatpush1.bf16.msra.mxu0 0
        %755 = vmatprep.subr.bf16.mxu0 0
        %756 = vmatpush1.bf16.msra.mxu0 0
        %757 = vmatprep.subr.bf16.mxu0 0
        %758 = vmatpush1.bf16.msra.mxu0 0
        %759 = vmatprep.subr.bf16.mxu0 0
        %760 = vmatpush1.bf16.msra.mxu0 0
        %761 = vmatprep.subr.bf16.mxu0 0
        %762 = vmatpush1.bf16.msra.mxu0 0
        %763 = vmatprep.subr.bf16.mxu0 0
        %764 = vmatpush1.bf16.msra.mxu0 0
        %765 = vmatprep.subr.bf16.mxu0 0
        %766 = vmatpush1.bf16.msra.mxu0 0
        %767 = vmatprep.subr.bf16.mxu0 0
        %768 = vmatpush1.bf16.msra.mxu0 0
        %769 = vmatprep.subr.bf16.mxu0 0
        %770 = vmatpush1.bf16.msra.mxu0 0
        %771 = vmatprep.subr.bf16.mxu0 0
        %772 = vmatpush1.bf16.msra.mxu0 0
        %773 = vmatprep.subr.bf16.mxu0 0
        %774 = vmatpush1.bf16.msra.mxu0 0
        %775 = vmatprep.subr.bf16.mxu0 0
        %776 = vmatpush1.bf16.msra.mxu0 0
        %777 = vmatprep.mubr.bf16.mxu0 0
        %778 = vmatmul.mubr.bf16.gmra.mrb[0].mxu0 %v740
        %v779 = vpop.f32.mrb[0].mxu0
        %v780 = vadd.f32 0.0, %v779
        %v781 = vpop.f32.mrb[0].mxu0
        %v782 = vpop.f32.mrb[0].mxu0
        %v783 = vadd.f32 0.0, %v782
        %v784 = vpop.f32.mrb[0].mxu0
        %785 = vmatprep.mubr.bf16.mxu0 0
        %786 = vmatmul.mubr.bf16.gmra.mrb[0].mxu0 %v743
        %v787 = vpop.f32.mrb[0].mxu0
        %v788 = vadd.f32 0.0, %v787
        %v789 = vpop.f32.mrb[0].mxu0
        %v790 = vpop.f32.mrb[0].mxu0
        %v791 = vadd.f32 0.0, %v790
        %v792 = vpop.f32.mrb[0].mxu0
        %793 = vdwg.mxu0
        %v798 = vunpack.c.l.b16 %v312
        %v799 = vunpack.c.l.b16 %v313
        %v800 = vunpack.c.l.b16 %v314
        %v801 = vunpack.c.l.b16 %v315
        %v802 = vpack.c.b16 %v799, %v798
        %v803 = vpack.c.b16 %v801, %v800
        %v805 = vsel %vm671, %v802, 0
        %v808 = vsel %vm671, %v803, 0
        %810 = vmatprep.subr.bf16.mxu0 0
        %811 = vmatpush1.bf16.msra.mxu0 0
        %812 = vmatprep.subr.bf16.mxu0 0
        %813 = vmatpush1.bf16.msra.mxu0 0
        %814 = vmatprep.subr.bf16.mxu0 0
        %815 = vmatpush1.bf16.msra.mxu0 0
        %816 = vmatprep.subr.bf16.mxu0 0
        %817 = vmatpush1.bf16.msra.mxu0 0
        %818 = vmatprep.subr.bf16.mxu0 0
        %819 = vmatpush1.bf16.msra.mxu0 0
        %820 = vmatprep.subr.bf16.mxu0 0
        %821 = vmatpush1.bf16.msra.mxu0 0
        %822 = vmatprep.subr.bf16.mxu0 0
        %823 = vmatpush1.bf16.msra.mxu0 0
        %824 = vmatprep.subr.bf16.mxu0 0
        %825 = vmatpush1.bf16.msra.mxu0 0
        %826 = vmatprep.subr.bf16.mxu0 0
        %827 = vmatpush1.bf16.msra.mxu0 0
        %828 = vmatprep.subr.bf16.mxu0 0
        %829 = vmatpush1.bf16.msra.mxu0 0
        %830 = vmatprep.subr.bf16.mxu0 0
        %831 = vmatpush1.bf16.msra.mxu0 0
        %832 = vmatprep.subr.bf16.mxu0 0
        %833 = vmatpush1.bf16.msra.mxu0 0
        %834 = vmatprep.subr.bf16.mxu0 0
        %835 = vmatpush1.bf16.msra.mxu0 0
        %836 = vmatprep.subr.bf16.mxu0 0
        %837 = vmatpush1.bf16.msra.mxu0 0
        %838 = vmatprep.subr.bf16.mxu0 0
        %839 = vmatpush1.bf16.msra.mxu0 0
        %840 = vmatprep.subr.bf16.mxu0 0
        %841 = vmatpush1.bf16.msra.mxu0 0
        %842 = vmatprep.mubr.bf16.mxu0 0
        %843 = vmatmul.mubr.bf16.gmra.mrb[0].mxu0 %v805
        %v844 = vpop.f32.mrb[0].mxu0
        %v845 = vadd.f32 0.0, %v844
        %v846 = vpop.f32.mrb[0].mxu0
        %v847 = vpop.f32.mrb[0].mxu0
        %v848 = vadd.f32 0.0, %v847
        %v849 = vpop.f32.mrb[0].mxu0
        %850 = vmatprep.mubr.bf16.mxu0 0
        %851 = vmatmul.mubr.bf16.gmra.mrb[0].mxu0 %v808
        %v852 = vpop.f32.mrb[0].mxu0
        %v853 = vadd.f32 0.0, %v852
        %v854 = vpop.f32.mrb[0].mxu0
        %v855 = vpop.f32.mrb[0].mxu0
        %v856 = vadd.f32 0.0, %v855
        %v857 = vpop.f32.mrb[0].mxu0
        %858 = vdwg.mxu0
        %v859 = vpack.c.bf16 %v848, %v845
        %v860 = vpack.c.bf16 %v856, %v853
        %v863 = vunpack.c.l.b16 %v358
        %v864 = vunpack.c.l.b16 %v359
        %v865 = vpack.c.b16 %v864, %v863
        %v867 = vsel %vm372, %v859, 0
        %v870 = vsel %vm372, %v860, 0
        %v873 = vsel %vm372, %v865, 0
        %875 = vmatprep.subr.bf16.mxu0 0
        %876 = vmatpush1.bf16.xpose.msra.mxu0 %v873
        %877 = vmatprep.subr.bf16.mxu0 0
        %878 = vmatpush1.bf16.xpose.msra.mxu0 0
        %879 = vmatprep.subr.bf16.mxu0 0
        %880 = vmatpush1.bf16.xpose.msra.mxu0 0
        %881 = vmatprep.subr.bf16.mxu0 0
        %882 = vmatpush1.bf16.xpose.msra.mxu0 0
        %883 = vmatprep.subr.bf16.mxu0 0
        %884 = vmatpush1.bf16.xpose.msra.mxu0 0
        %885 = vmatprep.subr.bf16.mxu0 0
        %886 = vmatpush1.bf16.xpose.msra.mxu0 0
        %887 = vmatprep.subr.bf16.mxu0 0
        %888 = vmatpush1.bf16.xpose.msra.mxu0 0
        %889 = vmatprep.subr.bf16.mxu0 0
        %890 = vmatpush1.bf16.xpose.msra.mxu0 0
        %891 = vmatprep.subr.bf16.mxu0 0
        %892 = vmatpush1.bf16.xpose.msra.mxu0 0
        %893 = vmatprep.subr.bf16.mxu0 0
        %894 = vmatpush1.bf16.xpose.msra.mxu0 0
        %895 = vmatprep.subr.bf16.mxu0 0
        %896 = vmatpush1.bf16.xpose.msra.mxu0 0
        %897 = vmatprep.subr.bf16.mxu0 0
        %898 = vmatpush1.bf16.xpose.msra.mxu0 0
        %899 = vmatprep.subr.bf16.mxu0 0
        %900 = vmatpush1.bf16.xpose.msra.mxu0 0
        %901 = vmatprep.subr.bf16.mxu0 0
        %902 = vmatpush1.bf16.xpose.msra.mxu0 0
        %903 = vmatprep.subr.bf16.mxu0 0
        %904 = vmatpush1.bf16.xpose.msra.mxu0 0
        %905 = vmatprep.subr.bf16.mxu0 0
        %906 = vmatpush1.bf16.xpose.msra.mxu0 0
        %907 = vmatprep.mubr.bf16.mxu0 0
        %908 = vmatmul.mubr.bf16.gmra.mrb[0].mxu0 %v867
        %v909 = vpop.f32.mrb[0].mxu0
        %v910 = vadd.f32 0.0, %v909
        %v911 = vpop.f32.mrb[0].mxu0
        %v912 = vpop.f32.mrb[0].mxu0
        %v913 = vadd.f32 0.0, %v912
        %v914 = vpop.f32.mrb[0].mxu0
        %915 = vmatprep.mubr.bf16.mxu0 0
        %916 = vmatmul.mubr.bf16.gmra.mrb[0].mxu0 %v870
        %v917 = vpop.f32.mrb[0].mxu0
        %v918 = vadd.f32 0.0, %v917
        %v919 = vpop.f32.mrb[0].mxu0
        %v920 = vpop.f32.mrb[0].mxu0
        %v921 = vadd.f32 0.0, %v920
        %v922 = vpop.f32.mrb[0].mxu0
        %923 = vdwg.mxu0
        %v928 = vunpack.c.l.b16 %v316
        %v929 = vunpack.c.l.b16 %v317
        %v930 = vunpack.c.l.b16 %v318
        %v931 = vunpack.c.l.b16 %v319
        %v932 = vpack.c.b16 %v929, %v928
        %v933 = vpack.c.b16 %v931, %v930
        %v935 = vsel %vm671, %v932, 0
        %v938 = vsel %vm671, %v933, 0
        %940 = vmatprep.subr.bf16.mxu0 0
        %941 = vmatpush1.bf16.msra.mxu0 0
        %942 = vmatprep.subr.bf16.mxu0 0
        %943 = vmatpush1.bf16.msra.mxu0 0
        %944 = vmatprep.subr.bf16.mxu0 0
        %945 = vmatpush1.bf16.msra.mxu0 0
        %946 = vmatprep.subr.bf16.mxu0 0
        %947 = vmatpush1.bf16.msra.mxu0 0
        %948 = vmatprep.subr.bf16.mxu0 0
        %949 = vmatpush1.bf16.msra.mxu0 0
        %950 = vmatprep.subr.bf16.mxu0 0
        %951 = vmatpush1.bf16.msra.mxu0 0
        %952 = vmatprep.subr.bf16.mxu0 0
        %953 = vmatpush1.bf16.msra.mxu0 0
        %954 = vmatprep.subr.bf16.mxu0 0
        %955 = vmatpush1.bf16.msra.mxu0 0
        %956 = vmatprep.subr.bf16.mxu0 0
        %957 = vmatpush1.bf16.msra.mxu0 0
        %958 = vmatprep.subr.bf16.mxu0 0
        %959 = vmatpush1.bf16.msra.mxu0 0
        %960 = vmatprep.subr.bf16.mxu0 0
        %961 = vmatpush1.bf16.msra.mxu0 0
        %962 = vmatprep.subr.bf16.mxu0 0
        %963 = vmatpush1.bf16.msra.mxu0 0
        %964 = vmatprep.subr.bf16.mxu0 0
        %965 = vmatpush1.bf16.msra.mxu0 0
        %966 = vmatprep.subr.bf16.mxu0 0
        %967 = vmatpush1.bf16.msra.mxu0 0
        %968 = vmatprep.subr.bf16.mxu0 0
        %969 = vmatpush1.bf16.msra.mxu0 0
        %970 = vmatprep.subr.bf16.mxu0 0
        %971 = vmatpush1.bf16.msra.mxu0 0
        %972 = vmatprep.mubr.bf16.mxu0 0
        %973 = vmatmul.mubr.bf16.gmra.mrb[0].mxu0 %v935
        %v974 = vpop.f32.mrb[0].mxu0
        %v975 = vadd.f32 0.0, %v974
        %v976 = vpop.f32.mrb[0].mxu0
        %v977 = vpop.f32.mrb[0].mxu0
        %v978 = vadd.f32 0.0, %v977
        %v979 = vpop.f32.mrb[0].mxu0
        %980 = vmatprep.mubr.bf16.mxu0 0
        %981 = vmatmul.mubr.bf16.gmra.mrb[0].mxu0 %v938
        %v982 = vpop.f32.mrb[0].mxu0
        %v983 = vadd.f32 0.0, %v982
        %v984 = vpop.f32.mrb[0].mxu0
        %v985 = vpop.f32.mrb[0].mxu0
        %v986 = vadd.f32 0.0, %v985
        %v987 = vpop.f32.mrb[0].mxu0
        %988 = vdwg.mxu0
        %v989 = vpack.c.bf16 %v978, %v975
        %v990 = vpack.c.bf16 %v986, %v983
        %v993 = vsel %vm372, %v989, 0
        %v996 = vsel %vm372, %v990, 0
        %998 = vmatprep.subr.bf16.mxu0 0
        %999 = vmatpush1.bf16.msra.mxu0 %v865
        %1000 = vmatprep.subr.bf16.mxu0 0
        %1001 = vmatpush1.bf16.msra.mxu0 0
        %1002 = vmatprep.subr.bf16.mxu0 0
        %1003 = vmatpush1.bf16.msra.mxu0 0
        %1004 = vmatprep.subr.bf16.mxu0 0
        %1005 = vmatpush1.bf16.msra.mxu0 0
        %1006 = vmatprep.subr.bf16.mxu0 0
        %1007 = vmatpush1.bf16.msra.mxu0 0
        %1008 = vmatprep.subr.bf16.mxu0 0
        %1009 = vmatpush1.bf16.msra.mxu0 0
        %1010 = vmatprep.subr.bf16.mxu0 0
        %1011 = vmatpush1.bf16.msra.mxu0 0
        %1012 = vmatprep.subr.bf16.mxu0 0
        %1013 = vmatpush1.bf16.msra.mxu0 0
        %1014 = vmatprep.subr.bf16.mxu0 0
        %1015 = vmatpush1.bf16.msra.mxu0 0
        %1016 = vmatprep.subr.bf16.mxu0 0
        %1017 = vmatpush1.bf16.msra.mxu0 0
        %1018 = vmatprep.subr.bf16.mxu0 0
        %1019 = vmatpush1.bf16.msra.mxu0 0
        %1020 = vmatprep.subr.bf16.mxu0 0
        %1021 = vmatpush1.bf16.msra.mxu0 0
        %1022 = vmatprep.subr.bf16.mxu0 0
        %1023 = vmatpush1.bf16.msra.mxu0 0
        %1024 = vmatprep.subr.bf16.mxu0 0
        %1025 = vmatpush1.bf16.msra.mxu0 0
        %1026 = vmatprep.subr.bf16.mxu0 0
        %1027 = vmatpush1.bf16.msra.mxu0 0
        %1028 = vmatprep.subr.bf16.mxu0 0
        %1029 = vmatpush1.bf16.msra.mxu0 0
        %1030 = vmatprep.mubr.bf16.mxu0 0
        %1031 = vmatmul.mubr.bf16.gmra.mrb[0].mxu0 %v993
        %v1032 = vpop.f32.mrb[0].mxu0
        %v1033 = vadd.f32 0.0, %v1032
        %v1034 = vpop.f32.mrb[0].mxu0
        %v1035 = vpop.f32.mrb[0].mxu0
        %v1036 = vadd.f32 0.0, %v1035
        %v1037 = vpop.f32.mrb[0].mxu0
        %1038 = vmatprep.mubr.bf16.mxu0 0
        %1039 = vmatmul.mubr.bf16.gmra.mrb[0].mxu0 %v996
        %v1040 = vpop.f32.mrb[0].mxu0
        %v1041 = vadd.f32 0.0, %v1040
        %v1042 = vpop.f32.mrb[0].mxu0
        %v1043 = vpop.f32.mrb[0].mxu0
        %v1044 = vadd.f32 0.0, %v1043
        %v1045 = vpop.f32.mrb[0].mxu0
        %1046 = vdwg.mxu0
        %v1047 = vadd.f32 %v625, %v910
        %v1048 = vadd.f32 %v626, %v913
        %v1049 = vadd.f32 %v627, %v918
        %v1050 = vadd.f32 %v628, %v921
        %v1051 = vadd.f32 %v1047, %v713
        %v1052 = vadd.f32 %v1048, %v716
        %v1053 = vadd.f32 %v1049, %v721
        %v1054 = vadd.f32 %v1050, %v724
        %v1055 = vmax.f32 %v1051, 0.0
        %v1056 = vmax.f32 %v1052, 0.0
        %v1057 = vmax.f32 %v1053, 0.0
        %v1058 = vmax.f32 %v1054, 0.0
        %v1059 = vadd.f32 %v655, %v1033
        %v1060 = vadd.f32 %v656, %v1036
        %v1061 = vadd.f32 %v657, %v1041
        %v1062 = vadd.f32 %v658, %v1044
        %v1063 = vadd.f32 %v1059, %v780
        %v1064 = vadd.f32 %v1060, %v783
        %v1065 = vadd.f32 %v1061, %v788
        %v1066 = vadd.f32 %v1062, %v791
        %v1067 = vmax.f32 %v1063, 0.0
        %v1068 = vmax.f32 %v1064, 0.0
        %v1069 = vmax.f32 %v1065, 0.0
        %v1070 = vmax.f32 %v1066, 0.0
        %v1071 = vpack.c.bf16 %v1056, %v1055
        %v1072 = vpack.c.bf16 %v1058, %v1057
        %v1073 = vpack.c.bf16 %v1068, %v1067
        %v1074 = vpack.c.bf16 %v1070, %v1069
        %1075 = vmatprep.subr.bf16.mxu0 0
        %1076 = vmatpush1.bf16.msra.mxu0 %v1073
        %1077 = vmatprep.subr.bf16.mxu0 0
        %1078 = vmatpush1.bf16.msra.mxu0 %v1074
        %1079 = vmatprep.subr.bf16.mxu0 0
        %1080 = vmatpush1.bf16.msra.mxu0 0
        %1081 = vmatprep.subr.bf16.mxu0 0
        %1082 = vmatpush1.bf16.msra.mxu0 0
        %1083 = vmatprep.subr.bf16.mxu0 0
        %1084 = vmatpush1.bf16.msra.mxu0 0
        %1085 = vmatprep.subr.bf16.mxu0 0
        %1086 = vmatpush1.bf16.msra.mxu0 0
        %1087 = vmatprep.subr.bf16.mxu0 0
        %1088 = vmatpush1.bf16.msra.mxu0 0
        %1089 = vmatprep.subr.bf16.mxu0 0
        %1090 = vmatpush1.bf16.msra.mxu0 0
        %1091 = vmatprep.subr.bf16.mxu0 0
        %1092 = vmatpush1.bf16.msra.mxu0 0
        %1093 = vmatprep.subr.bf16.mxu0 0
        %1094 = vmatpush1.bf16.msra.mxu0 0
        %1095 = vmatprep.subr.bf16.mxu0 0
        %1096 = vmatpush1.bf16.msra.mxu0 0
        %1097 = vmatprep.subr.bf16.mxu0 0
        %1098 = vmatpush1.bf16.msra.mxu0 0
        %1099 = vmatprep.subr.bf16.mxu0 0
        %1100 = vmatpush1.bf16.msra.mxu0 0
        %1101 = vmatprep.subr.bf16.mxu0 0
        %1102 = vmatpush1.bf16.msra.mxu0 0
        %1103 = vmatprep.subr.bf16.mxu0 0
        %1104 = vmatpush1.bf16.msra.mxu0 0
        %1105 = vmatprep.subr.bf16.mxu0 0
        %1106 = vmatpush1.bf16.msra.mxu0 0
        %1107 = vmatprep.mubr.bf16.mxu0 0
        %1108 = vmatmul.mubr.bf16.gmra.mrb[0].mxu0 %v805
        %v1109 = vpop.f32.mrb[0].mxu0
        %v1110 = vadd.f32 0.0, %v1109
        %v1111 = vpop.f32.mrb[0].mxu0
        %v1112 = vpop.f32.mrb[0].mxu0
        %v1113 = vadd.f32 0.0, %v1112
        %v1114 = vpop.f32.mrb[0].mxu0
        %1115 = vmatprep.mubr.bf16.mxu0 0
        %1116 = vmatmul.mubr.bf16.gmra.mrb[0].mxu0 %v808
        %v1117 = vpop.f32.mrb[0].mxu0
        %v1118 = vadd.f32 0.0, %v1117
        %v1119 = vpop.f32.mrb[0].mxu0
        %v1120 = vpop.f32.mrb[0].mxu0
        %v1121 = vadd.f32 0.0, %v1120
        %v1122 = vpop.f32.mrb[0].mxu0
        %1123 = vdwg.mxu0
        %v1124 = vpack.c.bf16 %v1113, %v1110
        %v1125 = vpack.c.bf16 %v1121, %v1118
        %v1127 = vsel %vm372, %v1124, 0
        %v1130 = vsel %vm372, %v1125, 0
        %1132 = vmatprep.subr.bf16.mxu0 0
        %1133 = vmatpush1.bf16.xpose.msra.mxu0 %v873
        %1134 = vmatprep.subr.bf16.mxu0 0
        %1135 = vmatpush1.bf16.xpose.msra.mxu0 0
        %1136 = vmatprep.subr.bf16.mxu0 0
        %1137 = vmatpush1.bf16.xpose.msra.mxu0 0
        %1138 = vmatprep.subr.bf16.mxu0 0
        %1139 = vmatpush1.bf16.xpose.msra.mxu0 0
        %1140 = vmatprep.subr.bf16.mxu0 0
        %1141 = vmatpush1.bf16.xpose.msra.mxu0 0
        %1142 = vmatprep.subr.bf16.mxu0 0
        %1143 = vmatpush1.bf16.xpose.msra.mxu0 0
        %1144 = vmatprep.subr.bf16.mxu0 0
        %1145 = vmatpush1.bf16.xpose.msra.mxu0 0
        %1146 = vmatprep.subr.bf16.mxu0 0
        %1147 = vmatpush1.bf16.xpose.msra.mxu0 0
        %1148 = vmatprep.subr.bf16.mxu0 0
        %1149 = vmatpush1.bf16.xpose.msra.mxu0 0
        %1150 = vmatprep.subr.bf16.mxu0 0
        %1151 = vmatpush1.bf16.xpose.msra.mxu0 0
        %1152 = vmatprep.subr.bf16.mxu0 0
        %1153 = vmatpush1.bf16.xpose.msra.mxu0 0
        %1154 = vmatprep.subr.bf16.mxu0 0
        %1155 = vmatpush1.bf16.xpose.msra.mxu0 0
        %1156 = vmatprep.subr.bf16.mxu0 0
        %1157 = vmatpush1.bf16.xpose.msra.mxu0 0
        %1158 = vmatprep.subr.bf16.mxu0 0
        %1159 = vmatpush1.bf16.xpose.msra.mxu0 0
        %1160 = vmatprep.subr.bf16.mxu0 0
        %1161 = vmatpush1.bf16.xpose.msra.mxu0 0
        %1162 = vmatprep.subr.bf16.mxu0 0
        %1163 = vmatpush1.bf16.xpose.msra.mxu0 0
        %1164 = vmatprep.mubr.bf16.mxu0 0
        %1165 = vmatmul.mubr.bf16.gmra.mrb[0].mxu0 %v1127
        %v1166 = vpop.f32.mrb[0].mxu0
        %v1167 = vadd.f32 0.0, %v1166
        %v1168 = vpop.f32.mrb[0].mxu0
        %v1169 = vpop.f32.mrb[0].mxu0
        %v1170 = vadd.f32 0.0, %v1169
        %v1171 = vpop.f32.mrb[0].mxu0
        %1172 = vmatprep.mubr.bf16.mxu0 0
        %1173 = vmatmul.mubr.bf16.gmra.mrb[0].mxu0 %v1130
        %v1174 = vpop.f32.mrb[0].mxu0
        %v1175 = vadd.f32 0.0, %v1174
        %v1176 = vpop.f32.mrb[0].mxu0
        %v1177 = vpop.f32.mrb[0].mxu0
        %v1178 = vadd.f32 0.0, %v1177
        %v1179 = vpop.f32.mrb[0].mxu0
        %1180 = vdwg.mxu0
        %1181 = vmatprep.subr.bf16.mxu0 0
        %1182 = vmatpush1.bf16.msra.mxu0 %v1071
        %1183 = vmatprep.subr.bf16.mxu0 0
        %1184 = vmatpush1.bf16.msra.mxu0 %v1072
        %1185 = vmatprep.subr.bf16.mxu0 0
        %1186 = vmatpush1.bf16.msra.mxu0 0
        %1187 = vmatprep.subr.bf16.mxu0 0
        %1188 = vmatpush1.bf16.msra.mxu0 0
        %1189 = vmatprep.subr.bf16.mxu0 0
        %1190 = vmatpush1.bf16.msra.mxu0 0
        %1191 = vmatprep.subr.bf16.mxu0 0
        %1192 = vmatpush1.bf16.msra.mxu0 0
        %1193 = vmatprep.subr.bf16.mxu0 0
        %1194 = vmatpush1.bf16.msra.mxu0 0
        %1195 = vmatprep.subr.bf16.mxu0 0
        %1196 = vmatpush1.bf16.msra.mxu0 0
        %1197 = vmatprep.subr.bf16.mxu0 0
        %1198 = vmatpush1.bf16.msra.mxu0 0
        %1199 = vmatprep.subr.bf16.mxu0 0
        %1200 = vmatpush1.bf16.msra.mxu0 0
        %1201 = vmatprep.subr.bf16.mxu0 0
        %1202 = vmatpush1.bf16.msra.mxu0 0
        %1203 = vmatprep.subr.bf16.mxu0 0
        %1204 = vmatpush1.bf16.msra.mxu0 0
        %1205 = vmatprep.subr.bf16.mxu0 0
        %1206 = vmatpush1.bf16.msra.mxu0 0
        %1207 = vmatprep.subr.bf16.mxu0 0
        %1208 = vmatpush1.bf16.msra.mxu0 0
        %1209 = vmatprep.subr.bf16.mxu0 0
        %1210 = vmatpush1.bf16.msra.mxu0 0
        %1211 = vmatprep.subr.bf16.mxu0 0
        %1212 = vmatpush1.bf16.msra.mxu0 0
        %1213 = vmatprep.mubr.bf16.mxu0 0
        %1214 = vmatmul.mubr.bf16.gmra.mrb[0].mxu0 %v935
        %v1215 = vpop.f32.mrb[0].mxu0
        %v1216 = vadd.f32 0.0, %v1215
        %v1217 = vpop.f32.mrb[0].mxu0
        %v1218 = vpop.f32.mrb[0].mxu0
        %v1219 = vadd.f32 0.0, %v1218
        %v1220 = vpop.f32.mrb[0].mxu0
        %1221 = vmatprep.mubr.bf16.mxu0 0
        %1222 = vmatmul.mubr.bf16.gmra.mrb[0].mxu0 %v938
        %v1223 = vpop.f32.mrb[0].mxu0
        %v1224 = vadd.f32 0.0, %v1223
        %v1225 = vpop.f32.mrb[0].mxu0
        %v1226 = vpop.f32.mrb[0].mxu0
        %v1227 = vadd.f32 0.0, %v1226
        %v1228 = vpop.f32.mrb[0].mxu0
        %1229 = vdwg.mxu0
        %v1230 = vpack.c.bf16 %v1219, %v1216
        %v1231 = vpack.c.bf16 %v1227, %v1224
        %v1233 = vsel %vm372, %v1230, 0
        %v1236 = vsel %vm372, %v1231, 0
        %1238 = vmatprep.subr.bf16.mxu0 0
        %1239 = vmatpush1.bf16.msra.mxu0 %v865
        %1240 = vmatprep.subr.bf16.mxu0 0
        %1241 = vmatpush1.bf16.msra.mxu0 0
        %1242 = vmatprep.subr.bf16.mxu0 0
        %1243 = vmatpush1.bf16.msra.mxu0 0
        %1244 = vmatprep.subr.bf16.mxu0 0
        %1245 = vmatpush1.bf16.msra.mxu0 0
        %1246 = vmatprep.subr.bf16.mxu0 0
        %1247 = vmatpush1.bf16.msra.mxu0 0
        %1248 = vmatprep.subr.bf16.mxu0 0
        %1249 = vmatpush1.bf16.msra.mxu0 0
        %1250 = vmatprep.subr.bf16.mxu0 0
        %1251 = vmatpush1.bf16.msra.mxu0 0
        %1252 = vmatprep.subr.bf16.mxu0 0
        %1253 = vmatpush1.bf16.msra.mxu0 0
        %1254 = vmatprep.subr.bf16.mxu0 0
        %1255 = vmatpush1.bf16.msra.mxu0 0
        %1256 = vmatprep.subr.bf16.mxu0 0
        %1257 = vmatpush1.bf16.msra.mxu0 0
        %1258 = vmatprep.subr.bf16.mxu0 0
        %1259 = vmatpush1.bf16.msra.mxu0 0
        %1260 = vmatprep.subr.bf16.mxu0 0
        %1261 = vmatpush1.bf16.msra.mxu0 0
        %1262 = vmatprep.subr.bf16.mxu0 0
        %1263 = vmatpush1.bf16.msra.mxu0 0
        %1264 = vmatprep.subr.bf16.mxu0 0
        %1265 = vmatpush1.bf16.msra.mxu0 0
        %1266 = vmatprep.subr.bf16.mxu0 0
        %1267 = vmatpush1.bf16.msra.mxu0 0
        %1268 = vmatprep.subr.bf16.mxu0 0
        %1269 = vmatpush1.bf16.msra.mxu0 0
        %1270 = vmatprep.mubr.bf16.mxu0 0
        %1271 = vmatmul.mubr.bf16.gmra.mrb[0].mxu0 %v1233
        %v1272 = vpop.f32.mrb[0].mxu0
        %v1273 = vadd.f32 0.0, %v1272
        %v1274 = vpop.f32.mrb[0].mxu0
        %v1275 = vpop.f32.mrb[0].mxu0
        %v1276 = vadd.f32 0.0, %v1275
        %v1277 = vpop.f32.mrb[0].mxu0
        %1278 = vmatprep.mubr.bf16.mxu0 0
        %1279 = vmatmul.mubr.bf16.gmra.mrb[0].mxu0 %v1236
        %v1280 = vpop.f32.mrb[0].mxu0
        %v1281 = vadd.f32 0.0, %v1280
        %v1282 = vpop.f32.mrb[0].mxu0
        %v1283 = vpop.f32.mrb[0].mxu0
        %v1284 = vadd.f32 0.0, %v1283
        %v1285 = vpop.f32.mrb[0].mxu0
        %1286 = vdwg.mxu0
        %v1287 = vadd.f32 %v625, %v1167
        %v1288 = vadd.f32 %v626, %v1170
        %v1289 = vadd.f32 %v627, %v1175
        %v1290 = vadd.f32 %v628, %v1178
        %v1291 = vadd.f32 %v1287, %v713
        %v1292 = vadd.f32 %v1288, %v716
        %v1293 = vadd.f32 %v1289, %v721
        %v1294 = vadd.f32 %v1290, %v724
        %v1295 = vmax.f32 %v1291, 0.0
        %v1296 = vmax.f32 %v1292, 0.0
        %v1297 = vmax.f32 %v1293, 0.0
        %v1298 = vmax.f32 %v1294, 0.0
        %v1299 = vadd.f32 %v655, %v1273
        %v1300 = vadd.f32 %v656, %v1276
        %v1301 = vadd.f32 %v657, %v1281
        %v1302 = vadd.f32 %v658, %v1284
        %v1303 = vadd.f32 %v1299, %v780
        %v1304 = vadd.f32 %v1300, %v783
        %v1305 = vadd.f32 %v1301, %v788
        %v1306 = vadd.f32 %v1302, %v791
        %v1307 = vmax.f32 %v1303, 0.0
        %v1308 = vmax.f32 %v1304, 0.0
        %v1309 = vmax.f32 %v1305, 0.0
        %v1310 = vmax.f32 %v1306, 0.0
        %v1311 = vpack.c.bf16 %v1296, %v1295
        %v1312 = vpack.c.bf16 %v1298, %v1297
        %v1313 = vpack.c.bf16 %v1308, %v1307
        %v1314 = vpack.c.bf16 %v1310, %v1309
        %1315 = vmatprep.subr.bf16.mxu0 0
        %1316 = vmatpush1.bf16.msra.mxu0 %v1313
        %1317 = vmatprep.subr.bf16.mxu0 0
        %1318 = vmatpush1.bf16.msra.mxu0 %v1314
        %1319 = vmatprep.subr.bf16.mxu0 0
        %1320 = vmatpush1.bf16.msra.mxu0 0
        %1321 = vmatprep.subr.bf16.mxu0 0
        %1322 = vmatpush1.bf16.msra.mxu0 0
        %1323 = vmatprep.subr.bf16.mxu0 0
        %1324 = vmatpush1.bf16.msra.mxu0 0
        %1325 = vmatprep.subr.bf16.mxu0 0
        %1326 = vmatpush1.bf16.msra.mxu0 0
        %1327 = vmatprep.subr.bf16.mxu0 0
        %1328 = vmatpush1.bf16.msra.mxu0 0
        %1329 = vmatprep.subr.bf16.mxu0 0
        %1330 = vmatpush1.bf16.msra.mxu0 0
        %1331 = vmatprep.subr.bf16.mxu0 0
        %1332 = vmatpush1.bf16.msra.mxu0 0
        %1333 = vmatprep.subr.bf16.mxu0 0
        %1334 = vmatpush1.bf16.msra.mxu0 0
        %1335 = vmatprep.subr.bf16.mxu0 0
        %1336 = vmatpush1.bf16.msra.mxu0 0
        %1337 = vmatprep.subr.bf16.mxu0 0
        %1338 = vmatpush1.bf16.msra.mxu0 0
        %1339 = vmatprep.subr.bf16.mxu0 0
        %1340 = vmatpush1.bf16.msra.mxu0 0
        %1341 = vmatprep.subr.bf16.mxu0 0
        %1342 = vmatpush1.bf16.msra.mxu0 0
        %1343 = vmatprep.subr.bf16.mxu0 0
        %1344 = vmatpush1.bf16.msra.mxu0 0
        %1345 = vmatprep.subr.bf16.mxu0 0
        %1346 = vmatpush1.bf16.msra.mxu0 0
        %1347 = vmatprep.mubr.bf16.mxu0 0
        %1348 = vmatmul.mubr.bf16.gmra.mrb[0].mxu0 %v805
        %v1349 = vpop.f32.mrb[0].mxu0
        %v1350 = vadd.f32 0.0, %v1349
        %v1351 = vpop.f32.mrb[0].mxu0
        %v1352 = vpop.f32.mrb[0].mxu0
        %v1353 = vadd.f32 0.0, %v1352
        %v1354 = vpop.f32.mrb[0].mxu0
        %1355 = vmatprep.mubr.bf16.mxu0 0
        %1356 = vmatmul.mubr.bf16.gmra.mrb[0].mxu0 %v808
        %v1357 = vpop.f32.mrb[0].mxu0
        %v1358 = vadd.f32 0.0, %v1357
        %v1359 = vpop.f32.mrb[0].mxu0
        %v1360 = vpop.f32.mrb[0].mxu0
        %v1361 = vadd.f32 0.0, %v1360
        %v1362 = vpop.f32.mrb[0].mxu0
        %1363 = vdwg.mxu0
        %v1364 = vpack.c.bf16 %v1353, %v1350
        %v1365 = vpack.c.bf16 %v1361, %v1358
        %v1367 = vsel %vm372, %v1364, 0
        %v1370 = vsel %vm372, %v1365, 0
        %1372 = vmatprep.subr.bf16.mxu0 0
        %1373 = vmatpush1.bf16.xpose.msra.mxu0 %v873
        %1374 = vmatprep.subr.bf16.mxu0 0
        %1375 = vmatpush1.bf16.xpose.msra.mxu0 0
        %1376 = vmatprep.subr.bf16.mxu0 0
        %1377 = vmatpush1.bf16.xpose.msra.mxu0 0
        %1378 = vmatprep.subr.bf16.mxu0 0
        %1379 = vmatpush1.bf16.xpose.msra.mxu0 0
        %1380 = vmatprep.subr.bf16.mxu0 0
        %1381 = vmatpush1.bf16.xpose.msra.mxu0 0
        %1382 = vmatprep.subr.bf16.mxu0 0
        %1383 = vmatpush1.bf16.xpose.msra.mxu0 0
        %1384 = vmatprep.subr.bf16.mxu0 0
        %1385 = vmatpush1.bf16.xpose.msra.mxu0 0
        %1386 = vmatprep.subr.bf16.mxu0 0
        %1387 = vmatpush1.bf16.xpose.msra.mxu0 0
        %1388 = vmatprep.subr.bf16.mxu0 0
        %1389 = vmatpush1.bf16.xpose.msra.mxu0 0
        %1390 = vmatprep.subr.bf16.mxu0 0
        %1391 = vmatpush1.bf16.xpose.msra.mxu0 0
        %1392 = vmatprep.subr.bf16.mxu0 0
        %1393 = vmatpush1.bf16.xpose.msra.mxu0 0
        %1394 = vmatprep.subr.bf16.mxu0 0
        %1395 = vmatpush1.bf16.xpose.msra.mxu0 0
        %1396 = vmatprep.subr.bf16.mxu0 0
        %1397 = vmatpush1.bf16.xpose.msra.mxu0 0
        %1398 = vmatprep.subr.bf16.mxu0 0
        %1399 = vmatpush1.bf16.xpose.msra.mxu0 0
        %1400 = vmatprep.subr.bf16.mxu0 0
        %1401 = vmatpush1.bf16.xpose.msra.mxu0 0
        %1402 = vmatprep.subr.bf16.mxu0 0
        %1403 = vmatpush1.bf16.xpose.msra.mxu0 0
        %1404 = vmatprep.mubr.bf16.mxu0 0
        %1405 = vmatmul.mubr.bf16.gmra.mrb[0].mxu0 %v1367
        %v1406 = vpop.f32.mrb[0].mxu0
        %v1407 = vadd.f32 0.0, %v1406
        %v1408 = vpop.f32.mrb[0].mxu0
        %v1409 = vpop.f32.mrb[0].mxu0
        %v1410 = vadd.f32 0.0, %v1409
        %v1411 = vpop.f32.mrb[0].mxu0
        %1412 = vmatprep.mubr.bf16.mxu0 0
        %1413 = vmatmul.mubr.bf16.gmra.mrb[0].mxu0 %v1370
        %v1414 = vpop.f32.mrb[0].mxu0
        %v1415 = vadd.f32 0.0, %v1414
        %v1416 = vpop.f32.mrb[0].mxu0
        %v1417 = vpop.f32.mrb[0].mxu0
        %v1418 = vadd.f32 0.0, %v1417
        %v1419 = vpop.f32.mrb[0].mxu0
        %1420 = vdwg.mxu0
        %1421 = vmatprep.subr.bf16.mxu0 0
        %1422 = vmatpush1.bf16.msra.mxu0 %v1311
        %1423 = vmatprep.subr.bf16.mxu0 0
        %1424 = vmatpush1.bf16.msra.mxu0 %v1312
        %1425 = vmatprep.subr.bf16.mxu0 0
        %1426 = vmatpush1.bf16.msra.mxu0 0
        %1427 = vmatprep.subr.bf16.mxu0 0
        %1428 = vmatpush1.bf16.msra.mxu0 0
        %1429 = vmatprep.subr.bf16.mxu0 0
        %1430 = vmatpush1.bf16.msra.mxu0 0
        %1431 = vmatprep.subr.bf16.mxu0 0
        %1432 = vmatpush1.bf16.msra.mxu0 0
        %1433 = vmatprep.subr.bf16.mxu0 0
        %1434 = vmatpush1.bf16.msra.mxu0 0
        %1435 = vmatprep.subr.bf16.mxu0 0
        %1436 = vmatpush1.bf16.msra.mxu0 0
        %1437 = vmatprep.subr.bf16.mxu0 0
        %1438 = vmatpush1.bf16.msra.mxu0 0
        %1439 = vmatprep.subr.bf16.mxu0 0
        %1440 = vmatpush1.bf16.msra.mxu0 0
        %1441 = vmatprep.subr.bf16.mxu0 0
        %1442 = vmatpush1.bf16.msra.mxu0 0
        %1443 = vmatprep.subr.bf16.mxu0 0
        %1444 = vmatpush1.bf16.msra.mxu0 0
        %1445 = vmatprep.subr.bf16.mxu0 0
        %1446 = vmatpush1.bf16.msra.mxu0 0
        %1447 = vmatprep.subr.bf16.mxu0 0
        %1448 = vmatpush1.bf16.msra.mxu0 0
        %1449 = vmatprep.subr.bf16.mxu0 0
        %1450 = vmatpush1.bf16.msra.mxu0 0
        %1451 = vmatprep.subr.bf16.mxu0 0
        %1452 = vmatpush1.bf16.msra.mxu0 0
        %1453 = vmatprep.mubr.bf16.mxu0 0
        %1454 = vmatmul.mubr.bf16.gmra.mrb[0].mxu0 %v935
        %v1455 = vpop.f32.mrb[0].mxu0
        %v1456 = vadd.f32 0.0, %v1455
        %v1457 = vpop.f32.mrb[0].mxu0
        %v1458 = vpop.f32.mrb[0].mxu0
        %v1459 = vadd.f32 0.0, %v1458
        %v1460 = vpop.f32.mrb[0].mxu0
        %1461 = vmatprep.mubr.bf16.mxu0 0
        %1462 = vmatmul.mubr.bf16.gmra.mrb[0].mxu0 %v938
        %v1463 = vpop.f32.mrb[0].mxu0
        %v1464 = vadd.f32 0.0, %v1463
        %v1465 = vpop.f32.mrb[0].mxu0
        %v1466 = vpop.f32.mrb[0].mxu0
        %v1467 = vadd.f32 0.0, %v1466
        %v1468 = vpop.f32.mrb[0].mxu0
        %1469 = vdwg.mxu0
        %v1470 = vpack.c.bf16 %v1459, %v1456
        %v1471 = vpack.c.bf16 %v1467, %v1464
        %v1473 = vsel %vm372, %v1470, 0
        %v1476 = vsel %vm372, %v1471, 0
        %1478 = vmatprep.subr.bf16.mxu0 0
        %1479 = vmatpush1.bf16.msra.mxu0 %v865
        %1480 = vmatprep.subr.bf16.mxu0 0
        %1481 = vmatpush1.bf16.msra.mxu0 0
        %1482 = vmatprep.subr.bf16.mxu0 0
        %1483 = vmatpush1.bf16.msra.mxu0 0
        %1484 = vmatprep.subr.bf16.mxu0 0
        %1485 = vmatpush1.bf16.msra.mxu0 0
        %1486 = vmatprep.subr.bf16.mxu0 0
        %1487 = vmatpush1.bf16.msra.mxu0 0
        %1488 = vmatprep.subr.bf16.mxu0 0
        %1489 = vmatpush1.bf16.msra.mxu0 0
        %1490 = vmatprep.subr.bf16.mxu0 0
        %1491 = vmatpush1.bf16.msra.mxu0 0
        %1492 = vmatprep.subr.bf16.mxu0 0
        %1493 = vmatpush1.bf16.msra.mxu0 0
        %1494 = vmatprep.subr.bf16.mxu0 0
        %1495 = vmatpush1.bf16.msra.mxu0 0
        %1496 = vmatprep.subr.bf16.mxu0 0
        %1497 = vmatpush1.bf16.msra.mxu0 0
        %1498 = vmatprep.subr.bf16.mxu0 0
        %1499 = vmatpush1.bf16.msra.mxu0 0
        %1500 = vmatprep.subr.bf16.mxu0 0
        %1501 = vmatpush1.bf16.msra.mxu0 0
        %1502 = vmatprep.subr.bf16.mxu0 0
        %1503 = vmatpush1.bf16.msra.mxu0 0
        %1504 = vmatprep.subr.bf16.mxu0 0
        %1505 = vmatpush1.bf16.msra.mxu0 0
        %1506 = vmatprep.subr.bf16.mxu0 0
        %1507 = vmatpush1.bf16.msra.mxu0 0
        %1508 = vmatprep.subr.bf16.mxu0 0
        %1509 = vmatpush1.bf16.msra.mxu0 0
        %1510 = vmatprep.mubr.bf16.mxu0 0
        %1511 = vmatmul.mubr.bf16.gmra.mrb[0].mxu0 %v1473
        %v1512 = vpop.f32.mrb[0].mxu0
        %v1513 = vadd.f32 0.0, %v1512
        %v1514 = vpop.f32.mrb[0].mxu0
        %v1515 = vpop.f32.mrb[0].mxu0
        %v1516 = vadd.f32 0.0, %v1515
        %v1517 = vpop.f32.mrb[0].mxu0
        %1518 = vmatprep.mubr.bf16.mxu0 0
        %1519 = vmatmul.mubr.bf16.gmra.mrb[0].mxu0 %v1476
        %v1520 = vpop.f32.mrb[0].mxu0
        %v1521 = vadd.f32 0.0, %v1520
        %v1522 = vpop.f32.mrb[0].mxu0
        %v1523 = vpop.f32.mrb[0].mxu0
        %v1524 = vadd.f32 0.0, %v1523
        %v1525 = vpop.f32.mrb[0].mxu0
        %1526 = vdwg.mxu0
        %v1527 = vadd.f32 %v625, %v1407
        %v1528 = vadd.f32 %v626, %v1410
        %v1529 = vadd.f32 %v627, %v1415
        %v1530 = vadd.f32 %v628, %v1418
        %v1531 = vadd.f32 %v1527, %v713
        %v1532 = vadd.f32 %v1528, %v716
        %v1533 = vadd.f32 %v1529, %v721
        %v1534 = vadd.f32 %v1530, %v724
        %v1535 = vmax.f32 %v1531, 0.0
        %v1536 = vmax.f32 %v1532, 0.0
        %v1537 = vmax.f32 %v1533, 0.0
        %v1538 = vmax.f32 %v1534, 0.0
        %v1539 = vadd.f32 %v655, %v1513
        %v1540 = vadd.f32 %v656, %v1516
        %v1541 = vadd.f32 %v657, %v1521
        %v1542 = vadd.f32 %v658, %v1524
        %v1543 = vadd.f32 %v1539, %v780
        %v1544 = vadd.f32 %v1540, %v783
        %v1545 = vadd.f32 %v1541, %v788
        %v1546 = vadd.f32 %v1542, %v791
        %v1547 = vmax.f32 %v1543, 0.0
        %v1548 = vmax.f32 %v1544, 0.0
        %v1549 = vmax.f32 %v1545, 0.0
        %v1550 = vmax.f32 %v1546, 0.0
        %v1551 = vsel %vm372, %v1535, 0.0
        %1552 = vadd.xlane.f32.xlu0 %v1551
        %v1553 = vpop.xlane.xlu0 %1552
        %v1554 = vsel %vm372, %v1536, 0.0
        %1555 = vadd.xlane.f32.xlu0 %v1554
        %v1556 = vpop.xlane.xlu0 %1555
        %v1557 = vsel %vm372, %v1537, 0.0
        %1558 = vadd.xlane.f32.xlu0 %v1557
        %v1559 = vpop.xlane.xlu0 %1558
        %v1560 = vsel %vm372, %v1538, 0.0
        %1561 = vadd.xlane.f32.xlu0 %v1560
        %v1562 = vpop.xlane.xlu0 %1561
        %v1563 = vsel %vm372, %v1547, 0.0
        %1564 = vadd.xlane.f32.xlu0 %v1563
        %v1565 = vpop.xlane.xlu0 %1564
        %v1566 = vsel %vm372, %v1548, 0.0
        %1567 = vadd.xlane.f32.xlu0 %v1566
        %v1568 = vpop.xlane.xlu0 %1567
        %v1569 = vsel %vm372, %v1549, 0.0
        %1570 = vadd.xlane.f32.xlu0 %v1569
        %v1571 = vpop.xlane.xlu0 %1570
        %v1572 = vsel %vm372, %v1550, 0.0
        %1573 = vadd.xlane.f32.xlu0 %v1572
        %v1574 = vpop.xlane.xlu0 %1573
        %v1575 = vpack.c.bf16 %v1556, %v1553
        %v1576 = vpack.c.bf16 %v1562, %v1559
        %v1577 = vpack.c.bf16 %v1568, %v1565
        %v1578 = vpack.c.bf16 %v1574, %v1571
        %v1583 = vunpack.c.l.b16 %v332
        %v1584 = vunpack.c.l.b16 %v333
        %v1585 = vunpack.c.l.b16 %v334
        %v1586 = vunpack.c.l.b16 %v335
        %v1587 = vpack.c.b16 %v1584, %v1583
        %v1588 = vpack.c.b16 %v1586, %v1585
        %v1590 = vsel %vm671, %v1587, 0
        %v1593 = vsel %vm671, %v1588, 0
        %1595 = vmatprep.subr.bf16.mxu0 0
        %1596 = vmatpush1.bf16.msra.mxu0 %v1577
        %1597 = vmatprep.subr.bf16.mxu0 0
        %1598 = vmatpush1.bf16.msra.mxu0 %v1578
        %1599 = vmatprep.subr.bf16.mxu0 0
        %1600 = vmatpush1.bf16.msra.mxu0 0
        %1601 = vmatprep.subr.bf16.mxu0 0
        %1602 = vmatpush1.bf16.msra.mxu0 0
        %1603 = vmatprep.subr.bf16.mxu0 0
        %1604 = vmatpush1.bf16.msra.mxu0 0
        %1605 = vmatprep.subr.bf16.mxu0 0
        %1606 = vmatpush1.bf16.msra.mxu0 0
        %1607 = vmatprep.subr.bf16.mxu0 0
        %1608 = vmatpush1.bf16.msra.mxu0 0
        %1609 = vmatprep.subr.bf16.mxu0 0
        %1610 = vmatpush1.bf16.msra.mxu0 0
        %1611 = vmatprep.subr.bf16.mxu0 0
        %1612 = vmatpush1.bf16.msra.mxu0 0
        %1613 = vmatprep.subr.bf16.mxu0 0
        %1614 = vmatpush1.bf16.msra.mxu0 0
        %1615 = vmatprep.subr.bf16.mxu0 0
        %1616 = vmatpush1.bf16.msra.mxu0 0
        %1617 = vmatprep.subr.bf16.mxu0 0
        %1618 = vmatpush1.bf16.msra.mxu0 0
        %1619 = vmatprep.subr.bf16.mxu0 0
        %1620 = vmatpush1.bf16.msra.mxu0 0
        %1621 = vmatprep.subr.bf16.mxu0 0
        %1622 = vmatpush1.bf16.msra.mxu0 0
        %1623 = vmatprep.subr.bf16.mxu0 0
        %1624 = vmatpush1.bf16.msra.mxu0 0
        %1625 = vmatprep.subr.bf16.mxu0 0
        %1626 = vmatpush1.bf16.msra.mxu0 0
        %1627 = vmatprep.mubr.bf16.mxu0 0
        %1628 = vmatmul.mubr.bf16.gmra.mrb[0].mxu0 %v1590
        %v1629 = vpop.f32.mrb[0].mxu0
        %v1630 = vadd.f32 0.0, %v1629
        %v1631 = vpop.f32.mrb[0].mxu0
        %v1632 = vpop.f32.mrb[0].mxu0
        %v1633 = vadd.f32 0.0, %v1632
        %v1634 = vpop.f32.mrb[0].mxu0
        %1635 = vmatprep.mubr.bf16.mxu0 0
        %1636 = vmatmul.mubr.bf16.gmra.mrb[0].mxu0 %v1593
        %v1637 = vpop.f32.mrb[0].mxu0
        %v1638 = vadd.f32 0.0, %v1637
        %v1639 = vpop.f32.mrb[0].mxu0
        %v1640 = vpop.f32.mrb[0].mxu0
        %v1641 = vadd.f32 0.0, %v1640
        %v1642 = vpop.f32.mrb[0].mxu0
        %1643 = vdwg.mxu0
        %v1648 = vunpack.c.l.b16 %v328
        %v1649 = vunpack.c.l.b16 %v329
        %v1650 = vunpack.c.l.b16 %v330
        %v1651 = vunpack.c.l.b16 %v331
        %v1652 = vpack.c.b16 %v1649, %v1648
        %v1653 = vpack.c.b16 %v1651, %v1650
        %v1655 = vsel %vm671, %v1652, 0
        %v1658 = vsel %vm671, %v1653, 0
        %1660 = vmatprep.subr.bf16.mxu0 0
        %1661 = vmatpush1.bf16.msra.mxu0 %v1575
        %1662 = vmatprep.subr.bf16.mxu0 0
        %1663 = vmatpush1.bf16.msra.mxu0 %v1576
        %1664 = vmatprep.subr.bf16.mxu0 0
        %1665 = vmatpush1.bf16.msra.mxu0 0
        %1666 = vmatprep.subr.bf16.mxu0 0
        %1667 = vmatpush1.bf16.msra.mxu0 0
        %1668 = vmatprep.subr.bf16.mxu0 0
        %1669 = vmatpush1.bf16.msra.mxu0 0
        %1670 = vmatprep.subr.bf16.mxu0 0
        %1671 = vmatpush1.bf16.msra.mxu0 0
        %1672 = vmatprep.subr.bf16.mxu0 0
        %1673 = vmatpush1.bf16.msra.mxu0 0
        %1674 = vmatprep.subr.bf16.mxu0 0
        %1675 = vmatpush1.bf16.msra.mxu0 0
        %1676 = vmatprep.subr.bf16.mxu0 0
        %1677 = vmatpush1.bf16.msra.mxu0 0
        %1678 = vmatprep.subr.bf16.mxu0 0
        %1679 = vmatpush1.bf16.msra.mxu0 0
        %1680 = vmatprep.subr.bf16.mxu0 0
        %1681 = vmatpush1.bf16.msra.mxu0 0
        %1682 = vmatprep.subr.bf16.mxu0 0
        %1683 = vmatpush1.bf16.msra.mxu0 0
        %1684 = vmatprep.subr.bf16.mxu0 0
        %1685 = vmatpush1.bf16.msra.mxu0 0
        %1686 = vmatprep.subr.bf16.mxu0 0
        %1687 = vmatpush1.bf16.msra.mxu0 0
        %1688 = vmatprep.subr.bf16.mxu0 0
        %1689 = vmatpush1.bf16.msra.mxu0 0
        %1690 = vmatprep.subr.bf16.mxu0 0
        %1691 = vmatpush1.bf16.msra.mxu0 0
        %1692 = vmatprep.mubr.bf16.mxu0 0
        %1693 = vmatmul.mubr.bf16.gmra.mrb[0].mxu0 %v1655
        %v1694 = vpop.f32.mrb[0].mxu0
        %v1695 = vadd.f32 %v1630, %v1694
        %v1696 = vpop.f32.mrb[0].mxu0
        %v1697 = vpop.f32.mrb[0].mxu0
        %v1698 = vadd.f32 %v1633, %v1697
        %v1699 = vpop.f32.mrb[0].mxu0
        %1700 = vmatprep.mubr.bf16.mxu0 0
        %1701 = vmatmul.mubr.bf16.gmra.mrb[0].mxu0 %v1658
        %v1702 = vpop.f32.mrb[0].mxu0
        %v1703 = vadd.f32 %v1638, %v1702
        %v1704 = vpop.f32.mrb[0].mxu0
        %v1705 = vpop.f32.mrb[0].mxu0
        %v1706 = vadd.f32 %v1641, %v1705
        %v1707 = vpop.f32.mrb[0].mxu0
        %1708 = vdwg.mxu0
        %v1709 = vmax.f32 %v1695, 0.0
        %v1710 = vmax.f32 %v1698, 0.0
        %v1711 = vmax.f32 %v1703, 0.0
        %v1712 = vmax.f32 %v1706, 0.0
        %v1713 = vpack.c.bf16 %v1548, %v1547
        %v1714 = vpack.c.bf16 %v1550, %v1549
        %v1719 = vunpack.c.l.b16 %v336
        %v1720 = vunpack.c.l.b16 %v337
        %v1721 = vunpack.c.l.b16 %v338
        %v1722 = vunpack.c.l.b16 %v339
        %v1723 = vpack.c.b16 %v1720, %v1719
        %v1724 = vpack.c.b16 %v1722, %v1721
        %v1726 = vsel %vm671, %v1723, 0
        %v1729 = vsel %vm671, %v1724, 0
        %1731 = vmatprep.subr.bf16.mxu0 0
        %1732 = vmatpush1.bf16.msra.mxu0 %v1713
        %1733 = vmatprep.subr.bf16.mxu0 0
        %1734 = vmatpush1.bf16.msra.mxu0 %v1714
        %1735 = vmatprep.subr.bf16.mxu0 0
        %1736 = vmatpush1.bf16.msra.mxu0 0
        %1737 = vmatprep.subr.bf16.mxu0 0
        %1738 = vmatpush1.bf16.msra.mxu0 0
        %1739 = vmatprep.subr.bf16.mxu0 0
        %1740 = vmatpush1.bf16.msra.mxu0 0
        %1741 = vmatprep.subr.bf16.mxu0 0
        %1742 = vmatpush1.bf16.msra.mxu0 0
        %1743 = vmatprep.subr.bf16.mxu0 0
        %1744 = vmatpush1.bf16.msra.mxu0 0
        %1745 = vmatprep.subr.bf16.mxu0 0
        %1746 = vmatpush1.bf16.msra.mxu0 0
        %1747 = vmatprep.subr.bf16.mxu0 0
        %1748 = vmatpush1.bf16.msra.mxu0 0
        %1749 = vmatprep.subr.bf16.mxu0 0
        %1750 = vmatpush1.bf16.msra.mxu0 0
        %1751 = vmatprep.subr.bf16.mxu0 0
        %1752 = vmatpush1.bf16.msra.mxu0 0
        %1753 = vmatprep.subr.bf16.mxu0 0
        %1754 = vmatpush1.bf16.msra.mxu0 0
        %1755 = vmatprep.subr.bf16.mxu0 0
        %1756 = vmatpush1.bf16.msra.mxu0 0
        %1757 = vmatprep.subr.bf16.mxu0 0
        %1758 = vmatpush1.bf16.msra.mxu0 0
        %1759 = vmatprep.subr.bf16.mxu0 0
        %1760 = vmatpush1.bf16.msra.mxu0 0
        %1761 = vmatprep.subr.bf16.mxu0 0
        %1762 = vmatpush1.bf16.msra.mxu0 0
        %1763 = vmatprep.mubr.bf16.mxu0 0
        %1764 = vmatmul.mubr.bf16.gmra.mrb[0].mxu0 %v1726
        %v1765 = vpop.f32.mrb[0].mxu0
        %v1766 = vadd.f32 0.0, %v1765
        %v1767 = vpop.f32.mrb[0].mxu0
        %v1768 = vpop.f32.mrb[0].mxu0
        %v1769 = vadd.f32 0.0, %v1768
        %v1770 = vpop.f32.mrb[0].mxu0
        %1771 = vmatprep.mubr.bf16.mxu0 0
        %1772 = vmatmul.mubr.bf16.gmra.mrb[0].mxu0 %v1729
        %v1773 = vpop.f32.mrb[0].mxu0
        %v1774 = vadd.f32 0.0, %v1773
        %v1775 = vpop.f32.mrb[0].mxu0
        %v1776 = vpop.f32.mrb[0].mxu0
        %v1777 = vadd.f32 0.0, %v1776
        %v1778 = vpop.f32.mrb[0].mxu0
        %1779 = vdwg.mxu0
        %v1780 = vmax.f32 %v1766, 0.0
        %v1781 = vmax.f32 %v1769, 0.0
        %v1782 = vmax.f32 %v1774, 0.0
        %v1783 = vmax.f32 %v1777, 0.0
        %v1784 = vpack.c.bf16 %v1710, %v1709
        %v1785 = vpack.c.bf16 %v1712, %v1711
        %v1787 = vsel %vm671, %v356, 0
        %1789 = vmatprep.subr.bf16.mxu0 0
        %1790 = vmatpush1.bf16.msra.mxu0 %v1784
        %1791 = vmatprep.subr.bf16.mxu0 0
        %1792 = vmatpush1.bf16.msra.mxu0 %v1785
        %1793 = vmatprep.subr.bf16.mxu0 0
        %1794 = vmatpush1.bf16.msra.mxu0 0
        %1795 = vmatprep.subr.bf16.mxu0 0
        %1796 = vmatpush1.bf16.msra.mxu0 0
        %1797 = vmatprep.subr.bf16.mxu0 0
        %1798 = vmatpush1.bf16.msra.mxu0 0
        %1799 = vmatprep.subr.bf16.mxu0 0
        %1800 = vmatpush1.bf16.msra.mxu0 0
        %1801 = vmatprep.subr.bf16.mxu0 0
        %1802 = vmatpush1.bf16.msra.mxu0 0
        %1803 = vmatprep.subr.bf16.mxu0 0
        %1804 = vmatpush1.bf16.msra.mxu0 0
        %1805 = vmatprep.subr.bf16.mxu0 0
        %1806 = vmatpush1.bf16.msra.mxu0 0
        %1807 = vmatprep.subr.bf16.mxu0 0
        %1808 = vmatpush1.bf16.msra.mxu0 0
        %1809 = vmatprep.subr.bf16.mxu0 0
        %1810 = vmatpush1.bf16.msra.mxu0 0
        %1811 = vmatprep.subr.bf16.mxu0 0
        %1812 = vmatpush1.bf16.msra.mxu0 0
        %1813 = vmatprep.subr.bf16.mxu0 0
        %1814 = vmatpush1.bf16.msra.mxu0 0
        %1815 = vmatprep.subr.bf16.mxu0 0
        %1816 = vmatpush1.bf16.msra.mxu0 0
        %1817 = vmatprep.subr.bf16.mxu0 0
        %1818 = vmatpush1.bf16.msra.mxu0 0
        %1819 = vmatprep.subr.bf16.mxu0 0
        %1820 = vmatpush1.bf16.msra.mxu0 0
        %1821 = vmatprep.mubr.bf16.mxu0 0
        %1822 = vmatmul.mubr.bf16.gmra.mrb[0].mxu0 %v1787
        %v1823 = vpop.f32.mrb[0].mxu0
        %v1824 = vadd.f32 0.0, %v1823
        %v1825 = vpop.f32.mrb[0].mxu0
        %v1826 = vpop.f32.mrb[0].mxu0
        %v1827 = vpop.f32.mrb[0].mxu0
        %1828 = vdwg.mxu0
        %v1829 = vpack.c.bf16 %v1781, %v1780
        %v1830 = vpack.c.bf16 %v1783, %v1782
        %v1832 = vsel %vm671, %v357, 0
        %1834 = vmatprep.subr.bf16.mxu0 0
        %1835 = vmatpush1.bf16.msra.mxu0 %v1829
        %1836 = vmatprep.subr.bf16.mxu0 0
        %1837 = vmatpush1.bf16.msra.mxu0 %v1830
        %1838 = vmatprep.subr.bf16.mxu0 0
        %1839 = vmatpush1.bf16.msra.mxu0 0
        %1840 = vmatprep.subr.bf16.mxu0 0
        %1841 = vmatpush1.bf16.msra.mxu0 0
        %1842 = vmatprep.subr.bf16.mxu0 0
        %1843 = vmatpush1.bf16.msra.mxu0 0
        %1844 = vmatprep.subr.bf16.mxu0 0
        %1845 = vmatpush1.bf16.msra.mxu0 0
        %1846 = vmatprep.subr.bf16.mxu0 0
        %1847 = vmatpush1.bf16.msra.mxu0 0
        %1848 = vmatprep.subr.bf16.mxu0 0
        %1849 = vmatpush1.bf16.msra.mxu0 0
        %1850 = vmatprep.subr.bf16.mxu0 0
        %1851 = vmatpush1.bf16.msra.mxu0 0
        %1852 = vmatprep.subr.bf16.mxu0 0
        %1853 = vmatpush1.bf16.msra.mxu0 0
        %1854 = vmatprep.subr.bf16.mxu0 0
        %1855 = vmatpush1.bf16.msra.mxu0 0
        %1856 = vmatprep.subr.bf16.mxu0 0
        %1857 = vmatpush1.bf16.msra.mxu0 0
        %1858 = vmatprep.subr.bf16.mxu0 0
        %1859 = vmatpush1.bf16.msra.mxu0 0
        %1860 = vmatprep.subr.bf16.mxu0 0
        %1861 = vmatpush1.bf16.msra.mxu0 0
        %1862 = vmatprep.subr.bf16.mxu0 0
        %1863 = vmatpush1.bf16.msra.mxu0 0
        %1864 = vmatprep.subr.bf16.mxu0 0
        %1865 = vmatpush1.bf16.msra.mxu0 0
        %1866 = vmatprep.mubr.bf16.mxu0 0
        %1867 = vmatmul.mubr.bf16.gmra.mrb[0].mxu0 %v1832
        %v1868 = vpop.f32.mrb[0].mxu0
        %v1869 = vadd.f32 0.0, %v1868
        %v1870 = vpop.f32.mrb[0].mxu0
        %v1871 = vpop.f32.mrb[0].mxu0
        %v1872 = vpop.f32.mrb[0].mxu0
        %1873 = vdwg.mxu0
        %1875 = vset.pattern.permute.xlu0 0
        %1876 = vperm.xlu0 %1875, %v1824
        %v1877 = vpop.permute.xlu0 %1876
        %v1879 = vadd.f32 %v1877, %v1869
        %vm1880 = vcmask 123904
        %v1881 = vsel %vm1880, %v1879, -inf
        %v1882 = vrot.slane %v1881, 4
        %v1883 = vmax.f32 %v1881, %v1882
        %v1884 = vrot.slane %v1883, 2
        %v1885 = vmax.f32 %v1883, %v1884
        %v1886 = vrot.slane %v1885, 1
        %v1887 = vmax.f32 %v1885, %v1886
        %v1888 = vsub.f32 %v1879, %v1887
        %v1889 = vmul.f32 %v1888, 1.442695
        %v1890 = vpow.pop %v1889
        %v1891 = vsel %vm1880, %v1890, 0.0
        %v1892 = vrot.slane %v1891, 4
        %v1893 = vadd.f32 %v1891, %v1892
        %v1894 = vrot.slane %v1893, 2
        %v1895 = vadd.f32 %v1893, %v1894
        %v1896 = vrot.slane %v1895, 1
        %v1897 = vadd.f32 %v1895, %v1896
        %v1898 = vlog2.pop %v1897
        %v1899 = vmul.f32 %v1898, 0.6931472
        %v1900 = vadd.f32 %v1887, %v1899
        %v1901 = vsub.f32 %v1879, %v1900
        %1902 = vst.msk [vmem:[%s298] sm:$0x3] %vm1880, %v1901
        %s1903 = scalar_lea.vmem %s262, 8 [#allocation2]
        %v1904 = vld [vmem:[%s1903] sm:$0xf]
        %v1905 = vld [vmem:[%s1903 + $0x4] sm:$0xf]
        %s1906 = scalar_lea.vmem %s302, 1
        %v1907 = vld [vmem:[%s1906] sm:$0x1]
        %s1908 = scalar_lea.vmem %s307, 1
        %v1909 = vld [vmem:[%s1908] sm:$0x1]
        %v1910 = vmax.bf16 %v1904, 0
        %v1911 = vmax.bf16 %v1905, 0
        %v1912 = vunpack.c.l.bf16 %v1910
        %v1913 = vunpack.c.l.bf16 %v1911
        %v1914 = vsub.bf16 0, %v1904
        %v1915 = vsub.bf16 0, %v1905
        %v1916 = vmax.bf16 %v1914, 0
        %v1917 = vmax.bf16 %v1915, 0
        %v1918 = vunpack.c.l.bf16 %v1916
        %v1919 = vunpack.c.l.bf16 %v1917
        %v1920 = vsel %vm372, %v1912, 0.0
        %1921 = vadd.xlane.f32.xlu0 %v1920
        %v1922 = vpop.xlane.xlu0 %1921
        %v1923 = vsel %vm372, %v1913, 0.0
        %1924 = vadd.xlane.f32.xlu0 %v1923
        %v1925 = vpop.xlane.xlu0 %1924
        %v1926 = vsel %vm372, %v1918, 0.0
        %1927 = vadd.xlane.f32.xlu0 %v1926
        %v1928 = vpop.xlane.xlu0 %1927
        %v1929 = vsel %vm372, %v1919, 0.0
        %1930 = vadd.xlane.f32.xlu0 %v1929
        %v1931 = vpop.xlane.xlu0 %1930
        %v1932 = vadd.f32 %v1920, %v1923
        %v1933 = vrot.slane %v1932, 4
        %v1934 = vadd.f32 %v1932, %v1933
        %v1935 = vrot.slane %v1934, 2
        %v1936 = vadd.f32 %v1934, %v1935
        %v1937 = vrot.slane %v1936, 1
        %v1938 = vadd.f32 %v1936, %v1937
        %v1939 = vadd.f32 %v1926, %v1929
        %v1940 = vrot.slane %v1939, 4
        %v1941 = vadd.f32 %v1939, %v1940
        %v1942 = vrot.slane %v1941, 2
        %v1943 = vadd.f32 %v1941, %v1942
        %v1944 = vrot.slane %v1943, 1
        %v1945 = vadd.f32 %v1943, %v1944
        %1946 = vxpose.xlu0.b32.start [1/16] %v1922, 128
        %1947 = vxpose.xlu0.b32.cont [2/16] %v1925, 128
        %1948 = vxpose.xlu0.b32.cont [3/16] 0.0, 128
        %1949 = vxpose.xlu0.b32.cont [4/16] 0.0, 128
        %1950 = vxpose.xlu0.b32.cont [5/16] 0.0, 128
        %1951 = vxpose.xlu0.b32.cont [6/16] 0.0, 128
        %1952 = vxpose.xlu0.b32.cont [7/16] 0.0, 128
        %1953 = vxpose.xlu0.b32.cont [8/16] 0.0, 128
        %1954 = vxpose.xlu0.b32.cont [9/16] 0.0, 128
        %1955 = vxpose.xlu0.b32.cont [10/16] 0.0, 128
        %1956 = vxpose.xlu0.b32.cont [11/16] 0.0, 128
        %1957 = vxpose.xlu0.b32.cont [12/16] 0.0, 128
        %1958 = vxpose.xlu0.b32.cont [13/16] 0.0, 128
        %1959 = vxpose.xlu0.b32.cont [14/16] 0.0, 128
        %1960 = vxpose.xlu0.b32.cont [15/16] 0.0, 128
        %1961 = vxpose.xlu0.b32.end [16/16] 0.0, 128
        %v1962 = vpop.trf.xlu0
        %v1963 = vpop.trf.xlu0
        %v1964 = vpop.trf.xlu0
        %v1965 = vpop.trf.xlu0
        %v1966 = vpop.trf.xlu0
        %v1967 = vpop.trf.xlu0
        %v1968 = vpop.trf.xlu0
        %v1969 = vpop.trf.xlu0
        %v1970 = vpop.trf.xlu0
        %v1971 = vpop.trf.xlu0
        %v1972 = vpop.trf.xlu0
        %v1973 = vpop.trf.xlu0
        %v1974 = vpop.trf.xlu0
        %v1975 = vpop.trf.xlu0
        %v1976 = vpop.trf.xlu0
        %v1977 = vpop.trf.xlu0
        %v1978 = vlaneseq
        %v1979 = vshrl.u32 %v1978, 7
        %v1980 = vsub.s32 0, %v1979
        %v1981 = vrot.slane %v1962, %v1980
        %v1982 = vmul.f32 %v438, %v1981
        %v1983 = vmul.f32 %v443, %v1981
        %v1984 = vmul.f32 %v448, %v1981
        %v1985 = vmul.f32 %v453, %v1981
        %1986 = vxpose.xlu0.b32.start [1/16] %v1928, 128
        %1987 = vxpose.xlu0.b32.cont [2/16] %v1931, 128
        %1988 = vxpose.xlu0.b32.cont [3/16] 0.0, 128
        %1989 = vxpose.xlu0.b32.cont [4/16] 0.0, 128
        %1990 = vxpose.xlu0.b32.cont [5/16] 0.0, 128
        %1991 = vxpose.xlu0.b32.cont [6/16] 0.0, 128
        %1992 = vxpose.xlu0.b32.cont [7/16] 0.0, 128
        %1993 = vxpose.xlu0.b32.cont [8/16] 0.0, 128
        %1994 = vxpose.xlu0.b32.cont [9/16] 0.0, 128
        %1995 = vxpose.xlu0.b32.cont [10/16] 0.0, 128
        %1996 = vxpose.xlu0.b32.cont [11/16] 0.0, 128
        %1997 = vxpose.xlu0.b32.cont [12/16] 0.0, 128
        %1998 = vxpose.xlu0.b32.cont [13/16] 0.0, 128
        %1999 = vxpose.xlu0.b32.cont [14/16] 0.0, 128
        %2000 = vxpose.xlu0.b32.cont [15/16] 0.0, 128
        %2001 = vxpose.xlu0.b32.end [16/16] 0.0, 128
        %v2002 = vpop.trf.xlu0
        %v2003 = vpop.trf.xlu0
        %v2004 = vpop.trf.xlu0
        %v2005 = vpop.trf.xlu0
        %v2006 = vpop.trf.xlu0
        %v2007 = vpop.trf.xlu0
        %v2008 = vpop.trf.xlu0
        %v2009 = vpop.trf.xlu0
        %v2010 = vpop.trf.xlu0
        %v2011 = vpop.trf.xlu0
        %v2012 = vpop.trf.xlu0
        %v2013 = vpop.trf.xlu0
        %v2014 = vpop.trf.xlu0
        %v2015 = vpop.trf.xlu0
        %v2016 = vpop.trf.xlu0
        %v2017 = vpop.trf.xlu0
        %v2018 = vlaneseq
        %v2019 = vshrl.u32 %v2018, 7
        %v2020 = vsub.s32 0, %v2019
        %v2021 = vrot.slane %v2002, %v2020
        %v2022 = vmul.f32 %v506, %v2021
        %v2023 = vmul.f32 %v511, %v2021
        %v2024 = vmul.f32 %v516, %v2021
        %v2025 = vmul.f32 %v521, %v2021
        %v2026 = vadd.f32 %v1982, %v2022
        %v2027 = vadd.f32 %v1983, %v2023
        %v2028 = vadd.f32 %v1984, %v2024
        %v2029 = vadd.f32 %v1985, %v2025
        %v2030 = vmul.f32 %v542, %v1938
        %v2031 = vmul.f32 %v547, %v1938
        %v2032 = vmul.f32 %v552, %v1938
        %v2033 = vmul.f32 %v557, %v1938
        %v2034 = vmul.f32 %v574, %v1945
        %v2035 = vmul.f32 %v579, %v1945
        %v2036 = vmul.f32 %v584, %v1945
        %v2037 = vmul.f32 %v589, %v1945
        %v2038 = vadd.f32 %v2030, %v2034
        %v2039 = vadd.f32 %v2031, %v2035
        %v2040 = vadd.f32 %v2032, %v2036
        %v2041 = vadd.f32 %v2033, %v2037
        %v2043 = vlaneseq
        %v2044 = vshrl.u32 %v2043, 7
        %v2045 = vsub.s32 0, %v2044
        %v2046 = vrot.slane %v1907, %v2045
        %v2048 = vmul.f32 %v602, %v2046
        %v2049 = vmul.f32 %v607, %v2046
        %v2050 = vmul.f32 %v612, %v2046
        %v2051 = vmul.f32 %v617, %v2046
        %v2053 = vlaneseq
        %v2054 = vshrl.u32 %v2053, 7
        %v2055 = vsub.s32 0, %v2054
        %v2056 = vrot.slane %v1909, %v2055
        %v2058 = vmul.f32 %v632, %v2056
        %v2059 = vmul.f32 %v637, %v2056
        %v2060 = vmul.f32 %v642, %v2056
        %v2061 = vmul.f32 %v647, %v2056
        %v2062 = vpack.c.bf16 %v2027, %v2026
        %v2063 = vpack.c.bf16 %v2029, %v2028
        %2064 = vmatprep.subr.bf16.mxu0 0
        %2065 = vmatpush1.bf16.msra.mxu0 %v2062
        %2066 = vmatprep.subr.bf16.mxu0 0
        %2067 = vmatpush1.bf16.msra.mxu0 %v2063
        %2068 = vmatprep.subr.bf16.mxu0 0
        %2069 = vmatpush1.bf16.msra.mxu0 0
        %2070 = vmatprep.subr.bf16.mxu0 0
        %2071 = vmatpush1.bf16.msra.mxu0 0
        %2072 = vmatprep.subr.bf16.mxu0 0
        %2073 = vmatpush1.bf16.msra.mxu0 0
        %2074 = vmatprep.subr.bf16.mxu0 0
        %2075 = vmatpush1.bf16.msra.mxu0 0
        %2076 = vmatprep.subr.bf16.mxu0 0
        %2077 = vmatpush1.bf16.msra.mxu0 0
        %2078 = vmatprep.subr.bf16.mxu0 0
        %2079 = vmatpush1.bf16.msra.mxu0 0
        %2080 = vmatprep.subr.bf16.mxu0 0
        %2081 = vmatpush1.bf16.msra.mxu0 0
        %2082 = vmatprep.subr.bf16.mxu0 0
        %2083 = vmatpush1.bf16.msra.mxu0 0
        %2084 = vmatprep.subr.bf16.mxu0 0
        %2085 = vmatpush1.bf16.msra.mxu0 0
        %2086 = vmatprep.subr.bf16.mxu0 0
        %2087 = vmatpush1.bf16.msra.mxu0 0
        %2088 = vmatprep.subr.bf16.mxu0 0
        %2089 = vmatpush1.bf16.msra.mxu0 0
        %2090 = vmatprep.subr.bf16.mxu0 0
        %2091 = vmatpush1.bf16.msra.mxu0 0
        %2092 = vmatprep.subr.bf16.mxu0 0
        %2093 = vmatpush1.bf16.msra.mxu0 0
        %2094 = vmatprep.subr.bf16.mxu0 0
        %2095 = vmatpush1.bf16.msra.mxu0 0
        %2096 = vmatprep.mubr.bf16.mxu0 0
        %2097 = vmatmul.mubr.bf16.gmra.mrb[0].mxu0 %v673
        %v2098 = vpop.f32.mrb[0].mxu0
        %v2099 = vadd.f32 0.0, %v2098
        %v2100 = vpop.f32.mrb[0].mxu0
        %v2101 = vpop.f32.mrb[0].mxu0
        %v2102 = vadd.f32 0.0, %v2101
        %v2103 = vpop.f32.mrb[0].mxu0
        %2104 = vmatprep.mubr.bf16.mxu0 0
        %2105 = vmatmul.mubr.bf16.gmra.mrb[0].mxu0 %v676
        %v2106 = vpop.f32.mrb[0].mxu0
        %v2107 = vadd.f32 0.0, %v2106
        %v2108 = vpop.f32.mrb[0].mxu0
        %v2109 = vpop.f32.mrb[0].mxu0
        %v2110 = vadd.f32 0.0, %v2109
        %v2111 = vpop.f32.mrb[0].mxu0
        %2112 = vdwg.mxu0
        %v2113 = vpack.c.bf16 %v2039, %v2038
        %v2114 = vpack.c.bf16 %v2041, %v2040
        %2115 = vmatprep.subr.bf16.mxu0 0
        %2116 = vmatpush1.bf16.msra.mxu0 %v2113
        %2117 = vmatprep.subr.bf16.mxu0 0
        %2118 = vmatpush1.bf16.msra.mxu0 %v2114
        %2119 = vmatprep.subr.bf16.mxu0 0
        %2120 = vmatpush1.bf16.msra.mxu0 0
        %2121 = vmatprep.subr.bf16.mxu0 0
        %2122 = vmatpush1.bf16.msra.mxu0 0
        %2123 = vmatprep.subr.bf16.mxu0 0
        %2124 = vmatpush1.bf16.msra.mxu0 0
        %2125 = vmatprep.subr.bf16.mxu0 0
        %2126 = vmatpush1.bf16.msra.mxu0 0
        %2127 = vmatprep.subr.bf16.mxu0 0
        %2128 = vmatpush1.bf16.msra.mxu0 0
        %2129 = vmatprep.subr.bf16.mxu0 0
        %2130 = vmatpush1.bf16.msra.mxu0 0
        %2131 = vmatprep.subr.bf16.mxu0 0
        %2132 = vmatpush1.bf16.msra.mxu0 0
        %2133 = vmatprep.subr.bf16.mxu0 0
        %2134 = vmatpush1.bf16.msra.mxu0 0
        %2135 = vmatprep.subr.bf16.mxu0 0
        %2136 = vmatpush1.bf16.msra.mxu0 0
        %2137 = vmatprep.subr.bf16.mxu0 0
        %2138 = vmatpush1.bf16.msra.mxu0 0
        %2139 = vmatprep.subr.bf16.mxu0 0
        %2140 = vmatpush1.bf16.msra.mxu0 0
        %2141 = vmatprep.subr.bf16.mxu0 0
        %2142 = vmatpush1.bf16.msra.mxu0 0
        %2143 = vmatprep.subr.bf16.mxu0 0
        %2144 = vmatpush1.bf16.msra.mxu0 0
        %2145 = vmatprep.subr.bf16.mxu0 0
        %2146 = vmatpush1.bf16.msra.mxu0 0
        %2147 = vmatprep.mubr.bf16.mxu0 0
        %2148 = vmatmul.mubr.bf16.gmra.mrb[0].mxu0 %v740
        %v2149 = vpop.f32.mrb[0].mxu0
        %v2150 = vadd.f32 0.0, %v2149
        %v2151 = vpop.f32.mrb[0].mxu0
        %v2152 = vpop.f32.mrb[0].mxu0
        %v2153 = vadd.f32 0.0, %v2152
        %v2154 = vpop.f32.mrb[0].mxu0
        %2155 = vmatprep.mubr.bf16.mxu0 0
        %2156 = vmatmul.mubr.bf16.gmra.mrb[0].mxu0 %v743
        %v2157 = vpop.f32.mrb[0].mxu0
        %v2158 = vadd.f32 0.0, %v2157
        %v2159 = vpop.f32.mrb[0].mxu0
        %v2160 = vpop.f32.mrb[0].mxu0
        %v2161 = vadd.f32 0.0, %v2160
        %v2162 = vpop.f32.mrb[0].mxu0
        %2163 = vdwg.mxu0
        %v2166 = vunpack.c.l.b16 %v1904
        %v2167 = vunpack.c.l.b16 %v1905
        %v2168 = vpack.c.b16 %v2167, %v2166
        %v2170 = vsel %vm372, %v2168, 0
        %2172 = vmatprep.subr.bf16.mxu0 0
        %2173 = vmatpush1.bf16.xpose.msra.mxu0 %v2170
        %2174 = vmatprep.subr.bf16.mxu0 0
        %2175 = vmatpush1.bf16.xpose.msra.mxu0 0
        %2176 = vmatprep.subr.bf16.mxu0 0
        %2177 = vmatpush1.bf16.xpose.msra.mxu0 0
        %2178 = vmatprep.subr.bf16.mxu0 0
        %2179 = vmatpush1.bf16.xpose.msra.mxu0 0
        %2180 = vmatprep.subr.bf16.mxu0 0
        %2181 = vmatpush1.bf16.xpose.msra.mxu0 0
        %2182 = vmatprep.subr.bf16.mxu0 0
        %2183 = vmatpush1.bf16.xpose.msra.mxu0 0
        %2184 = vmatprep.subr.bf16.mxu0 0
        %2185 = vmatpush1.bf16.xpose.msra.mxu0 0
        %2186 = vmatprep.subr.bf16.mxu0 0
        %2187 = vmatpush1.bf16.xpose.msra.mxu0 0
        %2188 = vmatprep.subr.bf16.mxu0 0
        %2189 = vmatpush1.bf16.xpose.msra.mxu0 0
        %2190 = vmatprep.subr.bf16.mxu0 0
        %2191 = vmatpush1.bf16.xpose.msra.mxu0 0
        %2192 = vmatprep.subr.bf16.mxu0 0
        %2193 = vmatpush1.bf16.xpose.msra.mxu0 0
        %2194 = vmatprep.subr.bf16.mxu0 0
        %2195 = vmatpush1.bf16.xpose.msra.mxu0 0
        %2196 = vmatprep.subr.bf16.mxu0 0
        %2197 = vmatpush1.bf16.xpose.msra.mxu0 0
        %2198 = vmatprep.subr.bf16.mxu0 0
        %2199 = vmatpush1.bf16.xpose.msra.mxu0 0
        %2200 = vmatprep.subr.bf16.mxu0 0
        %2201 = vmatpush1.bf16.xpose.msra.mxu0 0
        %2202 = vmatprep.subr.bf16.mxu0 0
        %2203 = vmatpush1.bf16.xpose.msra.mxu0 0
        %2204 = vmatprep.mubr.bf16.mxu0 0
        %2205 = vmatmul.mubr.bf16.gmra.mrb[0].mxu0 %v867
        %v2206 = vpop.f32.mrb[0].mxu0
        %v2207 = vadd.f32 0.0, %v2206
        %v2208 = vpop.f32.mrb[0].mxu0
        %v2209 = vpop.f32.mrb[0].mxu0
        %v2210 = vadd.f32 0.0, %v2209
        %v2211 = vpop.f32.mrb[0].mxu0
        %2212 = vmatprep.mubr.bf16.mxu0 0
        %2213 = vmatmul.mubr.bf16.gmra.mrb[0].mxu0 %v870
        %v2214 = vpop.f32.mrb[0].mxu0
        %v2215 = vadd.f32 0.0, %v2214
        %v2216 = vpop.f32.mrb[0].mxu0
        %v2217 = vpop.f32.mrb[0].mxu0
        %v2218 = vadd.f32 0.0, %v2217
        %v2219 = vpop.f32.mrb[0].mxu0
        %2220 = vdwg.mxu0
        %2222 = vmatprep.subr.bf16.mxu0 0
        %2223 = vmatpush1.bf16.msra.mxu0 %v2168
        %2224 = vmatprep.subr.bf16.mxu0 0
        %2225 = vmatpush1.bf16.msra.mxu0 0
        %2226 = vmatprep.subr.bf16.mxu0 0
        %2227 = vmatpush1.bf16.msra.mxu0 0
        %2228 = vmatprep.subr.bf16.mxu0 0
        %2229 = vmatpush1.bf16.msra.mxu0 0
        %2230 = vmatprep.subr.bf16.mxu0 0
        %2231 = vmatpush1.bf16.msra.mxu0 0
        %2232 = vmatprep.subr.bf16.mxu0 0
        %2233 = vmatpush1.bf16.msra.mxu0 0
        %2234 = vmatprep.subr.bf16.mxu0 0
        %2235 = vmatpush1.bf16.msra.mxu0 0
        %2236 = vmatprep.subr.bf16.mxu0 0
        %2237 = vmatpush1.bf16.msra.mxu0 0
        %2238 = vmatprep.subr.bf16.mxu0 0
        %2239 = vmatpush1.bf16.msra.mxu0 0
        %2240 = vmatprep.subr.bf16.mxu0 0
        %2241 = vmatpush1.bf16.msra.mxu0 0
        %2242 = vmatprep.subr.bf16.mxu0 0
        %2243 = vmatpush1.bf16.msra.mxu0 0
        %2244 = vmatprep.subr.bf16.mxu0 0
        %2245 = vmatpush1.bf16.msra.mxu0 0
        %2246 = vmatprep.subr.bf16.mxu0 0
        %2247 = vmatpush1.bf16.msra.mxu0 0
        %2248 = vmatprep.subr.bf16.mxu0 0
        %2249 = vmatpush1.bf16.msra.mxu0 0
        %2250 = vmatprep.subr.bf16.mxu0 0
        %2251 = vmatpush1.bf16.msra.mxu0 0
        %2252 = vmatprep.subr.bf16.mxu0 0
        %2253 = vmatpush1.bf16.msra.mxu0 0
        %2254 = vmatprep.mubr.bf16.mxu0 0
        %2255 = vmatmul.mubr.bf16.gmra.mrb[0].mxu0 %v993
        %v2256 = vpop.f32.mrb[0].mxu0
        %v2257 = vadd.f32 0.0, %v2256
        %v2258 = vpop.f32.mrb[0].mxu0
        %v2259 = vpop.f32.mrb[0].mxu0
        %v2260 = vadd.f32 0.0, %v2259
        %v2261 = vpop.f32.mrb[0].mxu0
        %2262 = vmatprep.mubr.bf16.mxu0 0
        %2263 = vmatmul.mubr.bf16.gmra.mrb[0].mxu0 %v996
        %v2264 = vpop.f32.mrb[0].mxu0
        %v2265 = vadd.f32 0.0, %v2264
        %v2266 = vpop.f32.mrb[0].mxu0
        %v2267 = vpop.f32.mrb[0].mxu0
        %v2268 = vadd.f32 0.0, %v2267
        %v2269 = vpop.f32.mrb[0].mxu0
        %2270 = vdwg.mxu0
        %v2271 = vadd.f32 %v2048, %v2207
        %v2272 = vadd.f32 %v2049, %v2210
        %v2273 = vadd.f32 %v2050, %v2215
        %v2274 = vadd.f32 %v2051, %v2218
        %v2275 = vadd.f32 %v2271, %v2099
        %v2276 = vadd.f32 %v2272, %v2102
        %v2277 = vadd.f32 %v2273, %v2107
        %v2278 = vadd.f32 %v2274, %v2110
        %v2279 = vmax.f32 %v2275, 0.0
        %v2280 = vmax.f32 %v2276, 0.0
        %v2281 = vmax.f32 %v2277, 0.0
        %v2282 = vmax.f32 %v2278, 0.0
        %v2283 = vadd.f32 %v2058, %v2257
        %v2284 = vadd.f32 %v2059, %v2260
        %v2285 = vadd.f32 %v2060, %v2265
        %v2286 = vadd.f32 %v2061, %v2268
        %v2287 = vadd.f32 %v2283, %v2150
        %v2288 = vadd.f32 %v2284, %v2153
        %v2289 = vadd.f32 %v2285, %v2158
        %v2290 = vadd.f32 %v2286, %v2161
        %v2291 = vmax.f32 %v2287, 0.0
        %v2292 = vmax.f32 %v2288, 0.0
        %v2293 = vmax.f32 %v2289, 0.0
        %v2294 = vmax.f32 %v2290, 0.0
        %v2295 = vpack.c.bf16 %v2280, %v2279
        %v2296 = vpack.c.bf16 %v2282, %v2281
        %v2297 = vpack.c.bf16 %v2292, %v2291
        %v2298 = vpack.c.bf16 %v2294, %v2293
        %2299 = vmatprep.subr.bf16.mxu0 0
        %2300 = vmatpush1.bf16.msra.mxu0 %v2297
        %2301 = vmatprep.subr.bf16.mxu0 0
        %2302 = vmatpush1.bf16.msra.mxu0 %v2298
        %2303 = vmatprep.subr.bf16.mxu0 0
        %2304 = vmatpush1.bf16.msra.mxu0 0
        %2305 = vmatprep.subr.bf16.mxu0 0
        %2306 = vmatpush1.bf16.msra.mxu0 0
        %2307 = vmatprep.subr.bf16.mxu0 0
        %2308 = vmatpush1.bf16.msra.mxu0 0
        %2309 = vmatprep.subr.bf16.mxu0 0
        %2310 = vmatpush1.bf16.msra.mxu0 0
        %2311 = vmatprep.subr.bf16.mxu0 0
        %2312 = vmatpush1.bf16.msra.mxu0 0
        %2313 = vmatprep.subr.bf16.mxu0 0
        %2314 = vmatpush1.bf16.msra.mxu0 0
        %2315 = vmatprep.subr.bf16.mxu0 0
        %2316 = vmatpush1.bf16.msra.mxu0 0
        %2317 = vmatprep.subr.bf16.mxu0 0
        %2318 = vmatpush1.bf16.msra.mxu0 0
        %2319 = vmatprep.subr.bf16.mxu0 0
        %2320 = vmatpush1.bf16.msra.mxu0 0
        %2321 = vmatprep.subr.bf16.mxu0 0
        %2322 = vmatpush1.bf16.msra.mxu0 0
        %2323 = vmatprep.subr.bf16.mxu0 0
        %2324 = vmatpush1.bf16.msra.mxu0 0
        %2325 = vmatprep.subr.bf16.mxu0 0
        %2326 = vmatpush1.bf16.msra.mxu0 0
        %2327 = vmatprep.subr.bf16.mxu0 0
        %2328 = vmatpush1.bf16.msra.mxu0 0
        %2329 = vmatprep.subr.bf16.mxu0 0
        %2330 = vmatpush1.bf16.msra.mxu0 0
        %2331 = vmatprep.mubr.bf16.mxu0 0
        %2332 = vmatmul.mubr.bf16.gmra.mrb[0].mxu0 %v805
        %v2333 = vpop.f32.mrb[0].mxu0
        %v2334 = vadd.f32 0.0, %v2333
        %v2335 = vpop.f32.mrb[0].mxu0
        %v2336 = vpop.f32.mrb[0].mxu0
        %v2337 = vadd.f32 0.0, %v2336
        %v2338 = vpop.f32.mrb[0].mxu0
        %2339 = vmatprep.mubr.bf16.mxu0 0
        %2340 = vmatmul.mubr.bf16.gmra.mrb[0].mxu0 %v808
        %v2341 = vpop.f32.mrb[0].mxu0
        %v2342 = vadd.f32 0.0, %v2341
        %v2343 = vpop.f32.mrb[0].mxu0
        %v2344 = vpop.f32.mrb[0].mxu0
        %v2345 = vadd.f32 0.0, %v2344
        %v2346 = vpop.f32.mrb[0].mxu0
        %2347 = vdwg.mxu0
        %v2348 = vpack.c.bf16 %v2337, %v2334
        %v2349 = vpack.c.bf16 %v2345, %v2342
        %v2351 = vsel %vm372, %v2348, 0
        %v2354 = vsel %vm372, %v2349, 0
        %2356 = vmatprep.subr.bf16.mxu0 0
        %2357 = vmatpush1.bf16.xpose.msra.mxu0 %v2170
        %2358 = vmatprep.subr.bf16.mxu0 0
        %2359 = vmatpush1.bf16.xpose.msra.mxu0 0
        %2360 = vmatprep.subr.bf16.mxu0 0
        %2361 = vmatpush1.bf16.xpose.msra.mxu0 0
        %2362 = vmatprep.subr.bf16.mxu0 0
        %2363 = vmatpush1.bf16.xpose.msra.mxu0 0
        %2364 = vmatprep.subr.bf16.mxu0 0
        %2365 = vmatpush1.bf16.xpose.msra.mxu0 0
        %2366 = vmatprep.subr.bf16.mxu0 0
        %2367 = vmatpush1.bf16.xpose.msra.mxu0 0
        %2368 = vmatprep.subr.bf16.mxu0 0
        %2369 = vmatpush1.bf16.xpose.msra.mxu0 0
        %2370 = vmatprep.subr.bf16.mxu0 0
        %2371 = vmatpush1.bf16.xpose.msra.mxu0 0
        %2372 = vmatprep.subr.bf16.mxu0 0
        %2373 = vmatpush1.bf16.xpose.msra.mxu0 0
        %2374 = vmatprep.subr.bf16.mxu0 0
        %2375 = vmatpush1.bf16.xpose.msra.mxu0 0
        %2376 = vmatprep.subr.bf16.mxu0 0
        %2377 = vmatpush1.bf16.xpose.msra.mxu0 0
        %2378 = vmatprep.subr.bf16.mxu0 0
        %2379 = vmatpush1.bf16.xpose.msra.mxu0 0
        %2380 = vmatprep.subr.bf16.mxu0 0
        %2381 = vmatpush1.bf16.xpose.msra.mxu0 0
        %2382 = vmatprep.subr.bf16.mxu0 0
        %2383 = vmatpush1.bf16.xpose.msra.mxu0 0
        %2384 = vmatprep.subr.bf16.mxu0 0
        %2385 = vmatpush1.bf16.xpose.msra.mxu0 0
        %2386 = vmatprep.subr.bf16.mxu0 0
        %2387 = vmatpush1.bf16.xpose.msra.mxu0 0
        %2388 = vmatprep.mubr.bf16.mxu0 0
        %2389 = vmatmul.mubr.bf16.gmra.mrb[0].mxu0 %v2351
        %v2390 = vpop.f32.mrb[0].mxu0
        %v2391 = vadd.f32 0.0, %v2390
        %v2392 = vpop.f32.mrb[0].mxu0
        %v2393 = vpop.f32.mrb[0].mxu0
        %v2394 = vadd.f32 0.0, %v2393
        %v2395 = vpop.f32.mrb[0].mxu0
        %2396 = vmatprep.mubr.bf16.mxu0 0
        %2397 = vmatmul.mubr.bf16.gmra.mrb[0].mxu0 %v2354
        %v2398 = vpop.f32.mrb[0].mxu0
        %v2399 = vadd.f32 0.0, %v2398
        %v2400 = vpop.f32.mrb[0].mxu0
        %v2401 = vpop.f32.mrb[0].mxu0
        %v2402 = vadd.f32 0.0, %v2401
        %v2403 = vpop.f32.mrb[0].mxu0
        %2404 = vdwg.mxu0
        %2405 = vmatprep.subr.bf16.mxu0 0
        %2406 = vmatpush1.bf16.msra.mxu0 %v2295
        %2407 = vmatprep.subr.bf16.mxu0 0
        %2408 = vmatpush1.bf16.msra.mxu0 %v2296
        %2409 = vmatprep.subr.bf16.mxu0 0
        %2410 = vmatpush1.bf16.msra.mxu0 0
        %2411 = vmatprep.subr.bf16.mxu0 0
        %2412 = vmatpush1.bf16.msra.mxu0 0
        %2413 = vmatprep.subr.bf16.mxu0 0
        %2414 = vmatpush1.bf16.msra.mxu0 0
        %2415 = vmatprep.subr.bf16.mxu0 0
        %2416 = vmatpush1.bf16.msra.mxu0 0
        %2417 = vmatprep.subr.bf16.mxu0 0
        %2418 = vmatpush1.bf16.msra.mxu0 0
        %2419 = vmatprep.subr.bf16.mxu0 0
        %2420 = vmatpush1.bf16.msra.mxu0 0
        %2421 = vmatprep.subr.bf16.mxu0 0
        %2422 = vmatpush1.bf16.msra.mxu0 0
        %2423 = vmatprep.subr.bf16.mxu0 0
        %2424 = vmatpush1.bf16.msra.mxu0 0
        %2425 = vmatprep.subr.bf16.mxu0 0
        %2426 = vmatpush1.bf16.msra.mxu0 0
        %2427 = vmatprep.subr.bf16.mxu0 0
        %2428 = vmatpush1.bf16.msra.mxu0 0
        %2429 = vmatprep.subr.bf16.mxu0 0
        %2430 = vmatpush1.bf16.msra.mxu0 0
        %2431 = vmatprep.subr.bf16.mxu0 0
        %2432 = vmatpush1.bf16.msra.mxu0 0
        %2433 = vmatprep.subr.bf16.mxu0 0
        %2434 = vmatpush1.bf16.msra.mxu0 0
        %2435 = vmatprep.subr.bf16.mxu0 0
        %2436 = vmatpush1.bf16.msra.mxu0 0
        %2437 = vmatprep.mubr.bf16.mxu0 0
        %2438 = vmatmul.mubr.bf16.gmra.mrb[0].mxu0 %v935
        %v2439 = vpop.f32.mrb[0].mxu0
        %v2440 = vadd.f32 0.0, %v2439
        %v2441 = vpop.f32.mrb[0].mxu0
        %v2442 = vpop.f32.mrb[0].mxu0
        %v2443 = vadd.f32 0.0, %v2442
        %v2444 = vpop.f32.mrb[0].mxu0
        %2445 = vmatprep.mubr.bf16.mxu0 0
        %2446 = vmatmul.mubr.bf16.gmra.mrb[0].mxu0 %v938
        %v2447 = vpop.f32.mrb[0].mxu0
        %v2448 = vadd.f32 0.0, %v2447
        %v2449 = vpop.f32.mrb[0].mxu0
        %v2450 = vpop.f32.mrb[0].mxu0
        %v2451 = vadd.f32 0.0, %v2450
        %v2452 = vpop.f32.mrb[0].mxu0
        %2453 = vdwg.mxu0
        %v2454 = vpack.c.bf16 %v2443, %v2440
        %v2455 = vpack.c.bf16 %v2451, %v2448
        %v2457 = vsel %vm372, %v2454, 0
        %v2460 = vsel %vm372, %v2455, 0
        %2462 = vmatprep.subr.bf16.mxu0 0
        %2463 = vmatpush1.bf16.msra.mxu0 %v2168
        %2464 = vmatprep.subr.bf16.mxu0 0
        %2465 = vmatpush1.bf16.msra.mxu0 0
        %2466 = vmatprep.subr.bf16.mxu0 0
        %2467 = vmatpush1.bf16.msra.mxu0 0
        %2468 = vmatprep.subr.bf16.mxu0 0
        %2469 = vmatpush1.bf16.msra.mxu0 0
        %2470 = vmatprep.subr.bf16.mxu0 0
        %2471 = vmatpush1.bf16.msra.mxu0 0
        %2472 = vmatprep.subr.bf16.mxu0 0
        %2473 = vmatpush1.bf16.msra.mxu0 0
        %2474 = vmatprep.subr.bf16.mxu0 0
        %2475 = vmatpush1.bf16.msra.mxu0 0
        %2476 = vmatprep.subr.bf16.mxu0 0
        %2477 = vmatpush1.bf16.msra.mxu0 0
        %2478 = vmatprep.subr.bf16.mxu0 0
        %2479 = vmatpush1.bf16.msra.mxu0 0
        %2480 = vmatprep.subr.bf16.mxu0 0
        %2481 = vmatpush1.bf16.msra.mxu0 0
        %2482 = vmatprep.subr.bf16.mxu0 0
        %2483 = vmatpush1.bf16.msra.mxu0 0
        %2484 = vmatprep.subr.bf16.mxu0 0
        %2485 = vmatpush1.bf16.msra.mxu0 0
        %2486 = vmatprep.subr.bf16.mxu0 0
        %2487 = vmatpush1.bf16.msra.mxu0 0
        %2488 = vmatprep.subr.bf16.mxu0 0
        %2489 = vmatpush1.bf16.msra.mxu0 0
        %2490 = vmatprep.subr.bf16.mxu0 0
        %2491 = vmatpush1.bf16.msra.mxu0 0
        %2492 = vmatprep.subr.bf16.mxu0 0
        %2493 = vmatpush1.bf16.msra.mxu0 0
        %2494 = vmatprep.mubr.bf16.mxu0 0
        %2495 = vmatmul.mubr.bf16.gmra.mrb[0].mxu0 %v2457
        %v2496 = vpop.f32.mrb[0].mxu0
        %v2497 = vadd.f32 0.0, %v2496
        %v2498 = vpop.f32.mrb[0].mxu0
        %v2499 = vpop.f32.mrb[0].mxu0
        %v2500 = vadd.f32 0.0, %v2499
        %v2501 = vpop.f32.mrb[0].mxu0
        %2502 = vmatprep.mubr.bf16.mxu0 0
        %2503 = vmatmul.mubr.bf16.gmra.mrb[0].mxu0 %v2460
        %v2504 = vpop.f32.mrb[0].mxu0
        %v2505 = vadd.f32 0.0, %v2504
        %v2506 = vpop.f32.mrb[0].mxu0
        %v2507 = vpop.f32.mrb[0].mxu0
        %v2508 = vadd.f32 0.0, %v2507
        %v2509 = vpop.f32.mrb[0].mxu0
        %2510 = vdwg.mxu0
        %v2511 = vadd.f32 %v2048, %v2391
        %v2512 = vadd.f32 %v2049, %v2394
        %v2513 = vadd.f32 %v2050, %v2399
        %v2514 = vadd.f32 %v2051, %v2402
        %v2515 = vadd.f32 %v2511, %v2099
        %v2516 = vadd.f32 %v2512, %v2102
        %v2517 = vadd.f32 %v2513, %v2107
        %v2518 = vadd.f32 %v2514, %v2110
        %v2519 = vmax.f32 %v2515, 0.0
        %v2520 = vmax.f32 %v2516, 0.0
        %v2521 = vmax.f32 %v2517, 0.0
        %v2522 = vmax.f32 %v2518, 0.0
        %v2523 = vadd.f32 %v2058, %v2497
        %v2524 = vadd.f32 %v2059, %v2500
        %v2525 = vadd.f32 %v2060, %v2505
        %v2526 = vadd.f32 %v2061, %v2508
        %v2527 = vadd.f32 %v2523, %v2150
        %v2528 = vadd.f32 %v2524, %v2153
        %v2529 = vadd.f32 %v2525, %v2158
        %v2530 = vadd.f32 %v2526, %v2161
        %v2531 = vmax.f32 %v2527, 0.0
        %v2532 = vmax.f32 %v2528, 0.0
        %v2533 = vmax.f32 %v2529, 0.0
        %v2534 = vmax.f32 %v2530, 0.0
        %v2535 = vpack.c.bf16 %v2520, %v2519
        %v2536 = vpack.c.bf16 %v2522, %v2521
        %v2537 = vpack.c.bf16 %v2532, %v2531
        %v2538 = vpack.c.bf16 %v2534, %v2533
        %2539 = vmatprep.subr.bf16.mxu0 0
        %2540 = vmatpush1.bf16.msra.mxu0 %v2537
        %2541 = vmatprep.subr.bf16.mxu0 0
        %2542 = vmatpush1.bf16.msra.mxu0 %v2538
        %2543 = vmatprep.subr.bf16.mxu0 0
        %2544 = vmatpush1.bf16.msra.mxu0 0
        %2545 = vmatprep.subr.bf16.mxu0 0
        %2546 = vmatpush1.bf16.msra.mxu0 0
        %2547 = vmatprep.subr.bf16.mxu0 0
        %2548 = vmatpush1.bf16.msra.mxu0 0
        %2549 = vmatprep.subr.bf16.mxu0 0
        %2550 = vmatpush1.bf16.msra.mxu0 0
        %2551 = vmatprep.subr.bf16.mxu0 0
        %2552 = vmatpush1.bf16.msra.mxu0 0
        %2553 = vmatprep.subr.bf16.mxu0 0
        %2554 = vmatpush1.bf16.msra.mxu0 0
        %2555 = vmatprep.subr.bf16.mxu0 0
        %2556 = vmatpush1.bf16.msra.mxu0 0
        %2557 = vmatprep.subr.bf16.mxu0 0
        %2558 = vmatpush1.bf16.msra.mxu0 0
        %2559 = vmatprep.subr.bf16.mxu0 0
        %2560 = vmatpush1.bf16.msra.mxu0 0
        %2561 = vmatprep.subr.bf16.mxu0 0
        %2562 = vmatpush1.bf16.msra.mxu0 0
        %2563 = vmatprep.subr.bf16.mxu0 0
        %2564 = vmatpush1.bf16.msra.mxu0 0
        %2565 = vmatprep.subr.bf16.mxu0 0
        %2566 = vmatpush1.bf16.msra.mxu0 0
        %2567 = vmatprep.subr.bf16.mxu0 0
        %2568 = vmatpush1.bf16.msra.mxu0 0
        %2569 = vmatprep.subr.bf16.mxu0 0
        %2570 = vmatpush1.bf16.msra.mxu0 0
        %2571 = vmatprep.mubr.bf16.mxu0 0
        %2572 = vmatmul.mubr.bf16.gmra.mrb[0].mxu0 %v805
        %v2573 = vpop.f32.mrb[0].mxu0
        %v2574 = vadd.f32 0.0, %v2573
        %v2575 = vpop.f32.mrb[0].mxu0
        %v2576 = vpop.f32.mrb[0].mxu0
        %v2577 = vadd.f32 0.0, %v2576
        %v2578 = vpop.f32.mrb[0].mxu0
        %2579 = vmatprep.mubr.bf16.mxu0 0
        %2580 = vmatmul.mubr.bf16.gmra.mrb[0].mxu0 %v808
        %v2581 = vpop.f32.mrb[0].mxu0
        %v2582 = vadd.f32 0.0, %v2581
        %v2583 = vpop.f32.mrb[0].mxu0
        %v2584 = vpop.f32.mrb[0].mxu0
        %v2585 = vadd.f32 0.0, %v2584
        %v2586 = vpop.f32.mrb[0].mxu0
        %2587 = vdwg.mxu0
        %v2588 = vpack.c.bf16 %v2577, %v2574
        %v2589 = vpack.c.bf16 %v2585, %v2582
        %v2591 = vsel %vm372, %v2588, 0
        %v2594 = vsel %vm372, %v2589, 0
        %2596 = vmatprep.subr.bf16.mxu0 0
        %2597 = vmatpush1.bf16.xpose.msra.mxu0 %v2170
        %2598 = vmatprep.subr.bf16.mxu0 0
        %2599 = vmatpush1.bf16.xpose.msra.mxu0 0
        %2600 = vmatprep.subr.bf16.mxu0 0
        %2601 = vmatpush1.bf16.xpose.msra.mxu0 0
        %2602 = vmatprep.subr.bf16.mxu0 0
        %2603 = vmatpush1.bf16.xpose.msra.mxu0 0
        %2604 = vmatprep.subr.bf16.mxu0 0
        %2605 = vmatpush1.bf16.xpose.msra.mxu0 0
        %2606 = vmatprep.subr.bf16.mxu0 0
        %2607 = vmatpush1.bf16.xpose.msra.mxu0 0
        %2608 = vmatprep.subr.bf16.mxu0 0
        %2609 = vmatpush1.bf16.xpose.msra.mxu0 0
        %2610 = vmatprep.subr.bf16.mxu0 0
        %2611 = vmatpush1.bf16.xpose.msra.mxu0 0
        %2612 = vmatprep.subr.bf16.mxu0 0
        %2613 = vmatpush1.bf16.xpose.msra.mxu0 0
        %2614 = vmatprep.subr.bf16.mxu0 0
        %2615 = vmatpush1.bf16.xpose.msra.mxu0 0
        %2616 = vmatprep.subr.bf16.mxu0 0
        %2617 = vmatpush1.bf16.xpose.msra.mxu0 0
        %2618 = vmatprep.subr.bf16.mxu0 0
        %2619 = vmatpush1.bf16.xpose.msra.mxu0 0
        %2620 = vmatprep.subr.bf16.mxu0 0
        %2621 = vmatpush1.bf16.xpose.msra.mxu0 0
        %2622 = vmatprep.subr.bf16.mxu0 0
        %2623 = vmatpush1.bf16.xpose.msra.mxu0 0
        %2624 = vmatprep.subr.bf16.mxu0 0
        %2625 = vmatpush1.bf16.xpose.msra.mxu0 0
        %2626 = vmatprep.subr.bf16.mxu0 0
        %2627 = vmatpush1.bf16.xpose.msra.mxu0 0
        %2628 = vmatprep.mubr.bf16.mxu0 0
        %2629 = vmatmul.mubr.bf16.gmra.mrb[0].mxu0 %v2591
        %v2630 = vpop.f32.mrb[0].mxu0
        %v2631 = vadd.f32 0.0, %v2630
        %v2632 = vpop.f32.mrb[0].mxu0
        %v2633 = vpop.f32.mrb[0].mxu0
        %v2634 = vadd.f32 0.0, %v2633
        %v2635 = vpop.f32.mrb[0].mxu0
        %2636 = vmatprep.mubr.bf16.mxu0 0
        %2637 = vmatmul.mubr.bf16.gmra.mrb[0].mxu0 %v2594
        %v2638 = vpop.f32.mrb[0].mxu0
        %v2639 = vadd.f32 0.0, %v2638
        %v2640 = vpop.f32.mrb[0].mxu0
        %v2641 = vpop.f32.mrb[0].mxu0
        %v2642 = vadd.f32 0.0, %v2641
        %v2643 = vpop.f32.mrb[0].mxu0
        %2644 = vdwg.mxu0
        %2645 = vmatprep.subr.bf16.mxu0 0
        %2646 = vmatpush1.bf16.msra.mxu0 %v2535
        %2647 = vmatprep.subr.bf16.mxu0 0
        %2648 = vmatpush1.bf16.msra.mxu0 %v2536
        %2649 = vmatprep.subr.bf16.mxu0 0
        %2650 = vmatpush1.bf16.msra.mxu0 0
        %2651 = vmatprep.subr.bf16.mxu0 0
        %2652 = vmatpush1.bf16.msra.mxu0 0
        %2653 = vmatprep.subr.bf16.mxu0 0
        %2654 = vmatpush1.bf16.msra.mxu0 0
        %2655 = vmatprep.subr.bf16.mxu0 0
        %2656 = vmatpush1.bf16.msra.mxu0 0
        %2657 = vmatprep.subr.bf16.mxu0 0
        %2658 = vmatpush1.bf16.msra.mxu0 0
        %2659 = vmatprep.subr.bf16.mxu0 0
        %2660 = vmatpush1.bf16.msra.mxu0 0
        %2661 = vmatprep.subr.bf16.mxu0 0
        %2662 = vmatpush1.bf16.msra.mxu0 0
        %2663 = vmatprep.subr.bf16.mxu0 0
        %2664 = vmatpush1.bf16.msra.mxu0 0
        %2665 = vmatprep.subr.bf16.mxu0 0
        %2666 = vmatpush1.bf16.msra.mxu0 0
        %2667 = vmatprep.subr.bf16.mxu0 0
        %2668 = vmatpush1.bf16.msra.mxu0 0
        %2669 = vmatprep.subr.bf16.mxu0 0
        %2670 = vmatpush1.bf16.msra.mxu0 0
        %2671 = vmatprep.subr.bf16.mxu0 0
        %2672 = vmatpush1.bf16.msra.mxu0 0
        %2673 = vmatprep.subr.bf16.mxu0 0
        %2674 = vmatpush1.bf16.msra.mxu0 0
        %2675 = vmatprep.subr.bf16.mxu0 0
        %2676 = vmatpush1.bf16.msra.mxu0 0
        %2677 = vmatprep.mubr.bf16.mxu0 0
        %2678 = vmatmul.mubr.bf16.gmra.mrb[0].mxu0 %v935
        %v2679 = vpop.f32.mrb[0].mxu0
        %v2680 = vadd.f32 0.0, %v2679
        %v2681 = vpop.f32.mrb[0].mxu0
        %v2682 = vpop.f32.mrb[0].mxu0
        %v2683 = vadd.f32 0.0, %v2682
        %v2684 = vpop.f32.mrb[0].mxu0
        %2685 = vmatprep.mubr.bf16.mxu0 0
        %2686 = vmatmul.mubr.bf16.gmra.mrb[0].mxu0 %v938
        %v2687 = vpop.f32.mrb[0].mxu0
        %v2688 = vadd.f32 0.0, %v2687
        %v2689 = vpop.f32.mrb[0].mxu0
        %v2690 = vpop.f32.mrb[0].mxu0
        %v2691 = vadd.f32 0.0, %v2690
        %v2692 = vpop.f32.mrb[0].mxu0
        %2693 = vdwg.mxu0
        %v2694 = vpack.c.bf16 %v2683, %v2680
        %v2695 = vpack.c.bf16 %v2691, %v2688
        %v2697 = vsel %vm372, %v2694, 0
        %v2700 = vsel %vm372, %v2695, 0
        %2702 = vmatprep.subr.bf16.mxu0 0
        %2703 = vmatpush1.bf16.msra.mxu0 %v2168
        %2704 = vmatprep.subr.bf16.mxu0 0
        %2705 = vmatpush1.bf16.msra.mxu0 0
        %2706 = vmatprep.subr.bf16.mxu0 0
        %2707 = vmatpush1.bf16.msra.mxu0 0
        %2708 = vmatprep.subr.bf16.mxu0 0
        %2709 = vmatpush1.bf16.msra.mxu0 0
        %2710 = vmatprep.subr.bf16.mxu0 0
        %2711 = vmatpush1.bf16.msra.mxu0 0
        %2712 = vmatprep.subr.bf16.mxu0 0
        %2713 = vmatpush1.bf16.msra.mxu0 0
        %2714 = vmatprep.subr.bf16.mxu0 0
        %2715 = vmatpush1.bf16.msra.mxu0 0
        %2716 = vmatprep.subr.bf16.mxu0 0
        %2717 = vmatpush1.bf16.msra.mxu0 0
        %2718 = vmatprep.subr.bf16.mxu0 0
        %2719 = vmatpush1.bf16.msra.mxu0 0
        %2720 = vmatprep.subr.bf16.mxu0 0
        %2721 = vmatpush1.bf16.msra.mxu0 0
        %2722 = vmatprep.subr.bf16.mxu0 0
        %2723 = vmatpush1.bf16.msra.mxu0 0
        %2724 = vmatprep.subr.bf16.mxu0 0
        %2725 = vmatpush1.bf16.msra.mxu0 0
        %2726 = vmatprep.subr.bf16.mxu0 0
        %2727 = vmatpush1.bf16.msra.mxu0 0
        %2728 = vmatprep.subr.bf16.mxu0 0
        %2729 = vmatpush1.bf16.msra.mxu0 0
        %2730 = vmatprep.subr.bf16.mxu0 0
        %2731 = vmatpush1.bf16.msra.mxu0 0
        %2732 = vmatprep.subr.bf16.mxu0 0
        %2733 = vmatpush1.bf16.msra.mxu0 0
        %2734 = vmatprep.mubr.bf16.mxu0 0
        %2735 = vmatmul.mubr.bf16.gmra.mrb[0].mxu0 %v2697
        %v2736 = vpop.f32.mrb[0].mxu0
        %v2737 = vadd.f32 0.0, %v2736
        %v2738 = vpop.f32.mrb[0].mxu0
        %v2739 = vpop.f32.mrb[0].mxu0
        %v2740 = vadd.f32 0.0, %v2739
        %v2741 = vpop.f32.mrb[0].mxu0
        %2742 = vmatprep.mubr.bf16.mxu0 0
        %2743 = vmatmul.mubr.bf16.gmra.mrb[0].mxu0 %v2700
        %v2744 = vpop.f32.mrb[0].mxu0
        %v2745 = vadd.f32 0.0, %v2744
        %v2746 = vpop.f32.mrb[0].mxu0
        %v2747 = vpop.f32.mrb[0].mxu0
        %v2748 = vadd.f32 0.0, %v2747
        %v2749 = vpop.f32.mrb[0].mxu0
        %2750 = vdwg.mxu0
        %v2751 = vadd.f32 %v2048, %v2631
        %v2752 = vadd.f32 %v2049, %v2634
        %v2753 = vadd.f32 %v2050, %v2639
        %v2754 = vadd.f32 %v2051, %v2642
        %v2755 = vadd.f32 %v2751, %v2099
        %v2756 = vadd.f32 %v2752, %v2102
        %v2757 = vadd.f32 %v2753, %v2107
        %v2758 = vadd.f32 %v2754, %v2110
        %v2759 = vmax.f32 %v2755, 0.0
        %v2760 = vmax.f32 %v2756, 0.0
        %v2761 = vmax.f32 %v2757, 0.0
        %v2762 = vmax.f32 %v2758, 0.0
        %v2763 = vadd.f32 %v2058, %v2737
        %v2764 = vadd.f32 %v2059, %v2740
        %v2765 = vadd.f32 %v2060, %v2745
        %v2766 = vadd.f32 %v2061, %v2748
        %v2767 = vadd.f32 %v2763, %v2150
        %v2768 = vadd.f32 %v2764, %v2153
        %v2769 = vadd.f32 %v2765, %v2158
        %v2770 = vadd.f32 %v2766, %v2161
        %v2771 = vmax.f32 %v2767, 0.0
        %v2772 = vmax.f32 %v2768, 0.0
        %v2773 = vmax.f32 %v2769, 0.0
        %v2774 = vmax.f32 %v2770, 0.0
        %v2775 = vsel %vm372, %v2759, 0.0
        %2776 = vadd.xlane.f32.xlu0 %v2775
        %v2777 = vpop.xlane.xlu0 %2776
        %v2778 = vsel %vm372, %v2760, 0.0
        %2779 = vadd.xlane.f32.xlu0 %v2778
        %v2780 = vpop.xlane.xlu0 %2779
        %v2781 = vsel %vm372, %v2761, 0.0
        %2782 = vadd.xlane.f32.xlu0 %v2781
        %v2783 = vpop.xlane.xlu0 %2782
        %v2784 = vsel %vm372, %v2762, 0.0
        %2785 = vadd.xlane.f32.xlu0 %v2784
        %v2786 = vpop.xlane.xlu0 %2785
        %v2787 = vsel %vm372, %v2771, 0.0
        %2788 = vadd.xlane.f32.xlu0 %v2787
        %v2789 = vpop.xlane.xlu0 %2788
        %v2790 = vsel %vm372, %v2772, 0.0
        %2791 = vadd.xlane.f32.xlu0 %v2790
        %v2792 = vpop.xlane.xlu0 %2791
        %v2793 = vsel %vm372, %v2773, 0.0
        %2794 = vadd.xlane.f32.xlu0 %v2793
        %v2795 = vpop.xlane.xlu0 %2794
        %v2796 = vsel %vm372, %v2774, 0.0
        %2797 = vadd.xlane.f32.xlu0 %v2796
        %v2798 = vpop.xlane.xlu0 %2797
        %v2799 = vpack.c.bf16 %v2780, %v2777
        %v2800 = vpack.c.bf16 %v2786, %v2783
        %v2801 = vpack.c.bf16 %v2792, %v2789
        %v2802 = vpack.c.bf16 %v2798, %v2795
        %2803 = vmatprep.subr.bf16.mxu0 0
        %2804 = vmatpush1.bf16.msra.mxu0 %v2801
        %2805 = vmatprep.subr.bf16.mxu0 0
        %2806 = vmatpush1.bf16.msra.mxu0 %v2802
        %2807 = vmatprep.subr.bf16.mxu0 0
        %2808 = vmatpush1.bf16.msra.mxu0 0
        %2809 = vmatprep.subr.bf16.mxu0 0
        %2810 = vmatpush1.bf16.msra.mxu0 0
        %2811 = vmatprep.subr.bf16.mxu0 0
        %2812 = vmatpush1.bf16.msra.mxu0 0
        %2813 = vmatprep.subr.bf16.mxu0 0
        %2814 = vmatpush1.bf16.msra.mxu0 0
        %2815 = vmatprep.subr.bf16.mxu0 0
        %2816 = vmatpush1.bf16.msra.mxu0 0
        %2817 = vmatprep.subr.bf16.mxu0 0
        %2818 = vmatpush1.bf16.msra.mxu0 0
        %2819 = vmatprep.subr.bf16.mxu0 0
        %2820 = vmatpush1.bf16.msra.mxu0 0
        %2821 = vmatprep.subr.bf16.mxu0 0
        %2822 = vmatpush1.bf16.msra.mxu0 0
        %2823 = vmatprep.subr.bf16.mxu0 0
        %2824 = vmatpush1.bf16.msra.mxu0 0
        %2825 = vmatprep.subr.bf16.mxu0 0
        %2826 = vmatpush1.bf16.msra.mxu0 0
        %2827 = vmatprep.subr.bf16.mxu0 0
        %2828 = vmatpush1.bf16.msra.mxu0 0
        %2829 = vmatprep.subr.bf16.mxu0 0
        %2830 = vmatpush1.bf16.msra.mxu0 0
        %2831 = vmatprep.subr.bf16.mxu0 0
        %2832 = vmatpush1.bf16.msra.mxu0 0
        %2833 = vmatprep.subr.bf16.mxu0 0
        %2834 = vmatpush1.bf16.msra.mxu0 0
        %2835 = vmatprep.mubr.bf16.mxu0 0
        %2836 = vmatmul.mubr.bf16.gmra.mrb[0].mxu0 %v1590
        %v2837 = vpop.f32.mrb[0].mxu0
        %v2838 = vadd.f32 0.0, %v2837
        %v2839 = vpop.f32.mrb[0].mxu0
        %v2840 = vpop.f32.mrb[0].mxu0
        %v2841 = vadd.f32 0.0, %v2840
        %v2842 = vpop.f32.mrb[0].mxu0
        %2843 = vmatprep.mubr.bf16.mxu0 0
        %2844 = vmatmul.mubr.bf16.gmra.mrb[0].mxu0 %v1593
        %v2845 = vpop.f32.mrb[0].mxu0
        %v2846 = vadd.f32 0.0, %v2845
        %v2847 = vpop.f32.mrb[0].mxu0
        %v2848 = vpop.f32.mrb[0].mxu0
        %v2849 = vadd.f32 0.0, %v2848
        %v2850 = vpop.f32.mrb[0].mxu0
        %2851 = vdwg.mxu0
        %2852 = vmatprep.subr.bf16.mxu0 0
        %2853 = vmatpush1.bf16.msra.mxu0 %v2799
        %2854 = vmatprep.subr.bf16.mxu0 0
        %2855 = vmatpush1.bf16.msra.mxu0 %v2800
        %2856 = vmatprep.subr.bf16.mxu0 0
        %2857 = vmatpush1.bf16.msra.mxu0 0
        %2858 = vmatprep.subr.bf16.mxu0 0
        %2859 = vmatpush1.bf16.msra.mxu0 0
        %2860 = vmatprep.subr.bf16.mxu0 0
        %2861 = vmatpush1.bf16.msra.mxu0 0
        %2862 = vmatprep.subr.bf16.mxu0 0
        %2863 = vmatpush1.bf16.msra.mxu0 0
        %2864 = vmatprep.subr.bf16.mxu0 0
        %2865 = vmatpush1.bf16.msra.mxu0 0
        %2866 = vmatprep.subr.bf16.mxu0 0
        %2867 = vmatpush1.bf16.msra.mxu0 0
        %2868 = vmatprep.subr.bf16.mxu0 0
        %2869 = vmatpush1.bf16.msra.mxu0 0
        %2870 = vmatprep.subr.bf16.mxu0 0
        %2871 = vmatpush1.bf16.msra.mxu0 0
        %2872 = vmatprep.subr.bf16.mxu0 0
        %2873 = vmatpush1.bf16.msra.mxu0 0
        %2874 = vmatprep.subr.bf16.mxu0 0
        %2875 = vmatpush1.bf16.msra.mxu0 0
        %2876 = vmatprep.subr.bf16.mxu0 0
        %2877 = vmatpush1.bf16.msra.mxu0 0
        %2878 = vmatprep.subr.bf16.mxu0 0
        %2879 = vmatpush1.bf16.msra.mxu0 0
        %2880 = vmatprep.subr.bf16.mxu0 0
        %2881 = vmatpush1.bf16.msra.mxu0 0
        %2882 = vmatprep.subr.bf16.mxu0 0
        %2883 = vmatpush1.bf16.msra.mxu0 0
        %2884 = vmatprep.mubr.bf16.mxu0 0
        %2885 = vmatmul.mubr.bf16.gmra.mrb[0].mxu0 %v1655
        %v2886 = vpop.f32.mrb[0].mxu0
        %v2887 = vadd.f32 %v2838, %v2886
        %v2888 = vpop.f32.mrb[0].mxu0
        %v2889 = vpop.f32.mrb[0].mxu0
        %v2890 = vadd.f32 %v2841, %v2889
        %v2891 = vpop.f32.mrb[0].mxu0
        %2892 = vmatprep.mubr.bf16.mxu0 0
        %2893 = vmatmul.mubr.bf16.gmra.mrb[0].mxu0 %v1658
        %v2894 = vpop.f32.mrb[0].mxu0
        %v2895 = vadd.f32 %v2846, %v2894
        %v2896 = vpop.f32.mrb[0].mxu0
        %v2897 = vpop.f32.mrb[0].mxu0
        %v2898 = vadd.f32 %v2849, %v2897
        %v2899 = vpop.f32.mrb[0].mxu0
        %2900 = vdwg.mxu0
        %v2901 = vmax.f32 %v2887, 0.0
        %v2902 = vmax.f32 %v2890, 0.0
        %v2903 = vmax.f32 %v2895, 0.0
        %v2904 = vmax.f32 %v2898, 0.0
        %v2905 = vpack.c.bf16 %v2772, %v2771
        %v2906 = vpack.c.bf16 %v2774, %v2773
        %2907 = vmatprep.subr.bf16.mxu0 0
        %2908 = vmatpush1.bf16.msra.mxu0 %v2905
        %2909 = vmatprep.subr.bf16.mxu0 0
        %2910 = vmatpush1.bf16.msra.mxu0 %v2906
        %2911 = vmatprep.subr.bf16.mxu0 0
        %2912 = vmatpush1.bf16.msra.mxu0 0
        %2913 = vmatprep.subr.bf16.mxu0 0
        %2914 = vmatpush1.bf16.msra.mxu0 0
        %2915 = vmatprep.subr.bf16.mxu0 0
        %2916 = vmatpush1.bf16.msra.mxu0 0
        %2917 = vmatprep.subr.bf16.mxu0 0
        %2918 = vmatpush1.bf16.msra.mxu0 0
        %2919 = vmatprep.subr.bf16.mxu0 0
        %2920 = vmatpush1.bf16.msra.mxu0 0
        %2921 = vmatprep.subr.bf16.mxu0 0
        %2922 = vmatpush1.bf16.msra.mxu0 0
        %2923 = vmatprep.subr.bf16.mxu0 0
        %2924 = vmatpush1.bf16.msra.mxu0 0
        %2925 = vmatprep.subr.bf16.mxu0 0
        %2926 = vmatpush1.bf16.msra.mxu0 0
        %2927 = vmatprep.subr.bf16.mxu0 0
        %2928 = vmatpush1.bf16.msra.mxu0 0
        %2929 = vmatprep.subr.bf16.mxu0 0
        %2930 = vmatpush1.bf16.msra.mxu0 0
        %2931 = vmatprep.subr.bf16.mxu0 0
        %2932 = vmatpush1.bf16.msra.mxu0 0
        %2933 = vmatprep.subr.bf16.mxu0 0
        %2934 = vmatpush1.bf16.msra.mxu0 0
        %2935 = vmatprep.subr.bf16.mxu0 0
        %2936 = vmatpush1.bf16.msra.mxu0 0
        %2937 = vmatprep.subr.bf16.mxu0 0
        %2938 = vmatpush1.bf16.msra.mxu0 0
        %2939 = vmatprep.mubr.bf16.mxu0 0
        %2940 = vmatmul.mubr.bf16.gmra.mrb[0].mxu0 %v1726
        %v2941 = vpop.f32.mrb[0].mxu0
        %v2942 = vadd.f32 0.0, %v2941
        %v2943 = vpop.f32.mrb[0].mxu0
        %v2944 = vpop.f32.mrb[0].mxu0
        %v2945 = vadd.f32 0.0, %v2944
        %v2946 = vpop.f32.mrb[0].mxu0
        %2947 = vmatprep.mubr.bf16.mxu0 0
        %2948 = vmatmul.mubr.bf16.gmra.mrb[0].mxu0 %v1729
        %v2949 = vpop.f32.mrb[0].mxu0
        %v2950 = vadd.f32 0.0, %v2949
        %v2951 = vpop.f32.mrb[0].mxu0
        %v2952 = vpop.f32.mrb[0].mxu0
        %v2953 = vadd.f32 0.0, %v2952
        %v2954 = vpop.f32.mrb[0].mxu0
        %2955 = vdwg.mxu0
        %v2956 = vmax.f32 %v2942, 0.0
        %v2957 = vmax.f32 %v2945, 0.0
        %v2958 = vmax.f32 %v2950, 0.0
        %v2959 = vmax.f32 %v2953, 0.0
        %v2960 = vpack.c.bf16 %v2902, %v2901
        %v2961 = vpack.c.bf16 %v2904, %v2903
        %2962 = vmatprep.subr.bf16.mxu0 0
        %2963 = vmatpush1.bf16.msra.mxu0 %v2960
        %2964 = vmatprep.subr.bf16.mxu0 0
        %2965 = vmatpush1.bf16.msra.mxu0 %v2961
        %2966 = vmatprep.subr.bf16.mxu0 0
        %2967 = vmatpush1.bf16.msra.mxu0 0
        %2968 = vmatprep.subr.bf16.mxu0 0
        %2969 = vmatpush1.bf16.msra.mxu0 0
        %2970 = vmatprep.subr.bf16.mxu0 0
        %2971 = vmatpush1.bf16.msra.mxu0 0
        %2972 = vmatprep.subr.bf16.mxu0 0
        %2973 = vmatpush1.bf16.msra.mxu0 0
        %2974 = vmatprep.subr.bf16.mxu0 0
        %2975 = vmatpush1.bf16.msra.mxu0 0
        %2976 = vmatprep.subr.bf16.mxu0 0
        %2977 = vmatpush1.bf16.msra.mxu0 0
        %2978 = vmatprep.subr.bf16.mxu0 0
        %2979 = vmatpush1.bf16.msra.mxu0 0
        %2980 = vmatprep.subr.bf16.mxu0 0
        %2981 = vmatpush1.bf16.msra.mxu0 0
        %2982 = vmatprep.subr.bf16.mxu0 0
        %2983 = vmatpush1.bf16.msra.mxu0 0
        %2984 = vmatprep.subr.bf16.mxu0 0
        %2985 = vmatpush1.bf16.msra.mxu0 0
        %2986 = vmatprep.subr.bf16.mxu0 0
        %2987 = vmatpush1.bf16.msra.mxu0 0
        %2988 = vmatprep.subr.bf16.mxu0 0
        %2989 = vmatpush1.bf16.msra.mxu0 0
        %2990 = vmatprep.subr.bf16.mxu0 0
        %2991 = vmatpush1.bf16.msra.mxu0 0
        %2992 = vmatprep.subr.bf16.mxu0 0
        %2993 = vmatpush1.bf16.msra.mxu0 0
        %2994 = vmatprep.mubr.bf16.mxu0 0
        %2995 = vmatmul.mubr.bf16.gmra.mrb[0].mxu0 %v1787
        %v2996 = vpop.f32.mrb[0].mxu0
        %v2997 = vadd.f32 0.0, %v2996
        %v2998 = vpop.f32.mrb[0].mxu0
        %v2999 = vpop.f32.mrb[0].mxu0
        %v3000 = vpop.f32.mrb[0].mxu0
        %3001 = vdwg.mxu0
        %v3002 = vpack.c.bf16 %v2957, %v2956
        %v3003 = vpack.c.bf16 %v2959, %v2958
        %3004 = vmatprep.subr.bf16.mxu0 0
        %3005 = vmatpush1.bf16.msra.mxu0 %v3002
        %3006 = vmatprep.subr.bf16.mxu0 0
        %3007 = vmatpush1.bf16.msra.mxu0 %v3003
        %3008 = vmatprep.subr.bf16.mxu0 0
        %3009 = vmatpush1.bf16.msra.mxu0 0
        %3010 = vmatprep.subr.bf16.mxu0 0
        %3011 = vmatpush1.bf16.msra.mxu0 0
        %3012 = vmatprep.subr.bf16.mxu0 0
        %3013 = vmatpush1.bf16.msra.mxu0 0
        %3014 = vmatprep.subr.bf16.mxu0 0
        %3015 = vmatpush1.bf16.msra.mxu0 0
        %3016 = vmatprep.subr.bf16.mxu0 0
        %3017 = vmatpush1.bf16.msra.mxu0 0
        %3018 = vmatprep.subr.bf16.mxu0 0
        %3019 = vmatpush1.bf16.msra.mxu0 0
        %3020 = vmatprep.subr.bf16.mxu0 0
        %3021 = vmatpush1.bf16.msra.mxu0 0
        %3022 = vmatprep.subr.bf16.mxu0 0
        %3023 = vmatpush1.bf16.msra.mxu0 0
        %3024 = vmatprep.subr.bf16.mxu0 0
        %3025 = vmatpush1.bf16.msra.mxu0 0
        %3026 = vmatprep.subr.bf16.mxu0 0
        %3027 = vmatpush1.bf16.msra.mxu0 0
        %3028 = vmatprep.subr.bf16.mxu0 0
        %3029 = vmatpush1.bf16.msra.mxu0 0
        %3030 = vmatprep.subr.bf16.mxu0 0
        %3031 = vmatpush1.bf16.msra.mxu0 0
        %3032 = vmatprep.subr.bf16.mxu0 0
        %3033 = vmatpush1.bf16.msra.mxu0 0
        %3034 = vmatprep.subr.bf16.mxu0 0
        %3035 = vmatpush1.bf16.msra.mxu0 0
        %3036 = vmatprep.mubr.bf16.mxu0 0
        %3037 = vmatmul.mubr.bf16.gmra.mrb[0].mxu0 %v1832
        %v3038 = vpop.f32.mrb[0].mxu0
        %v3039 = vadd.f32 0.0, %v3038
        %v3040 = vpop.f32.mrb[0].mxu0
        %v3041 = vpop.f32.mrb[0].mxu0
        %v3042 = vpop.f32.mrb[0].mxu0
        %3043 = vdwg.mxu0
        %3045 = vset.pattern.permute.xlu0 0
        %3046 = vperm.xlu0 %3045, %v2997
        %v3047 = vpop.permute.xlu0 %3046
        %v3049 = vadd.f32 %v3047, %v3039
        %v3050 = vsel %vm1880, %v3049, -inf
        %v3051 = vrot.slane %v3050, 4
        %v3052 = vmax.f32 %v3050, %v3051
        %v3053 = vrot.slane %v3052, 2
        %v3054 = vmax.f32 %v3052, %v3053
        %v3055 = vrot.slane %v3054, 1
        %v3056 = vmax.f32 %v3054, %v3055
        %v3057 = vsub.f32 %v3049, %v3056
        %v3058 = vmul.f32 %v3057, 1.442695
        %v3059 = vpow.pop %v3058
        %v3060 = vsel %vm1880, %v3059, 0.0
        %v3061 = vrot.slane %v3060, 4
        %v3062 = vadd.f32 %v3060, %v3061
        %v3063 = vrot.slane %v3062, 2
        %v3064 = vadd.f32 %v3062, %v3063
        %v3065 = vrot.slane %v3064, 1
        %v3066 = vadd.f32 %v3064, %v3065
        %v3067 = vlog2.pop %v3066
        %v3068 = vmul.f32 %v3067, 0.6931472
        %v3069 = vadd.f32 %v3056, %v3068
        %v3070 = vsub.f32 %v3049, %v3069
        %s3071 = scalar_lea.vmem %s298, 2 [#allocation5]
        %3072 = vst.msk [vmem:[%s3071] sm:$0x3] %vm1880, %v3070
        %s3073 = scalar_lea.vmem %s262, 16 [#allocation2]
        %v3074 = vld [vmem:[%s3073] sm:$0xf]
        %v3075 = vld [vmem:[%s3073 + $0x4] sm:$0xf]
        %s3076 = scalar_lea.vmem %s302, 2
        %v3077 = vld [vmem:[%s3076] sm:$0x1]
        %s3078 = scalar_lea.vmem %s307, 2
        %v3079 = vld [vmem:[%s3078] sm:$0x1]
        %v3080 = vmax.bf16 %v3074, 0
        %v3081 = vmax.bf16 %v3075, 0
        %v3082 = vunpack.c.l.bf16 %v3080
        %v3083 = vunpack.c.l.bf16 %v3081
        %v3084 = vsub.bf16 0, %v3074
        %v3085 = vsub.bf16 0, %v3075
        %v3086 = vmax.bf16 %v3084, 0
        %v3087 = vmax.bf16 %v3085, 0
        %v3088 = vunpack.c.l.bf16 %v3086
        %v3089 = vunpack.c.l.bf16 %v3087
        %v3090 = vsel %vm372, %v3082, 0.0
        %3091 = vadd.xlane.f32.xlu0 %v3090
        %v3092 = vpop.xlane.xlu0 %3091
        %v3093 = vsel %vm372, %v3083, 0.0
        %3094 = vadd.xlane.f32.xlu0 %v3093
        %v3095 = vpop.xlane.xlu0 %3094
        %v3096 = vsel %vm372, %v3088, 0.0
        %3097 = vadd.xlane.f32.xlu0 %v3096
        %v3098 = vpop.xlane.xlu0 %3097
        %v3099 = vsel %vm372, %v3089, 0.0
        %3100 = vadd.xlane.f32.xlu0 %v3099
        %v3101 = vpop.xlane.xlu0 %3100
        %v3102 = vadd.f32 %v3090, %v3093
        %v3103 = vrot.slane %v3102, 4
        %v3104 = vadd.f32 %v3102, %v3103
        %v3105 = vrot.slane %v3104, 2
        %v3106 = vadd.f32 %v3104, %v3105
        %v3107 = vrot.slane %v3106, 1
        %v3108 = vadd.f32 %v3106, %v3107
        %v3109 = vadd.f32 %v3096, %v3099
        %v3110 = vrot.slane %v3109, 4
        %v3111 = vadd.f32 %v3109, %v3110
        %v3112 = vrot.slane %v3111, 2
        %v3113 = vadd.f32 %v3111, %v3112
        %v3114 = vrot.slane %v3113, 1
        %v3115 = vadd.f32 %v3113, %v3114
        %3116 = vxpose.xlu0.b32.start [1/16] %v3092, 128
        %3117 = vxpose.xlu0.b32.cont [2/16] %v3095, 128
        %3118 = vxpose.xlu0.b32.cont [3/16] 0.0, 128
        %3119 = vxpose.xlu0.b32.cont [4/16] 0.0, 128
        %3120 = vxpose.xlu0.b32.cont [5/16] 0.0, 128
        %3121 = vxpose.xlu0.b32.cont [6/16] 0.0, 128
        %3122 = vxpose.xlu0.b32.cont [7/16] 0.0, 128
        %3123 = vxpose.xlu0.b32.cont [8/16] 0.0, 128
        %3124 = vxpose.xlu0.b32.cont [9/16] 0.0, 128
        %3125 = vxpose.xlu0.b32.cont [10/16] 0.0, 128
        %3126 = vxpose.xlu0.b32.cont [11/16] 0.0, 128
        %3127 = vxpose.xlu0.b32.cont [12/16] 0.0, 128
        %3128 = vxpose.xlu0.b32.cont [13/16] 0.0, 128
        %3129 = vxpose.xlu0.b32.cont [14/16] 0.0, 128
        %3130 = vxpose.xlu0.b32.cont [15/16] 0.0, 128
        %3131 = vxpose.xlu0.b32.end [16/16] 0.0, 128
        %v3132 = vpop.trf.xlu0
        %v3133 = vpop.trf.xlu0
        %v3134 = vpop.trf.xlu0
        %v3135 = vpop.trf.xlu0
        %v3136 = vpop.trf.xlu0
        %v3137 = vpop.trf.xlu0
        %v3138 = vpop.trf.xlu0
        %v3139 = vpop.trf.xlu0
        %v3140 = vpop.trf.xlu0
        %v3141 = vpop.trf.xlu0
        %v3142 = vpop.trf.xlu0
        %v3143 = vpop.trf.xlu0
        %v3144 = vpop.trf.xlu0
        %v3145 = vpop.trf.xlu0
        %v3146 = vpop.trf.xlu0
        %v3147 = vpop.trf.xlu0
        %v3148 = vlaneseq
        %v3149 = vshrl.u32 %v3148, 7
        %v3150 = vsub.s32 0, %v3149
        %v3151 = vrot.slane %v3132, %v3150
        %v3152 = vmul.f32 %v438, %v3151
        %v3153 = vmul.f32 %v443, %v3151
        %v3154 = vmul.f32 %v448, %v3151
        %v3155 = vmul.f32 %v453, %v3151
        %3156 = vxpose.xlu0.b32.start [1/16] %v3098, 128
        %3157 = vxpose.xlu0.b32.cont [2/16] %v3101, 128
        %3158 = vxpose.xlu0.b32.cont [3/16] 0.0, 128
        %3159 = vxpose.xlu0.b32.cont [4/16] 0.0, 128
        %3160 = vxpose.xlu0.b32.cont [5/16] 0.0, 128
        %3161 = vxpose.xlu0.b32.cont [6/16] 0.0, 128
        %3162 = vxpose.xlu0.b32.cont [7/16] 0.0, 128
        %3163 = vxpose.xlu0.b32.cont [8/16] 0.0, 128
        %3164 = vxpose.xlu0.b32.cont [9/16] 0.0, 128
        %3165 = vxpose.xlu0.b32.cont [10/16] 0.0, 128
        %3166 = vxpose.xlu0.b32.cont [11/16] 0.0, 128
        %3167 = vxpose.xlu0.b32.cont [12/16] 0.0, 128
        %3168 = vxpose.xlu0.b32.cont [13/16] 0.0, 128
        %3169 = vxpose.xlu0.b32.cont [14/16] 0.0, 128
        %3170 = vxpose.xlu0.b32.cont [15/16] 0.0, 128
        %3171 = vxpose.xlu0.b32.end [16/16] 0.0, 128
        %v3172 = vpop.trf.xlu0
        %v3173 = vpop.trf.xlu0
        %v3174 = vpop.trf.xlu0
        %v3175 = vpop.trf.xlu0
        %v3176 = vpop.trf.xlu0
        %v3177 = vpop.trf.xlu0
        %v3178 = vpop.trf.xlu0
        %v3179 = vpop.trf.xlu0
        %v3180 = vpop.trf.xlu0
        %v3181 = vpop.trf.xlu0
        %v3182 = vpop.trf.xlu0
        %v3183 = vpop.trf.xlu0
        %v3184 = vpop.trf.xlu0
        %v3185 = vpop.trf.xlu0
        %v3186 = vpop.trf.xlu0
        %v3187 = vpop.trf.xlu0
        %v3188 = vlaneseq
        %v3189 = vshrl.u32 %v3188, 7
        %v3190 = vsub.s32 0, %v3189
        %v3191 = vrot.slane %v3172, %v3190
        %v3192 = vmul.f32 %v506, %v3191
        %v3193 = vmul.f32 %v511, %v3191
        %v3194 = vmul.f32 %v516, %v3191
        %v3195 = vmul.f32 %v521, %v3191
        %v3196 = vadd.f32 %v3152, %v3192
        %v3197 = vadd.f32 %v3153, %v3193
        %v3198 = vadd.f32 %v3154, %v3194
        %v3199 = vadd.f32 %v3155, %v3195
        %v3200 = vmul.f32 %v542, %v3108
        %v3201 = vmul.f32 %v547, %v3108
        %v3202 = vmul.f32 %v552, %v3108
        %v3203 = vmul.f32 %v557, %v3108
        %v3204 = vmul.f32 %v574, %v3115
        %v3205 = vmul.f32 %v579, %v3115
        %v3206 = vmul.f32 %v584, %v3115
        %v3207 = vmul.f32 %v589, %v3115
        %v3208 = vadd.f32 %v3200, %v3204
        %v3209 = vadd.f32 %v3201, %v3205
        %v3210 = vadd.f32 %v3202, %v3206
        %v3211 = vadd.f32 %v3203, %v3207
        %v3213 = vlaneseq
        %v3214 = vshrl.u32 %v3213, 7
        %v3215 = vsub.s32 0, %v3214
        %v3216 = vrot.slane %v3077, %v3215
        %v3218 = vmul.f32 %v602, %v3216
        %v3219 = vmul.f32 %v607, %v3216
        %v3220 = vmul.f32 %v612, %v3216
        %v3221 = vmul.f32 %v617, %v3216
        %v3223 = vlaneseq
        %v3224 = vshrl.u32 %v3223, 7
        %v3225 = vsub.s32 0, %v3224
        %v3226 = vrot.slane %v3079, %v3225
        %v3228 = vmul.f32 %v632, %v3226
        %v3229 = vmul.f32 %v637, %v3226
        %v3230 = vmul.f32 %v642, %v3226
        %v3231 = vmul.f32 %v647, %v3226
        %v3232 = vpack.c.bf16 %v3197, %v3196
        %v3233 = vpack.c.bf16 %v3199, %v3198
        %3234 = vmatprep.subr.bf16.mxu0 0
        %3235 = vmatpush1.bf16.msra.mxu0 %v3232
        %3236 = vmatprep.subr.bf16.mxu0 0
        %3237 = vmatpush1.bf16.msra.mxu0 %v3233
        %3238 = vmatprep.subr.bf16.mxu0 0
        %3239 = vmatpush1.bf16.msra.mxu0 0
        %3240 = vmatprep.subr.bf16.mxu0 0
        %3241 = vmatpush1.bf16.msra.mxu0 0
        %3242 = vmatprep.subr.bf16.mxu0 0
        %3243 = vmatpush1.bf16.msra.mxu0 0
        %3244 = vmatprep.subr.bf16.mxu0 0
        %3245 = vmatpush1.bf16.msra.mxu0 0
        %3246 = vmatprep.subr.bf16.mxu0 0
        %3247 = vmatpush1.bf16.msra.mxu0 0
        %3248 = vmatprep.subr.bf16.mxu0 0
        %3249 = vmatpush1.bf16.msra.mxu0 0
        %3250 = vmatprep.subr.bf16.mxu0 0
        %3251 = vmatpush1.bf16.msra.mxu0 0
        %3252 = vmatprep.subr.bf16.mxu0 0
        %3253 = vmatpush1.bf16.msra.mxu0 0
        %3254 = vmatprep.subr.bf16.mxu0 0
        %3255 = vmatpush1.bf16.msra.mxu0 0
        %3256 = vmatprep.subr.bf16.mxu0 0
        %3257 = vmatpush1.bf16.msra.mxu0 0
        %3258 = vmatprep.subr.bf16.mxu0 0
        %3259 = vmatpush1.bf16.msra.mxu0 0
        %3260 = vmatprep.subr.bf16.mxu0 0
        %3261 = vmatpush1.bf16.msra.mxu0 0
        %3262 = vmatprep.subr.bf16.mxu0 0
        %3263 = vmatpush1.bf16.msra.mxu0 0
        %3264 = vmatprep.subr.bf16.mxu0 0
        %3265 = vmatpush1.bf16.msra.mxu0 0
        %3266 = vmatprep.mubr.bf16.mxu0 0
        %3267 = vmatmul.mubr.bf16.gmra.mrb[0].mxu0 %v673
        %v3268 = vpop.f32.mrb[0].mxu0
        %v3269 = vadd.f32 0.0, %v3268
        %v3270 = vpop.f32.mrb[0].mxu0
        %v3271 = vpop.f32.mrb[0].mxu0
        %v3272 = vadd.f32 0.0, %v3271
        %v3273 = vpop.f32.mrb[0].mxu0
        %3274 = vmatprep.mubr.bf16.mxu0 0
        %3275 = vmatmul.mubr.bf16.gmra.mrb[0].mxu0 %v676
        %v3276 = vpop.f32.mrb[0].mxu0
        %v3277 = vadd.f32 0.0, %v3276
        %v3278 = vpop.f32.mrb[0].mxu0
        %v3279 = vpop.f32.mrb[0].mxu0
        %v3280 = vadd.f32 0.0, %v3279
        %v3281 = vpop.f32.mrb[0].mxu0
        %3282 = vdwg.mxu0
        %v3283 = vpack.c.bf16 %v3209, %v3208
        %v3284 = vpack.c.bf16 %v3211, %v3210
        %3285 = vmatprep.subr.bf16.mxu0 0
        %3286 = vmatpush1.bf16.msra.mxu0 %v3283
        %3287 = vmatprep.subr.bf16.mxu0 0
        %3288 = vmatpush1.bf16.msra.mxu0 %v3284
        %3289 = vmatprep.subr.bf16.mxu0 0
        %3290 = vmatpush1.bf16.msra.mxu0 0
        %3291 = vmatprep.subr.bf16.mxu0 0
        %3292 = vmatpush1.bf16.msra.mxu0 0
        %3293 = vmatprep.subr.bf16.mxu0 0
        %3294 = vmatpush1.bf16.msra.mxu0 0
        %3295 = vmatprep.subr.bf16.mxu0 0
        %3296 = vmatpush1.bf16.msra.mxu0 0
        %3297 = vmatprep.subr.bf16.mxu0 0
        %3298 = vmatpush1.bf16.msra.mxu0 0
        %3299 = vmatprep.subr.bf16.mxu0 0
        %3300 = vmatpush1.bf16.msra.mxu0 0
        %3301 = vmatprep.subr.bf16.mxu0 0
        %3302 = vmatpush1.bf16.msra.mxu0 0
        %3303 = vmatprep.subr.bf16.mxu0 0
        %3304 = vmatpush1.bf16.msra.mxu0 0
        %3305 = vmatprep.subr.bf16.mxu0 0
        %3306 = vmatpush1.bf16.msra.mxu0 0
        %3307 = vmatprep.subr.bf16.mxu0 0
        %3308 = vmatpush1.bf16.msra.mxu0 0
        %3309 = vmatprep.subr.bf16.mxu0 0
        %3310 = vmatpush1.bf16.msra.mxu0 0
        %3311 = vmatprep.subr.bf16.mxu0 0
        %3312 = vmatpush1.bf16.msra.mxu0 0
        %3313 = vmatprep.subr.bf16.mxu0 0
        %3314 = vmatpush1.bf16.msra.mxu0 0
        %3315 = vmatprep.subr.bf16.mxu0 0
        %3316 = vmatpush1.bf16.msra.mxu0 0
        %3317 = vmatprep.mubr.bf16.mxu0 0
        %3318 = vmatmul.mubr.bf16.gmra.mrb[0].mxu0 %v740
        %v3319 = vpop.f32.mrb[0].mxu0
        %v3320 = vadd.f32 0.0, %v3319
        %v3321 = vpop.f32.mrb[0].mxu0
        %v3322 = vpop.f32.mrb[0].mxu0
        %v3323 = vadd.f32 0.0, %v3322
        %v3324 = vpop.f32.mrb[0].mxu0
        %3325 = vmatprep.mubr.bf16.mxu0 0
        %3326 = vmatmul.mubr.bf16.gmra.mrb[0].mxu0 %v743
        %v3327 = vpop.f32.mrb[0].mxu0
        %v3328 = vadd.f32 0.0, %v3327
        %v3329 = vpop.f32.mrb[0].mxu0
        %v3330 = vpop.f32.mrb[0].mxu0
        %v3331 = vadd.f32 0.0, %v3330
        %v3332 = vpop.f32.mrb[0].mxu0
        %3333 = vdwg.mxu0
        %v3336 = vunpack.c.l.b16 %v3074
        %v3337 = vunpack.c.l.b16 %v3075
        %v3338 = vpack.c.b16 %v3337, %v3336
        %v3340 = vsel %vm372, %v3338, 0
        %3342 = vmatprep.subr.bf16.mxu0 0
        %3343 = vmatpush1.bf16.xpose.msra.mxu0 %v3340
        %3344 = vmatprep.subr.bf16.mxu0 0
        %3345 = vmatpush1.bf16.xpose.msra.mxu0 0
        %3346 = vmatprep.subr.bf16.mxu0 0
        %3347 = vmatpush1.bf16.xpose.msra.mxu0 0
        %3348 = vmatprep.subr.bf16.mxu0 0
        %3349 = vmatpush1.bf16.xpose.msra.mxu0 0
        %3350 = vmatprep.subr.bf16.mxu0 0
        %3351 = vmatpush1.bf16.xpose.msra.mxu0 0
        %3352 = vmatprep.subr.bf16.mxu0 0
        %3353 = vmatpush1.bf16.xpose.msra.mxu0 0
        %3354 = vmatprep.subr.bf16.mxu0 0
        %3355 = vmatpush1.bf16.xpose.msra.mxu0 0
        %3356 = vmatprep.subr.bf16.mxu0 0
        %3357 = vmatpush1.bf16.xpose.msra.mxu0 0
        %3358 = vmatprep.subr.bf16.mxu0 0
        %3359 = vmatpush1.bf16.xpose.msra.mxu0 0
        %3360 = vmatprep.subr.bf16.mxu0 0
        %3361 = vmatpush1.bf16.xpose.msra.mxu0 0
        %3362 = vmatprep.subr.bf16.mxu0 0
        %3363 = vmatpush1.bf16.xpose.msra.mxu0 0
        %3364 = vmatprep.subr.bf16.mxu0 0
        %3365 = vmatpush1.bf16.xpose.msra.mxu0 0
        %3366 = vmatprep.subr.bf16.mxu0 0
        %3367 = vmatpush1.bf16.xpose.msra.mxu0 0
        %3368 = vmatprep.subr.bf16.mxu0 0
        %3369 = vmatpush1.bf16.xpose.msra.mxu0 0
        %3370 = vmatprep.subr.bf16.mxu0 0
        %3371 = vmatpush1.bf16.xpose.msra.mxu0 0
        %3372 = vmatprep.subr.bf16.mxu0 0
        %3373 = vmatpush1.bf16.xpose.msra.mxu0 0
        %3374 = vmatprep.mubr.bf16.mxu0 0
        %3375 = vmatmul.mubr.bf16.gmra.mrb[0].mxu0 %v867
        %v3376 = vpop.f32.mrb[0].mxu0
        %v3377 = vadd.f32 0.0, %v3376
        %v3378 = vpop.f32.mrb[0].mxu0
        %v3379 = vpop.f32.mrb[0].mxu0
        %v3380 = vadd.f32 0.0, %v3379
        %v3381 = vpop.f32.mrb[0].mxu0
        %3382 = vmatprep.mubr.bf16.mxu0 0
        %3383 = vmatmul.mubr.bf16.gmra.mrb[0].mxu0 %v870
        %v3384 = vpop.f32.mrb[0].mxu0
        %v3385 = vadd.f32 0.0, %v3384
        %v3386 = vpop.f32.mrb[0].mxu0
        %v3387 = vpop.f32.mrb[0].mxu0
        %v3388 = vadd.f32 0.0, %v3387
        %v3389 = vpop.f32.mrb[0].mxu0
        %3390 = vdwg.mxu0
        %3392 = vmatprep.subr.bf16.mxu0 0
        %3393 = vmatpush1.bf16.msra.mxu0 %v3338
        %3394 = vmatprep.subr.bf16.mxu0 0
        %3395 = vmatpush1.bf16.msra.mxu0 0
        %3396 = vmatprep.subr.bf16.mxu0 0
        %3397 = vmatpush1.bf16.msra.mxu0 0
        %3398 = vmatprep.subr.bf16.mxu0 0
        %3399 = vmatpush1.bf16.msra.mxu0 0
        %3400 = vmatprep.subr.bf16.mxu0 0
        %3401 = vmatpush1.bf16.msra.mxu0 0
        %3402 = vmatprep.subr.bf16.mxu0 0
        %3403 = vmatpush1.bf16.msra.mxu0 0
        %3404 = vmatprep.subr.bf16.mxu0 0
        %3405 = vmatpush1.bf16.msra.mxu0 0
        %3406 = vmatprep.subr.bf16.mxu0 0
        %3407 = vmatpush1.bf16.msra.mxu0 0
        %3408 = vmatprep.subr.bf16.mxu0 0
        %3409 = vmatpush1.bf16.msra.mxu0 0
        %3410 = vmatprep.subr.bf16.mxu0 0
        %3411 = vmatpush1.bf16.msra.mxu0 0
        %3412 = vmatprep.subr.bf16.mxu0 0
        %3413 = vmatpush1.bf16.msra.mxu0 0
        %3414 = vmatprep.subr.bf16.mxu0 0
        %3415 = vmatpush1.bf16.msra.mxu0 0
        %3416 = vmatprep.subr.bf16.mxu0 0
        %3417 = vmatpush1.bf16.msra.mxu0 0
        %3418 = vmatprep.subr.bf16.mxu0 0
        %3419 = vmatpush1.bf16.msra.mxu0 0
        %3420 = vmatprep.subr.bf16.mxu0 0
        %3421 = vmatpush1.bf16.msra.mxu0 0
        %3422 = vmatprep.subr.bf16.mxu0 0
        %3423 = vmatpush1.bf16.msra.mxu0 0
        %3424 = vmatprep.mubr.bf16.mxu0 0
        %3425 = vmatmul.mubr.bf16.gmra.mrb[0].mxu0 %v993
        %v3426 = vpop.f32.mrb[0].mxu0
        %v3427 = vadd.f32 0.0, %v3426
        %v3428 = vpop.f32.mrb[0].mxu0
        %v3429 = vpop.f32.mrb[0].mxu0
        %v3430 = vadd.f32 0.0, %v3429
        %v3431 = vpop.f32.mrb[0].mxu0
        %3432 = vmatprep.mubr.bf16.mxu0 0
        %3433 = vmatmul.mubr.bf16.gmra.mrb[0].mxu0 %v996
        %v3434 = vpop.f32.mrb[0].mxu0
        %v3435 = vadd.f32 0.0, %v3434
        %v3436 = vpop.f32.mrb[0].mxu0
        %v3437 = vpop.f32.mrb[0].mxu0
        %v3438 = vadd.f32 0.0, %v3437
        %v3439 = vpop.f32.mrb[0].mxu0
        %3440 = vdwg.mxu0
        %v3441 = vadd.f32 %v3218, %v3377
        %v3442 = vadd.f32 %v3219, %v3380
        %v3443 = vadd.f32 %v3220, %v3385
        %v3444 = vadd.f32 %v3221, %v3388
        %v3445 = vadd.f32 %v3441, %v3269
        %v3446 = vadd.f32 %v3442, %v3272
        %v3447 = vadd.f32 %v3443, %v3277
        %v3448 = vadd.f32 %v3444, %v3280
        %v3449 = vmax.f32 %v3445, 0.0
        %v3450 = vmax.f32 %v3446, 0.0
        %v3451 = vmax.f32 %v3447, 0.0
        %v3452 = vmax.f32 %v3448, 0.0
        %v3453 = vadd.f32 %v3228, %v3427
        %v3454 = vadd.f32 %v3229, %v3430
        %v3455 = vadd.f32 %v3230, %v3435
        %v3456 = vadd.f32 %v3231, %v3438
        %v3457 = vadd.f32 %v3453, %v3320
        %v3458 = vadd.f32 %v3454, %v3323
        %v3459 = vadd.f32 %v3455, %v3328
        %v3460 = vadd.f32 %v3456, %v3331
        %v3461 = vmax.f32 %v3457, 0.0
        %v3462 = vmax.f32 %v3458, 0.0
        %v3463 = vmax.f32 %v3459, 0.0
        %v3464 = vmax.f32 %v3460, 0.0
        %v3465 = vpack.c.bf16 %v3450, %v3449
        %v3466 = vpack.c.bf16 %v3452, %v3451
        %v3467 = vpack.c.bf16 %v3462, %v3461
        %v3468 = vpack.c.bf16 %v3464, %v3463
        %3469 = vmatprep.subr.bf16.mxu0 0
        %3470 = vmatpush1.bf16.msra.mxu0 %v3467
        %3471 = vmatprep.subr.bf16.mxu0 0
        %3472 = vmatpush1.bf16.msra.mxu0 %v3468
        %3473 = vmatprep.subr.bf16.mxu0 0
        %3474 = vmatpush1.bf16.msra.mxu0 0
        %3475 = vmatprep.subr.bf16.mxu0 0
        %3476 = vmatpush1.bf16.msra.mxu0 0
        %3477 = vmatprep.subr.bf16.mxu0 0
        %3478 = vmatpush1.bf16.msra.mxu0 0
        %3479 = vmatprep.subr.bf16.mxu0 0
        %3480 = vmatpush1.bf16.msra.mxu0 0
        %3481 = vmatprep.subr.bf16.mxu0 0
        %3482 = vmatpush1.bf16.msra.mxu0 0
        %3483 = vmatprep.subr.bf16.mxu0 0
        %3484 = vmatpush1.bf16.msra.mxu0 0
        %3485 = vmatprep.subr.bf16.mxu0 0
        %3486 = vmatpush1.bf16.msra.mxu0 0
        %3487 = vmatprep.subr.bf16.mxu0 0
        %3488 = vmatpush1.bf16.msra.mxu0 0
        %3489 = vmatprep.subr.bf16.mxu0 0
        %3490 = vmatpush1.bf16.msra.mxu0 0
        %3491 = vmatprep.subr.bf16.mxu0 0
        %3492 = vmatpush1.bf16.msra.mxu0 0
        %3493 = vmatprep.subr.bf16.mxu0 0
        %3494 = vmatpush1.bf16.msra.mxu0 0
        %3495 = vmatprep.subr.bf16.mxu0 0
        %3496 = vmatpush1.bf16.msra.mxu0 0
        %3497 = vmatprep.subr.bf16.mxu0 0
        %3498 = vmatpush1.bf16.msra.mxu0 0
        %3499 = vmatprep.subr.bf16.mxu0 0
        %3500 = vmatpush1.bf16.msra.mxu0 0
        %3501 = vmatprep.mubr.bf16.mxu0 0
        %3502 = vmatmul.mubr.bf16.gmra.mrb[0].mxu0 %v805
        %v3503 = vpop.f32.mrb[0].mxu0
        %v3504 = vadd.f32 0.0, %v3503
        %v3505 = vpop.f32.mrb[0].mxu0
        %v3506 = vpop.f32.mrb[0].mxu0
        %v3507 = vadd.f32 0.0, %v3506
        %v3508 = vpop.f32.mrb[0].mxu0
        %3509 = vmatprep.mubr.bf16.mxu0 0
        %3510 = vmatmul.mubr.bf16.gmra.mrb[0].mxu0 %v808
        %v3511 = vpop.f32.mrb[0].mxu0
        %v3512 = vadd.f32 0.0, %v3511
        %v3513 = vpop.f32.mrb[0].mxu0
        %v3514 = vpop.f32.mrb[0].mxu0
        %v3515 = vadd.f32 0.0, %v3514
        %v3516 = vpop.f32.mrb[0].mxu0
        %3517 = vdwg.mxu0
        %v3518 = vpack.c.bf16 %v3507, %v3504
        %v3519 = vpack.c.bf16 %v3515, %v3512
        %v3521 = vsel %vm372, %v3518, 0
        %v3524 = vsel %vm372, %v3519, 0
        %3526 = vmatprep.subr.bf16.mxu0 0
        %3527 = vmatpush1.bf16.xpose.msra.mxu0 %v3340
        %3528 = vmatprep.subr.bf16.mxu0 0
        %3529 = vmatpush1.bf16.xpose.msra.mxu0 0
        %3530 = vmatprep.subr.bf16.mxu0 0
        %3531 = vmatpush1.bf16.xpose.msra.mxu0 0
        %3532 = vmatprep.subr.bf16.mxu0 0
        %3533 = vmatpush1.bf16.xpose.msra.mxu0 0
        %3534 = vmatprep.subr.bf16.mxu0 0
        %3535 = vmatpush1.bf16.xpose.msra.mxu0 0
        %3536 = vmatprep.subr.bf16.mxu0 0
        %3537 = vmatpush1.bf16.xpose.msra.mxu0 0
        %3538 = vmatprep.subr.bf16.mxu0 0
        %3539 = vmatpush1.bf16.xpose.msra.mxu0 0
        %3540 = vmatprep.subr.bf16.mxu0 0
        %3541 = vmatpush1.bf16.xpose.msra.mxu0 0
        %3542 = vmatprep.subr.bf16.mxu0 0
        %3543 = vmatpush1.bf16.xpose.msra.mxu0 0
        %3544 = vmatprep.subr.bf16.mxu0 0
        %3545 = vmatpush1.bf16.xpose.msra.mxu0 0
        %3546 = vmatprep.subr.bf16.mxu0 0
        %3547 = vmatpush1.bf16.xpose.msra.mxu0 0
        %3548 = vmatprep.subr.bf16.mxu0 0
        %3549 = vmatpush1.bf16.xpose.msra.mxu0 0
        %3550 = vmatprep.subr.bf16.mxu0 0
        %3551 = vmatpush1.bf16.xpose.msra.mxu0 0
        %3552 = vmatprep.subr.bf16.mxu0 0
        %3553 = vmatpush1.bf16.xpose.msra.mxu0 0
        %3554 = vmatprep.subr.bf16.mxu0 0
        %3555 = vmatpush1.bf16.xpose.msra.mxu0 0
        %3556 = vmatprep.subr.bf16.mxu0 0
        %3557 = vmatpush1.bf16.xpose.msra.mxu0 0
        %3558 = vmatprep.mubr.bf16.mxu0 0
        %3559 = vmatmul.mubr.bf16.gmra.mrb[0].mxu0 %v3521
        %v3560 = vpop.f32.mrb[0].mxu0
        %v3561 = vadd.f32 0.0, %v3560
        %v3562 = vpop.f32.mrb[0].mxu0
        %v3563 = vpop.f32.mrb[0].mxu0
        %v3564 = vadd.f32 0.0, %v3563
        %v3565 = vpop.f32.mrb[0].mxu0
        %3566 = vmatprep.mubr.bf16.mxu0 0
        %3567 = vmatmul.mubr.bf16.gmra.mrb[0].mxu0 %v3524
        %v3568 = vpop.f32.mrb[0].mxu0
        %v3569 = vadd.f32 0.0, %v3568
        %v3570 = vpop.f32.mrb[0].mxu0
        %v3571 = vpop.f32.mrb[0].mxu0
        %v3572 = vadd.f32 0.0, %v3571
        %v3573 = vpop.f32.mrb[0].mxu0
        %3574 = vdwg.mxu0
        %3575 = vmatprep.subr.bf16.mxu0 0
        %3576 = vmatpush1.bf16.msra.mxu0 %v3465
        %3577 = vmatprep.subr.bf16.mxu0 0
        %3578 = vmatpush1.bf16.msra.mxu0 %v3466
        %3579 = vmatprep.subr.bf16.mxu0 0
        %3580 = vmatpush1.bf16.msra.mxu0 0
        %3581 = vmatprep.subr.bf16.mxu0 0
        %3582 = vmatpush1.bf16.msra.mxu0 0
        %3583 = vmatprep.subr.bf16.mxu0 0
        %3584 = vmatpush1.bf16.msra.mxu0 0
        %3585 = vmatprep.subr.bf16.mxu0 0
        %3586 = vmatpush1.bf16.msra.mxu0 0
        %3587 = vmatprep.subr.bf16.mxu0 0
        %3588 = vmatpush1.bf16.msra.mxu0 0
        %3589 = vmatprep.subr.bf16.mxu0 0
        %3590 = vmatpush1.bf16.msra.mxu0 0
        %3591 = vmatprep.subr.bf16.mxu0 0
        %3592 = vmatpush1.bf16.msra.mxu0 0
        %3593 = vmatprep.subr.bf16.mxu0 0
        %3594 = vmatpush1.bf16.msra.mxu0 0
        %3595 = vmatprep.subr.bf16.mxu0 0
        %3596 = vmatpush1.bf16.msra.mxu0 0
        %3597 = vmatprep.subr.bf16.mxu0 0
        %3598 = vmatpush1.bf16.msra.mxu0 0
        %3599 = vmatprep.subr.bf16.mxu0 0
        %3600 = vmatpush1.bf16.msra.mxu0 0
        %3601 = vmatprep.subr.bf16.mxu0 0
        %3602 = vmatpush1.bf16.msra.mxu0 0
        %3603 = vmatprep.subr.bf16.mxu0 0
        %3604 = vmatpush1.bf16.msra.mxu0 0
        %3605 = vmatprep.subr.bf16.mxu0 0
        %3606 = vmatpush1.bf16.msra.mxu0 0
        %3607 = vmatprep.mubr.bf16.mxu0 0
        %3608 = vmatmul.mubr.bf16.gmra.mrb[0].mxu0 %v935
        %v3609 = vpop.f32.mrb[0].mxu0
        %v3610 = vadd.f32 0.0, %v3609
        %v3611 = vpop.f32.mrb[0].mxu0
        %v3612 = vpop.f32.mrb[0].mxu0
        %v3613 = vadd.f32 0.0, %v3612
        %v3614 = vpop.f32.mrb[0].mxu0
        %3615 = vmatprep.mubr.bf16.mxu0 0
        %3616 = vmatmul.mubr.bf16.gmra.mrb[0].mxu0 %v938
        %v3617 = vpop.f32.mrb[0].mxu0
        %v3618 = vadd.f32 0.0, %v3617
        %v3619 = vpop.f32.mrb[0].mxu0
        %v3620 = vpop.f32.mrb[0].mxu0
        %v3621 = vadd.f32 0.0, %v3620
        %v3622 = vpop.f32.mrb[0].mxu0
        %3623 = vdwg.mxu0
        %v3624 = vpack.c.bf16 %v3613, %v3610
        %v3625 = vpack.c.bf16 %v3621, %v3618
        %v3627 = vsel %vm372, %v3624, 0
        %v3630 = vsel %vm372, %v3625, 0
        %3632 = vmatprep.subr.bf16.mxu0 0
        %3633 = vmatpush1.bf16.msra.mxu0 %v3338
        %3634 = vmatprep.subr.bf16.mxu0 0
        %3635 = vmatpush1.bf16.msra.mxu0 0
        %3636 = vmatprep.subr.bf16.mxu0 0
        %3637 = vmatpush1.bf16.msra.mxu0 0
        %3638 = vmatprep.subr.bf16.mxu0 0
        %3639 = vmatpush1.bf16.msra.mxu0 0
        %3640 = vmatprep.subr.bf16.mxu0 0
        %3641 = vmatpush1.bf16.msra.mxu0 0
        %3642 = vmatprep.subr.bf16.mxu0 0
        %3643 = vmatpush1.bf16.msra.mxu0 0
        %3644 = vmatprep.subr.bf16.mxu0 0
        %3645 = vmatpush1.bf16.msra.mxu0 0
        %3646 = vmatprep.subr.bf16.mxu0 0
        %3647 = vmatpush1.bf16.msra.mxu0 0
        %3648 = vmatprep.subr.bf16.mxu0 0
        %3649 = vmatpush1.bf16.msra.mxu0 0
        %3650 = vmatprep.subr.bf16.mxu0 0
        %3651 = vmatpush1.bf16.msra.mxu0 0
        %3652 = vmatprep.subr.bf16.mxu0 0
        %3653 = vmatpush1.bf16.msra.mxu0 0
        %3654 = vmatprep.subr.bf16.mxu0 0
        %3655 = vmatpush1.bf16.msra.mxu0 0
        %3656 = vmatprep.subr.bf16.mxu0 0
        %3657 = vmatpush1.bf16.msra.mxu0 0
        %3658 = vmatprep.subr.bf16.mxu0 0
        %3659 = vmatpush1.bf16.msra.mxu0 0
        %3660 = vmatprep.subr.bf16.mxu0 0
        %3661 = vmatpush1.bf16.msra.mxu0 0
        %3662 = vmatprep.subr.bf16.mxu0 0
        %3663 = vmatpush1.bf16.msra.mxu0 0
        %3664 = vmatprep.mubr.bf16.mxu0 0
        %3665 = vmatmul.mubr.bf16.gmra.mrb[0].mxu0 %v3627
        %v3666 = vpop.f32.mrb[0].mxu0
        %v3667 = vadd.f32 0.0, %v3666
        %v3668 = vpop.f32.mrb[0].mxu0
        %v3669 = vpop.f32.mrb[0].mxu0
        %v3670 = vadd.f32 0.0, %v3669
        %v3671 = vpop.f32.mrb[0].mxu0
        %3672 = vmatprep.mubr.bf16.mxu0 0
        %3673 = vmatmul.mubr.bf16.gmra.mrb[0].mxu0 %v3630
        %v3674 = vpop.f32.mrb[0].mxu0
        %v3675 = vadd.f32 0.0, %v3674
        %v3676 = vpop.f32.mrb[0].mxu0
        %v3677 = vpop.f32.mrb[0].mxu0
        %v3678 = vadd.f32 0.0, %v3677
        %v3679 = vpop.f32.mrb[0].mxu0
        %3680 = vdwg.mxu0
        %v3681 = vadd.f32 %v3218, %v3561
        %v3682 = vadd.f32 %v3219, %v3564
        %v3683 = vadd.f32 %v3220, %v3569
        %v3684 = vadd.f32 %v3221, %v3572
        %v3685 = vadd.f32 %v3681, %v3269
        %v3686 = vadd.f32 %v3682, %v3272
        %v3687 = vadd.f32 %v3683, %v3277
        %v3688 = vadd.f32 %v3684, %v3280
        %v3689 = vmax.f32 %v3685, 0.0
        %v3690 = vmax.f32 %v3686, 0.0
        %v3691 = vmax.f32 %v3687, 0.0
        %v3692 = vmax.f32 %v3688, 0.0
        %v3693 = vadd.f32 %v3228, %v3667
        %v3694 = vadd.f32 %v3229, %v3670
        %v3695 = vadd.f32 %v3230, %v3675
        %v3696 = vadd.f32 %v3231, %v3678
        %v3697 = vadd.f32 %v3693, %v3320
        %v3698 = vadd.f32 %v3694, %v3323
        %v3699 = vadd.f32 %v3695, %v3328
        %v3700 = vadd.f32 %v3696, %v3331
        %v3701 = vmax.f32 %v3697, 0.0
        %v3702 = vmax.f32 %v3698, 0.0
        %v3703 = vmax.f32 %v3699, 0.0
        %v3704 = vmax.f32 %v3700, 0.0
        %v3705 = vpack.c.bf16 %v3690, %v3689
        %v3706 = vpack.c.bf16 %v3692, %v3691
        %v3707 = vpack.c.bf16 %v3702, %v3701
        %v3708 = vpack.c.bf16 %v3704, %v3703
        %3709 = vmatprep.subr.bf16.mxu0 0
        %3710 = vmatpush1.bf16.msra.mxu0 %v3707
        %3711 = vmatprep.subr.bf16.mxu0 0
        %3712 = vmatpush1.bf16.msra.mxu0 %v3708
        %3713 = vmatprep.subr.bf16.mxu0 0
        %3714 = vmatpush1.bf16.msra.mxu0 0
        %3715 = vmatprep.subr.bf16.mxu0 0
        %3716 = vmatpush1.bf16.msra.mxu0 0
        %3717 = vmatprep.subr.bf16.mxu0 0
        %3718 = vmatpush1.bf16.msra.mxu0 0
        %3719 = vmatprep.subr.bf16.mxu0 0
        %3720 = vmatpush1.bf16.msra.mxu0 0
        %3721 = vmatprep.subr.bf16.mxu0 0
        %3722 = vmatpush1.bf16.msra.mxu0 0
        %3723 = vmatprep.subr.bf16.mxu0 0
        %3724 = vmatpush1.bf16.msra.mxu0 0
        %3725 = vmatprep.subr.bf16.mxu0 0
        %3726 = vmatpush1.bf16.msra.mxu0 0
        %3727 = vmatprep.subr.bf16.mxu0 0
        %3728 = vmatpush1.bf16.msra.mxu0 0
        %3729 = vmatprep.subr.bf16.mxu0 0
        %3730 = vmatpush1.bf16.msra.mxu0 0
        %3731 = vmatprep.subr.bf16.mxu0 0
        %3732 = vmatpush1.bf16.msra.mxu0 0
        %3733 = vmatprep.subr.bf16.mxu0 0
        %3734 = vmatpush1.bf16.msra.mxu0 0
        %3735 = vmatprep.subr.bf16.mxu0 0
        %3736 = vmatpush1.bf16.msra.mxu0 0
        %3737 = vmatprep.subr.bf16.mxu0 0
        %3738 = vmatpush1.bf16.msra.mxu0 0
        %3739 = vmatprep.subr.bf16.mxu0 0
        %3740 = vmatpush1.bf16.msra.mxu0 0
        %3741 = vmatprep.mubr.bf16.mxu0 0
        %3742 = vmatmul.mubr.bf16.gmra.mrb[0].mxu0 %v805
        %v3743 = vpop.f32.mrb[0].mxu0
        %v3744 = vadd.f32 0.0, %v3743
        %v3745 = vpop.f32.mrb[0].mxu0
        %v3746 = vpop.f32.mrb[0].mxu0
        %v3747 = vadd.f32 0.0, %v3746
        %v3748 = vpop.f32.mrb[0].mxu0
        %3749 = vmatprep.mubr.bf16.mxu0 0
        %3750 = vmatmul.mubr.bf16.gmra.mrb[0].mxu0 %v808
        %v3751 = vpop.f32.mrb[0].mxu0
        %v3752 = vadd.f32 0.0, %v3751
        %v3753 = vpop.f32.mrb[0].mxu0
        %v3754 = vpop.f32.mrb[0].mxu0
        %v3755 = vadd.f32 0.0, %v3754
        %v3756 = vpop.f32.mrb[0].mxu0
        %3757 = vdwg.mxu0
        %v3758 = vpack.c.bf16 %v3747, %v3744
        %v3759 = vpack.c.bf16 %v3755, %v3752
        %v3761 = vsel %vm372, %v3758, 0
        %v3764 = vsel %vm372, %v3759, 0
        %3766 = vmatprep.subr.bf16.mxu0 0
        %3767 = vmatpush1.bf16.xpose.msra.mxu0 %v3340
        %3768 = vmatprep.subr.bf16.mxu0 0
        %3769 = vmatpush1.bf16.xpose.msra.mxu0 0
        %3770 = vmatprep.subr.bf16.mxu0 0
        %3771 = vmatpush1.bf16.xpose.msra.mxu0 0
        %3772 = vmatprep.subr.bf16.mxu0 0
        %3773 = vmatpush1.bf16.xpose.msra.mxu0 0
        %3774 = vmatprep.subr.bf16.mxu0 0
        %3775 = vmatpush1.bf16.xpose.msra.mxu0 0
        %3776 = vmatprep.subr.bf16.mxu0 0
        %3777 = vmatpush1.bf16.xpose.msra.mxu0 0
        %3778 = vmatprep.subr.bf16.mxu0 0
        %3779 = vmatpush1.bf16.xpose.msra.mxu0 0
        %3780 = vmatprep.subr.bf16.mxu0 0
        %3781 = vmatpush1.bf16.xpose.msra.mxu0 0
        %3782 = vmatprep.subr.bf16.mxu0 0
        %3783 = vmatpush1.bf16.xpose.msra.mxu0 0
        %3784 = vmatprep.subr.bf16.mxu0 0
        %3785 = vmatpush1.bf16.xpose.msra.mxu0 0
        %3786 = vmatprep.subr.bf16.mxu0 0
        %3787 = vmatpush1.bf16.xpose.msra.mxu0 0
        %3788 = vmatprep.subr.bf16.mxu0 0
        %3789 = vmatpush1.bf16.xpose.msra.mxu0 0
        %3790 = vmatprep.subr.bf16.mxu0 0
        %3791 = vmatpush1.bf16.xpose.msra.mxu0 0
        %3792 = vmatprep.subr.bf16.mxu0 0
        %3793 = vmatpush1.bf16.xpose.msra.mxu0 0
        %3794 = vmatprep.subr.bf16.mxu0 0
        %3795 = vmatpush1.bf16.xpose.msra.mxu0 0
        %3796 = vmatprep.subr.bf16.mxu0 0
        %3797 = vmatpush1.bf16.xpose.msra.mxu0 0
        %3798 = vmatprep.mubr.bf16.mxu0 0
        %3799 = vmatmul.mubr.bf16.gmra.mrb[0].mxu0 %v3761
        %v3800 = vpop.f32.mrb[0].mxu0
        %v3801 = vadd.f32 0.0, %v3800
        %v3802 = vpop.f32.mrb[0].mxu0
        %v3803 = vpop.f32.mrb[0].mxu0
        %v3804 = vadd.f32 0.0, %v3803
        %v3805 = vpop.f32.mrb[0].mxu0
        %3806 = vmatprep.mubr.bf16.mxu0 0
        %3807 = vmatmul.mubr.bf16.gmra.mrb[0].mxu0 %v3764
        %v3808 = vpop.f32.mrb[0].mxu0
        %v3809 = vadd.f32 0.0, %v3808
        %v3810 = vpop.f32.mrb[0].mxu0
        %v3811 = vpop.f32.mrb[0].mxu0
        %v3812 = vadd.f32 0.0, %v3811
        %v3813 = vpop.f32.mrb[0].mxu0
        %3814 = vdwg.mxu0
        %3815 = vmatprep.subr.bf16.mxu0 0
        %3816 = vmatpush1.bf16.msra.mxu0 %v3705
        %3817 = vmatprep.subr.bf16.mxu0 0
        %3818 = vmatpush1.bf16.msra.mxu0 %v3706
        %3819 = vmatprep.subr.bf16.mxu0 0
        %3820 = vmatpush1.bf16.msra.mxu0 0
        %3821 = vmatprep.subr.bf16.mxu0 0
        %3822 = vmatpush1.bf16.msra.mxu0 0
        %3823 = vmatprep.subr.bf16.mxu0 0
        %3824 = vmatpush1.bf16.msra.mxu0 0
        %3825 = vmatprep.subr.bf16.mxu0 0
        %3826 = vmatpush1.bf16.msra.mxu0 0
        %3827 = vmatprep.subr.bf16.mxu0 0
        %3828 = vmatpush1.bf16.msra.mxu0 0
        %3829 = vmatprep.subr.bf16.mxu0 0
        %3830 = vmatpush1.bf16.msra.mxu0 0
        %3831 = vmatprep.subr.bf16.mxu0 0
        %3832 = vmatpush1.bf16.msra.mxu0 0
        %3833 = vmatprep.subr.bf16.mxu0 0
        %3834 = vmatpush1.bf16.msra.mxu0 0
        %3835 = vmatprep.subr.bf16.mxu0 0
        %3836 = vmatpush1.bf16.msra.mxu0 0
        %3837 = vmatprep.subr.bf16.mxu0 0
        %3838 = vmatpush1.bf16.msra.mxu0 0
        %3839 = vmatprep.subr.bf16.mxu0 0
        %3840 = vmatpush1.bf16.msra.mxu0 0
        %3841 = vmatprep.subr.bf16.mxu0 0
        %3842 = vmatpush1.bf16.msra.mxu0 0
        %3843 = vmatprep.subr.bf16.mxu0 0
        %3844 = vmatpush1.bf16.msra.mxu0 0
        %3845 = vmatprep.subr.bf16.mxu0 0
        %3846 = vmatpush1.bf16.msra.mxu0 0
        %3847 = vmatprep.mubr.bf16.mxu0 0
        %3848 = vmatmul.mubr.bf16.gmra.mrb[0].mxu0 %v935
        %v3849 = vpop.f32.mrb[0].mxu0
        %v3850 = vadd.f32 0.0, %v3849
        %v3851 = vpop.f32.mrb[0].mxu0
        %v3852 = vpop.f32.mrb[0].mxu0
        %v3853 = vadd.f32 0.0, %v3852
        %v3854 = vpop.f32.mrb[0].mxu0
        %3855 = vmatprep.mubr.bf16.mxu0 0
        %3856 = vmatmul.mubr.bf16.gmra.mrb[0].mxu0 %v938
        %v3857 = vpop.f32.mrb[0].mxu0
        %v3858 = vadd.f32 0.0, %v3857
        %v3859 = vpop.f32.mrb[0].mxu0
        %v3860 = vpop.f32.mrb[0].mxu0
        %v3861 = vadd.f32 0.0, %v3860
        %v3862 = vpop.f32.mrb[0].mxu0
        %3863 = vdwg.mxu0
        %v3864 = vpack.c.bf16 %v3853, %v3850
        %v3865 = vpack.c.bf16 %v3861, %v3858
        %v3867 = vsel %vm372, %v3864, 0
        %v3870 = vsel %vm372, %v3865, 0
        %3872 = vmatprep.subr.bf16.mxu0 0
        %3873 = vmatpush1.bf16.msra.mxu0 %v3338
        %3874 = vmatprep.subr.bf16.mxu0 0
        %3875 = vmatpush1.bf16.msra.mxu0 0
        %3876 = vmatprep.subr.bf16.mxu0 0
        %3877 = vmatpush1.bf16.msra.mxu0 0
        %3878 = vmatprep.subr.bf16.mxu0 0
        %3879 = vmatpush1.bf16.msra.mxu0 0
        %3880 = vmatprep.subr.bf16.mxu0 0
        %3881 = vmatpush1.bf16.msra.mxu0 0
        %3882 = vmatprep.subr.bf16.mxu0 0
        %3883 = vmatpush1.bf16.msra.mxu0 0
        %3884 = vmatprep.subr.bf16.mxu0 0
        %3885 = vmatpush1.bf16.msra.mxu0 0
        %3886 = vmatprep.subr.bf16.mxu0 0
        %3887 = vmatpush1.bf16.msra.mxu0 0
        %3888 = vmatprep.subr.bf16.mxu0 0
        %3889 = vmatpush1.bf16.msra.mxu0 0
        %3890 = vmatprep.subr.bf16.mxu0 0
        %3891 = vmatpush1.bf16.msra.mxu0 0
        %3892 = vmatprep.subr.bf16.mxu0 0
        %3893 = vmatpush1.bf16.msra.mxu0 0
        %3894 = vmatprep.subr.bf16.mxu0 0
        %3895 = vmatpush1.bf16.msra.mxu0 0
        %3896 = vmatprep.subr.bf16.mxu0 0
        %3897 = vmatpush1.bf16.msra.mxu0 0
        %3898 = vmatprep.subr.bf16.mxu0 0
        %3899 = vmatpush1.bf16.msra.mxu0 0
        %3900 = vmatprep.subr.bf16.mxu0 0
        %3901 = vmatpush1.bf16.msra.mxu0 0
        %3902 = vmatprep.subr.bf16.mxu0 0
        %3903 = vmatpush1.bf16.msra.mxu0 0
        %3904 = vmatprep.mubr.bf16.mxu0 0
        %3905 = vmatmul.mubr.bf16.gmra.mrb[0].mxu0 %v3867
        %v3906 = vpop.f32.mrb[0].mxu0
        %v3907 = vadd.f32 0.0, %v3906
        %v3908 = vpop.f32.mrb[0].mxu0
        %v3909 = vpop.f32.mrb[0].mxu0
        %v3910 = vadd.f32 0.0, %v3909
        %v3911 = vpop.f32.mrb[0].mxu0
        %3912 = vmatprep.mubr.bf16.mxu0 0
        %3913 = vmatmul.mubr.bf16.gmra.mrb[0].mxu0 %v3870
        %v3914 = vpop.f32.mrb[0].mxu0
        %v3915 = vadd.f32 0.0, %v3914
        %v3916 = vpop.f32.mrb[0].mxu0
        %v3917 = vpop.f32.mrb[0].mxu0
        %v3918 = vadd.f32 0.0, %v3917
        %v3919 = vpop.f32.mrb[0].mxu0
        %3920 = vdwg.mxu0
        %v3921 = vadd.f32 %v3218, %v3801
        %v3922 = vadd.f32 %v3219, %v3804
        %v3923 = vadd.f32 %v3220, %v3809
        %v3924 = vadd.f32 %v3221, %v3812
        %v3925 = vadd.f32 %v3921, %v3269
        %v3926 = vadd.f32 %v3922, %v3272
        %v3927 = vadd.f32 %v3923, %v3277
        %v3928 = vadd.f32 %v3924, %v3280
        %v3929 = vmax.f32 %v3925, 0.0
        %v3930 = vmax.f32 %v3926, 0.0
        %v3931 = vmax.f32 %v3927, 0.0
        %v3932 = vmax.f32 %v3928, 0.0
        %v3933 = vadd.f32 %v3228, %v3907
        %v3934 = vadd.f32 %v3229, %v3910
        %v3935 = vadd.f32 %v3230, %v3915
        %v3936 = vadd.f32 %v3231, %v3918
        %v3937 = vadd.f32 %v3933, %v3320
        %v3938 = vadd.f32 %v3934, %v3323
        %v3939 = vadd.f32 %v3935, %v3328
        %v3940 = vadd.f32 %v3936, %v3331
        %v3941 = vmax.f32 %v3937, 0.0
        %v3942 = vmax.f32 %v3938, 0.0
        %v3943 = vmax.f32 %v3939, 0.0
        %v3944 = vmax.f32 %v3940, 0.0
        %v3945 = vsel %vm372, %v3929, 0.0
        %3946 = vadd.xlane.f32.xlu0 %v3945
        %v3947 = vpop.xlane.xlu0 %3946
        %v3948 = vsel %vm372, %v3930, 0.0
        %3949 = vadd.xlane.f32.xlu0 %v3948
        %v3950 = vpop.xlane.xlu0 %3949
        %v3951 = vsel %vm372, %v3931, 0.0
        %3952 = vadd.xlane.f32.xlu0 %v3951
        %v3953 = vpop.xlane.xlu0 %3952
        %v3954 = vsel %vm372, %v3932, 0.0
        %3955 = vadd.xlane.f32.xlu0 %v3954
        %v3956 = vpop.xlane.xlu0 %3955
        %v3957 = vsel %vm372, %v3941, 0.0
        %3958 = vadd.xlane.f32.xlu0 %v3957
        %v3959 = vpop.xlane.xlu0 %3958
        %v3960 = vsel %vm372, %v3942, 0.0
        %3961 = vadd.xlane.f32.xlu0 %v3960
        %v3962 = vpop.xlane.xlu0 %3961
        %v3963 = vsel %vm372, %v3943, 0.0
        %3964 = vadd.xlane.f32.xlu0 %v3963
        %v3965 = vpop.xlane.xlu0 %3964
        %v3966 = vsel %vm372, %v3944, 0.0
        %3967 = vadd.xlane.f32.xlu0 %v3966
        %v3968 = vpop.xlane.xlu0 %3967
        %v3969 = vpack.c.bf16 %v3950, %v3947
        %v3970 = vpack.c.bf16 %v3956, %v3953
        %v3971 = vpack.c.bf16 %v3962, %v3959
        %v3972 = vpack.c.bf16 %v3968, %v3965
        %3973 = vmatprep.subr.bf16.mxu0 0
        %3974 = vmatpush1.bf16.msra.mxu0 %v3971
        %3975 = vmatprep.subr.bf16.mxu0 0
        %3976 = vmatpush1.bf16.msra.mxu0 %v3972
        %3977 = vmatprep.subr.bf16.mxu0 0
        %3978 = vmatpush1.bf16.msra.mxu0 0
        %3979 = vmatprep.subr.bf16.mxu0 0
        %3980 = vmatpush1.bf16.msra.mxu0 0
        %3981 = vmatprep.subr.bf16.mxu0 0
        %3982 = vmatpush1.bf16.msra.mxu0 0
        %3983 = vmatprep.subr.bf16.mxu0 0
        %3984 = vmatpush1.bf16.msra.mxu0 0
        %3985 = vmatprep.subr.bf16.mxu0 0
        %3986 = vmatpush1.bf16.msra.mxu0 0
        %3987 = vmatprep.subr.bf16.mxu0 0
        %3988 = vmatpush1.bf16.msra.mxu0 0
        %3989 = vmatprep.subr.bf16.mxu0 0
        %3990 = vmatpush1.bf16.msra.mxu0 0
        %3991 = vmatprep.subr.bf16.mxu0 0
        %3992 = vmatpush1.bf16.msra.mxu0 0
        %3993 = vmatprep.subr.bf16.mxu0 0
        %3994 = vmatpush1.bf16.msra.mxu0 0
        %3995 = vmatprep.subr.bf16.mxu0 0
        %3996 = vmatpush1.bf16.msra.mxu0 0
        %3997 = vmatprep.subr.bf16.mxu0 0
        %3998 = vmatpush1.bf16.msra.mxu0 0
        %3999 = vmatprep.subr.bf16.mxu0 0
        %4000 = vmatpush1.bf16.msra.mxu0 0
        %4001 = vmatprep.subr.bf16.mxu0 0
        %4002 = vmatpush1.bf16.msra.mxu0 0
        %4003 = vmatprep.subr.bf16.mxu0 0
        %4004 = vmatpush1.bf16.msra.mxu0 0
        %4005 = vmatprep.mubr.bf16.mxu0 0
        %4006 = vmatmul.mubr.bf16.gmra.mrb[0].mxu0 %v1590
        %v4007 = vpop.f32.mrb[0].mxu0
        %v4008 = vadd.f32 0.0, %v4007
        %v4009 = vpop.f32.mrb[0].mxu0
        %v4010 = vpop.f32.mrb[0].mxu0
        %v4011 = vadd.f32 0.0, %v4010
        %v4012 = vpop.f32.mrb[0].mxu0
        %4013 = vmatprep.mubr.bf16.mxu0 0
        %4014 = vmatmul.mubr.bf16.gmra.mrb[0].mxu0 %v1593
        %v4015 = vpop.f32.mrb[0].mxu0
        %v4016 = vadd.f32 0.0, %v4015
        %v4017 = vpop.f32.mrb[0].mxu0
        %v4018 = vpop.f32.mrb[0].mxu0
        %v4019 = vadd.f32 0.0, %v4018
        %v4020 = vpop.f32.mrb[0].mxu0
        %4021 = vdwg.mxu0
        %4022 = vmatprep.subr.bf16.mxu0 0
        %4023 = vmatpush1.bf16.msra.mxu0 %v3969
        %4024 = vmatprep.subr.bf16.mxu0 0
        %4025 = vmatpush1.bf16.msra.mxu0 %v3970
        %4026 = vmatprep.subr.bf16.mxu0 0
        %4027 = vmatpush1.bf16.msra.mxu0 0
        %4028 = vmatprep.subr.bf16.mxu0 0
        %4029 = vmatpush1.bf16.msra.mxu0 0
        %4030 = vmatprep.subr.bf16.mxu0 0
        %4031 = vmatpush1.bf16.msra.mxu0 0
        %4032 = vmatprep.subr.bf16.mxu0 0
        %4033 = vmatpush1.bf16.msra.mxu0 0
        %4034 = vmatprep.subr.bf16.mxu0 0
        %4035 = vmatpush1.bf16.msra.mxu0 0
        %4036 = vmatprep.subr.bf16.mxu0 0
        %4037 = vmatpush1.bf16.msra.mxu0 0
        %4038 = vmatprep.subr.bf16.mxu0 0
        %4039 = vmatpush1.bf16.msra.mxu0 0
        %4040 = vmatprep.subr.bf16.mxu0 0
        %4041 = vmatpush1.bf16.msra.mxu0 0
        %4042 = vmatprep.subr.bf16.mxu0 0
        %4043 = vmatpush1.bf16.msra.mxu0 0
        %4044 = vmatprep.subr.bf16.mxu0 0
        %4045 = vmatpush1.bf16.msra.mxu0 0
        %4046 = vmatprep.subr.bf16.mxu0 0
        %4047 = vmatpush1.bf16.msra.mxu0 0
        %4048 = vmatprep.subr.bf16.mxu0 0
        %4049 = vmatpush1.bf16.msra.mxu0 0
        %4050 = vmatprep.subr.bf16.mxu0 0
        %4051 = vmatpush1.bf16.msra.mxu0 0
        %4052 = vmatprep.subr.bf16.mxu0 0
        %4053 = vmatpush1.bf16.msra.mxu0 0
        %4054 = vmatprep.mubr.bf16.mxu0 0
        %4055 = vmatmul.mubr.bf16.gmra.mrb[0].mxu0 %v1655
        %v4056 = vpop.f32.mrb[0].mxu0
        %v4057 = vadd.f32 %v4008, %v4056
        %v4058 = vpop.f32.mrb[0].mxu0
        %v4059 = vpop.f32.mrb[0].mxu0
        %v4060 = vadd.f32 %v4011, %v4059
        %v4061 = vpop.f32.mrb[0].mxu0
        %4062 = vmatprep.mubr.bf16.mxu0 0
        %4063 = vmatmul.mubr.bf16.gmra.mrb[0].mxu0 %v1658
        %v4064 = vpop.f32.mrb[0].mxu0
        %v4065 = vadd.f32 %v4016, %v4064
        %v4066 = vpop.f32.mrb[0].mxu0
        %v4067 = vpop.f32.mrb[0].mxu0
        %v4068 = vadd.f32 %v4019, %v4067
        %v4069 = vpop.f32.mrb[0].mxu0
        %4070 = vdwg.mxu0
        %v4071 = vmax.f32 %v4057, 0.0
        %v4072 = vmax.f32 %v4060, 0.0
        %v4073 = vmax.f32 %v4065, 0.0
        %v4074 = vmax.f32 %v4068, 0.0
        %v4075 = vpack.c.bf16 %v3942, %v3941
        %v4076 = vpack.c.bf16 %v3944, %v3943
        %4077 = vmatprep.subr.bf16.mxu0 0
        %4078 = vmatpush1.bf16.msra.mxu0 %v4075
        %4079 = vmatprep.subr.bf16.mxu0 0
        %4080 = vmatpush1.bf16.msra.mxu0 %v4076
        %4081 = vmatprep.subr.bf16.mxu0 0
        %4082 = vmatpush1.bf16.msra.mxu0 0
        %4083 = vmatprep.subr.bf16.mxu0 0
        %4084 = vmatpush1.bf16.msra.mxu0 0
        %4085 = vmatprep.subr.bf16.mxu0 0
        %4086 = vmatpush1.bf16.msra.mxu0 0
        %4087 = vmatprep.subr.bf16.mxu0 0
        %4088 = vmatpush1.bf16.msra.mxu0 0
        %4089 = vmatprep.subr.bf16.mxu0 0
        %4090 = vmatpush1.bf16.msra.mxu0 0
        %4091 = vmatprep.subr.bf16.mxu0 0
        %4092 = vmatpush1.bf16.msra.mxu0 0
        %4093 = vmatprep.subr.bf16.mxu0 0
        %4094 = vmatpush1.bf16.msra.mxu0 0
        %4095 = vmatprep.subr.bf16.mxu0 0
        %4096 = vmatpush1.bf16.msra.mxu0 0
        %4097 = vmatprep.subr.bf16.mxu0 0
        %4098 = vmatpush1.bf16.msra.mxu0 0
        %4099 = vmatprep.subr.bf16.mxu0 0
        %4100 = vmatpush1.bf16.msra.mxu0 0
        %4101 = vmatprep.subr.bf16.mxu0 0
        %4102 = vmatpush1.bf16.msra.mxu0 0
        %4103 = vmatprep.subr.bf16.mxu0 0
        %4104 = vmatpush1.bf16.msra.mxu0 0
        %4105 = vmatprep.subr.bf16.mxu0 0
        %4106 = vmatpush1.bf16.msra.mxu0 0
        %4107 = vmatprep.subr.bf16.mxu0 0
        %4108 = vmatpush1.bf16.msra.mxu0 0
        %4109 = vmatprep.mubr.bf16.mxu0 0
        %4110 = vmatmul.mubr.bf16.gmra.mrb[0].mxu0 %v1726
        %v4111 = vpop.f32.mrb[0].mxu0
        %v4112 = vadd.f32 0.0, %v4111
        %v4113 = vpop.f32.mrb[0].mxu0
        %v4114 = vpop.f32.mrb[0].mxu0
        %v4115 = vadd.f32 0.0, %v4114
        %v4116 = vpop.f32.mrb[0].mxu0
        %4117 = vmatprep.mubr.bf16.mxu0 0
        %4118 = vmatmul.mubr.bf16.gmra.mrb[0].mxu0 %v1729
        %v4119 = vpop.f32.mrb[0].mxu0
        %v4120 = vadd.f32 0.0, %v4119
        %v4121 = vpop.f32.mrb[0].mxu0
        %v4122 = vpop.f32.mrb[0].mxu0
        %v4123 = vadd.f32 0.0, %v4122
        %v4124 = vpop.f32.mrb[0].mxu0
        %4125 = vdwg.mxu0
        %v4126 = vmax.f32 %v4112, 0.0
        %v4127 = vmax.f32 %v4115, 0.0
        %v4128 = vmax.f32 %v4120, 0.0
        %v4129 = vmax.f32 %v4123, 0.0
        %v4130 = vpack.c.bf16 %v4072, %v4071
        %v4131 = vpack.c.bf16 %v4074, %v4073
        %4132 = vmatprep.subr.bf16.mxu0 0
        %4133 = vmatpush1.bf16.msra.mxu0 %v4130
        %4134 = vmatprep.subr.bf16.mxu0 0
        %4135 = vmatpush1.bf16.msra.mxu0 %v4131
        %4136 = vmatprep.subr.bf16.mxu0 0
        %4137 = vmatpush1.bf16.msra.mxu0 0
        %4138 = vmatprep.subr.bf16.mxu0 0
        %4139 = vmatpush1.bf16.msra.mxu0 0
        %4140 = vmatprep.subr.bf16.mxu0 0
        %4141 = vmatpush1.bf16.msra.mxu0 0
        %4142 = vmatprep.subr.bf16.mxu0 0
        %4143 = vmatpush1.bf16.msra.mxu0 0
        %4144 = vmatprep.subr.bf16.mxu0 0
        %4145 = vmatpush1.bf16.msra.mxu0 0
        %4146 = vmatprep.subr.bf16.mxu0 0
        %4147 = vmatpush1.bf16.msra.mxu0 0
        %4148 = vmatprep.subr.bf16.mxu0 0
        %4149 = vmatpush1.bf16.msra.mxu0 0
        %4150 = vmatprep.subr.bf16.mxu0 0
        %4151 = vmatpush1.bf16.msra.mxu0 0
        %4152 = vmatprep.subr.bf16.mxu0 0
        %4153 = vmatpush1.bf16.msra.mxu0 0
        %4154 = vmatprep.subr.bf16.mxu0 0
        %4155 = vmatpush1.bf16.msra.mxu0 0
        %4156 = vmatprep.subr.bf16.mxu0 0
        %4157 = vmatpush1.bf16.msra.mxu0 0
        %4158 = vmatprep.subr.bf16.mxu0 0
        %4159 = vmatpush1.bf16.msra.mxu0 0
        %4160 = vmatprep.subr.bf16.mxu0 0
        %4161 = vmatpush1.bf16.msra.mxu0 0
        %4162 = vmatprep.subr.bf16.mxu0 0
        %4163 = vmatpush1.bf16.msra.mxu0 0
        %4164 = vmatprep.mubr.bf16.mxu0 0
        %4165 = vmatmul.mubr.bf16.gmra.mrb[0].mxu0 %v1787
        %v4166 = vpop.f32.mrb[0].mxu0
        %v4167 = vadd.f32 0.0, %v4166
        %v4168 = vpop.f32.mrb[0].mxu0
        %v4169 = vpop.f32.mrb[0].mxu0
        %v4170 = vpop.f32.mrb[0].mxu0
        %4171 = vdwg.mxu0
        %v4172 = vpack.c.bf16 %v4127, %v4126
        %v4173 = vpack.c.bf16 %v4129, %v4128
        %4174 = vmatprep.subr.bf16.mxu0 0
        %4175 = vmatpush1.bf16.msra.mxu0 %v4172
        %4176 = vmatprep.subr.bf16.mxu0 0
        %4177 = vmatpush1.bf16.msra.mxu0 %v4173
        %4178 = vmatprep.subr.bf16.mxu0 0
        %4179 = vmatpush1.bf16.msra.mxu0 0
        %4180 = vmatprep.subr.bf16.mxu0 0
        %4181 = vmatpush1.bf16.msra.mxu0 0
        %4182 = vmatprep.subr.bf16.mxu0 0
        %4183 = vmatpush1.bf16.msra.mxu0 0
        %4184 = vmatprep.subr.bf16.mxu0 0
        %4185 = vmatpush1.bf16.msra.mxu0 0
        %4186 = vmatprep.subr.bf16.mxu0 0
        %4187 = vmatpush1.bf16.msra.mxu0 0
        %4188 = vmatprep.subr.bf16.mxu0 0
        %4189 = vmatpush1.bf16.msra.mxu0 0
        %4190 = vmatprep.subr.bf16.mxu0 0
        %4191 = vmatpush1.bf16.msra.mxu0 0
        %4192 = vmatprep.subr.bf16.mxu0 0
        %4193 = vmatpush1.bf16.msra.mxu0 0
        %4194 = vmatprep.subr.bf16.mxu0 0
        %4195 = vmatpush1.bf16.msra.mxu0 0
        %4196 = vmatprep.subr.bf16.mxu0 0
        %4197 = vmatpush1.bf16.msra.mxu0 0
        %4198 = vmatprep.subr.bf16.mxu0 0
        %4199 = vmatpush1.bf16.msra.mxu0 0
        %4200 = vmatprep.subr.bf16.mxu0 0
        %4201 = vmatpush1.bf16.msra.mxu0 0
        %4202 = vmatprep.subr.bf16.mxu0 0
        %4203 = vmatpush1.bf16.msra.mxu0 0
        %4204 = vmatprep.subr.bf16.mxu0 0
        %4205 = vmatpush1.bf16.msra.mxu0 0
        %4206 = vmatprep.mubr.bf16.mxu0 0
        %4207 = vmatmul.mubr.bf16.gmra.mrb[0].mxu0 %v1832
        %v4208 = vpop.f32.mrb[0].mxu0
        %v4209 = vadd.f32 0.0, %v4208
        %v4210 = vpop.f32.mrb[0].mxu0
        %v4211 = vpop.f32.mrb[0].mxu0
        %v4212 = vpop.f32.mrb[0].mxu0
        %4213 = vdwg.mxu0
        %4215 = vset.pattern.permute.xlu0 0
        %4216 = vperm.xlu0 %4215, %v4167
        %v4217 = vpop.permute.xlu0 %4216
        %v4219 = vadd.f32 %v4217, %v4209
        %v4220 = vsel %vm1880, %v4219, -inf
        %v4221 = vrot.slane %v4220, 4
        %v4222 = vmax.f32 %v4220, %v4221
        %v4223 = vrot.slane %v4222, 2
        %v4224 = vmax.f32 %v4222, %v4223
        %v4225 = vrot.slane %v4224, 1
        %v4226 = vmax.f32 %v4224, %v4225
        %v4227 = vsub.f32 %v4219, %v4226
        %v4228 = vmul.f32 %v4227, 1.442695
        %v4229 = vpow.pop %v4228
        %v4230 = vsel %vm1880, %v4229, 0.0
        %v4231 = vrot.slane %v4230, 4
        %v4232 = vadd.f32 %v4230, %v4231
        %v4233 = vrot.slane %v4232, 2
        %v4234 = vadd.f32 %v4232, %v4233
        %v4235 = vrot.slane %v4234, 1
        %v4236 = vadd.f32 %v4234, %v4235
        %v4237 = vlog2.pop %v4236
        %v4238 = vmul.f32 %v4237, 0.6931472
        %v4239 = vadd.f32 %v4226, %v4238
        %v4240 = vsub.f32 %v4219, %v4239
        %s4241 = scalar_lea.vmem %s298, 4 [#allocation5]
        %4242 = vst.msk [vmem:[%s4241] sm:$0x3] %vm1880, %v4240
        %s4243 = scalar_lea.vmem %s262, 24 [#allocation2]
        %v4244 = vld [vmem:[%s4243] sm:$0xf]
        %v4245 = vld [vmem:[%s4243 + $0x4] sm:$0xf]
        %s4246 = scalar_lea.vmem %s302, 3
        %v4247 = vld [vmem:[%s4246] sm:$0x1]
        %s4248 = scalar_lea.vmem %s307, 3
        %v4249 = vld [vmem:[%s4248] sm:$0x1]
        %v4250 = vmax.bf16 %v4244, 0
        %v4251 = vmax.bf16 %v4245, 0
        %v4252 = vunpack.c.l.bf16 %v4250
        %v4253 = vunpack.c.l.bf16 %v4251
        %v4254 = vsub.bf16 0, %v4244
        %v4255 = vsub.bf16 0, %v4245
        %v4256 = vmax.bf16 %v4254, 0
        %v4257 = vmax.bf16 %v4255, 0
        %v4258 = vunpack.c.l.bf16 %v4256
        %v4259 = vunpack.c.l.bf16 %v4257
        %v4260 = vsel %vm372, %v4252, 0.0
        %4261 = vadd.xlane.f32.xlu0 %v4260
        %v4262 = vpop.xlane.xlu0 %4261
        %v4263 = vsel %vm372, %v4253, 0.0
        %4264 = vadd.xlane.f32.xlu0 %v4263
        %v4265 = vpop.xlane.xlu0 %4264
        %v4266 = vsel %vm372, %v4258, 0.0
        %4267 = vadd.xlane.f32.xlu0 %v4266
        %v4268 = vpop.xlane.xlu0 %4267
        %v4269 = vsel %vm372, %v4259, 0.0
        %4270 = vadd.xlane.f32.xlu0 %v4269
        %v4271 = vpop.xlane.xlu0 %4270
        %v4272 = vadd.f32 %v4260, %v4263
        %v4273 = vrot.slane %v4272, 4
        %v4274 = vadd.f32 %v4272, %v4273
        %v4275 = vrot.slane %v4274, 2
        %v4276 = vadd.f32 %v4274, %v4275
        %v4277 = vrot.slane %v4276, 1
        %v4278 = vadd.f32 %v4276, %v4277
        %v4279 = vadd.f32 %v4266, %v4269
        %v4280 = vrot.slane %v4279, 4
        %v4281 = vadd.f32 %v4279, %v4280
        %v4282 = vrot.slane %v4281, 2
        %v4283 = vadd.f32 %v4281, %v4282
        %v4284 = vrot.slane %v4283, 1
        %v4285 = vadd.f32 %v4283, %v4284
        %4286 = vxpose.xlu0.b32.start [1/16] %v4262, 128
        %4287 = vxpose.xlu0.b32.cont [2/16] %v4265, 128
        %4288 = vxpose.xlu0.b32.cont [3/16] 0.0, 128
        %4289 = vxpose.xlu0.b32.cont [4/16] 0.0, 128
        %4290 = vxpose.xlu0.b32.cont [5/16] 0.0, 128
        %4291 = vxpose.xlu0.b32.cont [6/16] 0.0, 128
        %4292 = vxpose.xlu0.b32.cont [7/16] 0.0, 128
        %4293 = vxpose.xlu0.b32.cont [8/16] 0.0, 128
        %4294 = vxpose.xlu0.b32.cont [9/16] 0.0, 128
        %4295 = vxpose.xlu0.b32.cont [10/16] 0.0, 128
        %4296 = vxpose.xlu0.b32.cont [11/16] 0.0, 128
        %4297 = vxpose.xlu0.b32.cont [12/16] 0.0, 128
        %4298 = vxpose.xlu0.b32.cont [13/16] 0.0, 128
        %4299 = vxpose.xlu0.b32.cont [14/16] 0.0, 128
        %4300 = vxpose.xlu0.b32.cont [15/16] 0.0, 128
        %4301 = vxpose.xlu0.b32.end [16/16] 0.0, 128
        %v4302 = vpop.trf.xlu0
        %v4303 = vpop.trf.xlu0
        %v4304 = vpop.trf.xlu0
        %v4305 = vpop.trf.xlu0
        %v4306 = vpop.trf.xlu0
        %v4307 = vpop.trf.xlu0
        %v4308 = vpop.trf.xlu0
        %v4309 = vpop.trf.xlu0
        %v4310 = vpop.trf.xlu0
        %v4311 = vpop.trf.xlu0
        %v4312 = vpop.trf.xlu0
        %v4313 = vpop.trf.xlu0
        %v4314 = vpop.trf.xlu0
        %v4315 = vpop.trf.xlu0
        %v4316 = vpop.trf.xlu0
        %v4317 = vpop.trf.xlu0
        %v4318 = vlaneseq
        %v4319 = vshrl.u32 %v4318, 7
        %v4320 = vsub.s32 0, %v4319
        %v4321 = vrot.slane %v4302, %v4320
        %v4322 = vmul.f32 %v438, %v4321
        %v4323 = vmul.f32 %v443, %v4321
        %v4324 = vmul.f32 %v448, %v4321
        %v4325 = vmul.f32 %v453, %v4321
        %4326 = vxpose.xlu0.b32.start [1/16] %v4268, 128
        %4327 = vxpose.xlu0.b32.cont [2/16] %v4271, 128
        %4328 = vxpose.xlu0.b32.cont [3/16] 0.0, 128
        %4329 = vxpose.xlu0.b32.cont [4/16] 0.0, 128
        %4330 = vxpose.xlu0.b32.cont [5/16] 0.0, 128
        %4331 = vxpose.xlu0.b32.cont [6/16] 0.0, 128
        %4332 = vxpose.xlu0.b32.cont [7/16] 0.0, 128
        %4333 = vxpose.xlu0.b32.cont [8/16] 0.0, 128
        %4334 = vxpose.xlu0.b32.cont [9/16] 0.0, 128
        %4335 = vxpose.xlu0.b32.cont [10/16] 0.0, 128
        %4336 = vxpose.xlu0.b32.cont [11/16] 0.0, 128
        %4337 = vxpose.xlu0.b32.cont [12/16] 0.0, 128
        %4338 = vxpose.xlu0.b32.cont [13/16] 0.0, 128
        %4339 = vxpose.xlu0.b32.cont [14/16] 0.0, 128
        %4340 = vxpose.xlu0.b32.cont [15/16] 0.0, 128
        %4341 = vxpose.xlu0.b32.end [16/16] 0.0, 128
        %v4342 = vpop.trf.xlu0
        %v4343 = vpop.trf.xlu0
        %v4344 = vpop.trf.xlu0
        %v4345 = vpop.trf.xlu0
        %v4346 = vpop.trf.xlu0
        %v4347 = vpop.trf.xlu0
        %v4348 = vpop.trf.xlu0
        %v4349 = vpop.trf.xlu0
        %v4350 = vpop.trf.xlu0
        %v4351 = vpop.trf.xlu0
        %v4352 = vpop.trf.xlu0
        %v4353 = vpop.trf.xlu0
        %v4354 = vpop.trf.xlu0
        %v4355 = vpop.trf.xlu0
        %v4356 = vpop.trf.xlu0
        %v4357 = vpop.trf.xlu0
        %v4358 = vlaneseq
        %v4359 = vshrl.u32 %v4358, 7
        %v4360 = vsub.s32 0, %v4359
        %v4361 = vrot.slane %v4342, %v4360
        %v4362 = vmul.f32 %v506, %v4361
        %v4363 = vmul.f32 %v511, %v4361
        %v4364 = vmul.f32 %v516, %v4361
        %v4365 = vmul.f32 %v521, %v4361
        %v4366 = vadd.f32 %v4322, %v4362
        %v4367 = vadd.f32 %v4323, %v4363
        %v4368 = vadd.f32 %v4324, %v4364
        %v4369 = vadd.f32 %v4325, %v4365
        %v4370 = vmul.f32 %v542, %v4278
        %v4371 = vmul.f32 %v547, %v4278
        %v4372 = vmul.f32 %v552, %v4278
        %v4373 = vmul.f32 %v557, %v4278
        %v4374 = vmul.f32 %v574, %v4285
        %v4375 = vmul.f32 %v579, %v4285
        %v4376 = vmul.f32 %v584, %v4285
        %v4377 = vmul.f32 %v589, %v4285
        %v4378 = vadd.f32 %v4370, %v4374
        %v4379 = vadd.f32 %v4371, %v4375
        %v4380 = vadd.f32 %v4372, %v4376
        %v4381 = vadd.f32 %v4373, %v4377
        %v4383 = vlaneseq
        %v4384 = vshrl.u32 %v4383, 7
        %v4385 = vsub.s32 0, %v4384
        %v4386 = vrot.slane %v4247, %v4385
        %v4388 = vmul.f32 %v602, %v4386
        %v4389 = vmul.f32 %v607, %v4386
        %v4390 = vmul.f32 %v612, %v4386
        %v4391 = vmul.f32 %v617, %v4386
        %v4393 = vlaneseq
        %v4394 = vshrl.u32 %v4393, 7
        %v4395 = vsub.s32 0, %v4394
        %v4396 = vrot.slane %v4249, %v4395
        %v4398 = vmul.f32 %v632, %v4396
        %v4399 = vmul.f32 %v637, %v4396
        %v4400 = vmul.f32 %v642, %v4396
        %v4401 = vmul.f32 %v647, %v4396
        %v4402 = vpack.c.bf16 %v4367, %v4366
        %v4403 = vpack.c.bf16 %v4369, %v4368
        %4404 = vmatprep.subr.bf16.mxu0 0
        %4405 = vmatpush1.bf16.msra.mxu0 %v4402
        %4406 = vmatprep.subr.bf16.mxu0 0
        %4407 = vmatpush1.bf16.msra.mxu0 %v4403
        %4408 = vmatprep.subr.bf16.mxu0 0
        %4409 = vmatpush1.bf16.msra.mxu0 0
        %4410 = vmatprep.subr.bf16.mxu0 0
        %4411 = vmatpush1.bf16.msra.mxu0 0
        %4412 = vmatprep.subr.bf16.mxu0 0
        %4413 = vmatpush1.bf16.msra.mxu0 0
        %4414 = vmatprep.subr.bf16.mxu0 0
        %4415 = vmatpush1.bf16.msra.mxu0 0
        %4416 = vmatprep.subr.bf16.mxu0 0
        %4417 = vmatpush1.bf16.msra.mxu0 0
        %4418 = vmatprep.subr.bf16.mxu0 0
        %4419 = vmatpush1.bf16.msra.mxu0 0
        %4420 = vmatprep.subr.bf16.mxu0 0
        %4421 = vmatpush1.bf16.msra.mxu0 0
        %4422 = vmatprep.subr.bf16.mxu0 0
        %4423 = vmatpush1.bf16.msra.mxu0 0
        %4424 = vmatprep.subr.bf16.mxu0 0
        %4425 = vmatpush1.bf16.msra.mxu0 0
        %4426 = vmatprep.subr.bf16.mxu0 0
        %4427 = vmatpush1.bf16.msra.mxu0 0
        %4428 = vmatprep.subr.bf16.mxu0 0
        %4429 = vmatpush1.bf16.msra.mxu0 0
        %4430 = vmatprep.subr.bf16.mxu0 0
        %4431 = vmatpush1.bf16.msra.mxu0 0
        %4432 = vmatprep.subr.bf16.mxu0 0
        %4433 = vmatpush1.bf16.msra.mxu0 0
        %4434 = vmatprep.subr.bf16.mxu0 0
        %4435 = vmatpush1.bf16.msra.mxu0 0
        %4436 = vmatprep.mubr.bf16.mxu0 0
        %4437 = vmatmul.mubr.bf16.gmra.mrb[0].mxu0 %v673
        %v4438 = vpop.f32.mrb[0].mxu0
        %v4439 = vadd.f32 0.0, %v4438
        %v4440 = vpop.f32.mrb[0].mxu0
        %v4441 = vpop.f32.mrb[0].mxu0
        %v4442 = vadd.f32 0.0, %v4441
        %v4443 = vpop.f32.mrb[0].mxu0
        %4444 = vmatprep.mubr.bf16.mxu0 0
        %4445 = vmatmul.mubr.bf16.gmra.mrb[0].mxu0 %v676
        %v4446 = vpop.f32.mrb[0].mxu0
        %v4447 = vadd.f32 0.0, %v4446
        %v4448 = vpop.f32.mrb[0].mxu0
        %v4449 = vpop.f32.mrb[0].mxu0
        %v4450 = vadd.f32 0.0, %v4449
        %v4451 = vpop.f32.mrb[0].mxu0
        %4452 = vdwg.mxu0
        %v4453 = vpack.c.bf16 %v4379, %v4378
        %v4454 = vpack.c.bf16 %v4381, %v4380
        %4455 = vmatprep.subr.bf16.mxu0 0
        %4456 = vmatpush1.bf16.msra.mxu0 %v4453
        %4457 = vmatprep.subr.bf16.mxu0 0
        %4458 = vmatpush1.bf16.msra.mxu0 %v4454
        %4459 = vmatprep.subr.bf16.mxu0 0
        %4460 = vmatpush1.bf16.msra.mxu0 0
        %4461 = vmatprep.subr.bf16.mxu0 0
        %4462 = vmatpush1.bf16.msra.mxu0 0
        %4463 = vmatprep.subr.bf16.mxu0 0
        %4464 = vmatpush1.bf16.msra.mxu0 0
        %4465 = vmatprep.subr.bf16.mxu0 0
        %4466 = vmatpush1.bf16.msra.mxu0 0
        %4467 = vmatprep.subr.bf16.mxu0 0
        %4468 = vmatpush1.bf16.msra.mxu0 0
        %4469 = vmatprep.subr.bf16.mxu0 0
        %4470 = vmatpush1.bf16.msra.mxu0 0
        %4471 = vmatprep.subr.bf16.mxu0 0
        %4472 = vmatpush1.bf16.msra.mxu0 0
        %4473 = vmatprep.subr.bf16.mxu0 0
        %4474 = vmatpush1.bf16.msra.mxu0 0
        %4475 = vmatprep.subr.bf16.mxu0 0
        %4476 = vmatpush1.bf16.msra.mxu0 0
        %4477 = vmatprep.subr.bf16.mxu0 0
        %4478 = vmatpush1.bf16.msra.mxu0 0
        %4479 = vmatprep.subr.bf16.mxu0 0
        %4480 = vmatpush1.bf16.msra.mxu0 0
        %4481 = vmatprep.subr.bf16.mxu0 0
        %4482 = vmatpush1.bf16.msra.mxu0 0
        %4483 = vmatprep.subr.bf16.mxu0 0
        %4484 = vmatpush1.bf16.msra.mxu0 0
        %4485 = vmatprep.subr.bf16.mxu0 0
        %4486 = vmatpush1.bf16.msra.mxu0 0
        %4487 = vmatprep.mubr.bf16.mxu0 0
        %4488 = vmatmul.mubr.bf16.gmra.mrb[0].mxu0 %v740
        %v4489 = vpop.f32.mrb[0].mxu0
        %v4490 = vadd.f32 0.0, %v4489
        %v4491 = vpop.f32.mrb[0].mxu0
        %v4492 = vpop.f32.mrb[0].mxu0
        %v4493 = vadd.f32 0.0, %v4492
        %v4494 = vpop.f32.mrb[0].mxu0
        %4495 = vmatprep.mubr.bf16.mxu0 0
        %4496 = vmatmul.mubr.bf16.gmra.mrb[0].mxu0 %v743
        %v4497 = vpop.f32.mrb[0].mxu0
        %v4498 = vadd.f32 0.0, %v4497
        %v4499 = vpop.f32.mrb[0].mxu0
        %v4500 = vpop.f32.mrb[0].mxu0
        %v4501 = vadd.f32 0.0, %v4500
        %v4502 = vpop.f32.mrb[0].mxu0
        %4503 = vdwg.mxu0
        %v4506 = vunpack.c.l.b16 %v4244
        %v4507 = vunpack.c.l.b16 %v4245
        %v4508 = vpack.c.b16 %v4507, %v4506
        %v4510 = vsel %vm372, %v4508, 0
        %4512 = vmatprep.subr.bf16.mxu0 0
        %4513 = vmatpush1.bf16.xpose.msra.mxu0 %v4510
        %4514 = vmatprep.subr.bf16.mxu0 0
        %4515 = vmatpush1.bf16.xpose.msra.mxu0 0
        %4516 = vmatprep.subr.bf16.mxu0 0
        %4517 = vmatpush1.bf16.xpose.msra.mxu0 0
        %4518 = vmatprep.subr.bf16.mxu0 0
        %4519 = vmatpush1.bf16.xpose.msra.mxu0 0
        %4520 = vmatprep.subr.bf16.mxu0 0
        %4521 = vmatpush1.bf16.xpose.msra.mxu0 0
        %4522 = vmatprep.subr.bf16.mxu0 0
        %4523 = vmatpush1.bf16.xpose.msra.mxu0 0
        %4524 = vmatprep.subr.bf16.mxu0 0
        %4525 = vmatpush1.bf16.xpose.msra.mxu0 0
        %4526 = vmatprep.subr.bf16.mxu0 0
        %4527 = vmatpush1.bf16.xpose.msra.mxu0 0
        %4528 = vmatprep.subr.bf16.mxu0 0
        %4529 = vmatpush1.bf16.xpose.msra.mxu0 0
        %4530 = vmatprep.subr.bf16.mxu0 0
        %4531 = vmatpush1.bf16.xpose.msra.mxu0 0
        %4532 = vmatprep.subr.bf16.mxu0 0
        %4533 = vmatpush1.bf16.xpose.msra.mxu0 0
        %4534 = vmatprep.subr.bf16.mxu0 0
        %4535 = vmatpush1.bf16.xpose.msra.mxu0 0
        %4536 = vmatprep.subr.bf16.mxu0 0
        %4537 = vmatpush1.bf16.xpose.msra.mxu0 0
        %4538 = vmatprep.subr.bf16.mxu0 0
        %4539 = vmatpush1.bf16.xpose.msra.mxu0 0
        %4540 = vmatprep.subr.bf16.mxu0 0
        %4541 = vmatpush1.bf16.xpose.msra.mxu0 0
        %4542 = vmatprep.subr.bf16.mxu0 0
        %4543 = vmatpush1.bf16.xpose.msra.mxu0 0
        %4544 = vmatprep.mubr.bf16.mxu0 0
        %4545 = vmatmul.mubr.bf16.gmra.mrb[0].mxu0 %v867
        %v4546 = vpop.f32.mrb[0].mxu0
        %v4547 = vadd.f32 0.0, %v4546
        %v4548 = vpop.f32.mrb[0].mxu0
        %v4549 = vpop.f32.mrb[0].mxu0
        %v4550 = vadd.f32 0.0, %v4549
        %v4551 = vpop.f32.mrb[0].mxu0
        %4552 = vmatprep.mubr.bf16.mxu0 0
        %4553 = vmatmul.mubr.bf16.gmra.mrb[0].mxu0 %v870
        %v4554 = vpop.f32.mrb[0].mxu0
        %v4555 = vadd.f32 0.0, %v4554
        %v4556 = vpop.f32.mrb[0].mxu0
        %v4557 = vpop.f32.mrb[0].mxu0
        %v4558 = vadd.f32 0.0, %v4557
        %v4559 = vpop.f32.mrb[0].mxu0
        %4560 = vdwg.mxu0
        %4562 = vmatprep.subr.bf16.mxu0 0
        %4563 = vmatpush1.bf16.msra.mxu0 %v4508
        %4564 = vmatprep.subr.bf16.mxu0 0
        %4565 = vmatpush1.bf16.msra.mxu0 0
        %4566 = vmatprep.subr.bf16.mxu0 0
        %4567 = vmatpush1.bf16.msra.mxu0 0
        %4568 = vmatprep.subr.bf16.mxu0 0
        %4569 = vmatpush1.bf16.msra.mxu0 0
        %4570 = vmatprep.subr.bf16.mxu0 0
        %4571 = vmatpush1.bf16.msra.mxu0 0
        %4572 = vmatprep.subr.bf16.mxu0 0
        %4573 = vmatpush1.bf16.msra.mxu0 0
        %4574 = vmatprep.subr.bf16.mxu0 0
        %4575 = vmatpush1.bf16.msra.mxu0 0
        %4576 = vmatprep.subr.bf16.mxu0 0
        %4577 = vmatpush1.bf16.msra.mxu0 0
        %4578 = vmatprep.subr.bf16.mxu0 0
        %4579 = vmatpush1.bf16.msra.mxu0 0
        %4580 = vmatprep.subr.bf16.mxu0 0
        %4581 = vmatpush1.bf16.msra.mxu0 0
        %4582 = vmatprep.subr.bf16.mxu0 0
        %4583 = vmatpush1.bf16.msra.mxu0 0
        %4584 = vmatprep.subr.bf16.mxu0 0
        %4585 = vmatpush1.bf16.msra.mxu0 0
        %4586 = vmatprep.subr.bf16.mxu0 0
        %4587 = vmatpush1.bf16.msra.mxu0 0
        %4588 = vmatprep.subr.bf16.mxu0 0
        %4589 = vmatpush1.bf16.msra.mxu0 0
        %4590 = vmatprep.subr.bf16.mxu0 0
        %4591 = vmatpush1.bf16.msra.mxu0 0
        %4592 = vmatprep.subr.bf16.mxu0 0
        %4593 = vmatpush1.bf16.msra.mxu0 0
        %4594 = vmatprep.mubr.bf16.mxu0 0
        %4595 = vmatmul.mubr.bf16.gmra.mrb[0].mxu0 %v993
        %v4596 = vpop.f32.mrb[0].mxu0
        %v4597 = vadd.f32 0.0, %v4596
        %v4598 = vpop.f32.mrb[0].mxu0
        %v4599 = vpop.f32.mrb[0].mxu0
        %v4600 = vadd.f32 0.0, %v4599
        %v4601 = vpop.f32.mrb[0].mxu0
        %4602 = vmatprep.mubr.bf16.mxu0 0
        %4603 = vmatmul.mubr.bf16.gmra.mrb[0].mxu0 %v996
        %v4604 = vpop.f32.mrb[0].mxu0
        %v4605 = vadd.f32 0.0, %v4604
        %v4606 = vpop.f32.mrb[0].mxu0
        %v4607 = vpop.f32.mrb[0].mxu0
        %v4608 = vadd.f32 0.0, %v4607
        %v4609 = vpop.f32.mrb[0].mxu0
        %4610 = vdwg.mxu0
        %v4611 = vadd.f32 %v4388, %v4547
        %v4612 = vadd.f32 %v4389, %v4550
        %v4613 = vadd.f32 %v4390, %v4555
        %v4614 = vadd.f32 %v4391, %v4558
        %v4615 = vadd.f32 %v4611, %v4439
        %v4616 = vadd.f32 %v4612, %v4442
        %v4617 = vadd.f32 %v4613, %v4447
        %v4618 = vadd.f32 %v4614, %v4450
        %v4619 = vmax.f32 %v4615, 0.0
        %v4620 = vmax.f32 %v4616, 0.0
        %v4621 = vmax.f32 %v4617, 0.0
        %v4622 = vmax.f32 %v4618, 0.0
        %v4623 = vadd.f32 %v4398, %v4597
        %v4624 = vadd.f32 %v4399, %v4600
        %v4625 = vadd.f32 %v4400, %v4605
        %v4626 = vadd.f32 %v4401, %v4608
        %v4627 = vadd.f32 %v4623, %v4490
        %v4628 = vadd.f32 %v4624, %v4493
        %v4629 = vadd.f32 %v4625, %v4498
        %v4630 = vadd.f32 %v4626, %v4501
        %v4631 = vmax.f32 %v4627, 0.0
        %v4632 = vmax.f32 %v4628, 0.0
        %v4633 = vmax.f32 %v4629, 0.0
        %v4634 = vmax.f32 %v4630, 0.0
        %v4635 = vpack.c.bf16 %v4620, %v4619
        %v4636 = vpack.c.bf16 %v4622, %v4621
        %v4637 = vpack.c.bf16 %v4632, %v4631
        %v4638 = vpack.c.bf16 %v4634, %v4633
        %4639 = vmatprep.subr.bf16.mxu0 0
        %4640 = vmatpush1.bf16.msra.mxu0 %v4637
        %4641 = vmatprep.subr.bf16.mxu0 0
        %4642 = vmatpush1.bf16.msra.mxu0 %v4638
        %4643 = vmatprep.subr.bf16.mxu0 0
        %4644 = vmatpush1.bf16.msra.mxu0 0
        %4645 = vmatprep.subr.bf16.mxu0 0
        %4646 = vmatpush1.bf16.msra.mxu0 0
        %4647 = vmatprep.subr.bf16.mxu0 0
        %4648 = vmatpush1.bf16.msra.mxu0 0
        %4649 = vmatprep.subr.bf16.mxu0 0
        %4650 = vmatpush1.bf16.msra.mxu0 0
        %4651 = vmatprep.subr.bf16.mxu0 0
        %4652 = vmatpush1.bf16.msra.mxu0 0
        %4653 = vmatprep.subr.bf16.mxu0 0
        %4654 = vmatpush1.bf16.msra.mxu0 0
        %4655 = vmatprep.subr.bf16.mxu0 0
        %4656 = vmatpush1.bf16.msra.mxu0 0
        %4657 = vmatprep.subr.bf16.mxu0 0
        %4658 = vmatpush1.bf16.msra.mxu0 0
        %4659 = vmatprep.subr.bf16.mxu0 0
        %4660 = vmatpush1.bf16.msra.mxu0 0
        %4661 = vmatprep.subr.bf16.mxu0 0
        %4662 = vmatpush1.bf16.msra.mxu0 0
        %4663 = vmatprep.subr.bf16.mxu0 0
        %4664 = vmatpush1.bf16.msra.mxu0 0
        %4665 = vmatprep.subr.bf16.mxu0 0
        %4666 = vmatpush1.bf16.msra.mxu0 0
        %4667 = vmatprep.subr.bf16.mxu0 0
        %4668 = vmatpush1.bf16.msra.mxu0 0
        %4669 = vmatprep.subr.bf16.mxu0 0
        %4670 = vmatpush1.bf16.msra.mxu0 0
        %4671 = vmatprep.mubr.bf16.mxu0 0
        %4672 = vmatmul.mubr.bf16.gmra.mrb[0].mxu0 %v805
        %v4673 = vpop.f32.mrb[0].mxu0
        %v4674 = vadd.f32 0.0, %v4673
        %v4675 = vpop.f32.mrb[0].mxu0
        %v4676 = vpop.f32.mrb[0].mxu0
        %v4677 = vadd.f32 0.0, %v4676
        %v4678 = vpop.f32.mrb[0].mxu0
        %4679 = vmatprep.mubr.bf16.mxu0 0
        %4680 = vmatmul.mubr.bf16.gmra.mrb[0].mxu0 %v808
        %v4681 = vpop.f32.mrb[0].mxu0
        %v4682 = vadd.f32 0.0, %v4681
        %v4683 = vpop.f32.mrb[0].mxu0
        %v4684 = vpop.f32.mrb[0].mxu0
        %v4685 = vadd.f32 0.0, %v4684
        %v4686 = vpop.f32.mrb[0].mxu0
        %4687 = vdwg.mxu0
        %v4688 = vpack.c.bf16 %v4677, %v4674
        %v4689 = vpack.c.bf16 %v4685, %v4682
        %v4691 = vsel %vm372, %v4688, 0
        %v4694 = vsel %vm372, %v4689, 0
        %4696 = vmatprep.subr.bf16.mxu0 0
        %4697 = vmatpush1.bf16.xpose.msra.mxu0 %v4510
        %4698 = vmatprep.subr.bf16.mxu0 0
        %4699 = vmatpush1.bf16.xpose.msra.mxu0 0
        %4700 = vmatprep.subr.bf16.mxu0 0
        %4701 = vmatpush1.bf16.xpose.msra.mxu0 0
        %4702 = vmatprep.subr.bf16.mxu0 0
        %4703 = vmatpush1.bf16.xpose.msra.mxu0 0
        %4704 = vmatprep.subr.bf16.mxu0 0
        %4705 = vmatpush1.bf16.xpose.msra.mxu0 0
        %4706 = vmatprep.subr.bf16.mxu0 0
        %4707 = vmatpush1.bf16.xpose.msra.mxu0 0
        %4708 = vmatprep.subr.bf16.mxu0 0
        %4709 = vmatpush1.bf16.xpose.msra.mxu0 0
        %4710 = vmatprep.subr.bf16.mxu0 0
        %4711 = vmatpush1.bf16.xpose.msra.mxu0 0
        %4712 = vmatprep.subr.bf16.mxu0 0
        %4713 = vmatpush1.bf16.xpose.msra.mxu0 0
        %4714 = vmatprep.subr.bf16.mxu0 0
        %4715 = vmatpush1.bf16.xpose.msra.mxu0 0
        %4716 = vmatprep.subr.bf16.mxu0 0
        %4717 = vmatpush1.bf16.xpose.msra.mxu0 0
        %4718 = vmatprep.subr.bf16.mxu0 0
        %4719 = vmatpush1.bf16.xpose.msra.mxu0 0
        %4720 = vmatprep.subr.bf16.mxu0 0
        %4721 = vmatpush1.bf16.xpose.msra.mxu0 0
        %4722 = vmatprep.subr.bf16.mxu0 0
        %4723 = vmatpush1.bf16.xpose.msra.mxu0 0
        %4724 = vmatprep.subr.bf16.mxu0 0
        %4725 = vmatpush1.bf16.xpose.msra.mxu0 0
        %4726 = vmatprep.subr.bf16.mxu0 0
        %4727 = vmatpush1.bf16.xpose.msra.mxu0 0
        %4728 = vmatprep.mubr.bf16.mxu0 0
        %4729 = vmatmul.mubr.bf16.gmra.mrb[0].mxu0 %v4691
        %v4730 = vpop.f32.mrb[0].mxu0
        %v4731 = vadd.f32 0.0, %v4730
        %v4732 = vpop.f32.mrb[0].mxu0
        %v4733 = vpop.f32.mrb[0].mxu0
        %v4734 = vadd.f32 0.0, %v4733
        %v4735 = vpop.f32.mrb[0].mxu0
        %4736 = vmatprep.mubr.bf16.mxu0 0
        %4737 = vmatmul.mubr.bf16.gmra.mrb[0].mxu0 %v4694
        %v4738 = vpop.f32.mrb[0].mxu0
        %v4739 = vadd.f32 0.0, %v4738
        %v4740 = vpop.f32.mrb[0].mxu0
        %v4741 = vpop.f32.mrb[0].mxu0
        %v4742 = vadd.f32 0.0, %v4741
        %v4743 = vpop.f32.mrb[0].mxu0
        %4744 = vdwg.mxu0
        %4745 = vmatprep.subr.bf16.mxu0 0
        %4746 = vmatpush1.bf16.msra.mxu0 %v4635
        %4747 = vmatprep.subr.bf16.mxu0 0
        %4748 = vmatpush1.bf16.msra.mxu0 %v4636
        %4749 = vmatprep.subr.bf16.mxu0 0
        %4750 = vmatpush1.bf16.msra.mxu0 0
        %4751 = vmatprep.subr.bf16.mxu0 0
        %4752 = vmatpush1.bf16.msra.mxu0 0
        %4753 = vmatprep.subr.bf16.mxu0 0
        %4754 = vmatpush1.bf16.msra.mxu0 0
        %4755 = vmatprep.subr.bf16.mxu0 0
        %4756 = vmatpush1.bf16.msra.mxu0 0
        %4757 = vmatprep.subr.bf16.mxu0 0
        %4758 = vmatpush1.bf16.msra.mxu0 0
        %4759 = vmatprep.subr.bf16.mxu0 0
        %4760 = vmatpush1.bf16.msra.mxu0 0
        %4761 = vmatprep.subr.bf16.mxu0 0
        %4762 = vmatpush1.bf16.msra.mxu0 0
        %4763 = vmatprep.subr.bf16.mxu0 0
        %4764 = vmatpush1.bf16.msra.mxu0 0
        %4765 = vmatprep.subr.bf16.mxu0 0
        %4766 = vmatpush1.bf16.msra.mxu0 0
        %4767 = vmatprep.subr.bf16.mxu0 0
        %4768 = vmatpush1.bf16.msra.mxu0 0
        %4769 = vmatprep.subr.bf16.mxu0 0
        %4770 = vmatpush1.bf16.msra.mxu0 0
        %4771 = vmatprep.subr.bf16.mxu0 0
        %4772 = vmatpush1.bf16.msra.mxu0 0
        %4773 = vmatprep.subr.bf16.mxu0 0
        %4774 = vmatpush1.bf16.msra.mxu0 0
        %4775 = vmatprep.subr.bf16.mxu0 0
        %4776 = vmatpush1.bf16.msra.mxu0 0
        %4777 = vmatprep.mubr.bf16.mxu0 0
        %4778 = vmatmul.mubr.bf16.gmra.mrb[0].mxu0 %v935
        %v4779 = vpop.f32.mrb[0].mxu0
        %v4780 = vadd.f32 0.0, %v4779
        %v4781 = vpop.f32.mrb[0].mxu0
        %v4782 = vpop.f32.mrb[0].mxu0
        %v4783 = vadd.f32 0.0, %v4782
        %v4784 = vpop.f32.mrb[0].mxu0
        %4785 = vmatprep.mubr.bf16.mxu0 0
        %4786 = vmatmul.mubr.bf16.gmra.mrb[0].mxu0 %v938
        %v4787 = vpop.f32.mrb[0].mxu0
        %v4788 = vadd.f32 0.0, %v4787
        %v4789 = vpop.f32.mrb[0].mxu0
        %v4790 = vpop.f32.mrb[0].mxu0
        %v4791 = vadd.f32 0.0, %v4790
        %v4792 = vpop.f32.mrb[0].mxu0
        %4793 = vdwg.mxu0
        %v4794 = vpack.c.bf16 %v4783, %v4780
        %v4795 = vpack.c.bf16 %v4791, %v4788
        %v4797 = vsel %vm372, %v4794, 0
        %v4800 = vsel %vm372, %v4795, 0
        %4802 = vmatprep.subr.bf16.mxu0 0
        %4803 = vmatpush1.bf16.msra.mxu0 %v4508
        %4804 = vmatprep.subr.bf16.mxu0 0
        %4805 = vmatpush1.bf16.msra.mxu0 0
        %4806 = vmatprep.subr.bf16.mxu0 0
        %4807 = vmatpush1.bf16.msra.mxu0 0
        %4808 = vmatprep.subr.bf16.mxu0 0
        %4809 = vmatpush1.bf16.msra.mxu0 0
        %4810 = vmatprep.subr.bf16.mxu0 0
        %4811 = vmatpush1.bf16.msra.mxu0 0
        %4812 = vmatprep.subr.bf16.mxu0 0
        %4813 = vmatpush1.bf16.msra.mxu0 0
        %4814 = vmatprep.subr.bf16.mxu0 0
        %4815 = vmatpush1.bf16.msra.mxu0 0
        %4816 = vmatprep.subr.bf16.mxu0 0
        %4817 = vmatpush1.bf16.msra.mxu0 0
        %4818 = vmatprep.subr.bf16.mxu0 0
        %4819 = vmatpush1.bf16.msra.mxu0 0
        %4820 = vmatprep.subr.bf16.mxu0 0
        %4821 = vmatpush1.bf16.msra.mxu0 0
        %4822 = vmatprep.subr.bf16.mxu0 0
        %4823 = vmatpush1.bf16.msra.mxu0 0
        %4824 = vmatprep.subr.bf16.mxu0 0
        %4825 = vmatpush1.bf16.msra.mxu0 0
        %4826 = vmatprep.subr.bf16.mxu0 0
        %4827 = vmatpush1.bf16.msra.mxu0 0
        %4828 = vmatprep.subr.bf16.mxu0 0
        %4829 = vmatpush1.bf16.msra.mxu0 0
        %4830 = vmatprep.subr.bf16.mxu0 0
        %4831 = vmatpush1.bf16.msra.mxu0 0
        %4832 = vmatprep.subr.bf16.mxu0 0
        %4833 = vmatpush1.bf16.msra.mxu0 0
        %4834 = vmatprep.mubr.bf16.mxu0 0
        %4835 = vmatmul.mubr.bf16.gmra.mrb[0].mxu0 %v4797
        %v4836 = vpop.f32.mrb[0].mxu0
        %v4837 = vadd.f32 0.0, %v4836
        %v4838 = vpop.f32.mrb[0].mxu0
        %v4839 = vpop.f32.mrb[0].mxu0
        %v4840 = vadd.f32 0.0, %v4839
        %v4841 = vpop.f32.mrb[0].mxu0
        %4842 = vmatprep.mubr.bf16.mxu0 0
        %4843 = vmatmul.mubr.bf16.gmra.mrb[0].mxu0 %v4800
        %v4844 = vpop.f32.mrb[0].mxu0
        %v4845 = vadd.f32 0.0, %v4844
        %v4846 = vpop.f32.mrb[0].mxu0
        %v4847 = vpop.f32.mrb[0].mxu0
        %v4848 = vadd.f32 0.0, %v4847
        %v4849 = vpop.f32.mrb[0].mxu0
        %4850 = vdwg.mxu0
        %v4851 = vadd.f32 %v4388, %v4731
        %v4852 = vadd.f32 %v4389, %v4734
        %v4853 = vadd.f32 %v4390, %v4739
        %v4854 = vadd.f32 %v4391, %v4742
        %v4855 = vadd.f32 %v4851, %v4439
        %v4856 = vadd.f32 %v4852, %v4442
        %v4857 = vadd.f32 %v4853, %v4447
        %v4858 = vadd.f32 %v4854, %v4450
        %v4859 = vmax.f32 %v4855, 0.0
        %v4860 = vmax.f32 %v4856, 0.0
        %v4861 = vmax.f32 %v4857, 0.0
        %v4862 = vmax.f32 %v4858, 0.0
        %v4863 = vadd.f32 %v4398, %v4837
        %v4864 = vadd.f32 %v4399, %v4840
        %v4865 = vadd.f32 %v4400, %v4845
        %v4866 = vadd.f32 %v4401, %v4848
        %v4867 = vadd.f32 %v4863, %v4490
        %v4868 = vadd.f32 %v4864, %v4493
        %v4869 = vadd.f32 %v4865, %v4498
        %v4870 = vadd.f32 %v4866, %v4501
        %v4871 = vmax.f32 %v4867, 0.0
        %v4872 = vmax.f32 %v4868, 0.0
        %v4873 = vmax.f32 %v4869, 0.0
        %v4874 = vmax.f32 %v4870, 0.0
        %v4875 = vpack.c.bf16 %v4860, %v4859
        %v4876 = vpack.c.bf16 %v4862, %v4861
        %v4877 = vpack.c.bf16 %v4872, %v4871
        %v4878 = vpack.c.bf16 %v4874, %v4873
        %4879 = vmatprep.subr.bf16.mxu0 0
        %4880 = vmatpush1.bf16.msra.mxu0 %v4877
        %4881 = vmatprep.subr.bf16.mxu0 0
        %4882 = vmatpush1.bf16.msra.mxu0 %v4878
        %4883 = vmatprep.subr.bf16.mxu0 0
        %4884 = vmatpush1.bf16.msra.mxu0 0
        %4885 = vmatprep.subr.bf16.mxu0 0
        %4886 = vmatpush1.bf16.msra.mxu0 0
        %4887 = vmatprep.subr.bf16.mxu0 0
        %4888 = vmatpush1.bf16.msra.mxu0 0
        %4889 = vmatprep.subr.bf16.mxu0 0
        %4890 = vmatpush1.bf16.msra.mxu0 0
        %4891 = vmatprep.subr.bf16.mxu0 0
        %4892 = vmatpush1.bf16.msra.mxu0 0
        %4893 = vmatprep.subr.bf16.mxu0 0
        %4894 = vmatpush1.bf16.msra.mxu0 0
        %4895 = vmatprep.subr.bf16.mxu0 0
        %4896 = vmatpush1.bf16.msra.mxu0 0
        %4897 = vmatprep.subr.bf16.mxu0 0
        %4898 = vmatpush1.bf16.msra.mxu0 0
        %4899 = vmatprep.subr.bf16.mxu0 0
        %4900 = vmatpush1.bf16.msra.mxu0 0
        %4901 = vmatprep.subr.bf16.mxu0 0
        %4902 = vmatpush1.bf16.msra.mxu0 0
        %4903 = vmatprep.subr.bf16.mxu0 0
        %4904 = vmatpush1.bf16.msra.mxu0 0
        %4905 = vmatprep.subr.bf16.mxu0 0
        %4906 = vmatpush1.bf16.msra.mxu0 0
        %4907 = vmatprep.subr.bf16.mxu0 0
        %4908 = vmatpush1.bf16.msra.mxu0 0
        %4909 = vmatprep.subr.bf16.mxu0 0
        %4910 = vmatpush1.bf16.msra.mxu0 0
        %4911 = vmatprep.mubr.bf16.mxu0 0
        %4912 = vmatmul.mubr.bf16.gmra.mrb[0].mxu0 %v805
        %v4913 = vpop.f32.mrb[0].mxu0
        %v4914 = vadd.f32 0.0, %v4913
        %v4915 = vpop.f32.mrb[0].mxu0
        %v4916 = vpop.f32.mrb[0].mxu0
        %v4917 = vadd.f32 0.0, %v4916
        %v4918 = vpop.f32.mrb[0].mxu0
        %4919 = vmatprep.mubr.bf16.mxu0 0
        %4920 = vmatmul.mubr.bf16.gmra.mrb[0].mxu0 %v808
        %v4921 = vpop.f32.mrb[0].mxu0
        %v4922 = vadd.f32 0.0, %v4921
        %v4923 = vpop.f32.mrb[0].mxu0
        %v4924 = vpop.f32.mrb[0].mxu0
        %v4925 = vadd.f32 0.0, %v4924
        %v4926 = vpop.f32.mrb[0].mxu0
        %4927 = vdwg.mxu0
        %v4928 = vpack.c.bf16 %v4917, %v4914
        %v4929 = vpack.c.bf16 %v4925, %v4922
        %v4931 = vsel %vm372, %v4928, 0
        %v4934 = vsel %vm372, %v4929, 0
        %4936 = vmatprep.subr.bf16.mxu0 0
        %4937 = vmatpush1.bf16.xpose.msra.mxu0 %v4510
        %4938 = vmatprep.subr.bf16.mxu0 0
        %4939 = vmatpush1.bf16.xpose.msra.mxu0 0
        %4940 = vmatprep.subr.bf16.mxu0 0
        %4941 = vmatpush1.bf16.xpose.msra.mxu0 0
        %4942 = vmatprep.subr.bf16.mxu0 0
        %4943 = vmatpush1.bf16.xpose.msra.mxu0 0
        %4944 = vmatprep.subr.bf16.mxu0 0
        %4945 = vmatpush1.bf16.xpose.msra.mxu0 0
        %4946 = vmatprep.subr.bf16.mxu0 0
        %4947 = vmatpush1.bf16.xpose.msra.mxu0 0
        %4948 = vmatprep.subr.bf16.mxu0 0
        %4949 = vmatpush1.bf16.xpose.msra.mxu0 0
        %4950 = vmatprep.subr.bf16.mxu0 0
        %4951 = vmatpush1.bf16.xpose.msra.mxu0 0
        %4952 = vmatprep.subr.bf16.mxu0 0
        %4953 = vmatpush1.bf16.xpose.msra.mxu0 0
        %4954 = vmatprep.subr.bf16.mxu0 0
        %4955 = vmatpush1.bf16.xpose.msra.mxu0 0
        %4956 = vmatprep.subr.bf16.mxu0 0
        %4957 = vmatpush1.bf16.xpose.msra.mxu0 0
        %4958 = vmatprep.subr.bf16.mxu0 0
        %4959 = vmatpush1.bf16.xpose.msra.mxu0 0
        %4960 = vmatprep.subr.bf16.mxu0 0
        %4961 = vmatpush1.bf16.xpose.msra.mxu0 0
        %4962 = vmatprep.subr.bf16.mxu0 0
        %4963 = vmatpush1.bf16.xpose.msra.mxu0 0
        %4964 = vmatprep.subr.bf16.mxu0 0
        %4965 = vmatpush1.bf16.xpose.msra.mxu0 0
        %4966 = vmatprep.subr.bf16.mxu0 0
        %4967 = vmatpush1.bf16.xpose.msra.mxu0 0
        %4968 = vmatprep.mubr.bf16.mxu0 0
        %4969 = vmatmul.mubr.bf16.gmra.mrb[0].mxu0 %v4931
        %v4970 = vpop.f32.mrb[0].mxu0
        %v4971 = vadd.f32 0.0, %v4970
        %v4972 = vpop.f32.mrb[0].mxu0
        %v4973 = vpop.f32.mrb[0].mxu0
        %v4974 = vadd.f32 0.0, %v4973
        %v4975 = vpop.f32.mrb[0].mxu0
        %4976 = vmatprep.mubr.bf16.mxu0 0
        %4977 = vmatmul.mubr.bf16.gmra.mrb[0].mxu0 %v4934
        %v4978 = vpop.f32.mrb[0].mxu0
        %v4979 = vadd.f32 0.0, %v4978
        %v4980 = vpop.f32.mrb[0].mxu0
        %v4981 = vpop.f32.mrb[0].mxu0
        %v4982 = vadd.f32 0.0, %v4981
        %v4983 = vpop.f32.mrb[0].mxu0
        %4984 = vdwg.mxu0
        %4985 = vmatprep.subr.bf16.mxu0 0
        %4986 = vmatpush1.bf16.msra.mxu0 %v4875
        %4987 = vmatprep.subr.bf16.mxu0 0
        %4988 = vmatpush1.bf16.msra.mxu0 %v4876
        %4989 = vmatprep.subr.bf16.mxu0 0
        %4990 = vmatpush1.bf16.msra.mxu0 0
        %4991 = vmatprep.subr.bf16.mxu0 0
        %4992 = vmatpush1.bf16.msra.mxu0 0
        %4993 = vmatprep.subr.bf16.mxu0 0
        %4994 = vmatpush1.bf16.msra.mxu0 0
        %4995 = vmatprep.subr.bf16.mxu0 0
        %4996 = vmatpush1.bf16.msra.mxu0 0
        %4997 = vmatprep.subr.bf16.mxu0 0
        %4998 = vmatpush1.bf16.msra.mxu0 0
        %4999 = vmatprep.subr.bf16.mxu0 0
        %5000 = vmatpush1.bf16.msra.mxu0 0
        %5001 = vmatprep.subr.bf16.mxu0 0
        %5002 = vmatpush1.bf16.msra.mxu0 0
        %5003 = vmatprep.subr.bf16.mxu0 0
        %5004 = vmatpush1.bf16.msra.mxu0 0
        %5005 = vmatprep.subr.bf16.mxu0 0
        %5006 = vmatpush1.bf16.msra.mxu0 0
        %5007 = vmatprep.subr.bf16.mxu0 0
        %5008 = vmatpush1.bf16.msra.mxu0 0
        %5009 = vmatprep.subr.bf16.mxu0 0
        %5010 = vmatpush1.bf16.msra.mxu0 0
        %5011 = vmatprep.subr.bf16.mxu0 0
        %5012 = vmatpush1.bf16.msra.mxu0 0
        %5013 = vmatprep.subr.bf16.mxu0 0
        %5014 = vmatpush1.bf16.msra.mxu0 0
        %5015 = vmatprep.subr.bf16.mxu0 0
        %5016 = vmatpush1.bf16.msra.mxu0 0
        %5017 = vmatprep.mubr.bf16.mxu0 0
        %5018 = vmatmul.mubr.bf16.gmra.mrb[0].mxu0 %v935
        %v5019 = vpop.f32.mrb[0].mxu0
        %v5020 = vadd.f32 0.0, %v5019
        %v5021 = vpop.f32.mrb[0].mxu0
        %v5022 = vpop.f32.mrb[0].mxu0
        %v5023 = vadd.f32 0.0, %v5022
        %v5024 = vpop.f32.mrb[0].mxu0
        %5025 = vmatprep.mubr.bf16.mxu0 0
        %5026 = vmatmul.mubr.bf16.gmra.mrb[0].mxu0 %v938
        %v5027 = vpop.f32.mrb[0].mxu0
        %v5028 = vadd.f32 0.0, %v5027
        %v5029 = vpop.f32.mrb[0].mxu0
        %v5030 = vpop.f32.mrb[0].mxu0
        %v5031 = vadd.f32 0.0, %v5030
        %v5032 = vpop.f32.mrb[0].mxu0
        %5033 = vdwg.mxu0
        %v5034 = vpack.c.bf16 %v5023, %v5020
        %v5035 = vpack.c.bf16 %v5031, %v5028
        %v5037 = vsel %vm372, %v5034, 0
        %v5040 = vsel %vm372, %v5035, 0
        %5042 = vmatprep.subr.bf16.mxu0 0
        %5043 = vmatpush1.bf16.msra.mxu0 %v4508
        %5044 = vmatprep.subr.bf16.mxu0 0
        %5045 = vmatpush1.bf16.msra.mxu0 0
        %5046 = vmatprep.subr.bf16.mxu0 0
        %5047 = vmatpush1.bf16.msra.mxu0 0
        %5048 = vmatprep.subr.bf16.mxu0 0
        %5049 = vmatpush1.bf16.msra.mxu0 0
        %5050 = vmatprep.subr.bf16.mxu0 0
        %5051 = vmatpush1.bf16.msra.mxu0 0
        %5052 = vmatprep.subr.bf16.mxu0 0
        %5053 = vmatpush1.bf16.msra.mxu0 0
        %5054 = vmatprep.subr.bf16.mxu0 0
        %5055 = vmatpush1.bf16.msra.mxu0 0
        %5056 = vmatprep.subr.bf16.mxu0 0
        %5057 = vmatpush1.bf16.msra.mxu0 0
        %5058 = vmatprep.subr.bf16.mxu0 0
        %5059 = vmatpush1.bf16.msra.mxu0 0
        %5060 = vmatprep.subr.bf16.mxu0 0
        %5061 = vmatpush1.bf16.msra.mxu0 0
        %5062 = vmatprep.subr.bf16.mxu0 0
        %5063 = vmatpush1.bf16.msra.mxu0 0
        %5064 = vmatprep.subr.bf16.mxu0 0
        %5065 = vmatpush1.bf16.msra.mxu0 0
        %5066 = vmatprep.subr.bf16.mxu0 0
        %5067 = vmatpush1.bf16.msra.mxu0 0
        %5068 = vmatprep.subr.bf16.mxu0 0
        %5069 = vmatpush1.bf16.msra.mxu0 0
        %5070 = vmatprep.subr.bf16.mxu0 0
        %5071 = vmatpush1.bf16.msra.mxu0 0
        %5072 = vmatprep.subr.bf16.mxu0 0
        %5073 = vmatpush1.bf16.msra.mxu0 0
        %5074 = vmatprep.mubr.bf16.mxu0 0
        %5075 = vmatmul.mubr.bf16.gmra.mrb[0].mxu0 %v5037
        %v5076 = vpop.f32.mrb[0].mxu0
        %v5077 = vadd.f32 0.0, %v5076
        %v5078 = vpop.f32.mrb[0].mxu0
        %v5079 = vpop.f32.mrb[0].mxu0
        %v5080 = vadd.f32 0.0, %v5079
        %v5081 = vpop.f32.mrb[0].mxu0
        %5082 = vmatprep.mubr.bf16.mxu0 0
        %5083 = vmatmul.mubr.bf16.gmra.mrb[0].mxu0 %v5040
        %v5084 = vpop.f32.mrb[0].mxu0
        %v5085 = vadd.f32 0.0, %v5084
        %v5086 = vpop.f32.mrb[0].mxu0
        %v5087 = vpop.f32.mrb[0].mxu0
        %v5088 = vadd.f32 0.0, %v5087
        %v5089 = vpop.f32.mrb[0].mxu0
        %5090 = vdwg.mxu0
        %v5091 = vadd.f32 %v4388, %v4971
        %v5092 = vadd.f32 %v4389, %v4974
        %v5093 = vadd.f32 %v4390, %v4979
        %v5094 = vadd.f32 %v4391, %v4982
        %v5095 = vadd.f32 %v5091, %v4439
        %v5096 = vadd.f32 %v5092, %v4442
        %v5097 = vadd.f32 %v5093, %v4447
        %v5098 = vadd.f32 %v5094, %v4450
        %v5099 = vmax.f32 %v5095, 0.0
        %v5100 = vmax.f32 %v5096, 0.0
        %v5101 = vmax.f32 %v5097, 0.0
        %v5102 = vmax.f32 %v5098, 0.0
        %v5103 = vadd.f32 %v4398, %v5077
        %v5104 = vadd.f32 %v4399, %v5080
        %v5105 = vadd.f32 %v4400, %v5085
        %v5106 = vadd.f32 %v4401, %v5088
        %v5107 = vadd.f32 %v5103, %v4490
        %v5108 = vadd.f32 %v5104, %v4493
        %v5109 = vadd.f32 %v5105, %v4498
        %v5110 = vadd.f32 %v5106, %v4501
        %v5111 = vmax.f32 %v5107, 0.0
        %v5112 = vmax.f32 %v5108, 0.0
        %v5113 = vmax.f32 %v5109, 0.0
        %v5114 = vmax.f32 %v5110, 0.0
        %v5115 = vsel %vm372, %v5099, 0.0
        %5116 = vadd.xlane.f32.xlu0 %v5115
        %v5117 = vpop.xlane.xlu0 %5116
        %v5118 = vsel %vm372, %v5100, 0.0
        %5119 = vadd.xlane.f32.xlu0 %v5118
        %v5120 = vpop.xlane.xlu0 %5119
        %v5121 = vsel %vm372, %v5101, 0.0
        %5122 = vadd.xlane.f32.xlu0 %v5121
        %v5123 = vpop.xlane.xlu0 %5122
        %v5124 = vsel %vm372, %v5102, 0.0
        %5125 = vadd.xlane.f32.xlu0 %v5124
        %v5126 = vpop.xlane.xlu0 %5125
        %v5127 = vsel %vm372, %v5111, 0.0
        %5128 = vadd.xlane.f32.xlu0 %v5127
        %v5129 = vpop.xlane.xlu0 %5128
        %v5130 = vsel %vm372, %v5112, 0.0
        %5131 = vadd.xlane.f32.xlu0 %v5130
        %v5132 = vpop.xlane.xlu0 %5131
        %v5133 = vsel %vm372, %v5113, 0.0
        %5134 = vadd.xlane.f32.xlu0 %v5133
        %v5135 = vpop.xlane.xlu0 %5134
        %v5136 = vsel %vm372, %v5114, 0.0
        %5137 = vadd.xlane.f32.xlu0 %v5136
        %v5138 = vpop.xlane.xlu0 %5137
        %v5139 = vpack.c.bf16 %v5120, %v5117
        %v5140 = vpack.c.bf16 %v5126, %v5123
        %v5141 = vpack.c.bf16 %v5132, %v5129
        %v5142 = vpack.c.bf16 %v5138, %v5135
        %5143 = vmatprep.subr.bf16.mxu0 0
        %5144 = vmatpush1.bf16.msra.mxu0 %v5141
        %5145 = vmatprep.subr.bf16.mxu0 0
        %5146 = vmatpush1.bf16.msra.mxu0 %v5142
        %5147 = vmatprep.subr.bf16.mxu0 0
        %5148 = vmatpush1.bf16.msra.mxu0 0
        %5149 = vmatprep.subr.bf16.mxu0 0
        %5150 = vmatpush1.bf16.msra.mxu0 0
        %5151 = vmatprep.subr.bf16.mxu0 0
        %5152 = vmatpush1.bf16.msra.mxu0 0
        %5153 = vmatprep.subr.bf16.mxu0 0
        %5154 = vmatpush1.bf16.msra.mxu0 0
        %5155 = vmatprep.subr.bf16.mxu0 0
        %5156 = vmatpush1.bf16.msra.mxu0 0
        %5157 = vmatprep.subr.bf16.mxu0 0
        %5158 = vmatpush1.bf16.msra.mxu0 0
        %5159 = vmatprep.subr.bf16.mxu0 0
        %5160 = vmatpush1.bf16.msra.mxu0 0
        %5161 = vmatprep.subr.bf16.mxu0 0
        %5162 = vmatpush1.bf16.msra.mxu0 0
        %5163 = vmatprep.subr.bf16.mxu0 0
        %5164 = vmatpush1.bf16.msra.mxu0 0
        %5165 = vmatprep.subr.bf16.mxu0 0
        %5166 = vmatpush1.bf16.msra.mxu0 0
        %5167 = vmatprep.subr.bf16.mxu0 0
        %5168 = vmatpush1.bf16.msra.mxu0 0
        %5169 = vmatprep.subr.bf16.mxu0 0
        %5170 = vmatpush1.bf16.msra.mxu0 0
        %5171 = vmatprep.subr.bf16.mxu0 0
        %5172 = vmatpush1.bf16.msra.mxu0 0
        %5173 = vmatprep.subr.bf16.mxu0 0
        %5174 = vmatpush1.bf16.msra.mxu0 0
        %5175 = vmatprep.mubr.bf16.mxu0 0
        %5176 = vmatmul.mubr.bf16.gmra.mrb[0].mxu0 %v1590
        %v5177 = vpop.f32.mrb[0].mxu0
        %v5178 = vadd.f32 0.0, %v5177
        %v5179 = vpop.f32.mrb[0].mxu0
        %v5180 = vpop.f32.mrb[0].mxu0
        %v5181 = vadd.f32 0.0, %v5180
        %v5182 = vpop.f32.mrb[0].mxu0
        %5183 = vmatprep.mubr.bf16.mxu0 0
        %5184 = vmatmul.mubr.bf16.gmra.mrb[0].mxu0 %v1593
        %v5185 = vpop.f32.mrb[0].mxu0
        %v5186 = vadd.f32 0.0, %v5185
        %v5187 = vpop.f32.mrb[0].mxu0
        %v5188 = vpop.f32.mrb[0].mxu0
        %v5189 = vadd.f32 0.0, %v5188
        %v5190 = vpop.f32.mrb[0].mxu0
        %5191 = vdwg.mxu0
        %5192 = vmatprep.subr.bf16.mxu0 0
        %5193 = vmatpush1.bf16.msra.mxu0 %v5139
        %5194 = vmatprep.subr.bf16.mxu0 0
        %5195 = vmatpush1.bf16.msra.mxu0 %v5140
        %5196 = vmatprep.subr.bf16.mxu0 0
        %5197 = vmatpush1.bf16.msra.mxu0 0
        %5198 = vmatprep.subr.bf16.mxu0 0
        %5199 = vmatpush1.bf16.msra.mxu0 0
        %5200 = vmatprep.subr.bf16.mxu0 0
        %5201 = vmatpush1.bf16.msra.mxu0 0
        %5202 = vmatprep.subr.bf16.mxu0 0
        %5203 = vmatpush1.bf16.msra.mxu0 0
        %5204 = vmatprep.subr.bf16.mxu0 0
        %5205 = vmatpush1.bf16.msra.mxu0 0
        %5206 = vmatprep.subr.bf16.mxu0 0
        %5207 = vmatpush1.bf16.msra.mxu0 0
        %5208 = vmatprep.subr.bf16.mxu0 0
        %5209 = vmatpush1.bf16.msra.mxu0 0
        %5210 = vmatprep.subr.bf16.mxu0 0
        %5211 = vmatpush1.bf16.msra.mxu0 0
        %5212 = vmatprep.subr.bf16.mxu0 0
        %5213 = vmatpush1.bf16.msra.mxu0 0
        %5214 = vmatprep.subr.bf16.mxu0 0
        %5215 = vmatpush1.bf16.msra.mxu0 0
        %5216 = vmatprep.subr.bf16.mxu0 0
        %5217 = vmatpush1.bf16.msra.mxu0 0
        %5218 = vmatprep.subr.bf16.mxu0 0
        %5219 = vmatpush1.bf16.msra.mxu0 0
        %5220 = vmatprep.subr.bf16.mxu0 0
        %5221 = vmatpush1.bf16.msra.mxu0 0
        %5222 = vmatprep.subr.bf16.mxu0 0
        %5223 = vmatpush1.bf16.msra.mxu0 0
        %5224 = vmatprep.mubr.bf16.mxu0 0
        %5225 = vmatmul.mubr.bf16.gmra.mrb[0].mxu0 %v1655
        %v5226 = vpop.f32.mrb[0].mxu0
        %v5227 = vadd.f32 %v5178, %v5226
        %v5228 = vpop.f32.mrb[0].mxu0
        %v5229 = vpop.f32.mrb[0].mxu0
        %v5230 = vadd.f32 %v5181, %v5229
        %v5231 = vpop.f32.mrb[0].mxu0
        %5232 = vmatprep.mubr.bf16.mxu0 0
        %5233 = vmatmul.mubr.bf16.gmra.mrb[0].mxu0 %v1658
        %v5234 = vpop.f32.mrb[0].mxu0
        %v5235 = vadd.f32 %v5186, %v5234
        %v5236 = vpop.f32.mrb[0].mxu0
        %v5237 = vpop.f32.mrb[0].mxu0
        %v5238 = vadd.f32 %v5189, %v5237
        %v5239 = vpop.f32.mrb[0].mxu0
        %5240 = vdwg.mxu0
        %v5241 = vmax.f32 %v5227, 0.0
        %v5242 = vmax.f32 %v5230, 0.0
        %v5243 = vmax.f32 %v5235, 0.0
        %v5244 = vmax.f32 %v5238, 0.0
        %v5245 = vpack.c.bf16 %v5112, %v5111
        %v5246 = vpack.c.bf16 %v5114, %v5113
        %5247 = vmatprep.subr.bf16.mxu0 0
        %5248 = vmatpush1.bf16.msra.mxu0 %v5245
        %5249 = vmatprep.subr.bf16.mxu0 0
        %5250 = vmatpush1.bf16.msra.mxu0 %v5246
        %5251 = vmatprep.subr.bf16.mxu0 0
        %5252 = vmatpush1.bf16.msra.mxu0 0
        %5253 = vmatprep.subr.bf16.mxu0 0
        %5254 = vmatpush1.bf16.msra.mxu0 0
        %5255 = vmatprep.subr.bf16.mxu0 0
        %5256 = vmatpush1.bf16.msra.mxu0 0
        %5257 = vmatprep.subr.bf16.mxu0 0
        %5258 = vmatpush1.bf16.msra.mxu0 0
        %5259 = vmatprep.subr.bf16.mxu0 0
        %5260 = vmatpush1.bf16.msra.mxu0 0
        %5261 = vmatprep.subr.bf16.mxu0 0
        %5262 = vmatpush1.bf16.msra.mxu0 0
        %5263 = vmatprep.subr.bf16.mxu0 0
        %5264 = vmatpush1.bf16.msra.mxu0 0
        %5265 = vmatprep.subr.bf16.mxu0 0
        %5266 = vmatpush1.bf16.msra.mxu0 0
        %5267 = vmatprep.subr.bf16.mxu0 0
        %5268 = vmatpush1.bf16.msra.mxu0 0
        %5269 = vmatprep.subr.bf16.mxu0 0
        %5270 = vmatpush1.bf16.msra.mxu0 0
        %5271 = vmatprep.subr.bf16.mxu0 0
        %5272 = vmatpush1.bf16.msra.mxu0 0
        %5273 = vmatprep.subr.bf16.mxu0 0
        %5274 = vmatpush1.bf16.msra.mxu0 0
        %5275 = vmatprep.subr.bf16.mxu0 0
        %5276 = vmatpush1.bf16.msra.mxu0 0
        %5277 = vmatprep.subr.bf16.mxu0 0
        %5278 = vmatpush1.bf16.msra.mxu0 0
        %5279 = vmatprep.mubr.bf16.mxu0 0
        %5280 = vmatmul.mubr.bf16.gmra.mrb[0].mxu0 %v1726
        %v5281 = vpop.f32.mrb[0].mxu0
        %v5282 = vadd.f32 0.0, %v5281
        %v5283 = vpop.f32.mrb[0].mxu0
        %v5284 = vpop.f32.mrb[0].mxu0
        %v5285 = vadd.f32 0.0, %v5284
        %v5286 = vpop.f32.mrb[0].mxu0
        %5287 = vmatprep.mubr.bf16.mxu0 0
        %5288 = vmatmul.mubr.bf16.gmra.mrb[0].mxu0 %v1729
        %v5289 = vpop.f32.mrb[0].mxu0
        %v5290 = vadd.f32 0.0, %v5289
        %v5291 = vpop.f32.mrb[0].mxu0
        %v5292 = vpop.f32.mrb[0].mxu0
        %v5293 = vadd.f32 0.0, %v5292
        %v5294 = vpop.f32.mrb[0].mxu0
        %5295 = vdwg.mxu0
        %v5296 = vmax.f32 %v5282, 0.0
        %v5297 = vmax.f32 %v5285, 0.0
        %v5298 = vmax.f32 %v5290, 0.0
        %v5299 = vmax.f32 %v5293, 0.0
        %v5300 = vpack.c.bf16 %v5242, %v5241
        %v5301 = vpack.c.bf16 %v5244, %v5243
        %5302 = vmatprep.subr.bf16.mxu0 0
        %5303 = vmatpush1.bf16.msra.mxu0 %v5300
        %5304 = vmatprep.subr.bf16.mxu0 0
        %5305 = vmatpush1.bf16.msra.mxu0 %v5301
        %5306 = vmatprep.subr.bf16.mxu0 0
        %5307 = vmatpush1.bf16.msra.mxu0 0
        %5308 = vmatprep.subr.bf16.mxu0 0
        %5309 = vmatpush1.bf16.msra.mxu0 0
        %5310 = vmatprep.subr.bf16.mxu0 0
        %5311 = vmatpush1.bf16.msra.mxu0 0
        %5312 = vmatprep.subr.bf16.mxu0 0
        %5313 = vmatpush1.bf16.msra.mxu0 0
        %5314 = vmatprep.subr.bf16.mxu0 0
        %5315 = vmatpush1.bf16.msra.mxu0 0
        %5316 = vmatprep.subr.bf16.mxu0 0
        %5317 = vmatpush1.bf16.msra.mxu0 0
        %5318 = vmatprep.subr.bf16.mxu0 0
        %5319 = vmatpush1.bf16.msra.mxu0 0
        %5320 = vmatprep.subr.bf16.mxu0 0
        %5321 = vmatpush1.bf16.msra.mxu0 0
        %5322 = vmatprep.subr.bf16.mxu0 0
        %5323 = vmatpush1.bf16.msra.mxu0 0
        %5324 = vmatprep.subr.bf16.mxu0 0
        %5325 = vmatpush1.bf16.msra.mxu0 0
        %5326 = vmatprep.subr.bf16.mxu0 0
        %5327 = vmatpush1.bf16.msra.mxu0 0
        %5328 = vmatprep.subr.bf16.mxu0 0
        %5329 = vmatpush1.bf16.msra.mxu0 0
        %5330 = vmatprep.subr.bf16.mxu0 0
        %5331 = vmatpush1.bf16.msra.mxu0 0
        %5332 = vmatprep.subr.bf16.mxu0 0
        %5333 = vmatpush1.bf16.msra.mxu0 0
        %5334 = vmatprep.mubr.bf16.mxu0 0
        %5335 = vmatmul.mubr.bf16.gmra.mrb[0].mxu0 %v1787
        %v5336 = vpop.f32.mrb[0].mxu0
        %v5337 = vadd.f32 0.0, %v5336
        %v5338 = vpop.f32.mrb[0].mxu0
        %v5339 = vpop.f32.mrb[0].mxu0
        %v5340 = vpop.f32.mrb[0].mxu0
        %5341 = vdwg.mxu0
        %v5342 = vpack.c.bf16 %v5297, %v5296
        %v5343 = vpack.c.bf16 %v5299, %v5298
        %5344 = vmatprep.subr.bf16.mxu0 0
        %5345 = vmatpush1.bf16.msra.mxu0 %v5342
        %5346 = vmatprep.subr.bf16.mxu0 0
        %5347 = vmatpush1.bf16.msra.mxu0 %v5343
        %5348 = vmatprep.subr.bf16.mxu0 0
        %5349 = vmatpush1.bf16.msra.mxu0 0
        %5350 = vmatprep.subr.bf16.mxu0 0
        %5351 = vmatpush1.bf16.msra.mxu0 0
        %5352 = vmatprep.subr.bf16.mxu0 0
        %5353 = vmatpush1.bf16.msra.mxu0 0
        %5354 = vmatprep.subr.bf16.mxu0 0
        %5355 = vmatpush1.bf16.msra.mxu0 0
        %5356 = vmatprep.subr.bf16.mxu0 0
        %5357 = vmatpush1.bf16.msra.mxu0 0
        %5358 = vmatprep.subr.bf16.mxu0 0
        %5359 = vmatpush1.bf16.msra.mxu0 0
        %5360 = vmatprep.subr.bf16.mxu0 0
        %5361 = vmatpush1.bf16.msra.mxu0 0
        %5362 = vmatprep.subr.bf16.mxu0 0
        %5363 = vmatpush1.bf16.msra.mxu0 0
        %5364 = vmatprep.subr.bf16.mxu0 0
        %5365 = vmatpush1.bf16.msra.mxu0 0
        %5366 = vmatprep.subr.bf16.mxu0 0
        %5367 = vmatpush1.bf16.msra.mxu0 0
        %5368 = vmatprep.subr.bf16.mxu0 0
        %5369 = vmatpush1.bf16.msra.mxu0 0
        %5370 = vmatprep.subr.bf16.mxu0 0
        %5371 = vmatpush1.bf16.msra.mxu0 0
        %5372 = vmatprep.subr.bf16.mxu0 0
        %5373 = vmatpush1.bf16.msra.mxu0 0
        %5374 = vmatprep.subr.bf16.mxu0 0
        %5375 = vmatpush1.bf16.msra.mxu0 0
        %5376 = vmatprep.mubr.bf16.mxu0 0
        %5377 = vmatmul.mubr.bf16.gmra.mrb[0].mxu0 %v1832
        %v5378 = vpop.f32.mrb[0].mxu0
        %v5379 = vadd.f32 0.0, %v5378
        %v5380 = vpop.f32.mrb[0].mxu0
        %v5381 = vpop.f32.mrb[0].mxu0
        %v5382 = vpop.f32.mrb[0].mxu0
        %5383 = vdwg.mxu0
        %5385 = vset.pattern.permute.xlu0 0
        %5386 = vperm.xlu0 %5385, %v5337
        %v5387 = vpop.permute.xlu0 %5386
        %v5389 = vadd.f32 %v5387, %v5379
        %v5390 = vsel %vm1880, %v5389, -inf
        %v5391 = vrot.slane %v5390, 4
        %v5392 = vmax.f32 %v5390, %v5391
        %v5393 = vrot.slane %v5392, 2
        %v5394 = vmax.f32 %v5392, %v5393
        %v5395 = vrot.slane %v5394, 1
        %v5396 = vmax.f32 %v5394, %v5395
        %v5397 = vsub.f32 %v5389, %v5396
        %v5398 = vmul.f32 %v5397, 1.442695
        %v5399 = vpow.pop %v5398
        %v5400 = vsel %vm1880, %v5399, 0.0
        %v5401 = vrot.slane %v5400, 4
        %v5402 = vadd.f32 %v5400, %v5401
        %v5403 = vrot.slane %v5402, 2
        %v5404 = vadd.f32 %v5402, %v5403
        %v5405 = vrot.slane %v5404, 1
        %v5406 = vadd.f32 %v5404, %v5405
        %v5407 = vlog2.pop %v5406
        %v5408 = vmul.f32 %v5407, 0.6931472
        %v5409 = vadd.f32 %v5396, %v5408
        %v5410 = vsub.f32 %v5389, %v5409
        %s5411 = scalar_lea.vmem %s298, 6 [#allocation5]
        %5412 = vst.msk [vmem:[%s5411] sm:$0x3] %vm1880, %v5410
        %s5413 = sand.u32 %s172, 1
        %s5414 = scalar_lea.sflag [#allocation4], %s5413
        %s5415 = sand.u32 %s172, 1
        %s5416 = smul.addr %s5415, 8
        %s5417 = scalar_lea.vmem [#allocation5], %s5416
        // Predicated region
        $region49: #{tpu_custom_call.1} parent=43 // pred_check
          %p5418 = pneg %p182
        $region50: #{tpu_custom_call.1} parent=43 // pred_check_branch
          %5420 = sbr.rel (%p5418) target = $region52
        $region51: #{tpu_custom_call.1} parent=43 // pred_region
          %s5421 = smul.u32 4, %s23
          %s5423 = ssub.s32 128, 128
          %5424 = vsyncadd %s5414, %s5423
          %s5425 = smul.addr %s5421, 32
          %s5426 = scalar_lea.hbm %s6, %s5425
          %s5427 = sshll.u32 %s5417, 4
          %s5428 = int_to_ptr.vmem [resolvable:$true] %s5427
          %5433 = dma.vmem_to_hbm [thread:$0]  %s5428, 128, %s5426, %s5414, 32, 32, 2
        $region52: #{tpu_custom_call.1} parent=43 // pred_fallthru
          _
      $region44: #{tpu_custom_call.1} parent=5 // pred_fallthru
        _
      %p5434 = scmp.le.s32.totalorder 2, %s18
      // Predicated region
      $region53: #{tpu_custom_call.1} parent=5 // pred_check
        %p5435 = pneg %p5434
      $region54: #{tpu_custom_call.1} parent=5 // pred_check_branch
        %5437 = sbr.rel (%p5435) target = $region56
      $region55: #{tpu_custom_call.1} parent=5 // pred_region
        %s5438 = ssub.s32 %s18, 2
        // Predicated region
        $region57: #{tpu_custom_call.1} parent=55 // pred_check
          %p5439 = pneg %p188
        $region58: #{tpu_custom_call.1} parent=55 // pred_check_branch
          %5441 = sbr.rel (%p5439) target = $region60
        $region59: #{tpu_custom_call.1} parent=55 // pred_region
          %s5442 = sand.u32 %s173, 1
          %s5443 = scalar_lea.sflag [#allocation4], %s5442
          %s5444 = sand.u32 %s173, 1
          %s5445 = smul.addr %s5444, 8
          %s5446 = scalar_lea.vmem [#allocation5], %s5445
          %5447 = dma.done %s5443, 128
        $region60: #{tpu_custom_call.1} parent=55 // pred_fallthru
          _
      $region56: #{tpu_custom_call.1} parent=5 // pred_fallthru
        _
    $region6: #{tpu_custom_call.1} parent=1 // loop_footer
      %s22 = sadd.s32 1, %s18
    $region7: #{tpu_custom_call.1} parent=1 // loop_footer_branch
      %17 = sbr.rel target = $region3
    $region8: #{tpu_custom_call.1} parent=1 // loop_exit
      _
    %5448 = vsyncpa [#allocation3], 1
    %s5449 = scalar_lea.sflag [#allocation3], 1
    %5450 = vsyncpa %s5449, 1
    %5451 = vsyncpa [#allocation4], 1
    %s5452 = scalar_lea.sflag [#allocation4], 1
    %5453 = vsyncpa %s5452, 1

</llo_original>
